<compile_context>
chip_gen: v7x
topology: tpu7x:2x2x1
jax: 0.10.0
libtpu: 0.0.40
codegen_flags: <defaults>
</compile_context>

<pallas_src>
import functools

import jax
import jax.numpy as jnp
from jax.experimental import pallas as pl
from jax.experimental.pallas import tpu as pltpu


# ----------------------------------------------------------------------------
# Fused kernel
# ----------------------------------------------------------------------------
def _inception_kernel(x_ref, w1x1_ref, b1x1_ref, w3_ref, b3_ref,
                      w5_ref, b5_ref, wm_ref, bm_ref, o_ref,
                      pad3_ref, pad5_ref, padp_ref, *, H, W, splits):
  """One batch-block of the Inception module.

  x_ref   : (BN, H, W, Cin)              bf16
  w1x1_ref: (Cin, c3rp + c5rp + c1)      bf16  (w3a|pad, w5a|pad, w1 fused)
  b1x1_ref: (1, c3rp + c5rp + c1)        f32
  w3_ref  : (9  * c3rp, c3)              bf16  row order = (kh, kw, cin)
  w5_ref  : (25 * c5rp, c5)              bf16
  wm_ref  : (Cin, cm)                    bf16
  b*_ref  : (1, c*)                      f32
  o_ref   : (BN, H, W, c1+c3+c5+cm)      f32
  pad*_ref: zero-padded VMEM scratch for the 3x3 / 5x5 convs and the max-pool.
  """
  c1, c3rp, c3, c5rp, c5, cm = splits
  BN = x_ref.shape[0]
  Cin = x_ref.shape[-1]
  R = BN * H * W
  f32, bf16 = jnp.float32, jnp.bfloat16

  x = x_ref[...]                                        # (BN, H, W, Cin) bf16

  # ---- Stage 1: branch1x1 + 3x3-reduce + 5x5-reduce as one fused MXU matmul.
  y = jnp.dot(x.reshape(R, Cin), w1x1_ref[...], preferred_element_type=f32)
  y = jnp.maximum(y + b1x1_ref[...], 0.0)
  red3 = y[:, 0:c3rp]                      # 128-aligned lane slices
  red5 = y[:, c3rp:c3rp + c5rp]
  y1 = y[:, c3rp + c5rp:]                  # branch1x1 output (width c1)

  def conv_kxk(red, pad_ref, K, w_ref, b_ref):
    """KxK stride-1 'same' conv: pad in VMEM, im2col taps, single matmul."""
    crp = red.shape[-1]
    P = K // 2
    pad_ref[...] = jnp.zeros_like(pad_ref)
    pad_ref[:, P:P + H, P:P + W, :] = red.reshape(BN, H, W, crp)
    patch = jnp.concatenate(
        [pad_ref[:, kh:kh + H, kw:kw + W, :].astype(bf16)
         for kh in range(K) for kw in range(K)],
        axis=-1)                                        # (BN, H, W, K*K*crp)
    out = jnp.dot(patch.reshape(R, K * K * crp), w_ref[...],
                  preferred_element_type=f32)
    return jnp.maximum(out + b_ref[...], 0.0)

  y3 = conv_kxk(red3, pad3_ref, 3, w3_ref, b3_ref)
  y5 = conv_kxk(red5, pad5_ref, 5, w5_ref, b5_ref)

  # ---- Pool branch: 3x3/s1/p1 max-pool + ReLU, then 1x1 conv + ReLU.
  # Zero padding is equivalent to -inf padding because ReLU follows the pool.
  padp_ref[...] = jnp.zeros_like(padp_ref)
  padp_ref[:, 1:1 + H, 1:1 + W, :] = x.astype(f32)
  m = padp_ref[:, 0:H, 0:W, :]
  for kh in range(3):
    for kw in range(3):
      if kh or kw:
        m = jnp.maximum(m, padp_ref[:, kh:kh + H, kw:kw + W, :])
  m = jnp.maximum(m, 0.0)                               # ReLU(maxpool(x))
  ym = jnp.dot(m.reshape(R, Cin).astype(bf16), wm_ref[...],
               preferred_element_type=f32)
  ym = jnp.maximum(ym + bm_ref[...], 0.0)

  # ---- Write each branch straight into its channel slice (fused concat).
  o_ref[:, :, :, 0:c1] = y1.reshape(BN, H, W, c1)
  o_ref[:, :, :, c1:c1 + c3] = y3.reshape(BN, H, W, c3)
  o_ref[:, :, :, c1 + c3:c1 + c3 + c5] = y5.reshape(BN, H, W, c5)
  o_ref[:, :, :, c1 + c3 + c5:c1 + c3 + c5 + cm] = ym.reshape(BN, H, W, cm)


# ----------------------------------------------------------------------------
# Parameter construction / packing
# ----------------------------------------------------------------------------
def init_inception_params(key, channel):
  """channel = [Cin, c1x1, c3x3red, c3x3, c5x5red, c5x5, cpool] (HWIO, f32)."""
  cin, c1, c3r, c3, c5r, c5, cm = channel

  def conv_w(k, kh, kw, ci, co):
    return jax.random.normal(k, (kh, kw, ci, co), jnp.float32) * 0.05

  keys = jax.random.split(key, 12)
  return {
      "w1": conv_w(keys[0], 1, 1, cin, c1),
      "b1": jax.random.normal(keys[1], (c1,), jnp.float32) * 0.01,
      "w3a": conv_w(keys[2], 1, 1, cin, c3r),
      "b3a": jax.random.normal(keys[3], (c3r,), jnp.float32) * 0.01,
      "w3b": conv_w(keys[4], 3, 3, c3r, c3),
      "b3b": jax.random.normal(keys[5], (c3,), jnp.float32) * 0.01,
      "w5a": conv_w(keys[6], 1, 1, cin, c5r),
      "b5a": jax.random.normal(keys[7], (c5r,), jnp.float32) * 0.01,
      "w5b": conv_w(keys[8], 5, 5, c5r, c5),
      "b5b": jax.random.normal(keys[9], (c5,), jnp.float32) * 0.01,
      "wm": conv_w(keys[10], 1, 1, cin, cm),
      "bm": jax.random.normal(keys[11], (cm,), jnp.float32) * 0.01,
  }


def _round_up(v, m):
  return (v + m - 1) // m * m


def pack_inception_params(p):
  """Pre-pack raw HWIO params into the fused / lane-aligned kernel layout."""
  f32, bf16 = jnp.float32, jnp.bfloat16
  cin = p["w1"].shape[2]
  c3r = p["w3b"].shape[2]
  c5r = p["w5b"].shape[2]
  c3rp, c5rp = _round_up(c3r, 128), _round_up(c5r, 128)

  def pad_cols(w, b, cp):
    extra = cp - w.shape[-1]
    if extra:
      w = jnp.concatenate([w, jnp.zeros((cin, extra), f32)], axis=-1)
      b = jnp.concatenate([b, jnp.zeros((extra,), f32)])
    return w, b

  # Fused stage-1 weights: [w3a|0pad, w5a|0pad, w1] along Cout so both reduce
  # outputs land on 128-aligned lane offsets inside the kernel.
  w3a_p, b3a_p = pad_cols(p["w3a"][0, 0], p["b3a"], c3rp)
  w5a_p, b5a_p = pad_cols(p["w5a"][0, 0], p["b5a"], c5rp)
  w1x1 = jnp.concatenate([w3a_p, w5a_p, p["w1"][0, 0]], axis=-1).astype(bf16)
  b1x1 = jnp.concatenate([b3a_p, b5a_p, p["b1"]]).reshape(1, -1).astype(f32)

  def pack_kxk(w, cp):
    K, _, cr, co = w.shape
    if cp != cr:
      w = jnp.concatenate([w, jnp.zeros((K, K, cp - cr, co), f32)], axis=2)
    return w.reshape(K * K * cp, co).astype(bf16)

  return {
      "w1x1": w1x1, "b1x1": b1x1,
      "w3": pack_kxk(p["w3b"], c3rp),
      "b3": p["b3b"].reshape(1, -1).astype(f32),
      "w5": pack_kxk(p["w5b"], c5rp),
      "b5": p["b5b"].reshape(1, -1).astype(f32),
      "wm": p["wm"][0, 0].astype(bf16),
      "bm": p["bm"].reshape(1, -1).astype(f32),
  }


# ----------------------------------------------------------------------------
# Forward (single fused pallas_call)
# ----------------------------------------------------------------------------
def _inception_forward_fn(x_nchw, pp):
  N, Cin, H, W = x_nchw.shape
  w1x1, b1x1 = pp["w1x1"], pp["b1x1"]
  w3, b3, w5, b5 = pp["w3"], pp["b3"], pp["w5"], pp["b5"]
  wm, bm = pp["wm"], pp["bm"]

  c3, c5, cm = w3.shape[1], w5.shape[1], wm.shape[1]
  c3rp, c5rp = w3.shape[0] // 9, w5.shape[0] // 25
  c1 = w1x1.shape[1] - c3rp - c5rp
  cout = c1 + c3 + c5 + cm

  x = jnp.transpose(x_nchw, (0, 2, 3, 1)).astype(jnp.bfloat16)  # NCHW -> NHWC

  bn = 1                       # batch block; grid over batch ("parallel")
  kernel = functools.partial(_inception_kernel, H=H, W=W,
                             splits=(c1, c3rp, c3, c5rp, c5, cm))

  out_nhwc = pl.pallas_call(
      kernel,
      out_shape=jax.ShapeDtypeStruct((N, H, W, cout), jnp.float32),
      grid_spec=pltpu.PrefetchScalarGridSpec(
          num_scalar_prefetch=0,
          grid=(N // bn,),
          in_specs=[
              pl.BlockSpec((bn, H, W, Cin), lambda n: (n, 0, 0, 0)),
              pl.BlockSpec(w1x1.shape, lambda n: (0, 0)),
              pl.BlockSpec(b1x1.shape, lambda n: (0, 0)),
              pl.BlockSpec(w3.shape, lambda n: (0, 0)),
              pl.BlockSpec(b3.shape, lambda n: (0, 0)),
              pl.BlockSpec(w5.shape, lambda n: (0, 0)),
              pl.BlockSpec(b5.shape, lambda n: (0, 0)),
              pl.BlockSpec(wm.shape, lambda n: (0, 0)),
              pl.BlockSpec(bm.shape, lambda n: (0, 0)),
          ],
          out_specs=pl.BlockSpec((bn, H, W, cout), lambda n: (n, 0, 0, 0)),
          scratch_shapes=[
              pltpu.VMEM((bn, H + 2, W + 2, c3rp), jnp.float32),
              pltpu.VMEM((bn, H + 4, W + 4, c5rp), jnp.float32),
              pltpu.VMEM((bn, H + 2, W + 2, Cin), jnp.float32),
          ]),
      compiler_params=pltpu.CompilerParams(
          dimension_semantics=("parallel",)),
  )(x, w1x1, b1x1, w3, b3, w5, b5, wm, bm)

  return jnp.transpose(out_nhwc, (0, 3, 1, 2))            # NHWC -> NCHW


inception_forward = jax.jit(_inception_forward_fn)


# ----------------------------------------------------------------------------
# Pure-JAX reference (bf16-rounded operands, f32 accumulation) for checking
# ----------------------------------------------------------------------------
def _ref_forward(x_nchw, p):
  f32 = jnp.float32
  bf = lambda a: a.astype(jnp.bfloat16).astype(f32)
  x = jnp.transpose(x_nchw, (0, 2, 3, 1))

  def conv(inp, w, b, pad):
    y = jax.lax.conv_general_dilated(
        bf(inp), bf(w), window_strides=(1, 1),
        padding=[(pad, pad), (pad, pad)],
        dimension_numbers=("NHWC", "HWIO", "NHWC"))
    return jnp.maximum(y + b, 0.0)

  b1 = conv(x, p["w1"], p["b1"], 0)
  b3 = conv(conv(x, p["w3a"], p["b3a"], 0), p["w3b"], p["b3b"], 1)
  b5 = conv(conv(x, p["w5a"], p["b5a"], 0), p["w5b"], p["b5b"], 2)
  xp = jnp.pad(x, ((0, 0), (1, 1), (1, 1), (0, 0)), constant_values=-jnp.inf)
  mp = jnp.max(jnp.stack([xp[:, i:i + x.shape[1], j:j + x.shape[2], :]
                          for i in range(3) for j in range(3)]), axis=0)
  bm = conv(jnp.maximum(mp, 0.0), p["wm"], p["bm"], 0)
  return jnp.transpose(jnp.concatenate([b1, b3, b5, bm], -1), (0, 3, 1, 2))


if __name__ == "__main__":
  channel = [192, 64, 96, 128, 16, 32, 32]   # first InceptionV1 block config
  N, H, W = 2, 8, 8                          # small deterministic test shape

  key = jax.random.PRNGKey(0)
  kx, kp = jax.random.split(key)
  x = jax.random.normal(kx, (N, channel[0], H, W), jnp.float32)   # NCHW input
  params = init_inception_params(kp, channel)
  packed = pack_inception_params(params)     # one-time weight packing

  out = jax.block_until_ready(inception_forward(x, packed))

  expected_c = channel[1] + channel[3] + channel[5] + channel[6]
  assert out.shape == (N, expected_c, H, W), out.shape

  ref = _ref_forward(x, params)
  err = float(jnp.max(jnp.abs(out - ref)))
  assert err < 1e-2, f"max abs err {err}"
  print("KERNEL_OK")
</pallas_src>

<mosaic_0001>
module attributes {stable_mosaic.version = 11 : i64} {
  func.func @_inception_kernel(%arg0: i32, %arg1: memref<1x8x8x192xbf16, #tpu.memory_space<vmem>>, %arg2: memref<192x320xbf16, #tpu.memory_space<vmem>>, %arg3: memref<1x320xf32, #tpu.memory_space<vmem>>, %arg4: memref<1152x128xbf16, #tpu.memory_space<vmem>>, %arg5: memref<1x128xf32, #tpu.memory_space<vmem>>, %arg6: memref<3200x32xbf16, #tpu.memory_space<vmem>>, %arg7: memref<1x32xf32, #tpu.memory_space<vmem>>, %arg8: memref<192x32xbf16, #tpu.memory_space<vmem>>, %arg9: memref<1x32xf32, #tpu.memory_space<vmem>>, %arg10: memref<1x8x8x256xf32, #tpu.memory_space<vmem>>, %arg11: memref<1x10x10x128xf32, #tpu.memory_space<vmem>>, %arg12: memref<1x12x12x128xf32, #tpu.memory_space<vmem>>, %arg13: memref<1x10x10x192xf32, #tpu.memory_space<vmem>>) attributes {dimension_semantics = [#tpu.dimension_semantics<parallel>], iteration_bounds = array<i64: 2>, scalar_prefetch = 0 : i64, scratch_operands = 3 : i64, tpu.core_type = #tpu.core_type<tc>, window_params = [{transform_indices = @transform_0, window_bounds = array<i64: 1, 8, 8, 192>}, {pipeline_mode = #tpu.pipeline_mode<synchronous>, transform_indices = @transform_1, window_bounds = array<i64: 192, 320>}, {pipeline_mode = #tpu.pipeline_mode<synchronous>, transform_indices = @transform_2, window_bounds = array<i64: 1, 320>}, {pipeline_mode = #tpu.pipeline_mode<synchronous>, transform_indices = @transform_3, window_bounds = array<i64: 1152, 128>}, {pipeline_mode = #tpu.pipeline_mode<synchronous>, transform_indices = @transform_4, window_bounds = array<i64: 1, 128>}, {pipeline_mode = #tpu.pipeline_mode<synchronous>, transform_indices = @transform_5, window_bounds = array<i64: 3200, 32>}, {pipeline_mode = #tpu.pipeline_mode<synchronous>, transform_indices = @transform_6, window_bounds = array<i64: 1, 32>}, {pipeline_mode = #tpu.pipeline_mode<synchronous>, transform_indices = @transform_7, window_bounds = array<i64: 192, 32>}, {pipeline_mode = #tpu.pipeline_mode<synchronous>, transform_indices = @transform_8, window_bounds = array<i64: 1, 32>}, {transform_indices = @transform_9, window_bounds = array<i64: 1, 8, 8, 256>}]} {
    %c0 = arith.constant 0 : index
    %c0_0 = arith.constant 0 : index
    %c0_1 = arith.constant 0 : index
    %c0_2 = arith.constant 0 : index
    %0 = vector.load %arg1[%c0, %c0_0, %c0_1, %c0_2] : memref<1x8x8x192xbf16, #tpu.memory_space<vmem>>, vector<1x8x8x192xbf16>
    %1 = vector.shape_cast %0 : vector<1x8x8x192xbf16> to vector<64x192xbf16>
    %c0_3 = arith.constant 0 : index
    %c0_4 = arith.constant 0 : index
    %2 = vector.load %arg2[%c0_3, %c0_4] : memref<192x320xbf16, #tpu.memory_space<vmem>>, vector<192x320xbf16>
    %cst = arith.constant dense<0.000000e+00> : vector<64x320xf32>
    %3 = tpu.matmul %1, %2, %cst {dimension_numbers = #tpu.dot_dimension_numbers<[1], [0], [0], [1], [0, 0, 1, 1], [], []>} : vector<64x192xbf16>, vector<192x320xbf16>, vector<64x320xf32> -> vector<64x320xf32>
    %c0_5 = arith.constant 0 : index
    %c0_6 = arith.constant 0 : index
    %4 = vector.load %arg3[%c0_5, %c0_6] : memref<1x320xf32, #tpu.memory_space<vmem>>, vector<1x320xf32>
    %5 = vector.broadcast %4 : vector<1x320xf32> to vector<64x320xf32>
    %6 = arith.addf %3, %5 : vector<64x320xf32>
    %cst_7 = arith.constant 0.000000e+00 : f32
    %7 = vector.broadcast %cst_7 : f32 to vector<64x320xf32>
    %8 = arith.maximumf %6, %7 : vector<64x320xf32>
    %9 = vector.extract_strided_slice %8 {offsets = [0, 0], sizes = [64, 128], strides = [1, 1]} : vector<64x320xf32> to vector<64x128xf32>
    %10 = vector.extract_strided_slice %8 {offsets = [0, 128], sizes = [64, 128], strides = [1, 1]} : vector<64x320xf32> to vector<64x128xf32>
    %11 = vector.extract_strided_slice %8 {offsets = [0, 256], sizes = [64, 64], strides = [1, 1]} : vector<64x320xf32> to vector<64x64xf32>
    %cst_8 = arith.constant 0.000000e+00 : f32
    %12 = vector.broadcast %cst_8 : f32 to vector<1x10x10x128xf32>
    %c0_9 = arith.constant 0 : index
    %c0_10 = arith.constant 0 : index
    %c0_11 = arith.constant 0 : index
    %c0_12 = arith.constant 0 : index
    %13 = vector.load %arg11[%c0_9, %c0_10, %c0_11, %c0_12] : memref<1x10x10x128xf32, #tpu.memory_space<vmem>>, vector<1x10x10x128xf32>
    tpu.vector_store %arg11[%c0_9, %c0_10, %c0_11, %c0_12], %12 {strides = array<i32>} : memref<1x10x10x128xf32, #tpu.memory_space<vmem>>, vector<1x10x10x128xf32>,
    %14 = vector.shape_cast %9 : vector<64x128xf32> to vector<1x8x8x128xf32>
    %c0_13 = arith.constant 0 : index
    %c1 = arith.constant 1 : index
    %c1_14 = arith.constant 1 : index
    %c0_15 = arith.constant 0 : index
    %15 = vector.load %arg11[%c0_13, %c1, %c1_14, %c0_15] : memref<1x10x10x128xf32, #tpu.memory_space<vmem>>, vector<1x8x8x128xf32>
    tpu.vector_store %arg11[%c0_13, %c1, %c1_14, %c0_15], %14 {strides = array<i32>} : memref<1x10x10x128xf32, #tpu.memory_space<vmem>>, vector<1x8x8x128xf32>,
    %c0_16 = arith.constant 0 : index
    %c0_17 = arith.constant 0 : index
    %c0_18 = arith.constant 0 : index
    %c0_19 = arith.constant 0 : index
    %16 = vector.load %arg11[%c0_16, %c0_17, %c0_18, %c0_19] : memref<1x10x10x128xf32, #tpu.memory_space<vmem>>, vector<1x8x8x128xf32>
    %17 = arith.truncf %16 : vector<1x8x8x128xf32> to vector<1x8x8x128xbf16>
    %c0_20 = arith.constant 0 : index
    %c0_21 = arith.constant 0 : index
    %c1_22 = arith.constant 1 : index
    %c0_23 = arith.constant 0 : index
    %18 = vector.load %arg11[%c0_20, %c0_21, %c1_22, %c0_23] : memref<1x10x10x128xf32, #tpu.memory_space<vmem>>, vector<1x8x8x128xf32>
    %19 = arith.truncf %18 : vector<1x8x8x128xf32> to vector<1x8x8x128xbf16>
    %c0_24 = arith.constant 0 : index
    %c0_25 = arith.constant 0 : index
    %c2 = arith.constant 2 : index
    %c0_26 = arith.constant 0 : index
    %20 = vector.load %arg11[%c0_24, %c0_25, %c2, %c0_26] : memref<1x10x10x128xf32, #tpu.memory_space<vmem>>, vector<1x8x8x128xf32>
    %21 = arith.truncf %20 : vector<1x8x8x128xf32> to vector<1x8x8x128xbf16>
    %c0_27 = arith.constant 0 : index
    %c1_28 = arith.constant 1 : index
    %c0_29 = arith.constant 0 : index
    %c0_30 = arith.constant 0 : index
    %22 = vector.load %arg11[%c0_27, %c1_28, %c0_29, %c0_30] : memref<1x10x10x128xf32, #tpu.memory_space<vmem>>, vector<1x8x8x128xf32>
    %23 = arith.truncf %22 : vector<1x8x8x128xf32> to vector<1x8x8x128xbf16>
    %c0_31 = arith.constant 0 : index
    %c1_32 = arith.constant 1 : index
    %c1_33 = arith.constant 1 : index
    %c0_34 = arith.constant 0 : index
    %24 = vector.load %arg11[%c0_31, %c1_32, %c1_33, %c0_34] : memref<1x10x10x128xf32, #tpu.memory_space<vmem>>, vector<1x8x8x128xf32>
    %25 = arith.truncf %24 : vector<1x8x8x128xf32> to vector<1x8x8x128xbf16>
    %c0_35 = arith.constant 0 : index
    %c1_36 = arith.constant 1 : index
    %c2_37 = arith.constant 2 : index
    %c0_38 = arith.constant 0 : index
    %26 = vector.load %arg11[%c0_35, %c1_36, %c2_37, %c0_38] : memref<1x10x10x128xf32, #tpu.memory_space<vmem>>, vector<1x8x8x128xf32>
    %27 = arith.truncf %26 : vector<1x8x8x128xf32> to vector<1x8x8x128xbf16>
    %c0_39 = arith.constant 0 : index
    %c2_40 = arith.constant 2 : index
    %c0_41 = arith.constant 0 : index
    %c0_42 = arith.constant 0 : index
    %28 = vector.load %arg11[%c0_39, %c2_40, %c0_41, %c0_42] : memref<1x10x10x128xf32, #tpu.memory_space<vmem>>, vector<1x8x8x128xf32>
    %29 = arith.truncf %28 : vector<1x8x8x128xf32> to vector<1x8x8x128xbf16>
    %c0_43 = arith.constant 0 : index
    %c2_44 = arith.constant 2 : index
    %c1_45 = arith.constant 1 : index
    %c0_46 = arith.constant 0 : index
    %30 = vector.load %arg11[%c0_43, %c2_44, %c1_45, %c0_46] : memref<1x10x10x128xf32, #tpu.memory_space<vmem>>, vector<1x8x8x128xf32>
    %31 = arith.truncf %30 : vector<1x8x8x128xf32> to vector<1x8x8x128xbf16>
    %c0_47 = arith.constant 0 : index
    %c2_48 = arith.constant 2 : index
    %c2_49 = arith.constant 2 : index
    %c0_50 = arith.constant 0 : index
    %32 = vector.load %arg11[%c0_47, %c2_48, %c2_49, %c0_50] : memref<1x10x10x128xf32, #tpu.memory_space<vmem>>, vector<1x8x8x128xf32>
    %33 = arith.truncf %32 : vector<1x8x8x128xf32> to vector<1x8x8x128xbf16>
    %34 = tpu.concatenate %17, %19, %21, %23, %25, %27, %29, %31, %33 in 3 : vector<1x8x8x128xbf16>, vector<1x8x8x128xbf16>, vector<1x8x8x128xbf16>, vector<1x8x8x128xbf16>, vector<1x8x8x128xbf16>, vector<1x8x8x128xbf16>, vector<1x8x8x128xbf16>, vector<1x8x8x128xbf16>, vector<1x8x8x128xbf16> -> vector<1x8x8x1152xbf16>
    %35 = vector.shape_cast %34 : vector<1x8x8x1152xbf16> to vector<64x1152xbf16>
    %c0_51 = arith.constant 0 : index
    %c0_52 = arith.constant 0 : index
    %36 = vector.load %arg4[%c0_51, %c0_52] : memref<1152x128xbf16, #tpu.memory_space<vmem>>, vector<1152x128xbf16>
    %cst_53 = arith.constant dense<0.000000e+00> : vector<64x128xf32>
    %37 = tpu.matmul %35, %36, %cst_53 {dimension_numbers = #tpu.dot_dimension_numbers<[1], [0], [0], [1], [0, 0, 1, 1], [], []>} : vector<64x1152xbf16>, vector<1152x128xbf16>, vector<64x128xf32> -> vector<64x128xf32>
    %c0_54 = arith.constant 0 : index
    %c0_55 = arith.constant 0 : index
    %38 = vector.load %arg5[%c0_54, %c0_55] : memref<1x128xf32, #tpu.memory_space<vmem>>, vector<1x128xf32>
    %39 = vector.broadcast %38 : vector<1x128xf32> to vector<64x128xf32>
    %40 = arith.addf %37, %39 : vector<64x128xf32>
    %cst_56 = arith.constant 0.000000e+00 : f32
    %41 = vector.broadcast %cst_56 : f32 to vector<64x128xf32>
    %42 = arith.maximumf %40, %41 : vector<64x128xf32>
    %cst_57 = arith.constant 0.000000e+00 : f32
    %43 = vector.broadcast %cst_57 : f32 to vector<1x12x12x128xf32>
    %c0_58 = arith.constant 0 : index
    %c0_59 = arith.constant 0 : index
    %c0_60 = arith.constant 0 : index
    %c0_61 = arith.constant 0 : index
    %44 = vector.load %arg12[%c0_58, %c0_59, %c0_60, %c0_61] : memref<1x12x12x128xf32, #tpu.memory_space<vmem>>, vector<1x12x12x128xf32>
    tpu.vector_store %arg12[%c0_58, %c0_59, %c0_60, %c0_61], %43 {strides = array<i32>} : memref<1x12x12x128xf32, #tpu.memory_space<vmem>>, vector<1x12x12x128xf32>,
    %45 = vector.shape_cast %10 : vector<64x128xf32> to vector<1x8x8x128xf32>
    %c0_62 = arith.constant 0 : index
    %c2_63 = arith.constant 2 : index
    %c2_64 = arith.constant 2 : index
    %c0_65 = arith.constant 0 : index
    %46 = vector.load %arg12[%c0_62, %c2_63, %c2_64, %c0_65] : memref<1x12x12x128xf32, #tpu.memory_space<vmem>>, vector<1x8x8x128xf32>
    tpu.vector_store %arg12[%c0_62, %c2_63, %c2_64, %c0_65], %45 {strides = array<i32>} : memref<1x12x12x128xf32, #tpu.memory_space<vmem>>, vector<1x8x8x128xf32>,
    %c0_66 = arith.constant 0 : index
    %c0_67 = arith.constant 0 : index
    %c0_68 = arith.constant 0 : index
    %c0_69 = arith.constant 0 : index
    %47 = vector.load %arg12[%c0_66, %c0_67, %c0_68, %c0_69] : memref<1x12x12x128xf32, #tpu.memory_space<vmem>>, vector<1x8x8x128xf32>
    %48 = arith.truncf %47 : vector<1x8x8x128xf32> to vector<1x8x8x128xbf16>
    %c0_70 = arith.constant 0 : index
    %c0_71 = arith.constant 0 : index
    %c1_72 = arith.constant 1 : index
    %c0_73 = arith.constant 0 : index
    %49 = vector.load %arg12[%c0_70, %c0_71, %c1_72, %c0_73] : memref<1x12x12x128xf32, #tpu.memory_space<vmem>>, vector<1x8x8x128xf32>
    %50 = arith.truncf %49 : vector<1x8x8x128xf32> to vector<1x8x8x128xbf16>
    %c0_74 = arith.constant 0 : index
    %c0_75 = arith.constant 0 : index
    %c2_76 = arith.constant 2 : index
    %c0_77 = arith.constant 0 : index
    %51 = vector.load %arg12[%c0_74, %c0_75, %c2_76, %c0_77] : memref<1x12x12x128xf32, #tpu.memory_space<vmem>>, vector<1x8x8x128xf32>
    %52 = arith.truncf %51 : vector<1x8x8x128xf32> to vector<1x8x8x128xbf16>
    %c0_78 = arith.constant 0 : index
    %c0_79 = arith.constant 0 : index
    %c3 = arith.constant 3 : index
    %c0_80 = arith.constant 0 : index
    %53 = vector.load %arg12[%c0_78, %c0_79, %c3, %c0_80] : memref<1x12x12x128xf32, #tpu.memory_space<vmem>>, vector<1x8x8x128xf32>
    %54 = arith.truncf %53 : vector<1x8x8x128xf32> to vector<1x8x8x128xbf16>
    %c0_81 = arith.constant 0 : index
    %c0_82 = arith.constant 0 : index
    %c4 = arith.constant 4 : index
    %c0_83 = arith.constant 0 : index
    %55 = vector.load %arg12[%c0_81, %c0_82, %c4, %c0_83] : memref<1x12x12x128xf32, #tpu.memory_space<vmem>>, vector<1x8x8x128xf32>
    %56 = arith.truncf %55 : vector<1x8x8x128xf32> to vector<1x8x8x128xbf16>
    %c0_84 = arith.constant 0 : index
    %c1_85 = arith.constant 1 : index
    %c0_86 = arith.constant 0 : index
    %c0_87 = arith.constant 0 : index
    %57 = vector.load %arg12[%c0_84, %c1_85, %c0_86, %c0_87] : memref<1x12x12x128xf32, #tpu.memory_space<vmem>>, vector<1x8x8x128xf32>
    %58 = arith.truncf %57 : vector<1x8x8x128xf32> to vector<1x8x8x128xbf16>
    %c0_88 = arith.constant 0 : index
    %c1_89 = arith.constant 1 : index
    %c1_90 = arith.constant 1 : index
    %c0_91 = arith.constant 0 : index
    %59 = vector.load %arg12[%c0_88, %c1_89, %c1_90, %c0_91] : memref<1x12x12x128xf32, #tpu.memory_space<vmem>>, vector<1x8x8x128xf32>
    %60 = arith.truncf %59 : vector<1x8x8x128xf32> to vector<1x8x8x128xbf16>
    %c0_92 = arith.constant 0 : index
    %c1_93 = arith.constant 1 : index
    %c2_94 = arith.constant 2 : index
    %c0_95 = arith.constant 0 : index
    %61 = vector.load %arg12[%c0_92, %c1_93, %c2_94, %c0_95] : memref<1x12x12x128xf32, #tpu.memory_space<vmem>>, vector<1x8x8x128xf32>
    %62 = arith.truncf %61 : vector<1x8x8x128xf32> to vector<1x8x8x128xbf16>
    %c0_96 = arith.constant 0 : index
    %c1_97 = arith.constant 1 : index
    %c3_98 = arith.constant 3 : index
    %c0_99 = arith.constant 0 : index
    %63 = vector.load %arg12[%c0_96, %c1_97, %c3_98, %c0_99] : memref<1x12x12x128xf32, #tpu.memory_space<vmem>>, vector<1x8x8x128xf32>
    %64 = arith.truncf %63 : vector<1x8x8x128xf32> to vector<1x8x8x128xbf16>
    %c0_100 = arith.constant 0 : index
    %c1_101 = arith.constant 1 : index
    %c4_102 = arith.constant 4 : index
    %c0_103 = arith.constant 0 : index
    %65 = vector.load %arg12[%c0_100, %c1_101, %c4_102, %c0_103] : memref<1x12x12x128xf32, #tpu.memory_space<vmem>>, vector<1x8x8x128xf32>
    %66 = arith.truncf %65 : vector<1x8x8x128xf32> to vector<1x8x8x128xbf16>
    %c0_104 = arith.constant 0 : index
    %c2_105 = arith.constant 2 : index
    %c0_106 = arith.constant 0 : index
    %c0_107 = arith.constant 0 : index
    %67 = vector.load %arg12[%c0_104, %c2_105, %c0_106, %c0_107] : memref<1x12x12x128xf32, #tpu.memory_space<vmem>>, vector<1x8x8x128xf32>
    %68 = arith.truncf %67 : vector<1x8x8x128xf32> to vector<1x8x8x128xbf16>
    %c0_108 = arith.constant 0 : index
    %c2_109 = arith.constant 2 : index
    %c1_110 = arith.constant 1 : index
    %c0_111 = arith.constant 0 : index
    %69 = vector.load %arg12[%c0_108, %c2_109, %c1_110, %c0_111] : memref<1x12x12x128xf32, #tpu.memory_space<vmem>>, vector<1x8x8x128xf32>
    %70 = arith.truncf %69 : vector<1x8x8x128xf32> to vector<1x8x8x128xbf16>
    %c0_112 = arith.constant 0 : index
    %c2_113 = arith.constant 2 : index
    %c2_114 = arith.constant 2 : index
    %c0_115 = arith.constant 0 : index
    %71 = vector.load %arg12[%c0_112, %c2_113, %c2_114, %c0_115] : memref<1x12x12x128xf32, #tpu.memory_space<vmem>>, vector<1x8x8x128xf32>
    %72 = arith.truncf %71 : vector<1x8x8x128xf32> to vector<1x8x8x128xbf16>
    %c0_116 = arith.constant 0 : index
    %c2_117 = arith.constant 2 : index
    %c3_118 = arith.constant 3 : index
    %c0_119 = arith.constant 0 : index
    %73 = vector.load %arg12[%c0_116, %c2_117, %c3_118, %c0_119] : memref<1x12x12x128xf32, #tpu.memory_space<vmem>>, vector<1x8x8x128xf32>
    %74 = arith.truncf %73 : vector<1x8x8x128xf32> to vector<1x8x8x128xbf16>
    %c0_120 = arith.constant 0 : index
    %c2_121 = arith.constant 2 : index
    %c4_122 = arith.constant 4 : index
    %c0_123 = arith.constant 0 : index
    %75 = vector.load %arg12[%c0_120, %c2_121, %c4_122, %c0_123] : memref<1x12x12x128xf32, #tpu.memory_space<vmem>>, vector<1x8x8x128xf32>
    %76 = arith.truncf %75 : vector<1x8x8x128xf32> to vector<1x8x8x128xbf16>
    %c0_124 = arith.constant 0 : index
    %c3_125 = arith.constant 3 : index
    %c0_126 = arith.constant 0 : index
    %c0_127 = arith.constant 0 : index
    %77 = vector.load %arg12[%c0_124, %c3_125, %c0_126, %c0_127] : memref<1x12x12x128xf32, #tpu.memory_space<vmem>>, vector<1x8x8x128xf32>
    %78 = arith.truncf %77 : vector<1x8x8x128xf32> to vector<1x8x8x128xbf16>
    %c0_128 = arith.constant 0 : index
    %c3_129 = arith.constant 3 : index
    %c1_130 = arith.constant 1 : index
    %c0_131 = arith.constant 0 : index
    %79 = vector.load %arg12[%c0_128, %c3_129, %c1_130, %c0_131] : memref<1x12x12x128xf32, #tpu.memory_space<vmem>>, vector<1x8x8x128xf32>
    %80 = arith.truncf %79 : vector<1x8x8x128xf32> to vector<1x8x8x128xbf16>
    %c0_132 = arith.constant 0 : index
    %c3_133 = arith.constant 3 : index
    %c2_134 = arith.constant 2 : index
    %c0_135 = arith.constant 0 : index
    %81 = vector.load %arg12[%c0_132, %c3_133, %c2_134, %c0_135] : memref<1x12x12x128xf32, #tpu.memory_space<vmem>>, vector<1x8x8x128xf32>
    %82 = arith.truncf %81 : vector<1x8x8x128xf32> to vector<1x8x8x128xbf16>
    %c0_136 = arith.constant 0 : index
    %c3_137 = arith.constant 3 : index
    %c3_138 = arith.constant 3 : index
    %c0_139 = arith.constant 0 : index
    %83 = vector.load %arg12[%c0_136, %c3_137, %c3_138, %c0_139] : memref<1x12x12x128xf32, #tpu.memory_space<vmem>>, vector<1x8x8x128xf32>
    %84 = arith.truncf %83 : vector<1x8x8x128xf32> to vector<1x8x8x128xbf16>
    %c0_140 = arith.constant 0 : index
    %c3_141 = arith.constant 3 : index
    %c4_142 = arith.constant 4 : index
    %c0_143 = arith.constant 0 : index
    %85 = vector.load %arg12[%c0_140, %c3_141, %c4_142, %c0_143] : memref<1x12x12x128xf32, #tpu.memory_space<vmem>>, vector<1x8x8x128xf32>
    %86 = arith.truncf %85 : vector<1x8x8x128xf32> to vector<1x8x8x128xbf16>
    %c0_144 = arith.constant 0 : index
    %c4_145 = arith.constant 4 : index
    %c0_146 = arith.constant 0 : index
    %c0_147 = arith.constant 0 : index
    %87 = vector.load %arg12[%c0_144, %c4_145, %c0_146, %c0_147] : memref<1x12x12x128xf32, #tpu.memory_space<vmem>>, vector<1x8x8x128xf32>
    %88 = arith.truncf %87 : vector<1x8x8x128xf32> to vector<1x8x8x128xbf16>
    %c0_148 = arith.constant 0 : index
    %c4_149 = arith.constant 4 : index
    %c1_150 = arith.constant 1 : index
    %c0_151 = arith.constant 0 : index
    %89 = vector.load %arg12[%c0_148, %c4_149, %c1_150, %c0_151] : memref<1x12x12x128xf32, #tpu.memory_space<vmem>>, vector<1x8x8x128xf32>
    %90 = arith.truncf %89 : vector<1x8x8x128xf32> to vector<1x8x8x128xbf16>
    %c0_152 = arith.constant 0 : index
    %c4_153 = arith.constant 4 : index
    %c2_154 = arith.constant 2 : index
    %c0_155 = arith.constant 0 : index
    %91 = vector.load %arg12[%c0_152, %c4_153, %c2_154, %c0_155] : memref<1x12x12x128xf32, #tpu.memory_space<vmem>>, vector<1x8x8x128xf32>
    %92 = arith.truncf %91 : vector<1x8x8x128xf32> to vector<1x8x8x128xbf16>
    %c0_156 = arith.constant 0 : index
    %c4_157 = arith.constant 4 : index
    %c3_158 = arith.constant 3 : index
    %c0_159 = arith.constant 0 : index
    %93 = vector.load %arg12[%c0_156, %c4_157, %c3_158, %c0_159] : memref<1x12x12x128xf32, #tpu.memory_space<vmem>>, vector<1x8x8x128xf32>
    %94 = arith.truncf %93 : vector<1x8x8x128xf32> to vector<1x8x8x128xbf16>
    %c0_160 = arith.constant 0 : index
    %c4_161 = arith.constant 4 : index
    %c4_162 = arith.constant 4 : index
    %c0_163 = arith.constant 0 : index
    %95 = vector.load %arg12[%c0_160, %c4_161, %c4_162, %c0_163] : memref<1x12x12x128xf32, #tpu.memory_space<vmem>>, vector<1x8x8x128xf32>
    %96 = arith.truncf %95 : vector<1x8x8x128xf32> to vector<1x8x8x128xbf16>
    %97 = tpu.concatenate %48, %50, %52, %54, %56, %58, %60, %62, %64, %66, %68, %70, %72, %74, %76, %78 in 3 : vector<1x8x8x128xbf16>, vector<1x8x8x128xbf16>, vector<1x8x8x128xbf16>, vector<1x8x8x128xbf16>, vector<1x8x8x128xbf16>, vector<1x8x8x128xbf16>, vector<1x8x8x128xbf16>, vector<1x8x8x128xbf16>, vector<1x8x8x128xbf16>, vector<1x8x8x128xbf16>, vector<1x8x8x128xbf16>, vector<1x8x8x128xbf16>, vector<1x8x8x128xbf16>, vector<1x8x8x128xbf16>, vector<1x8x8x128xbf16>, vector<1x8x8x128xbf16> -> vector<1x8x8x2048xbf16>
    %98 = tpu.concatenate %80, %82, %84, %86, %88, %90, %92, %94, %96 in 3 : vector<1x8x8x128xbf16>, vector<1x8x8x128xbf16>, vector<1x8x8x128xbf16>, vector<1x8x8x128xbf16>, vector<1x8x8x128xbf16>, vector<1x8x8x128xbf16>, vector<1x8x8x128xbf16>, vector<1x8x8x128xbf16>, vector<1x8x8x128xbf16> -> vector<1x8x8x1152xbf16>
    %99 = tpu.concatenate %97, %98 in 3 : vector<1x8x8x2048xbf16>, vector<1x8x8x1152xbf16> -> vector<1x8x8x3200xbf16>
    %100 = vector.shape_cast %99 : vector<1x8x8x3200xbf16> to vector<64x3200xbf16>
    %c0_164 = arith.constant 0 : index
    %c0_165 = arith.constant 0 : index
    %101 = vector.load %arg6[%c0_164, %c0_165] : memref<3200x32xbf16, #tpu.memory_space<vmem>>, vector<3200x32xbf16>
    %cst_166 = arith.constant dense<0.000000e+00> : vector<64x32xf32>
    %102 = tpu.matmul %100, %101, %cst_166 {dimension_numbers = #tpu.dot_dimension_numbers<[1], [0], [0], [1], [0, 0, 1, 1], [], []>} : vector<64x3200xbf16>, vector<3200x32xbf16>, vector<64x32xf32> -> vector<64x32xf32>
    %c0_167 = arith.constant 0 : index
    %c0_168 = arith.constant 0 : index
    %103 = vector.load %arg7[%c0_167, %c0_168] : memref<1x32xf32, #tpu.memory_space<vmem>>, vector<1x32xf32>
    %104 = vector.broadcast %103 : vector<1x32xf32> to vector<64x32xf32>
    %105 = arith.addf %102, %104 : vector<64x32xf32>
    %cst_169 = arith.constant 0.000000e+00 : f32
    %106 = vector.broadcast %cst_169 : f32 to vector<64x32xf32>
    %107 = arith.maximumf %105, %106 : vector<64x32xf32>
    %cst_170 = arith.constant 0.000000e+00 : f32
    %108 = vector.broadcast %cst_170 : f32 to vector<1x10x10x192xf32>
    %c0_171 = arith.constant 0 : index
    %c0_172 = arith.constant 0 : index
    %c0_173 = arith.constant 0 : index
    %c0_174 = arith.constant 0 : index
    %109 = vector.load %arg13[%c0_171, %c0_172, %c0_173, %c0_174] : memref<1x10x10x192xf32, #tpu.memory_space<vmem>>, vector<1x10x10x192xf32>
    tpu.vector_store %arg13[%c0_171, %c0_172, %c0_173, %c0_174], %108 {strides = array<i32>} : memref<1x10x10x192xf32, #tpu.memory_space<vmem>>, vector<1x10x10x192xf32>,
    %110 = arith.extf %0 : vector<1x8x8x192xbf16> to vector<1x8x8x192xf32>
    %c0_175 = arith.constant 0 : index
    %c1_176 = arith.constant 1 : index
    %c1_177 = arith.constant 1 : index
    %c0_178 = arith.constant 0 : index
    %111 = vector.load %arg13[%c0_175, %c1_176, %c1_177, %c0_178] : memref<1x10x10x192xf32, #tpu.memory_space<vmem>>, vector<1x8x8x192xf32>
    tpu.vector_store %arg13[%c0_175, %c1_176, %c1_177, %c0_178], %110 {strides = array<i32>} : memref<1x10x10x192xf32, #tpu.memory_space<vmem>>, vector<1x8x8x192xf32>,
    %c0_179 = arith.constant 0 : index
    %c0_180 = arith.constant 0 : index
    %c0_181 = arith.constant 0 : index
    %c0_182 = arith.constant 0 : index
    %112 = vector.load %arg13[%c0_179, %c0_180, %c0_181, %c0_182] : memref<1x10x10x192xf32, #tpu.memory_space<vmem>>, vector<1x8x8x192xf32>
    %c0_183 = arith.constant 0 : index
    %c0_184 = arith.constant 0 : index
    %c1_185 = arith.constant 1 : index
    %c0_186 = arith.constant 0 : index
    %113 = vector.load %arg13[%c0_183, %c0_184, %c1_185, %c0_186] : memref<1x10x10x192xf32, #tpu.memory_space<vmem>>, vector<1x8x8x192xf32>
    %114 = arith.maximumf %112, %113 : vector<1x8x8x192xf32>
    %c0_187 = arith.constant 0 : index
    %c0_188 = arith.constant 0 : index
    %c2_189 = arith.constant 2 : index
    %c0_190 = arith.constant 0 : index
    %115 = vector.load %arg13[%c0_187, %c0_188, %c2_189, %c0_190] : memref<1x10x10x192xf32, #tpu.memory_space<vmem>>, vector<1x8x8x192xf32>
    %116 = arith.maximumf %114, %115 : vector<1x8x8x192xf32>
    %c0_191 = arith.constant 0 : index
    %c1_192 = arith.constant 1 : index
    %c0_193 = arith.constant 0 : index
    %c0_194 = arith.constant 0 : index
    %117 = vector.load %arg13[%c0_191, %c1_192, %c0_193, %c0_194] : memref<1x10x10x192xf32, #tpu.memory_space<vmem>>, vector<1x8x8x192xf32>
    %118 = arith.maximumf %116, %117 : vector<1x8x8x192xf32>
    %c0_195 = arith.constant 0 : index
    %c1_196 = arith.constant 1 : index
    %c1_197 = arith.constant 1 : index
    %c0_198 = arith.constant 0 : index
    %119 = vector.load %arg13[%c0_195, %c1_196, %c1_197, %c0_198] : memref<1x10x10x192xf32, #tpu.memory_space<vmem>>, vector<1x8x8x192xf32>
    %120 = arith.maximumf %118, %119 : vector<1x8x8x192xf32>
    %c0_199 = arith.constant 0 : index
    %c1_200 = arith.constant 1 : index
    %c2_201 = arith.constant 2 : index
    %c0_202 = arith.constant 0 : index
    %121 = vector.load %arg13[%c0_199, %c1_200, %c2_201, %c0_202] : memref<1x10x10x192xf32, #tpu.memory_space<vmem>>, vector<1x8x8x192xf32>
    %122 = arith.maximumf %120, %121 : vector<1x8x8x192xf32>
    %c0_203 = arith.constant 0 : index
    %c2_204 = arith.constant 2 : index
    %c0_205 = arith.constant 0 : index
    %c0_206 = arith.constant 0 : index
    %123 = vector.load %arg13[%c0_203, %c2_204, %c0_205, %c0_206] : memref<1x10x10x192xf32, #tpu.memory_space<vmem>>, vector<1x8x8x192xf32>
    %124 = arith.maximumf %122, %123 : vector<1x8x8x192xf32>
    %c0_207 = arith.constant 0 : index
    %c2_208 = arith.constant 2 : index
    %c1_209 = arith.constant 1 : index
    %c0_210 = arith.constant 0 : index
    %125 = vector.load %arg13[%c0_207, %c2_208, %c1_209, %c0_210] : memref<1x10x10x192xf32, #tpu.memory_space<vmem>>, vector<1x8x8x192xf32>
    %126 = arith.maximumf %124, %125 : vector<1x8x8x192xf32>
    %c0_211 = arith.constant 0 : index
    %c2_212 = arith.constant 2 : index
    %c2_213 = arith.constant 2 : index
    %c0_214 = arith.constant 0 : index
    %127 = vector.load %arg13[%c0_211, %c2_212, %c2_213, %c0_214] : memref<1x10x10x192xf32, #tpu.memory_space<vmem>>, vector<1x8x8x192xf32>
    %128 = arith.maximumf %126, %127 : vector<1x8x8x192xf32>
    %cst_215 = arith.constant 0.000000e+00 : f32
    %129 = vector.broadcast %cst_215 : f32 to vector<1x8x8x192xf32>
    %130 = arith.maximumf %128, %129 : vector<1x8x8x192xf32>
    %131 = vector.shape_cast %130 : vector<1x8x8x192xf32> to vector<64x192xf32>
    %132 = arith.truncf %131 : vector<64x192xf32> to vector<64x192xbf16>
    %c0_216 = arith.constant 0 : index
    %c0_217 = arith.constant 0 : index
    %133 = vector.load %arg8[%c0_216, %c0_217] : memref<192x32xbf16, #tpu.memory_space<vmem>>, vector<192x32xbf16>
    %cst_218 = arith.constant dense<0.000000e+00> : vector<64x32xf32>
    %134 = tpu.matmul %132, %133, %cst_218 {dimension_numbers = #tpu.dot_dimension_numbers<[1], [0], [0], [1], [0, 0, 1, 1], [], []>} : vector<64x192xbf16>, vector<192x32xbf16>, vector<64x32xf32> -> vector<64x32xf32>
    %c0_219 = arith.constant 0 : index
    %c0_220 = arith.constant 0 : index
    %135 = vector.load %arg9[%c0_219, %c0_220] : memref<1x32xf32, #tpu.memory_space<vmem>>, vector<1x32xf32>
    %136 = vector.broadcast %135 : vector<1x32xf32> to vector<64x32xf32>
    %137 = arith.addf %134, %136 : vector<64x32xf32>
    %cst_221 = arith.constant 0.000000e+00 : f32
    %138 = vector.broadcast %cst_221 : f32 to vector<64x32xf32>
    %139 = arith.maximumf %137, %138 : vector<64x32xf32>
    %140 = vector.shape_cast %11 : vector<64x64xf32> to vector<1x8x8x64xf32>
    %c0_222 = arith.constant 0 : index
    %c0_223 = arith.constant 0 : index
    %c0_224 = arith.constant 0 : index
    %c0_225 = arith.constant 0 : index
    %141 = vector.load %arg10[%c0_222, %c0_223, %c0_224, %c0_225] : memref<1x8x8x256xf32, #tpu.memory_space<vmem>>, vector<1x8x8x64xf32>
    tpu.vector_store %arg10[%c0_222, %c0_223, %c0_224, %c0_225], %140 {strides = array<i32>} : memref<1x8x8x256xf32, #tpu.memory_space<vmem>>, vector<1x8x8x64xf32>,
    %142 = vector.shape_cast %42 : vector<64x128xf32> to vector<1x8x8x128xf32>
    %c0_226 = arith.constant 0 : index
    %c0_227 = arith.constant 0 : index
    %c0_228 = arith.constant 0 : index
    %c64 = arith.constant 64 : index
    %143 = vector.load %arg10[%c0_226, %c0_227, %c0_228, %c64] : memref<1x8x8x256xf32, #tpu.memory_space<vmem>>, vector<1x8x8x128xf32>
    tpu.vector_store %arg10[%c0_226, %c0_227, %c0_228, %c64], %142 {strides = array<i32>} : memref<1x8x8x256xf32, #tpu.memory_space<vmem>>, vector<1x8x8x128xf32>,
    %144 = vector.shape_cast %107 : vector<64x32xf32> to vector<1x8x8x32xf32>
    %c0_229 = arith.constant 0 : index
    %c0_230 = arith.constant 0 : index
    %c0_231 = arith.constant 0 : index
    %c192 = arith.constant 192 : index
    %145 = vector.load %arg10[%c0_229, %c0_230, %c0_231, %c192] : memref<1x8x8x256xf32, #tpu.memory_space<vmem>>, vector<1x8x8x32xf32>
    tpu.vector_store %arg10[%c0_229, %c0_230, %c0_231, %c192], %144 {strides = array<i32>} : memref<1x8x8x256xf32, #tpu.memory_space<vmem>>, vector<1x8x8x32xf32>,
    %146 = vector.shape_cast %139 : vector<64x32xf32> to vector<1x8x8x32xf32>
    %c0_232 = arith.constant 0 : index
    %c0_233 = arith.constant 0 : index
    %c0_234 = arith.constant 0 : index
    %c224 = arith.constant 224 : index
    %147 = vector.load %arg10[%c0_232, %c0_233, %c0_234, %c224] : memref<1x8x8x256xf32, #tpu.memory_space<vmem>>, vector<1x8x8x32xf32>
    tpu.vector_store %arg10[%c0_232, %c0_233, %c0_234, %c224], %146 {strides = array<i32>} : memref<1x8x8x256xf32, #tpu.memory_space<vmem>>, vector<1x8x8x32xf32>,
    return
  }
  func.func @transform_0(%arg0: i32) -> (i32, i32, i32, i32) {
    %c0_i32 = arith.constant 0 : i32
    %c0_i32_0 = arith.constant 0 : i32
    %c0_i32_1 = arith.constant 0 : i32
    %c0_i32_2 = arith.constant 0 : i32
    return %arg0, %c0_i32, %c0_i32_0, %c0_i32_1 : i32, i32, i32, i32
  }
  func.func @transform_1(%arg0: i32) -> (i32, i32) {
    %c0_i32 = arith.constant 0 : i32
    %c0_i32_0 = arith.constant 0 : i32
    %c0_i32_1 = arith.constant 0 : i32
    return %c0_i32, %c0_i32_0 : i32, i32
  }
  func.func @transform_2(%arg0: i32) -> (i32, i32) {
    %c0_i32 = arith.constant 0 : i32
    %c0_i32_0 = arith.constant 0 : i32
    %c0_i32_1 = arith.constant 0 : i32
    return %c0_i32, %c0_i32_0 : i32, i32
  }
  func.func @transform_3(%arg0: i32) -> (i32, i32) {
    %c0_i32 = arith.constant 0 : i32
    %c0_i32_0 = arith.constant 0 : i32
    %c0_i32_1 = arith.constant 0 : i32
    return %c0_i32, %c0_i32_0 : i32, i32
  }
  func.func @transform_4(%arg0: i32) -> (i32, i32) {
    %c0_i32 = arith.constant 0 : i32
    %c0_i32_0 = arith.constant 0 : i32
    %c0_i32_1 = arith.constant 0 : i32
    return %c0_i32, %c0_i32_0 : i32, i32
  }
  func.func @transform_5(%arg0: i32) -> (i32, i32) {
    %c0_i32 = arith.constant 0 : i32
    %c0_i32_0 = arith.constant 0 : i32
    %c0_i32_1 = arith.constant 0 : i32
    return %c0_i32, %c0_i32_0 : i32, i32
  }
  func.func @transform_6(%arg0: i32) -> (i32, i32) {
    %c0_i32 = arith.constant 0 : i32
    %c0_i32_0 = arith.constant 0 : i32
    %c0_i32_1 = arith.constant 0 : i32
    return %c0_i32, %c0_i32_0 : i32, i32
  }
  func.func @transform_7(%arg0: i32) -> (i32, i32) {
    %c0_i32 = arith.constant 0 : i32
    %c0_i32_0 = arith.constant 0 : i32
    %c0_i32_1 = arith.constant 0 : i32
    return %c0_i32, %c0_i32_0 : i32, i32
  }
  func.func @transform_8(%arg0: i32) -> (i32, i32) {
    %c0_i32 = arith.constant 0 : i32
    %c0_i32_0 = arith.constant 0 : i32
    %c0_i32_1 = arith.constant 0 : i32
    return %c0_i32, %c0_i32_0 : i32, i32
  }
  func.func @transform_9(%arg0: i32) -> (i32, i32, i32, i32) {
    %c0_i32 = arith.constant 0 : i32
    %c0_i32_0 = arith.constant 0 : i32
    %c0_i32_1 = arith.constant 0 : i32
    %c0_i32_2 = arith.constant 0 : i32
    return %arg0, %c0_i32, %c0_i32_0, %c0_i32_1 : i32, i32, i32, i32
  }
}

</mosaic_0001>

<llo_original>
// kernel: _inception_forward_fn.1
$region0: #{_inception_forward_fn.1}
  #allocation0 [shape = 'u32[]', space=smem, size = 0x4, offset = 0x4, fixed_abs, tag = 'smem constant byte address 0x4 - core index']
  #allocation1 [shape = 'u32[144,128]{1,0:T(1,128)}', space=vmem, size = 0x12000, scoped, tag = 'internal scratch']
  #allocation2 [shape = 'f32[1,10,10,128]{3,2,1,0:T(8,128)}', space=vmem, size = 0x14000, scoped, tag = 'scratch operand']
  #allocation3 [shape = 'f32[1,12,12,128]{3,2,1,0:T(8,128)}', space=vmem, size = 0x18000, scoped, tag = 'scratch operand']
  #allocation4 [shape = 'f32[1,10,10,192]{3,2,1,0:T(8,128)}', space=vmem, size = 0x28000, scoped, tag = 'scratch operand']
  %s0 = inlined_call_operand.vmem [shape: bf16[2,8,8,192], index: 0, kind: input, shape index: {}]
  %s1 = inlined_call_operand.vmem [shape: bf16[192,320], index: 1, kind: input, shape index: {}]
  %s2 = inlined_call_operand.vmem [shape: f32[1,320], index: 2, kind: input, shape index: {}]
  %s3 = inlined_call_operand.vmem [shape: bf16[1152,128], index: 3, kind: input, shape index: {}]
  %s4 = inlined_call_operand.vmem [shape: f32[1,128], index: 4, kind: input, shape index: {}]
  %s5 = inlined_call_operand.vmem [shape: bf16[3200,32], index: 5, kind: input, shape index: {}]
  %s6 = inlined_call_operand.vmem [shape: f32[1,32], index: 6, kind: input, shape index: {}]
  %s7 = inlined_call_operand.vmem [shape: bf16[192,32], index: 7, kind: input, shape index: {}]
  %s8 = inlined_call_operand.vmem [shape: f32[1,32], index: 8, kind: input, shape index: {}]
  %s9 = inlined_call_operand.hbm [shape: f32[2,8,8,256], index: 9, kind: output, shape index: {}]
  %s10 = sld [smem:[#allocation0]]
  $region69: #{_inception_forward_fn.1} parent=0
    _
  %s12 = ssub.s32 1, %s10
  %s13 = scalar_select 0, %s12, %s10
  $region1: #{_inception_forward_fn.1} parent=0
    #allocation5 [shape = 'u8[131072]{0}', space=vmem, size = 0x20000, scoped, tag = 'output window, operand 0']
    #allocation6 [shape = 's32[2]{0}', space=sflag, size = 0x8, scoped, tag = 'scoped memory for _inception_forward_fn.1']
    %14 = vsyncpa [#allocation6], 0
    %s15 = scalar_lea.sflag [#allocation6], 1
    %16 = vsyncpa %s15, 0
    loop: start=0, step=1, limit=4
    $region2: #{_inception_forward_fn.1} parent=1 // loop_pre_header
      _
    $region3: #{_inception_forward_fn.1} parent=1 // loop_header
      %s18 = sphi 0, %s22
      %p19 = scmp.ge.s32.totalorder %s18, 4
      %s28 = sphi 0, %s30
      %s31 = sphi 0, %s28
      %s32 = sphi 0, %s31
      %s48 = sphi 0, %s32
      %s52 = sphi 0, %s52
      %s54 = sphi 0, %s52
      %s55 = sphi 0, %s54
      %s69 = sphi 0, %s55
      %s73 = sphi 0, %s73
      %s75 = sphi 0, %s73
      %s76 = sphi 0, %s75
      %s90 = sphi 0, %s76
      %s94 = sphi 0, %s94
      %s96 = sphi 0, %s94
      %s97 = sphi 0, %s96
      %s111 = sphi 0, %s97
      %s115 = sphi 0, %s115
      %s117 = sphi 0, %s115
      %s118 = sphi 0, %s117
      %s132 = sphi 0, %s118
      %s136 = sphi 0, %s136
      %s138 = sphi 0, %s136
      %s139 = sphi 0, %s138
      %s153 = sphi 0, %s139
      %s157 = sphi 0, %s157
      %s159 = sphi 0, %s157
      %s160 = sphi 0, %s159
      %s174 = sphi 0, %s160
      %s178 = sphi 0, %s178
      %s180 = sphi 0, %s178
      %s181 = sphi 0, %s180
      %s195 = sphi 0, %s181
      %s199 = sphi 0, %s199
      %s201 = sphi 0, %s199
      %s202 = sphi 0, %s201
      %s216 = sphi 0, %s202
      %s222 = sphi 0, %s224
      %s225 = sphi 0, %s222
      %s226 = sphi 0, %s225
      %s242 = sphi 0, %s226
    $region4: #{_inception_forward_fn.1} parent=1 // loop_header_branch
      %21 = sbr.rel (%p19) target = $region8
    $region5: #{_inception_forward_fn.1} parent=1 // loop_body
      %s23 = ssub.s32 %s18, 1
      %s24 = ssub.s32 %s18, 2
      %s25 = sadd.s32 %s18, 1
      %s26 = ssub.s32 %s18, %s25
      %p27 = scmp.eq.s32.totalorder %s26, 0
      %s29 = sadd.s32 %s28, 1
      %s30 = scalar_select %p27, %s28, %s29
      %p33 = pneg %p27
      %p34 = scmp.eq.s32.totalorder %s18, 1
      %p35 = por %p33, %p34
      %p36 = scmp.ne.s32.totalorder %s28, %s31
      %p37 = scmp.eq.s32.totalorder %s18, 0
      %p38 = por %p36, %p37
      %p39 = scmp.ne.s32.totalorder %s28, %s31
      %p40 = scmp.eq.s32.totalorder %s23, 1
      %p41 = por %p39, %p40
      %p42 = scmp.ne.s32.totalorder %s31, %s32
      %p43 = scmp.eq.s32.totalorder %s23, 0
      %p44 = por %p42, %p43
      %p45 = scmp.ne.s32.totalorder %s31, %s32
      %p46 = scmp.eq.s32.totalorder %s24, 1
      %p47 = por %p45, %p46
      %p49 = scmp.ne.s32.totalorder %s32, %s48
      %p50 = scmp.eq.s32.totalorder %s24, 0
      %p51 = por %p49, %p50
      %s53 = sadd.s32 %s52, 1
      %p56 = scmp.eq.s32.totalorder %s18, 1
      %p57 = scmp.ne.s32.totalorder %s52, %s54
      %p58 = scmp.eq.s32.totalorder %s18, 0
      %p59 = por %p57, %p58
      %p60 = scmp.ne.s32.totalorder %s52, %s54
      %p61 = scmp.eq.s32.totalorder %s23, 1
      %p62 = por %p60, %p61
      %p63 = scmp.ne.s32.totalorder %s54, %s55
      %p64 = scmp.eq.s32.totalorder %s23, 0
      %p65 = por %p63, %p64
      %p66 = scmp.ne.s32.totalorder %s54, %s55
      %p67 = scmp.eq.s32.totalorder %s24, 1
      %p68 = por %p66, %p67
      %p70 = scmp.ne.s32.totalorder %s55, %s69
      %p71 = scmp.eq.s32.totalorder %s24, 0
      %p72 = por %p70, %p71
      %s74 = sadd.s32 %s73, 1
      %p77 = scmp.eq.s32.totalorder %s18, 1
      %p78 = scmp.ne.s32.totalorder %s73, %s75
      %p79 = scmp.eq.s32.totalorder %s18, 0
      %p80 = por %p78, %p79
      %p81 = scmp.ne.s32.totalorder %s73, %s75
      %p82 = scmp.eq.s32.totalorder %s23, 1
      %p83 = por %p81, %p82
      %p84 = scmp.ne.s32.totalorder %s75, %s76
      %p85 = scmp.eq.s32.totalorder %s23, 0
      %p86 = por %p84, %p85
      %p87 = scmp.ne.s32.totalorder %s75, %s76
      %p88 = scmp.eq.s32.totalorder %s24, 1
      %p89 = por %p87, %p88
      %p91 = scmp.ne.s32.totalorder %s76, %s90
      %p92 = scmp.eq.s32.totalorder %s24, 0
      %p93 = por %p91, %p92
      %s95 = sadd.s32 %s94, 1
      %p98 = scmp.eq.s32.totalorder %s18, 1
      %p99 = scmp.ne.s32.totalorder %s94, %s96
      %p100 = scmp.eq.s32.totalorder %s18, 0
      %p101 = por %p99, %p100
      %p102 = scmp.ne.s32.totalorder %s94, %s96
      %p103 = scmp.eq.s32.totalorder %s23, 1
      %p104 = por %p102, %p103
      %p105 = scmp.ne.s32.totalorder %s96, %s97
      %p106 = scmp.eq.s32.totalorder %s23, 0
      %p107 = por %p105, %p106
      %p108 = scmp.ne.s32.totalorder %s96, %s97
      %p109 = scmp.eq.s32.totalorder %s24, 1
      %p110 = por %p108, %p109
      %p112 = scmp.ne.s32.totalorder %s97, %s111
      %p113 = scmp.eq.s32.totalorder %s24, 0
      %p114 = por %p112, %p113
      %s116 = sadd.s32 %s115, 1
      %p119 = scmp.eq.s32.totalorder %s18, 1
      %p120 = scmp.ne.s32.totalorder %s115, %s117
      %p121 = scmp.eq.s32.totalorder %s18, 0
      %p122 = por %p120, %p121
      %p123 = scmp.ne.s32.totalorder %s115, %s117
      %p124 = scmp.eq.s32.totalorder %s23, 1
      %p125 = por %p123, %p124
      %p126 = scmp.ne.s32.totalorder %s117, %s118
      %p127 = scmp.eq.s32.totalorder %s23, 0
      %p128 = por %p126, %p127
      %p129 = scmp.ne.s32.totalorder %s117, %s118
      %p130 = scmp.eq.s32.totalorder %s24, 1
      %p131 = por %p129, %p130
      %p133 = scmp.ne.s32.totalorder %s118, %s132
      %p134 = scmp.eq.s32.totalorder %s24, 0
      %p135 = por %p133, %p134
      %s137 = sadd.s32 %s136, 1
      %p140 = scmp.eq.s32.totalorder %s18, 1
      %p141 = scmp.ne.s32.totalorder %s136, %s138
      %p142 = scmp.eq.s32.totalorder %s18, 0
      %p143 = por %p141, %p142
      %p144 = scmp.ne.s32.totalorder %s136, %s138
      %p145 = scmp.eq.s32.totalorder %s23, 1
      %p146 = por %p144, %p145
      %p147 = scmp.ne.s32.totalorder %s138, %s139
      %p148 = scmp.eq.s32.totalorder %s23, 0
      %p149 = por %p147, %p148
      %p150 = scmp.ne.s32.totalorder %s138, %s139
      %p151 = scmp.eq.s32.totalorder %s24, 1
      %p152 = por %p150, %p151
      %p154 = scmp.ne.s32.totalorder %s139, %s153
      %p155 = scmp.eq.s32.totalorder %s24, 0
      %p156 = por %p154, %p155
      %s158 = sadd.s32 %s157, 1
      %p161 = scmp.eq.s32.totalorder %s18, 1
      %p162 = scmp.ne.s32.totalorder %s157, %s159
      %p163 = scmp.eq.s32.totalorder %s18, 0
      %p164 = por %p162, %p163
      %p165 = scmp.ne.s32.totalorder %s157, %s159
      %p166 = scmp.eq.s32.totalorder %s23, 1
      %p167 = por %p165, %p166
      %p168 = scmp.ne.s32.totalorder %s159, %s160
      %p169 = scmp.eq.s32.totalorder %s23, 0
      %p170 = por %p168, %p169
      %p171 = scmp.ne.s32.totalorder %s159, %s160
      %p172 = scmp.eq.s32.totalorder %s24, 1
      %p173 = por %p171, %p172
      %p175 = scmp.ne.s32.totalorder %s160, %s174
      %p176 = scmp.eq.s32.totalorder %s24, 0
      %p177 = por %p175, %p176
      %s179 = sadd.s32 %s178, 1
      %p182 = scmp.eq.s32.totalorder %s18, 1
      %p183 = scmp.ne.s32.totalorder %s178, %s180
      %p184 = scmp.eq.s32.totalorder %s18, 0
      %p185 = por %p183, %p184
      %p186 = scmp.ne.s32.totalorder %s178, %s180
      %p187 = scmp.eq.s32.totalorder %s23, 1
      %p188 = por %p186, %p187
      %p189 = scmp.ne.s32.totalorder %s180, %s181
      %p190 = scmp.eq.s32.totalorder %s23, 0
      %p191 = por %p189, %p190
      %p192 = scmp.ne.s32.totalorder %s180, %s181
      %p193 = scmp.eq.s32.totalorder %s24, 1
      %p194 = por %p192, %p193
      %p196 = scmp.ne.s32.totalorder %s181, %s195
      %p197 = scmp.eq.s32.totalorder %s24, 0
      %p198 = por %p196, %p197
      %s200 = sadd.s32 %s199, 1
      %p203 = scmp.eq.s32.totalorder %s18, 1
      %p204 = scmp.ne.s32.totalorder %s199, %s201
      %p205 = scmp.eq.s32.totalorder %s18, 0
      %p206 = por %p204, %p205
      %p207 = scmp.ne.s32.totalorder %s199, %s201
      %p208 = scmp.eq.s32.totalorder %s23, 1
      %p209 = por %p207, %p208
      %p210 = scmp.ne.s32.totalorder %s201, %s202
      %p211 = scmp.eq.s32.totalorder %s23, 0
      %p212 = por %p210, %p211
      %p213 = scmp.ne.s32.totalorder %s201, %s202
      %p214 = scmp.eq.s32.totalorder %s24, 1
      %p215 = por %p213, %p214
      %p217 = scmp.ne.s32.totalorder %s202, %s216
      %p218 = scmp.eq.s32.totalorder %s24, 0
      %p219 = por %p217, %p218
      %s220 = ssub.s32 %s18, %s25
      %p221 = scmp.eq.s32.totalorder %s220, 0
      %s223 = sadd.s32 %s222, 1
      %s224 = scalar_select %p221, %s222, %s223
      %p227 = pneg %p221
      %p228 = scmp.eq.s32.totalorder %s18, 1
      %p229 = por %p227, %p228
      %p230 = scmp.ne.s32.totalorder %s222, %s225
      %p231 = scmp.eq.s32.totalorder %s18, 0
      %p232 = por %p230, %p231
      %p233 = scmp.ne.s32.totalorder %s222, %s225
      %p234 = scmp.eq.s32.totalorder %s23, 1
      %p235 = por %p233, %p234
      %p236 = scmp.ne.s32.totalorder %s225, %s226
      %p237 = scmp.eq.s32.totalorder %s23, 0
      %p238 = por %p236, %p237
      %p239 = scmp.ne.s32.totalorder %s225, %s226
      %p240 = scmp.eq.s32.totalorder %s24, 1
      %p241 = por %p239, %p240
      %p243 = scmp.ne.s32.totalorder %s226, %s242
      %p244 = scmp.eq.s32.totalorder %s24, 0
      %p245 = por %p243, %p244
      %p246 = scmp.le.s32.totalorder 1, %s18
      %p247 = scmp.lt.s32.totalorder %s18, 3
      %p248 = pnand %p246, %p247
      %p249 = pneg %p248
      // Predicated region
      $region9: #{_inception_forward_fn.1} parent=5 // pred_check
        _
      $region10: #{_inception_forward_fn.1} parent=5 // pred_check_branch
        %251 = sbr.rel (%p248) target = $region12
      $region11: #{_inception_forward_fn.1} parent=5 // pred_region
        %s252 = ssub.s32 %s18, 1
        // Predicated region
        $region13: #{_inception_forward_fn.1} parent=11 // pred_check
          %p253 = pneg %p65
        $region14: #{_inception_forward_fn.1} parent=11 // pred_check_branch
          %255 = sbr.rel (%p253) target = $region16
        $region15: #{_inception_forward_fn.1} parent=11 // pred_region
          _
        $region16: #{_inception_forward_fn.1} parent=11 // pred_fallthru
          _
        // Predicated region
        $region17: #{_inception_forward_fn.1} parent=11 // pred_check
          %p256 = pneg %p86
        $region18: #{_inception_forward_fn.1} parent=11 // pred_check_branch
          %258 = sbr.rel (%p256) target = $region20
        $region19: #{_inception_forward_fn.1} parent=11 // pred_region
          _
        $region20: #{_inception_forward_fn.1} parent=11 // pred_fallthru
          _
        // Predicated region
        $region21: #{_inception_forward_fn.1} parent=11 // pred_check
          %p259 = pneg %p107
        $region22: #{_inception_forward_fn.1} parent=11 // pred_check_branch
          %261 = sbr.rel (%p259) target = $region24
        $region23: #{_inception_forward_fn.1} parent=11 // pred_region
          _
        $region24: #{_inception_forward_fn.1} parent=11 // pred_fallthru
          _
        // Predicated region
        $region25: #{_inception_forward_fn.1} parent=11 // pred_check
          %p262 = pneg %p128
        $region26: #{_inception_forward_fn.1} parent=11 // pred_check_branch
          %264 = sbr.rel (%p262) target = $region28
        $region27: #{_inception_forward_fn.1} parent=11 // pred_region
          _
        $region28: #{_inception_forward_fn.1} parent=11 // pred_fallthru
          _
        // Predicated region
        $region29: #{_inception_forward_fn.1} parent=11 // pred_check
          %p265 = pneg %p149
        $region30: #{_inception_forward_fn.1} parent=11 // pred_check_branch
          %267 = sbr.rel (%p265) target = $region32
        $region31: #{_inception_forward_fn.1} parent=11 // pred_region
          _
        $region32: #{_inception_forward_fn.1} parent=11 // pred_fallthru
          _
        // Predicated region
        $region33: #{_inception_forward_fn.1} parent=11 // pred_check
          %p268 = pneg %p170
        $region34: #{_inception_forward_fn.1} parent=11 // pred_check_branch
          %270 = sbr.rel (%p268) target = $region36
        $region35: #{_inception_forward_fn.1} parent=11 // pred_region
          _
        $region36: #{_inception_forward_fn.1} parent=11 // pred_fallthru
          _
        // Predicated region
        $region37: #{_inception_forward_fn.1} parent=11 // pred_check
          %p271 = pneg %p191
        $region38: #{_inception_forward_fn.1} parent=11 // pred_check_branch
          %273 = sbr.rel (%p271) target = $region40
        $region39: #{_inception_forward_fn.1} parent=11 // pred_region
          _
        $region40: #{_inception_forward_fn.1} parent=11 // pred_fallthru
          _
        // Predicated region
        $region41: #{_inception_forward_fn.1} parent=11 // pred_check
          %p274 = pneg %p212
        $region42: #{_inception_forward_fn.1} parent=11 // pred_check_branch
          %276 = sbr.rel (%p274) target = $region44
        $region43: #{_inception_forward_fn.1} parent=11 // pred_region
          _
        $region44: #{_inception_forward_fn.1} parent=11 // pred_fallthru
          _
      $region12: #{_inception_forward_fn.1} parent=5 // pred_fallthru
        _
      %p277 = scmp.lt.s32.totalorder %s18, 2
      // Predicated region
      $region45: #{_inception_forward_fn.1} parent=5 // pred_check
        %p278 = pneg %p277
      $region46: #{_inception_forward_fn.1} parent=5 // pred_check_branch
        %280 = sbr.rel (%p278) target = $region48
      $region47: #{_inception_forward_fn.1} parent=5 // pred_region
        // Predicated region
        $region49: #{_inception_forward_fn.1} parent=47 // pred_check
          %p281 = pneg %p38
        $region50: #{_inception_forward_fn.1} parent=47 // pred_check_branch
          %283 = sbr.rel (%p281) target = $region52
        $region51: #{_inception_forward_fn.1} parent=47 // pred_region
          %p284 = scmp.lt.s32.totalorder %s18, 1
          %s285 = scalar_select %p284, %s18, 1
          %s286 = smul.addr %s285, 16
          %s287 = smul.addr %s286, 4
          %s288 = scalar_lea.vmem %s0, %s287
        $region52: #{_inception_forward_fn.1} parent=47 // pred_fallthru
          _
      $region48: #{_inception_forward_fn.1} parent=5 // pred_fallthru
        _
      %p289 = scmp.le.s32.totalorder 1, %s18
      %p290 = scmp.lt.s32.totalorder %s18, 3
      %p291 = pnand %p289, %p290
      %p292 = pneg %p291
      // Predicated region
      $region53: #{_inception_forward_fn.1} parent=5 // pred_check
        _
      $region54: #{_inception_forward_fn.1} parent=5 // pred_check_branch
        %294 = sbr.rel (%p291) target = $region56
      $region55: #{_inception_forward_fn.1} parent=5 // pred_region
        %s295 = ssub.s32 %s18, 1
        %p296 = scmp.lt.s32.totalorder %s23, 1
        %s297 = scalar_select %p296, %s23, 1
        %s298 = smul.addr %s297, 16
        %s299 = smul.addr %s298, 4
        %s300 = scalar_lea.vmem %s0, %s299
        %p301 = pneg %p44
        %p302 = pneg %p41
        %p303 = pneg %p65
        %p304 = pneg %p62
        %p305 = pneg %p86
        %p306 = pneg %p83
        %p307 = pneg %p107
        %p308 = pneg %p104
        %p309 = pneg %p128
        %p310 = pneg %p125
        %p311 = pneg %p149
        %p312 = pneg %p146
        %p313 = pneg %p170
        %p314 = pneg %p167
        %p315 = pneg %p191
        %p316 = pneg %p188
        %p317 = pneg %p212
        %p318 = pneg %p209
        %p319 = pneg %p238
        %p320 = pneg %p235
        %s321 = sand.u32 %s225, 1
        %s322 = scalar_lea.sflag [#allocation6], %s321
        %s323 = sand.u32 %s225, 1
        %s324 = smul.addr %s323, 128
        %s325 = scalar_lea.vmem [#allocation5], %s324
        %p326 = scmp.lt.s32.totalorder %s23, 1
        %s327 = scalar_select %p326, %s23, 1
        %s328 = smul.addr %s327, 16
        %s329 = smul.addr %s328, 4
        %s330 = scalar_lea.vmem %s0, %s329
        %v332 = vld [vmem:[%s330] sm:$0xff]
        %v333 = vld [vmem:[%s330 + $0x8] sm:$0xff]
        %v334 = vld [vmem:[%s330 + $0x10] sm:$0xff]
        %v335 = vld [vmem:[%s330 + $0x18] sm:$0xff]
        %v336 = vld [vmem:[%s330 + $0x20] sm:$0xff]
        %v337 = vld [vmem:[%s330 + $0x28] sm:$0xff]
        %v338 = vld [vmem:[%s330 + $0x30] sm:$0xff]
        %v339 = vld [vmem:[%s330 + $0x38] sm:$0xff]
        %v340 = vld [vmem:[%s1] sm:$0xff]
        %v341 = vld [vmem:[%s1 + $0x8] sm:$0xf]
        %v342 = vld [vmem:[%s1 + $0xc] sm:$0xff]
        %v343 = vld [vmem:[%s1 + $0x14] sm:$0xf]
        %v344 = vld [vmem:[%s1 + $0x18] sm:$0xff]
        %v345 = vld [vmem:[%s1 + $0x20] sm:$0xf]
        %v346 = vld [vmem:[%s1 + $0x24] sm:$0xff]
        %v347 = vld [vmem:[%s1 + $0x2c] sm:$0xf]
        %v348 = vld [vmem:[%s1 + $0x30] sm:$0xff]
        %v349 = vld [vmem:[%s1 + $0x38] sm:$0xf]
        %v350 = vld [vmem:[%s1 + $0x3c] sm:$0xff]
        %v351 = vld [vmem:[%s1 + $0x44] sm:$0xf]
        %v352 = vld [vmem:[%s1 + $0x48] sm:$0xff]
        %v353 = vld [vmem:[%s1 + $0x50] sm:$0xf]
        %v354 = vld [vmem:[%s1 + $0x54] sm:$0xff]
        %v355 = vld [vmem:[%s1 + $0x5c] sm:$0xf]
        %v356 = vld [vmem:[%s1 + $0x60] sm:$0xff]
        %v357 = vld [vmem:[%s1 + $0x68] sm:$0xf]
        %v358 = vld [vmem:[%s1 + $0x6c] sm:$0xff]
        %v359 = vld [vmem:[%s1 + $0x74] sm:$0xf]
        %v360 = vld [vmem:[%s1 + $0x78] sm:$0xff]
        %v361 = vld [vmem:[%s1 + $0x80] sm:$0xf]
        %v362 = vld [vmem:[%s1 + $0x84] sm:$0xff]
        %v363 = vld [vmem:[%s1 + $0x8c] sm:$0xf]
        %v364 = vld [vmem:[%s1 + $0x90] sm:$0xff]
        %v365 = vld [vmem:[%s1 + $0x98] sm:$0xf]
        %v366 = vld [vmem:[%s1 + $0x9c] sm:$0xff]
        %v367 = vld [vmem:[%s1 + $0xa4] sm:$0xf]
        %v368 = vld [vmem:[%s1 + $0xa8] sm:$0xff]
        %v369 = vld [vmem:[%s1 + $0xb0] sm:$0xf]
        %v370 = vld [vmem:[%s1 + $0xb4] sm:$0xff]
        %v371 = vld [vmem:[%s1 + $0xbc] sm:$0xf]
        %v372 = vld [vmem:[%s1 + $0xc0] sm:$0xff]
        %v373 = vld [vmem:[%s1 + $0xc8] sm:$0xf]
        %v374 = vld [vmem:[%s1 + $0xcc] sm:$0xff]
        %v375 = vld [vmem:[%s1 + $0xd4] sm:$0xf]
        %v376 = vld [vmem:[%s1 + $0xd8] sm:$0xff]
        %v377 = vld [vmem:[%s1 + $0xe0] sm:$0xf]
        %v378 = vld [vmem:[%s1 + $0xe4] sm:$0xff]
        %v379 = vld [vmem:[%s1 + $0xec] sm:$0xf]
        %v380 = vld [vmem:[%s1 + $0xf0] sm:$0xff]
        %v381 = vld [vmem:[%s1 + $0xf8] sm:$0xf]
        %v382 = vld [vmem:[%s1 + $0xfc] sm:$0xff]
        %v383 = vld [vmem:[%s1 + $0x104] sm:$0xf]
        %v384 = vld [vmem:[%s1 + $0x108] sm:$0xff]
        %v385 = vld [vmem:[%s1 + $0x110] sm:$0xf]
        %v386 = vld [vmem:[%s1 + $0x114] sm:$0xff]
        %v387 = vld [vmem:[%s1 + $0x11c] sm:$0xf]
        %v388 = vld [vmem:[%s2] sm:$0x7]
        %v390 = vlaneseq
        %v391 = vshrl.u32 %v390, 7
        %v392 = vsub.s32 0, %v391
        %v393 = vrot.slane %v388, %v392
        %v394 = vlaneseq
        %v395 = vshrl.u32 %v394, 7
        %v396 = vsub.s32 1, %v395
        %v397 = vrot.slane %v388, %v396
        %v398 = vlaneseq
        %v399 = vshrl.u32 %v398, 7
        %v400 = vsub.s32 2, %v399
        %v401 = vrot.slane %v388, %v400
        %v413 = vunpack.c.l.b16 %v332
        %v414 = vunpack.c.h.b16 %v332
        %v415 = vunpack.c.l.b16 %v333
        %v416 = vunpack.c.h.b16 %v333
        %v417 = vunpack.c.l.b16 %v334
        %v418 = vunpack.c.h.b16 %v334
        %v419 = vunpack.c.l.b16 %v335
        %v420 = vunpack.c.h.b16 %v335
        %v421 = vunpack.c.l.b16 %v336
        %v422 = vunpack.c.h.b16 %v336
        %v423 = vunpack.c.l.b16 %v337
        %v424 = vunpack.c.h.b16 %v337
        %v425 = vunpack.c.l.b16 %v338
        %v426 = vunpack.c.h.b16 %v338
        %v427 = vunpack.c.l.b16 %v339
        %v428 = vunpack.c.h.b16 %v339
        %v429 = vpack.c.b16 %v415, %v413
        %v430 = vpack.c.b16 %v416, %v414
        %v431 = vpack.c.b16 %v419, %v417
        %v432 = vpack.c.b16 %v420, %v418
        %v433 = vpack.c.b16 %v423, %v421
        %v434 = vpack.c.b16 %v424, %v422
        %v435 = vpack.c.b16 %v427, %v425
        %v436 = vpack.c.b16 %v428, %v426
        %v489 = vunpack.c.l.b16 %v340
        %v490 = vunpack.c.h.b16 %v340
        %v491 = vunpack.c.l.b16 %v341
        %v492 = vunpack.c.l.b16 %v342
        %v493 = vunpack.c.h.b16 %v342
        %v494 = vunpack.c.l.b16 %v343
        %v495 = vunpack.c.l.b16 %v344
        %v496 = vunpack.c.h.b16 %v344
        %v497 = vunpack.c.l.b16 %v345
        %v498 = vunpack.c.l.b16 %v346
        %v499 = vunpack.c.h.b16 %v346
        %v500 = vunpack.c.l.b16 %v347
        %v501 = vunpack.c.l.b16 %v348
        %v502 = vunpack.c.h.b16 %v348
        %v503 = vunpack.c.l.b16 %v349
        %v504 = vunpack.c.l.b16 %v350
        %v505 = vunpack.c.h.b16 %v350
        %v506 = vunpack.c.l.b16 %v351
        %v507 = vunpack.c.l.b16 %v352
        %v508 = vunpack.c.h.b16 %v352
        %v509 = vunpack.c.l.b16 %v353
        %v510 = vunpack.c.l.b16 %v354
        %v511 = vunpack.c.h.b16 %v354
        %v512 = vunpack.c.l.b16 %v355
        %v513 = vunpack.c.l.b16 %v356
        %v514 = vunpack.c.h.b16 %v356
        %v515 = vunpack.c.l.b16 %v357
        %v516 = vunpack.c.l.b16 %v358
        %v517 = vunpack.c.h.b16 %v358
        %v518 = vunpack.c.l.b16 %v359
        %v519 = vunpack.c.l.b16 %v360
        %v520 = vunpack.c.h.b16 %v360
        %v521 = vunpack.c.l.b16 %v361
        %v522 = vunpack.c.l.b16 %v362
        %v523 = vunpack.c.h.b16 %v362
        %v524 = vunpack.c.l.b16 %v363
        %v525 = vunpack.c.l.b16 %v364
        %v526 = vunpack.c.h.b16 %v364
        %v527 = vunpack.c.l.b16 %v365
        %v528 = vunpack.c.l.b16 %v366
        %v529 = vunpack.c.h.b16 %v366
        %v530 = vunpack.c.l.b16 %v367
        %v531 = vunpack.c.l.b16 %v368
        %v532 = vunpack.c.h.b16 %v368
        %v533 = vunpack.c.l.b16 %v369
        %v534 = vunpack.c.l.b16 %v370
        %v535 = vunpack.c.h.b16 %v370
        %v536 = vunpack.c.l.b16 %v371
        %v537 = vunpack.c.l.b16 %v372
        %v538 = vunpack.c.h.b16 %v372
        %v539 = vunpack.c.l.b16 %v373
        %v540 = vunpack.c.l.b16 %v374
        %v541 = vunpack.c.h.b16 %v374
        %v542 = vunpack.c.l.b16 %v375
        %v543 = vunpack.c.l.b16 %v376
        %v544 = vunpack.c.h.b16 %v376
        %v545 = vunpack.c.l.b16 %v377
        %v546 = vunpack.c.l.b16 %v378
        %v547 = vunpack.c.h.b16 %v378
        %v548 = vunpack.c.l.b16 %v379
        %v549 = vunpack.c.l.b16 %v380
        %v550 = vunpack.c.h.b16 %v380
        %v551 = vunpack.c.l.b16 %v381
        %v552 = vunpack.c.l.b16 %v382
        %v553 = vunpack.c.h.b16 %v382
        %v554 = vunpack.c.l.b16 %v383
        %v555 = vunpack.c.l.b16 %v384
        %v556 = vunpack.c.h.b16 %v384
        %v557 = vunpack.c.l.b16 %v385
        %v558 = vunpack.c.l.b16 %v386
        %v559 = vunpack.c.h.b16 %v386
        %v560 = vunpack.c.l.b16 %v387
        %v561 = vpack.c.b16 %v492, %v489
        %v562 = vpack.c.b16 %v493, %v490
        %v563 = vpack.c.b16 %v494, %v491
        %v564 = vpack.c.b16 %v498, %v495
        %v565 = vpack.c.b16 %v499, %v496
        %v566 = vpack.c.b16 %v500, %v497
        %v567 = vpack.c.b16 %v504, %v501
        %v568 = vpack.c.b16 %v505, %v502
        %v569 = vpack.c.b16 %v506, %v503
        %v570 = vpack.c.b16 %v510, %v507
        %v571 = vpack.c.b16 %v511, %v508
        %v572 = vpack.c.b16 %v512, %v509
        %v573 = vpack.c.b16 %v516, %v513
        %v574 = vpack.c.b16 %v517, %v514
        %v575 = vpack.c.b16 %v518, %v515
        %v576 = vpack.c.b16 %v522, %v519
        %v577 = vpack.c.b16 %v523, %v520
        %v578 = vpack.c.b16 %v524, %v521
        %v579 = vpack.c.b16 %v528, %v525
        %v580 = vpack.c.b16 %v529, %v526
        %v581 = vpack.c.b16 %v530, %v527
        %v582 = vpack.c.b16 %v534, %v531
        %v583 = vpack.c.b16 %v535, %v532
        %v584 = vpack.c.b16 %v536, %v533
        %v585 = vpack.c.b16 %v540, %v537
        %v586 = vpack.c.b16 %v541, %v538
        %v587 = vpack.c.b16 %v542, %v539
        %v588 = vpack.c.b16 %v546, %v543
        %v589 = vpack.c.b16 %v547, %v544
        %v590 = vpack.c.b16 %v548, %v545
        %v591 = vpack.c.b16 %v552, %v549
        %v592 = vpack.c.b16 %v553, %v550
        %v593 = vpack.c.b16 %v554, %v551
        %v594 = vpack.c.b16 %v558, %v555
        %v595 = vpack.c.b16 %v559, %v556
        %v596 = vpack.c.b16 %v560, %v557
        %vm633 = vcmask 523264
        %v635 = vsel %vm633, %v430, 0
        %v638 = vsel %vm633, %v432, 0
        %v641 = vsel %vm633, %v434, 0
        %v644 = vsel %vm633, %v436, 0
        %646 = vmatprep.subr.bf16.mxu0 %v562
        %647 = vmatpush1.bf16.msra.mxu0 %v561
        %648 = vmatprep.subr.bf16.mxu0 %v565
        %649 = vmatpush1.bf16.msra.mxu0 %v564
        %650 = vmatprep.subr.bf16.mxu0 %v568
        %651 = vmatpush1.bf16.msra.mxu0 %v567
        %652 = vmatprep.subr.bf16.mxu0 %v571
        %653 = vmatpush1.bf16.msra.mxu0 %v570
        %654 = vmatprep.subr.bf16.mxu0 %v574
        %655 = vmatpush1.bf16.msra.mxu0 %v573
        %656 = vmatprep.subr.bf16.mxu0 %v577
        %657 = vmatpush1.bf16.msra.mxu0 %v576
        %658 = vmatprep.subr.bf16.mxu0 %v580
        %659 = vmatpush1.bf16.msra.mxu0 %v579
        %660 = vmatprep.subr.bf16.mxu0 %v583
        %661 = vmatpush1.bf16.msra.mxu0 %v582
        %662 = vmatprep.subr.bf16.mxu0 %v586
        %663 = vmatpush1.bf16.msra.mxu0 %v585
        %664 = vmatprep.subr.bf16.mxu0 %v589
        %665 = vmatpush1.bf16.msra.mxu0 %v588
        %666 = vmatprep.subr.bf16.mxu0 %v592
        %667 = vmatpush1.bf16.msra.mxu0 %v591
        %668 = vmatprep.subr.bf16.mxu0 %v595
        %669 = vmatpush1.bf16.msra.mxu0 %v594
        %670 = vmatprep.subr.bf16.mxu0 0
        %671 = vmatpush1.bf16.msra.mxu0 0
        %672 = vmatprep.subr.bf16.mxu0 0
        %673 = vmatpush1.bf16.msra.mxu0 0
        %674 = vmatprep.subr.bf16.mxu0 0
        %675 = vmatpush1.bf16.msra.mxu0 0
        %676 = vmatprep.subr.bf16.mxu0 0
        %677 = vmatpush1.bf16.msra.mxu0 0
        %678 = vmatprep.mubr.bf16.mxu0 %v635
        %679 = vmatmul.mubr.bf16.gmra.mrb[0].mxu0 %v429
        %v680 = vpop.f32.mrb[0].mxu0
        %v681 = vadd.f32 %v393, %v680
        %v682 = vpop.f32.mrb[0].mxu0
        %v683 = vadd.f32 %v397, %v682
        %v684 = vpop.f32.mrb[0].mxu0
        %v685 = vadd.f32 %v393, %v684
        %v686 = vpop.f32.mrb[0].mxu0
        %v687 = vadd.f32 %v397, %v686
        %688 = vmatprep.mubr.bf16.mxu0 %v638
        %689 = vmatmul.mubr.bf16.gmra.mrb[0].mxu0 %v431
        %v690 = vpop.f32.mrb[0].mxu0
        %v691 = vadd.f32 %v393, %v690
        %v692 = vpop.f32.mrb[0].mxu0
        %v693 = vadd.f32 %v397, %v692
        %v694 = vpop.f32.mrb[0].mxu0
        %v695 = vadd.f32 %v393, %v694
        %v696 = vpop.f32.mrb[0].mxu0
        %v697 = vadd.f32 %v397, %v696
        %698 = vmatprep.mubr.bf16.mxu0 %v641
        %699 = vmatmul.mubr.bf16.gmra.mrb[0].mxu0 %v433
        %v700 = vpop.f32.mrb[0].mxu0
        %v701 = vadd.f32 %v393, %v700
        %v702 = vpop.f32.mrb[0].mxu0
        %v703 = vadd.f32 %v397, %v702
        %v704 = vpop.f32.mrb[0].mxu0
        %v705 = vadd.f32 %v393, %v704
        %v706 = vpop.f32.mrb[0].mxu0
        %v707 = vadd.f32 %v397, %v706
        %708 = vmatprep.mubr.bf16.mxu0 %v644
        %709 = vmatmul.mubr.bf16.gmra.mrb[0].mxu0 %v435
        %v710 = vpop.f32.mrb[0].mxu0
        %v711 = vadd.f32 %v393, %v710
        %v712 = vpop.f32.mrb[0].mxu0
        %v713 = vadd.f32 %v397, %v712
        %v714 = vpop.f32.mrb[0].mxu0
        %v715 = vadd.f32 %v393, %v714
        %v716 = vpop.f32.mrb[0].mxu0
        %v717 = vadd.f32 %v397, %v716
        %718 = vdwg.mxu0
        %719 = vmatprep.subr.bf16.mxu0 0
        %720 = vmatpush1.bf16.msra.mxu0 %v563
        %721 = vmatprep.subr.bf16.mxu0 0
        %722 = vmatpush1.bf16.msra.mxu0 %v566
        %723 = vmatprep.subr.bf16.mxu0 0
        %724 = vmatpush1.bf16.msra.mxu0 %v569
        %725 = vmatprep.subr.bf16.mxu0 0
        %726 = vmatpush1.bf16.msra.mxu0 %v572
        %727 = vmatprep.subr.bf16.mxu0 0
        %728 = vmatpush1.bf16.msra.mxu0 %v575
        %729 = vmatprep.subr.bf16.mxu0 0
        %730 = vmatpush1.bf16.msra.mxu0 %v578
        %731 = vmatprep.subr.bf16.mxu0 0
        %732 = vmatpush1.bf16.msra.mxu0 %v581
        %733 = vmatprep.subr.bf16.mxu0 0
        %734 = vmatpush1.bf16.msra.mxu0 %v584
        %735 = vmatprep.subr.bf16.mxu0 0
        %736 = vmatpush1.bf16.msra.mxu0 %v587
        %737 = vmatprep.subr.bf16.mxu0 0
        %738 = vmatpush1.bf16.msra.mxu0 %v590
        %739 = vmatprep.subr.bf16.mxu0 0
        %740 = vmatpush1.bf16.msra.mxu0 %v593
        %741 = vmatprep.subr.bf16.mxu0 0
        %742 = vmatpush1.bf16.msra.mxu0 %v596
        %743 = vmatprep.subr.bf16.mxu0 0
        %744 = vmatpush1.bf16.msra.mxu0 0
        %745 = vmatprep.subr.bf16.mxu0 0
        %746 = vmatpush1.bf16.msra.mxu0 0
        %747 = vmatprep.subr.bf16.mxu0 0
        %748 = vmatpush1.bf16.msra.mxu0 0
        %749 = vmatprep.subr.bf16.mxu0 0
        %750 = vmatpush1.bf16.msra.mxu0 0
        %751 = vmatprep.mubr.bf16.mxu0 %v635
        %752 = vmatmul.mubr.bf16.gmra.mrb[0].mxu0 %v429
        %v753 = vpop.f32.mrb[0].mxu0
        %v754 = vadd.f32 %v401, %v753
        %v755 = vpop.f32.mrb[0].mxu0
        %v756 = vpop.f32.mrb[0].mxu0
        %v757 = vadd.f32 %v401, %v756
        %v758 = vpop.f32.mrb[0].mxu0
        %759 = vmatprep.mubr.bf16.mxu0 %v638
        %760 = vmatmul.mubr.bf16.gmra.mrb[0].mxu0 %v431
        %v761 = vpop.f32.mrb[0].mxu0
        %v762 = vadd.f32 %v401, %v761
        %v763 = vpop.f32.mrb[0].mxu0
        %v764 = vpop.f32.mrb[0].mxu0
        %v765 = vadd.f32 %v401, %v764
        %v766 = vpop.f32.mrb[0].mxu0
        %767 = vmatprep.mubr.bf16.mxu0 %v641
        %768 = vmatmul.mubr.bf16.gmra.mrb[0].mxu0 %v433
        %v769 = vpop.f32.mrb[0].mxu0
        %v770 = vadd.f32 %v401, %v769
        %v771 = vpop.f32.mrb[0].mxu0
        %v772 = vpop.f32.mrb[0].mxu0
        %v773 = vadd.f32 %v401, %v772
        %v774 = vpop.f32.mrb[0].mxu0
        %775 = vmatprep.mubr.bf16.mxu0 %v644
        %776 = vmatmul.mubr.bf16.gmra.mrb[0].mxu0 %v435
        %v777 = vpop.f32.mrb[0].mxu0
        %v778 = vadd.f32 %v401, %v777
        %v779 = vpop.f32.mrb[0].mxu0
        %v780 = vpop.f32.mrb[0].mxu0
        %v781 = vadd.f32 %v401, %v780
        %v782 = vpop.f32.mrb[0].mxu0
        %783 = vdwg.mxu0
        %v784 = vmax.f32 %v681, 0.0
        %v785 = vmax.f32 %v683, 0.0
        %v786 = vmax.f32 %v754, 0.0
        %v787 = vmax.f32 %v685, 0.0
        %v788 = vmax.f32 %v687, 0.0
        %v789 = vmax.f32 %v757, 0.0
        %v790 = vmax.f32 %v691, 0.0
        %v791 = vmax.f32 %v693, 0.0
        %v792 = vmax.f32 %v762, 0.0
        %v793 = vmax.f32 %v695, 0.0
        %v794 = vmax.f32 %v697, 0.0
        %v795 = vmax.f32 %v765, 0.0
        %v796 = vmax.f32 %v701, 0.0
        %v797 = vmax.f32 %v703, 0.0
        %v798 = vmax.f32 %v770, 0.0
        %v799 = vmax.f32 %v705, 0.0
        %v800 = vmax.f32 %v707, 0.0
        %v801 = vmax.f32 %v773, 0.0
        %v802 = vmax.f32 %v711, 0.0
        %v803 = vmax.f32 %v713, 0.0
        %v804 = vmax.f32 %v778, 0.0
        %v805 = vmax.f32 %v715, 0.0
        %v806 = vmax.f32 %v717, 0.0
        %v807 = vmax.f32 %v781, 0.0
        %808 = vst [vmem:[#allocation2] sm:$0xff] 0.0
        %809 = vst [vmem:[#allocation2 + $0x8] sm:$0x3] 0.0
        %810 = vst [vmem:[#allocation2 + $0x10] sm:$0xff] 0.0
        %811 = vst [vmem:[#allocation2 + $0x18] sm:$0x3] 0.0
        %812 = vst [vmem:[#allocation2 + $0x20] sm:$0xff] 0.0
        %813 = vst [vmem:[#allocation2 + $0x28] sm:$0x3] 0.0
        %814 = vst [vmem:[#allocation2 + $0x30] sm:$0xff] 0.0
        %815 = vst [vmem:[#allocation2 + $0x38] sm:$0x3] 0.0
        %816 = vst [vmem:[#allocation2 + $0x40] sm:$0xff] 0.0
        %817 = vst [vmem:[#allocation2 + $0x48] sm:$0x3] 0.0
        %818 = vst [vmem:[#allocation2 + $0x50] sm:$0xff] 0.0
        %819 = vst [vmem:[#allocation2 + $0x58] sm:$0x3] 0.0
        %820 = vst [vmem:[#allocation2 + $0x60] sm:$0xff] 0.0
        %821 = vst [vmem:[#allocation2 + $0x68] sm:$0x3] 0.0
        %822 = vst [vmem:[#allocation2 + $0x70] sm:$0xff] 0.0
        %823 = vst [vmem:[#allocation2 + $0x78] sm:$0x3] 0.0
        %824 = vst [vmem:[#allocation2 + $0x80] sm:$0xff] 0.0
        %825 = vst [vmem:[#allocation2 + $0x88] sm:$0x3] 0.0
        %826 = vst [vmem:[#allocation2 + $0x90] sm:$0xff] 0.0
        %827 = vst [vmem:[#allocation2 + $0x98] sm:$0x3] 0.0
        %s828 = scalar_lea.vmem [#allocation2], 16
        %829 = vst [vmem:[%s828 + $0x1] sm:$0xff] %v784
        %830 = vst [vmem:[%s828 + $0x11] sm:$0xff] %v787
        %831 = vst [vmem:[%s828 + $0x21] sm:$0xff] %v790
        %832 = vst [vmem:[%s828 + $0x31] sm:$0xff] %v793
        %833 = vst [vmem:[%s828 + $0x41] sm:$0xff] %v796
        %834 = vst [vmem:[%s828 + $0x51] sm:$0xff] %v799
        %835 = vst [vmem:[%s828 + $0x61] sm:$0xff] %v802
        %836 = vst [vmem:[%s828 + $0x71] sm:$0xff] %v805
        %v837 = vld [vmem:[#allocation2] sm:$0xff]
        %v838 = vld [vmem:[#allocation2 + $0x10] sm:$0xff]
        %v839 = vld [vmem:[#allocation2 + $0x20] sm:$0xff]
        %v840 = vld [vmem:[#allocation2 + $0x30] sm:$0xff]
        %v841 = vld [vmem:[#allocation2 + $0x40] sm:$0xff]
        %v842 = vld [vmem:[#allocation2 + $0x50] sm:$0xff]
        %v843 = vld [vmem:[#allocation2 + $0x60] sm:$0xff]
        %v844 = vld [vmem:[#allocation2 + $0x70] sm:$0xff]
        %v845 = vpack.c.bf16 %v837, %v837
        %v846 = vpack.c.bf16 %v838, %v838
        %v847 = vpack.c.bf16 %v839, %v839
        %v848 = vpack.c.bf16 %v840, %v840
        %v849 = vpack.c.bf16 %v841, %v841
        %v850 = vpack.c.bf16 %v842, %v842
        %v851 = vpack.c.bf16 %v843, %v843
        %v852 = vpack.c.bf16 %v844, %v844
        %v853 = vld [vmem:[#allocation2 + $0x1] sm:$0xff]
        %v854 = vld [vmem:[#allocation2 + $0x11] sm:$0xff]
        %v855 = vld [vmem:[#allocation2 + $0x21] sm:$0xff]
        %v856 = vld [vmem:[#allocation2 + $0x31] sm:$0xff]
        %v857 = vld [vmem:[#allocation2 + $0x41] sm:$0xff]
        %v858 = vld [vmem:[#allocation2 + $0x51] sm:$0xff]
        %v859 = vld [vmem:[#allocation2 + $0x61] sm:$0xff]
        %v860 = vld [vmem:[#allocation2 + $0x71] sm:$0xff]
        %v861 = vpack.c.bf16 %v853, %v853
        %v862 = vpack.c.bf16 %v854, %v854
        %v863 = vpack.c.bf16 %v855, %v855
        %v864 = vpack.c.bf16 %v856, %v856
        %v865 = vpack.c.bf16 %v857, %v857
        %v866 = vpack.c.bf16 %v858, %v858
        %v867 = vpack.c.bf16 %v859, %v859
        %v868 = vpack.c.bf16 %v860, %v860
        %v869 = vld [vmem:[#allocation2 + $0x2] sm:$0xff]
        %v870 = vld [vmem:[#allocation2 + $0x12] sm:$0xff]
        %v871 = vld [vmem:[#allocation2 + $0x22] sm:$0xff]
        %v872 = vld [vmem:[#allocation2 + $0x32] sm:$0xff]
        %v873 = vld [vmem:[#allocation2 + $0x42] sm:$0xff]
        %v874 = vld [vmem:[#allocation2 + $0x52] sm:$0xff]
        %v875 = vld [vmem:[#allocation2 + $0x62] sm:$0xff]
        %v876 = vld [vmem:[#allocation2 + $0x72] sm:$0xff]
        %v877 = vpack.c.bf16 %v869, %v869
        %v878 = vpack.c.bf16 %v870, %v870
        %v879 = vpack.c.bf16 %v871, %v871
        %v880 = vpack.c.bf16 %v872, %v872
        %v881 = vpack.c.bf16 %v873, %v873
        %v882 = vpack.c.bf16 %v874, %v874
        %v883 = vpack.c.bf16 %v875, %v875
        %v884 = vpack.c.bf16 %v876, %v876
        %v885 = vld [vmem:[%s828] sm:$0xff]
        %v886 = vld [vmem:[%s828 + $0x10] sm:$0xff]
        %v887 = vld [vmem:[%s828 + $0x20] sm:$0xff]
        %v888 = vld [vmem:[%s828 + $0x30] sm:$0xff]
        %v889 = vld [vmem:[%s828 + $0x40] sm:$0xff]
        %v890 = vld [vmem:[%s828 + $0x50] sm:$0xff]
        %v891 = vld [vmem:[%s828 + $0x60] sm:$0xff]
        %v892 = vld [vmem:[%s828 + $0x70] sm:$0xff]
        %v893 = vpack.c.bf16 %v885, %v885
        %v894 = vpack.c.bf16 %v886, %v886
        %v895 = vpack.c.bf16 %v887, %v887
        %v896 = vpack.c.bf16 %v888, %v888
        %v897 = vpack.c.bf16 %v889, %v889
        %v898 = vpack.c.bf16 %v890, %v890
        %v899 = vpack.c.bf16 %v891, %v891
        %v900 = vpack.c.bf16 %v892, %v892
        %v901 = vld [vmem:[%s828 + $0x1] sm:$0xff]
        %v902 = vld [vmem:[%s828 + $0x11] sm:$0xff]
        %v903 = vld [vmem:[%s828 + $0x21] sm:$0xff]
        %v904 = vld [vmem:[%s828 + $0x31] sm:$0xff]
        %v905 = vld [vmem:[%s828 + $0x41] sm:$0xff]
        %v906 = vld [vmem:[%s828 + $0x51] sm:$0xff]
        %v907 = vld [vmem:[%s828 + $0x61] sm:$0xff]
        %v908 = vld [vmem:[%s828 + $0x71] sm:$0xff]
        %v909 = vpack.c.bf16 %v901, %v901
        %v910 = vpack.c.bf16 %v902, %v902
        %v911 = vpack.c.bf16 %v903, %v903
        %v912 = vpack.c.bf16 %v904, %v904
        %v913 = vpack.c.bf16 %v905, %v905
        %v914 = vpack.c.bf16 %v906, %v906
        %v915 = vpack.c.bf16 %v907, %v907
        %v916 = vpack.c.bf16 %v908, %v908
        %v917 = vld [vmem:[%s828 + $0x2] sm:$0xff]
        %v918 = vld [vmem:[%s828 + $0x12] sm:$0xff]
        %v919 = vld [vmem:[%s828 + $0x22] sm:$0xff]
        %v920 = vld [vmem:[%s828 + $0x32] sm:$0xff]
        %v921 = vld [vmem:[%s828 + $0x42] sm:$0xff]
        %v922 = vld [vmem:[%s828 + $0x52] sm:$0xff]
        %v923 = vld [vmem:[%s828 + $0x62] sm:$0xff]
        %v924 = vld [vmem:[%s828 + $0x72] sm:$0xff]
        %v925 = vpack.c.bf16 %v917, %v917
        %v926 = vpack.c.bf16 %v918, %v918
        %v927 = vpack.c.bf16 %v919, %v919
        %v928 = vpack.c.bf16 %v920, %v920
        %v929 = vpack.c.bf16 %v921, %v921
        %v930 = vpack.c.bf16 %v922, %v922
        %v931 = vpack.c.bf16 %v923, %v923
        %v932 = vpack.c.bf16 %v924, %v924
        %s933 = scalar_lea.vmem [#allocation2], 32
        %v934 = vld [vmem:[%s933] sm:$0xff]
        %v935 = vld [vmem:[%s933 + $0x10] sm:$0xff]
        %v936 = vld [vmem:[%s933 + $0x20] sm:$0xff]
        %v937 = vld [vmem:[%s933 + $0x30] sm:$0xff]
        %v938 = vld [vmem:[%s933 + $0x40] sm:$0xff]
        %v939 = vld [vmem:[%s933 + $0x50] sm:$0xff]
        %v940 = vld [vmem:[%s933 + $0x60] sm:$0xff]
        %v941 = vld [vmem:[%s933 + $0x70] sm:$0xff]
        %v942 = vpack.c.bf16 %v934, %v934
        %v943 = vpack.c.bf16 %v935, %v935
        %v944 = vpack.c.bf16 %v936, %v936
        %v945 = vpack.c.bf16 %v937, %v937
        %v946 = vpack.c.bf16 %v938, %v938
        %v947 = vpack.c.bf16 %v939, %v939
        %v948 = vpack.c.bf16 %v940, %v940
        %v949 = vpack.c.bf16 %v941, %v941
        %v950 = vld [vmem:[%s933 + $0x1] sm:$0xff]
        %v951 = vld [vmem:[%s933 + $0x11] sm:$0xff]
        %v952 = vld [vmem:[%s933 + $0x21] sm:$0xff]
        %v953 = vld [vmem:[%s933 + $0x31] sm:$0xff]
        %v954 = vld [vmem:[%s933 + $0x41] sm:$0xff]
        %v955 = vld [vmem:[%s933 + $0x51] sm:$0xff]
        %v956 = vld [vmem:[%s933 + $0x61] sm:$0xff]
        %v957 = vld [vmem:[%s933 + $0x71] sm:$0xff]
        %v958 = vpack.c.bf16 %v950, %v950
        %v959 = vpack.c.bf16 %v951, %v951
        %v960 = vpack.c.bf16 %v952, %v952
        %v961 = vpack.c.bf16 %v953, %v953
        %v962 = vpack.c.bf16 %v954, %v954
        %v963 = vpack.c.bf16 %v955, %v955
        %v964 = vpack.c.bf16 %v956, %v956
        %v965 = vpack.c.bf16 %v957, %v957
        %v966 = vld [vmem:[%s933 + $0x2] sm:$0xff]
        %v967 = vld [vmem:[%s933 + $0x12] sm:$0xff]
        %v968 = vld [vmem:[%s933 + $0x22] sm:$0xff]
        %v969 = vld [vmem:[%s933 + $0x32] sm:$0xff]
        %v970 = vld [vmem:[%s933 + $0x42] sm:$0xff]
        %v971 = vld [vmem:[%s933 + $0x52] sm:$0xff]
        %v972 = vld [vmem:[%s933 + $0x62] sm:$0xff]
        %v973 = vld [vmem:[%s933 + $0x72] sm:$0xff]
        %v974 = vpack.c.bf16 %v966, %v966
        %v975 = vpack.c.bf16 %v967, %v967
        %v976 = vpack.c.bf16 %v968, %v968
        %v977 = vpack.c.bf16 %v969, %v969
        %v978 = vpack.c.bf16 %v970, %v970
        %v979 = vpack.c.bf16 %v971, %v971
        %v980 = vpack.c.bf16 %v972, %v972
        %v981 = vpack.c.bf16 %v973, %v973
        %v1054 = vunpack.c.l.b16 %v845
        %v1055 = vunpack.c.l.b16 %v861
        %v1056 = vunpack.c.l.b16 %v877
        %v1057 = vunpack.c.l.b16 %v893
        %v1058 = vunpack.c.l.b16 %v909
        %v1059 = vunpack.c.l.b16 %v925
        %v1060 = vunpack.c.l.b16 %v942
        %v1061 = vunpack.c.l.b16 %v958
        %v1062 = vunpack.c.l.b16 %v974
        %v1063 = vunpack.c.l.b16 %v846
        %v1064 = vunpack.c.l.b16 %v862
        %v1065 = vunpack.c.l.b16 %v878
        %v1066 = vunpack.c.l.b16 %v894
        %v1067 = vunpack.c.l.b16 %v910
        %v1068 = vunpack.c.l.b16 %v926
        %v1069 = vunpack.c.l.b16 %v943
        %v1070 = vunpack.c.l.b16 %v959
        %v1071 = vunpack.c.l.b16 %v975
        %v1072 = vunpack.c.l.b16 %v847
        %v1073 = vunpack.c.l.b16 %v863
        %v1074 = vunpack.c.l.b16 %v879
        %v1075 = vunpack.c.l.b16 %v895
        %v1076 = vunpack.c.l.b16 %v911
        %v1077 = vunpack.c.l.b16 %v927
        %v1078 = vunpack.c.l.b16 %v944
        %v1079 = vunpack.c.l.b16 %v960
        %v1080 = vunpack.c.l.b16 %v976
        %v1081 = vunpack.c.l.b16 %v848
        %v1082 = vunpack.c.l.b16 %v864
        %v1083 = vunpack.c.l.b16 %v880
        %v1084 = vunpack.c.l.b16 %v896
        %v1085 = vunpack.c.l.b16 %v912
        %v1086 = vunpack.c.l.b16 %v928
        %v1087 = vunpack.c.l.b16 %v945
        %v1088 = vunpack.c.l.b16 %v961
        %v1089 = vunpack.c.l.b16 %v977
        %v1090 = vunpack.c.l.b16 %v849
        %v1091 = vunpack.c.l.b16 %v865
        %v1092 = vunpack.c.l.b16 %v881
        %v1093 = vunpack.c.l.b16 %v897
        %v1094 = vunpack.c.l.b16 %v913
        %v1095 = vunpack.c.l.b16 %v929
        %v1096 = vunpack.c.l.b16 %v946
        %v1097 = vunpack.c.l.b16 %v962
        %v1098 = vunpack.c.l.b16 %v978
        %v1099 = vunpack.c.l.b16 %v850
        %v1100 = vunpack.c.l.b16 %v866
        %v1101 = vunpack.c.l.b16 %v882
        %v1102 = vunpack.c.l.b16 %v898
        %v1103 = vunpack.c.l.b16 %v914
        %v1104 = vunpack.c.l.b16 %v930
        %v1105 = vunpack.c.l.b16 %v947
        %v1106 = vunpack.c.l.b16 %v963
        %v1107 = vunpack.c.l.b16 %v979
        %v1108 = vunpack.c.l.b16 %v851
        %v1109 = vunpack.c.l.b16 %v867
        %v1110 = vunpack.c.l.b16 %v883
        %v1111 = vunpack.c.l.b16 %v899
        %v1112 = vunpack.c.l.b16 %v915
        %v1113 = vunpack.c.l.b16 %v931
        %v1114 = vunpack.c.l.b16 %v948
        %v1115 = vunpack.c.l.b16 %v964
        %v1116 = vunpack.c.l.b16 %v980
        %v1117 = vunpack.c.l.b16 %v852
        %v1118 = vunpack.c.l.b16 %v868
        %v1119 = vunpack.c.l.b16 %v884
        %v1120 = vunpack.c.l.b16 %v900
        %v1121 = vunpack.c.l.b16 %v916
        %v1122 = vunpack.c.l.b16 %v932
        %v1123 = vunpack.c.l.b16 %v949
        %v1124 = vunpack.c.l.b16 %v965
        %v1125 = vunpack.c.l.b16 %v981
        %v1126 = vld [vmem:[%s3] sm:$0xf]
        %v1127 = vld [vmem:[%s3 + $0x4] sm:$0xf]
        %v1128 = vld [vmem:[%s3 + $0x8] sm:$0xf]
        %v1129 = vld [vmem:[%s3 + $0xc] sm:$0xf]
        %v1130 = vld [vmem:[%s3 + $0x10] sm:$0xf]
        %v1131 = vld [vmem:[%s3 + $0x14] sm:$0xf]
        %v1132 = vld [vmem:[%s3 + $0x18] sm:$0xf]
        %v1133 = vld [vmem:[%s3 + $0x1c] sm:$0xf]
        %v1134 = vld [vmem:[%s3 + $0x20] sm:$0xf]
        %v1135 = vld [vmem:[%s3 + $0x24] sm:$0xf]
        %v1136 = vld [vmem:[%s3 + $0x28] sm:$0xf]
        %v1137 = vld [vmem:[%s3 + $0x2c] sm:$0xf]
        %v1138 = vld [vmem:[%s3 + $0x30] sm:$0xf]
        %v1139 = vld [vmem:[%s3 + $0x34] sm:$0xf]
        %v1140 = vld [vmem:[%s3 + $0x38] sm:$0xf]
        %v1141 = vld [vmem:[%s3 + $0x3c] sm:$0xf]
        %v1142 = vld [vmem:[%s3 + $0x40] sm:$0xf]
        %v1143 = vld [vmem:[%s3 + $0x44] sm:$0xf]
        %v1144 = vld [vmem:[%s3 + $0x48] sm:$0xf]
        %v1145 = vld [vmem:[%s3 + $0x4c] sm:$0xf]
        %v1146 = vld [vmem:[%s3 + $0x50] sm:$0xf]
        %v1147 = vld [vmem:[%s3 + $0x54] sm:$0xf]
        %v1148 = vld [vmem:[%s3 + $0x58] sm:$0xf]
        %v1149 = vld [vmem:[%s3 + $0x5c] sm:$0xf]
        %v1150 = vld [vmem:[%s3 + $0x60] sm:$0xf]
        %v1151 = vld [vmem:[%s3 + $0x64] sm:$0xf]
        %v1152 = vld [vmem:[%s3 + $0x68] sm:$0xf]
        %v1153 = vld [vmem:[%s3 + $0x6c] sm:$0xf]
        %v1154 = vld [vmem:[%s3 + $0x70] sm:$0xf]
        %v1155 = vld [vmem:[%s3 + $0x74] sm:$0xf]
        %v1156 = vld [vmem:[%s3 + $0x78] sm:$0xf]
        %v1157 = vld [vmem:[%s3 + $0x7c] sm:$0xf]
        %v1158 = vld [vmem:[%s3 + $0x80] sm:$0xf]
        %v1159 = vld [vmem:[%s3 + $0x84] sm:$0xf]
        %v1160 = vld [vmem:[%s3 + $0x88] sm:$0xf]
        %v1161 = vld [vmem:[%s3 + $0x8c] sm:$0xf]
        %v1162 = vld [vmem:[%s3 + $0x90] sm:$0xf]
        %v1163 = vld [vmem:[%s3 + $0x94] sm:$0xf]
        %v1164 = vld [vmem:[%s3 + $0x98] sm:$0xf]
        %v1165 = vld [vmem:[%s3 + $0x9c] sm:$0xf]
        %v1166 = vld [vmem:[%s3 + $0xa0] sm:$0xf]
        %v1167 = vld [vmem:[%s3 + $0xa4] sm:$0xf]
        %v1168 = vld [vmem:[%s3 + $0xa8] sm:$0xf]
        %v1169 = vld [vmem:[%s3 + $0xac] sm:$0xf]
        %v1170 = vld [vmem:[%s3 + $0xb0] sm:$0xf]
        %v1171 = vld [vmem:[%s3 + $0xb4] sm:$0xf]
        %v1172 = vld [vmem:[%s3 + $0xb8] sm:$0xf]
        %v1173 = vld [vmem:[%s3 + $0xbc] sm:$0xf]
        %v1174 = vld [vmem:[%s3 + $0xc0] sm:$0xf]
        %v1175 = vld [vmem:[%s3 + $0xc4] sm:$0xf]
        %v1176 = vld [vmem:[%s3 + $0xc8] sm:$0xf]
        %v1177 = vld [vmem:[%s3 + $0xcc] sm:$0xf]
        %v1178 = vld [vmem:[%s3 + $0xd0] sm:$0xf]
        %v1179 = vld [vmem:[%s3 + $0xd4] sm:$0xf]
        %v1180 = vld [vmem:[%s3 + $0xd8] sm:$0xf]
        %v1181 = vld [vmem:[%s3 + $0xdc] sm:$0xf]
        %v1182 = vld [vmem:[%s3 + $0xe0] sm:$0xf]
        %v1183 = vld [vmem:[%s3 + $0xe4] sm:$0xf]
        %v1184 = vld [vmem:[%s3 + $0xe8] sm:$0xf]
        %v1185 = vld [vmem:[%s3 + $0xec] sm:$0xf]
        %v1186 = vld [vmem:[%s3 + $0xf0] sm:$0xf]
        %v1187 = vld [vmem:[%s3 + $0xf4] sm:$0xf]
        %v1188 = vld [vmem:[%s3 + $0xf8] sm:$0xf]
        %v1189 = vld [vmem:[%s3 + $0xfc] sm:$0xf]
        %v1190 = vld [vmem:[%s3 + $0x100] sm:$0xf]
        %v1191 = vld [vmem:[%s3 + $0x104] sm:$0xf]
        %v1192 = vld [vmem:[%s3 + $0x108] sm:$0xf]
        %v1193 = vld [vmem:[%s3 + $0x10c] sm:$0xf]
        %v1194 = vld [vmem:[%s3 + $0x110] sm:$0xf]
        %v1195 = vld [vmem:[%s3 + $0x114] sm:$0xf]
        %v1196 = vld [vmem:[%s3 + $0x118] sm:$0xf]
        %v1197 = vld [vmem:[%s3 + $0x11c] sm:$0xf]
        %v1198 = vld [vmem:[%s3 + $0x120] sm:$0xf]
        %v1199 = vld [vmem:[%s3 + $0x124] sm:$0xf]
        %v1200 = vld [vmem:[%s3 + $0x128] sm:$0xf]
        %v1201 = vld [vmem:[%s3 + $0x12c] sm:$0xf]
        %v1202 = vld [vmem:[%s3 + $0x130] sm:$0xf]
        %v1203 = vld [vmem:[%s3 + $0x134] sm:$0xf]
        %v1204 = vld [vmem:[%s3 + $0x138] sm:$0xf]
        %v1205 = vld [vmem:[%s3 + $0x13c] sm:$0xf]
        %v1206 = vld [vmem:[%s3 + $0x140] sm:$0xf]
        %v1207 = vld [vmem:[%s3 + $0x144] sm:$0xf]
        %v1208 = vld [vmem:[%s3 + $0x148] sm:$0xf]
        %v1209 = vld [vmem:[%s3 + $0x14c] sm:$0xf]
        %v1210 = vld [vmem:[%s3 + $0x150] sm:$0xf]
        %v1211 = vld [vmem:[%s3 + $0x154] sm:$0xf]
        %v1212 = vld [vmem:[%s3 + $0x158] sm:$0xf]
        %v1213 = vld [vmem:[%s3 + $0x15c] sm:$0xf]
        %v1214 = vld [vmem:[%s3 + $0x160] sm:$0xf]
        %v1215 = vld [vmem:[%s3 + $0x164] sm:$0xf]
        %v1216 = vld [vmem:[%s3 + $0x168] sm:$0xf]
        %v1217 = vld [vmem:[%s3 + $0x16c] sm:$0xf]
        %v1218 = vld [vmem:[%s3 + $0x170] sm:$0xf]
        %v1219 = vld [vmem:[%s3 + $0x174] sm:$0xf]
        %v1220 = vld [vmem:[%s3 + $0x178] sm:$0xf]
        %v1221 = vld [vmem:[%s3 + $0x17c] sm:$0xf]
        %v1222 = vld [vmem:[%s3 + $0x180] sm:$0xf]
        %v1223 = vld [vmem:[%s3 + $0x184] sm:$0xf]
        %v1224 = vld [vmem:[%s3 + $0x188] sm:$0xf]
        %v1225 = vld [vmem:[%s3 + $0x18c] sm:$0xf]
        %v1226 = vld [vmem:[%s3 + $0x190] sm:$0xf]
        %v1227 = vld [vmem:[%s3 + $0x194] sm:$0xf]
        %v1228 = vld [vmem:[%s3 + $0x198] sm:$0xf]
        %v1229 = vld [vmem:[%s3 + $0x19c] sm:$0xf]
        %v1230 = vld [vmem:[%s3 + $0x1a0] sm:$0xf]
        %v1231 = vld [vmem:[%s3 + $0x1a4] sm:$0xf]
        %v1232 = vld [vmem:[%s3 + $0x1a8] sm:$0xf]
        %v1233 = vld [vmem:[%s3 + $0x1ac] sm:$0xf]
        %v1234 = vld [vmem:[%s3 + $0x1b0] sm:$0xf]
        %v1235 = vld [vmem:[%s3 + $0x1b4] sm:$0xf]
        %v1236 = vld [vmem:[%s3 + $0x1b8] sm:$0xf]
        %v1237 = vld [vmem:[%s3 + $0x1bc] sm:$0xf]
        %v1238 = vld [vmem:[%s3 + $0x1c0] sm:$0xf]
        %v1239 = vld [vmem:[%s3 + $0x1c4] sm:$0xf]
        %v1240 = vld [vmem:[%s3 + $0x1c8] sm:$0xf]
        %v1241 = vld [vmem:[%s3 + $0x1cc] sm:$0xf]
        %v1242 = vld [vmem:[%s3 + $0x1d0] sm:$0xf]
        %v1243 = vld [vmem:[%s3 + $0x1d4] sm:$0xf]
        %v1244 = vld [vmem:[%s3 + $0x1d8] sm:$0xf]
        %v1245 = vld [vmem:[%s3 + $0x1dc] sm:$0xf]
        %v1246 = vld [vmem:[%s3 + $0x1e0] sm:$0xf]
        %v1247 = vld [vmem:[%s3 + $0x1e4] sm:$0xf]
        %v1248 = vld [vmem:[%s3 + $0x1e8] sm:$0xf]
        %v1249 = vld [vmem:[%s3 + $0x1ec] sm:$0xf]
        %v1250 = vld [vmem:[%s3 + $0x1f0] sm:$0xf]
        %v1251 = vld [vmem:[%s3 + $0x1f4] sm:$0xf]
        %v1252 = vld [vmem:[%s3 + $0x1f8] sm:$0xf]
        %v1253 = vld [vmem:[%s3 + $0x1fc] sm:$0xf]
        %v1254 = vld [vmem:[%s3 + $0x200] sm:$0xf]
        %v1255 = vld [vmem:[%s3 + $0x204] sm:$0xf]
        %v1256 = vld [vmem:[%s3 + $0x208] sm:$0xf]
        %v1257 = vld [vmem:[%s3 + $0x20c] sm:$0xf]
        %v1258 = vld [vmem:[%s3 + $0x210] sm:$0xf]
        %v1259 = vld [vmem:[%s3 + $0x214] sm:$0xf]
        %v1260 = vld [vmem:[%s3 + $0x218] sm:$0xf]
        %v1261 = vld [vmem:[%s3 + $0x21c] sm:$0xf]
        %v1262 = vld [vmem:[%s3 + $0x220] sm:$0xf]
        %v1263 = vld [vmem:[%s3 + $0x224] sm:$0xf]
        %v1264 = vld [vmem:[%s3 + $0x228] sm:$0xf]
        %v1265 = vld [vmem:[%s3 + $0x22c] sm:$0xf]
        %v1266 = vld [vmem:[%s3 + $0x230] sm:$0xf]
        %v1267 = vld [vmem:[%s3 + $0x234] sm:$0xf]
        %v1268 = vld [vmem:[%s3 + $0x238] sm:$0xf]
        %v1269 = vld [vmem:[%s3 + $0x23c] sm:$0xf]
        %v1270 = vld [vmem:[%s4] sm:$0x1]
        %v1272 = vlaneseq
        %v1273 = vshrl.u32 %v1272, 7
        %v1274 = vsub.s32 0, %v1273
        %v1275 = vrot.slane %v1270, %v1274
        %v1277 = vpack.c.b16 %v1063, %v1054
        %v1278 = vpack.c.b16 %v1064, %v1055
        %v1279 = vpack.c.b16 %v1065, %v1056
        %v1280 = vpack.c.b16 %v1066, %v1057
        %v1281 = vpack.c.b16 %v1067, %v1058
        %v1282 = vpack.c.b16 %v1068, %v1059
        %v1283 = vpack.c.b16 %v1069, %v1060
        %v1284 = vpack.c.b16 %v1070, %v1061
        %v1285 = vpack.c.b16 %v1071, %v1062
        %v1286 = vpack.c.b16 %v1081, %v1072
        %v1287 = vpack.c.b16 %v1082, %v1073
        %v1288 = vpack.c.b16 %v1083, %v1074
        %v1289 = vpack.c.b16 %v1084, %v1075
        %v1290 = vpack.c.b16 %v1085, %v1076
        %v1291 = vpack.c.b16 %v1086, %v1077
        %v1292 = vpack.c.b16 %v1087, %v1078
        %v1293 = vpack.c.b16 %v1088, %v1079
        %v1294 = vpack.c.b16 %v1089, %v1080
        %v1295 = vpack.c.b16 %v1099, %v1090
        %v1296 = vpack.c.b16 %v1100, %v1091
        %v1297 = vpack.c.b16 %v1101, %v1092
        %v1298 = vpack.c.b16 %v1102, %v1093
        %v1299 = vpack.c.b16 %v1103, %v1094
        %v1300 = vpack.c.b16 %v1104, %v1095
        %v1301 = vpack.c.b16 %v1105, %v1096
        %v1302 = vpack.c.b16 %v1106, %v1097
        %v1303 = vpack.c.b16 %v1107, %v1098
        %v1304 = vpack.c.b16 %v1117, %v1108
        %v1305 = vpack.c.b16 %v1118, %v1109
        %v1306 = vpack.c.b16 %v1119, %v1110
        %v1307 = vpack.c.b16 %v1120, %v1111
        %v1308 = vpack.c.b16 %v1121, %v1112
        %v1309 = vpack.c.b16 %v1122, %v1113
        %v1310 = vpack.c.b16 %v1123, %v1114
        %v1311 = vpack.c.b16 %v1124, %v1115
        %v1312 = vpack.c.b16 %v1125, %v1116
        %v1493 = vunpack.c.l.b16 %v1126
        %v1494 = vunpack.c.l.b16 %v1127
        %v1495 = vunpack.c.l.b16 %v1128
        %v1496 = vunpack.c.l.b16 %v1129
        %v1497 = vunpack.c.l.b16 %v1130
        %v1498 = vunpack.c.l.b16 %v1131
        %v1499 = vunpack.c.l.b16 %v1132
        %v1500 = vunpack.c.l.b16 %v1133
        %v1501 = vunpack.c.l.b16 %v1134
        %v1502 = vunpack.c.l.b16 %v1135
        %v1503 = vunpack.c.l.b16 %v1136
        %v1504 = vunpack.c.l.b16 %v1137
        %v1505 = vunpack.c.l.b16 %v1138
        %v1506 = vunpack.c.l.b16 %v1139
        %v1507 = vunpack.c.l.b16 %v1140
        %v1508 = vunpack.c.l.b16 %v1141
        %v1509 = vunpack.c.l.b16 %v1142
        %v1510 = vunpack.c.l.b16 %v1143
        %v1511 = vunpack.c.l.b16 %v1144
        %v1512 = vunpack.c.l.b16 %v1145
        %v1513 = vunpack.c.l.b16 %v1146
        %v1514 = vunpack.c.l.b16 %v1147
        %v1515 = vunpack.c.l.b16 %v1148
        %v1516 = vunpack.c.l.b16 %v1149
        %v1517 = vunpack.c.l.b16 %v1150
        %v1518 = vunpack.c.l.b16 %v1151
        %v1519 = vunpack.c.l.b16 %v1152
        %v1520 = vunpack.c.l.b16 %v1153
        %v1521 = vunpack.c.l.b16 %v1154
        %v1522 = vunpack.c.l.b16 %v1155
        %v1523 = vunpack.c.l.b16 %v1156
        %v1524 = vunpack.c.l.b16 %v1157
        %v1525 = vunpack.c.l.b16 %v1158
        %v1526 = vunpack.c.l.b16 %v1159
        %v1527 = vunpack.c.l.b16 %v1160
        %v1528 = vunpack.c.l.b16 %v1161
        %v1529 = vunpack.c.l.b16 %v1162
        %v1530 = vunpack.c.l.b16 %v1163
        %v1531 = vunpack.c.l.b16 %v1164
        %v1532 = vunpack.c.l.b16 %v1165
        %v1533 = vunpack.c.l.b16 %v1166
        %v1534 = vunpack.c.l.b16 %v1167
        %v1535 = vunpack.c.l.b16 %v1168
        %v1536 = vunpack.c.l.b16 %v1169
        %v1537 = vunpack.c.l.b16 %v1170
        %v1538 = vunpack.c.l.b16 %v1171
        %v1539 = vunpack.c.l.b16 %v1172
        %v1540 = vunpack.c.l.b16 %v1173
        %v1541 = vunpack.c.l.b16 %v1174
        %v1542 = vunpack.c.l.b16 %v1175
        %v1543 = vunpack.c.l.b16 %v1176
        %v1544 = vunpack.c.l.b16 %v1177
        %v1545 = vunpack.c.l.b16 %v1178
        %v1546 = vunpack.c.l.b16 %v1179
        %v1547 = vunpack.c.l.b16 %v1180
        %v1548 = vunpack.c.l.b16 %v1181
        %v1549 = vunpack.c.l.b16 %v1182
        %v1550 = vunpack.c.l.b16 %v1183
        %v1551 = vunpack.c.l.b16 %v1184
        %v1552 = vunpack.c.l.b16 %v1185
        %v1553 = vunpack.c.l.b16 %v1186
        %v1554 = vunpack.c.l.b16 %v1187
        %v1555 = vunpack.c.l.b16 %v1188
        %v1556 = vunpack.c.l.b16 %v1189
        %v1557 = vunpack.c.l.b16 %v1190
        %v1558 = vunpack.c.l.b16 %v1191
        %v1559 = vunpack.c.l.b16 %v1192
        %v1560 = vunpack.c.l.b16 %v1193
        %v1561 = vunpack.c.l.b16 %v1194
        %v1562 = vunpack.c.l.b16 %v1195
        %v1563 = vunpack.c.l.b16 %v1196
        %v1564 = vunpack.c.l.b16 %v1197
        %v1565 = vunpack.c.l.b16 %v1198
        %v1566 = vunpack.c.l.b16 %v1199
        %v1567 = vunpack.c.l.b16 %v1200
        %v1568 = vunpack.c.l.b16 %v1201
        %v1569 = vunpack.c.l.b16 %v1202
        %v1570 = vunpack.c.l.b16 %v1203
        %v1571 = vunpack.c.l.b16 %v1204
        %v1572 = vunpack.c.l.b16 %v1205
        %v1573 = vunpack.c.l.b16 %v1206
        %v1574 = vunpack.c.l.b16 %v1207
        %v1575 = vunpack.c.l.b16 %v1208
        %v1576 = vunpack.c.l.b16 %v1209
        %v1577 = vunpack.c.l.b16 %v1210
        %v1578 = vunpack.c.l.b16 %v1211
        %v1579 = vunpack.c.l.b16 %v1212
        %v1580 = vunpack.c.l.b16 %v1213
        %v1581 = vunpack.c.l.b16 %v1214
        %v1582 = vunpack.c.l.b16 %v1215
        %v1583 = vunpack.c.l.b16 %v1216
        %v1584 = vunpack.c.l.b16 %v1217
        %v1585 = vunpack.c.l.b16 %v1218
        %v1586 = vunpack.c.l.b16 %v1219
        %v1587 = vunpack.c.l.b16 %v1220
        %v1588 = vunpack.c.l.b16 %v1221
        %v1589 = vunpack.c.l.b16 %v1222
        %v1590 = vunpack.c.l.b16 %v1223
        %v1591 = vunpack.c.l.b16 %v1224
        %v1592 = vunpack.c.l.b16 %v1225
        %v1593 = vunpack.c.l.b16 %v1226
        %v1594 = vunpack.c.l.b16 %v1227
        %v1595 = vunpack.c.l.b16 %v1228
        %v1596 = vunpack.c.l.b16 %v1229
        %v1597 = vunpack.c.l.b16 %v1230
        %v1598 = vunpack.c.l.b16 %v1231
        %v1599 = vunpack.c.l.b16 %v1232
        %v1600 = vunpack.c.l.b16 %v1233
        %v1601 = vunpack.c.l.b16 %v1234
        %v1602 = vunpack.c.l.b16 %v1235
        %v1603 = vunpack.c.l.b16 %v1236
        %v1604 = vunpack.c.l.b16 %v1237
        %v1605 = vunpack.c.l.b16 %v1238
        %v1606 = vunpack.c.l.b16 %v1239
        %v1607 = vunpack.c.l.b16 %v1240
        %v1608 = vunpack.c.l.b16 %v1241
        %v1609 = vunpack.c.l.b16 %v1242
        %v1610 = vunpack.c.l.b16 %v1243
        %v1611 = vunpack.c.l.b16 %v1244
        %v1612 = vunpack.c.l.b16 %v1245
        %v1613 = vunpack.c.l.b16 %v1246
        %v1614 = vunpack.c.l.b16 %v1247
        %v1615 = vunpack.c.l.b16 %v1248
        %v1616 = vunpack.c.l.b16 %v1249
        %v1617 = vunpack.c.l.b16 %v1250
        %v1618 = vunpack.c.l.b16 %v1251
        %v1619 = vunpack.c.l.b16 %v1252
        %v1620 = vunpack.c.l.b16 %v1253
        %v1621 = vunpack.c.l.b16 %v1254
        %v1622 = vunpack.c.l.b16 %v1255
        %v1623 = vunpack.c.l.b16 %v1256
        %v1624 = vunpack.c.l.b16 %v1257
        %v1625 = vunpack.c.l.b16 %v1258
        %v1626 = vunpack.c.l.b16 %v1259
        %v1627 = vunpack.c.l.b16 %v1260
        %v1628 = vunpack.c.l.b16 %v1261
        %v1629 = vunpack.c.l.b16 %v1262
        %v1630 = vunpack.c.l.b16 %v1263
        %v1631 = vunpack.c.l.b16 %v1264
        %v1632 = vunpack.c.l.b16 %v1265
        %v1633 = vunpack.c.l.b16 %v1266
        %v1634 = vunpack.c.l.b16 %v1267
        %v1635 = vunpack.c.l.b16 %v1268
        %v1636 = vunpack.c.l.b16 %v1269
        %v1637 = vpack.c.b16 %v1494, %v1493
        %v1638 = vpack.c.b16 %v1496, %v1495
        %v1639 = vpack.c.b16 %v1498, %v1497
        %v1640 = vpack.c.b16 %v1500, %v1499
        %v1641 = vpack.c.b16 %v1502, %v1501
        %v1642 = vpack.c.b16 %v1504, %v1503
        %v1643 = vpack.c.b16 %v1506, %v1505
        %v1644 = vpack.c.b16 %v1508, %v1507
        %v1645 = vpack.c.b16 %v1510, %v1509
        %v1646 = vpack.c.b16 %v1512, %v1511
        %v1647 = vpack.c.b16 %v1514, %v1513
        %v1648 = vpack.c.b16 %v1516, %v1515
        %v1649 = vpack.c.b16 %v1518, %v1517
        %v1650 = vpack.c.b16 %v1520, %v1519
        %v1651 = vpack.c.b16 %v1522, %v1521
        %v1652 = vpack.c.b16 %v1524, %v1523
        %v1653 = vpack.c.b16 %v1526, %v1525
        %v1654 = vpack.c.b16 %v1528, %v1527
        %v1655 = vpack.c.b16 %v1530, %v1529
        %v1656 = vpack.c.b16 %v1532, %v1531
        %v1657 = vpack.c.b16 %v1534, %v1533
        %v1658 = vpack.c.b16 %v1536, %v1535
        %v1659 = vpack.c.b16 %v1538, %v1537
        %v1660 = vpack.c.b16 %v1540, %v1539
        %v1661 = vpack.c.b16 %v1542, %v1541
        %v1662 = vpack.c.b16 %v1544, %v1543
        %v1663 = vpack.c.b16 %v1546, %v1545
        %v1664 = vpack.c.b16 %v1548, %v1547
        %v1665 = vpack.c.b16 %v1550, %v1549
        %v1666 = vpack.c.b16 %v1552, %v1551
        %v1667 = vpack.c.b16 %v1554, %v1553
        %v1668 = vpack.c.b16 %v1556, %v1555
        %v1669 = vpack.c.b16 %v1558, %v1557
        %v1670 = vpack.c.b16 %v1560, %v1559
        %v1671 = vpack.c.b16 %v1562, %v1561
        %v1672 = vpack.c.b16 %v1564, %v1563
        %v1673 = vpack.c.b16 %v1566, %v1565
        %v1674 = vpack.c.b16 %v1568, %v1567
        %v1675 = vpack.c.b16 %v1570, %v1569
        %v1676 = vpack.c.b16 %v1572, %v1571
        %v1677 = vpack.c.b16 %v1574, %v1573
        %v1678 = vpack.c.b16 %v1576, %v1575
        %v1679 = vpack.c.b16 %v1578, %v1577
        %v1680 = vpack.c.b16 %v1580, %v1579
        %v1681 = vpack.c.b16 %v1582, %v1581
        %v1682 = vpack.c.b16 %v1584, %v1583
        %v1683 = vpack.c.b16 %v1586, %v1585
        %v1684 = vpack.c.b16 %v1588, %v1587
        %v1685 = vpack.c.b16 %v1590, %v1589
        %v1686 = vpack.c.b16 %v1592, %v1591
        %v1687 = vpack.c.b16 %v1594, %v1593
        %v1688 = vpack.c.b16 %v1596, %v1595
        %v1689 = vpack.c.b16 %v1598, %v1597
        %v1690 = vpack.c.b16 %v1600, %v1599
        %v1691 = vpack.c.b16 %v1602, %v1601
        %v1692 = vpack.c.b16 %v1604, %v1603
        %v1693 = vpack.c.b16 %v1606, %v1605
        %v1694 = vpack.c.b16 %v1608, %v1607
        %v1695 = vpack.c.b16 %v1610, %v1609
        %v1696 = vpack.c.b16 %v1612, %v1611
        %v1697 = vpack.c.b16 %v1614, %v1613
        %v1698 = vpack.c.b16 %v1616, %v1615
        %v1699 = vpack.c.b16 %v1618, %v1617
        %v1700 = vpack.c.b16 %v1620, %v1619
        %v1701 = vpack.c.b16 %v1622, %v1621
        %v1702 = vpack.c.b16 %v1624, %v1623
        %v1703 = vpack.c.b16 %v1626, %v1625
        %v1704 = vpack.c.b16 %v1628, %v1627
        %v1705 = vpack.c.b16 %v1630, %v1629
        %v1706 = vpack.c.b16 %v1632, %v1631
        %v1707 = vpack.c.b16 %v1634, %v1633
        %v1708 = vpack.c.b16 %v1636, %v1635
        %1781 = vmatprep.subr.bf16.mxu0 0
        %1782 = vmatpush1.bf16.msra.mxu0 %v1637
        %1783 = vmatprep.subr.bf16.mxu0 0
        %1784 = vmatpush1.bf16.msra.mxu0 %v1638
        %1785 = vmatprep.subr.bf16.mxu0 0
        %1786 = vmatpush1.bf16.msra.mxu0 %v1639
        %1787 = vmatprep.subr.bf16.mxu0 0
        %1788 = vmatpush1.bf16.msra.mxu0 %v1640
        %1789 = vmatprep.subr.bf16.mxu0 0
        %1790 = vmatpush1.bf16.msra.mxu0 %v1641
        %1791 = vmatprep.subr.bf16.mxu0 0
        %1792 = vmatpush1.bf16.msra.mxu0 %v1642
        %1793 = vmatprep.subr.bf16.mxu0 0
        %1794 = vmatpush1.bf16.msra.mxu0 %v1643
        %1795 = vmatprep.subr.bf16.mxu0 0
        %1796 = vmatpush1.bf16.msra.mxu0 %v1644
        %1797 = vmatprep.subr.bf16.mxu0 0
        %1798 = vmatpush1.bf16.msra.mxu0 %v1645
        %1799 = vmatprep.subr.bf16.mxu0 0
        %1800 = vmatpush1.bf16.msra.mxu0 %v1646
        %1801 = vmatprep.subr.bf16.mxu0 0
        %1802 = vmatpush1.bf16.msra.mxu0 %v1647
        %1803 = vmatprep.subr.bf16.mxu0 0
        %1804 = vmatpush1.bf16.msra.mxu0 %v1648
        %1805 = vmatprep.subr.bf16.mxu0 0
        %1806 = vmatpush1.bf16.msra.mxu0 %v1649
        %1807 = vmatprep.subr.bf16.mxu0 0
        %1808 = vmatpush1.bf16.msra.mxu0 %v1650
        %1809 = vmatprep.subr.bf16.mxu0 0
        %1810 = vmatpush1.bf16.msra.mxu0 %v1651
        %1811 = vmatprep.subr.bf16.mxu0 0
        %1812 = vmatpush1.bf16.msra.mxu0 %v1652
        %1813 = vmatprep.mubr.bf16.mxu0 %v1278
        %1814 = vmatmul.mubr.bf16.gmra.mrb[0].mxu0 %v1277
        %v1815 = vpop.f32.mrb[0].mxu0
        %v1816 = vadd.f32 %v1275, %v1815
        %v1817 = vpop.f32.mrb[0].mxu0
        %v1818 = vpop.f32.mrb[0].mxu0
        %v1819 = vadd.f32 %v1275, %v1818
        %v1820 = vpop.f32.mrb[0].mxu0
        %1821 = vmatprep.mubr.bf16.mxu0 %v1287
        %1822 = vmatmul.mubr.bf16.gmra.mrb[0].mxu0 %v1286
        %v1823 = vpop.f32.mrb[0].mxu0
        %v1824 = vadd.f32 %v1275, %v1823
        %v1825 = vpop.f32.mrb[0].mxu0
        %v1826 = vpop.f32.mrb[0].mxu0
        %v1827 = vadd.f32 %v1275, %v1826
        %v1828 = vpop.f32.mrb[0].mxu0
        %1829 = vmatprep.mubr.bf16.mxu0 %v1296
        %1830 = vmatmul.mubr.bf16.gmra.mrb[0].mxu0 %v1295
        %v1831 = vpop.f32.mrb[0].mxu0
        %v1832 = vadd.f32 %v1275, %v1831
        %v1833 = vpop.f32.mrb[0].mxu0
        %v1834 = vpop.f32.mrb[0].mxu0
        %v1835 = vadd.f32 %v1275, %v1834
        %v1836 = vpop.f32.mrb[0].mxu0
        %1837 = vmatprep.mubr.bf16.mxu0 %v1305
        %1838 = vmatmul.mubr.bf16.gmra.mrb[0].mxu0 %v1304
        %v1839 = vpop.f32.mrb[0].mxu0
        %v1840 = vadd.f32 %v1275, %v1839
        %v1841 = vpop.f32.mrb[0].mxu0
        %v1842 = vpop.f32.mrb[0].mxu0
        %v1843 = vadd.f32 %v1275, %v1842
        %v1844 = vpop.f32.mrb[0].mxu0
        %1845 = vdwg.mxu0
        %1846 = vmatprep.subr.bf16.mxu0 0
        %1847 = vmatpush1.bf16.msra.mxu0 %v1653
        %1848 = vmatprep.subr.bf16.mxu0 0
        %1849 = vmatpush1.bf16.msra.mxu0 %v1654
        %1850 = vmatprep.subr.bf16.mxu0 0
        %1851 = vmatpush1.bf16.msra.mxu0 %v1655
        %1852 = vmatprep.subr.bf16.mxu0 0
        %1853 = vmatpush1.bf16.msra.mxu0 %v1656
        %1854 = vmatprep.subr.bf16.mxu0 0
        %1855 = vmatpush1.bf16.msra.mxu0 %v1657
        %1856 = vmatprep.subr.bf16.mxu0 0
        %1857 = vmatpush1.bf16.msra.mxu0 %v1658
        %1858 = vmatprep.subr.bf16.mxu0 0
        %1859 = vmatpush1.bf16.msra.mxu0 %v1659
        %1860 = vmatprep.subr.bf16.mxu0 0
        %1861 = vmatpush1.bf16.msra.mxu0 %v1660
        %1862 = vmatprep.subr.bf16.mxu0 0
        %1863 = vmatpush1.bf16.msra.mxu0 %v1661
        %1864 = vmatprep.subr.bf16.mxu0 0
        %1865 = vmatpush1.bf16.msra.mxu0 %v1662
        %1866 = vmatprep.subr.bf16.mxu0 0
        %1867 = vmatpush1.bf16.msra.mxu0 %v1663
        %1868 = vmatprep.subr.bf16.mxu0 0
        %1869 = vmatpush1.bf16.msra.mxu0 %v1664
        %1870 = vmatprep.subr.bf16.mxu0 0
        %1871 = vmatpush1.bf16.msra.mxu0 %v1665
        %1872 = vmatprep.subr.bf16.mxu0 0
        %1873 = vmatpush1.bf16.msra.mxu0 %v1666
        %1874 = vmatprep.subr.bf16.mxu0 0
        %1875 = vmatpush1.bf16.msra.mxu0 %v1667
        %1876 = vmatprep.subr.bf16.mxu0 0
        %1877 = vmatpush1.bf16.msra.mxu0 %v1668
        %1878 = vmatprep.mubr.bf16.mxu0 %v1280
        %1879 = vmatmul.mubr.bf16.gmra.mrb[0].mxu0 %v1279
        %v1880 = vpop.f32.mrb[0].mxu0
        %v1881 = vadd.f32 %v1816, %v1880
        %v1882 = vpop.f32.mrb[0].mxu0
        %v1883 = vpop.f32.mrb[0].mxu0
        %v1884 = vadd.f32 %v1819, %v1883
        %v1885 = vpop.f32.mrb[0].mxu0
        %1886 = vmatprep.mubr.bf16.mxu0 %v1289
        %1887 = vmatmul.mubr.bf16.gmra.mrb[0].mxu0 %v1288
        %v1888 = vpop.f32.mrb[0].mxu0
        %v1889 = vadd.f32 %v1824, %v1888
        %v1890 = vpop.f32.mrb[0].mxu0
        %v1891 = vpop.f32.mrb[0].mxu0
        %v1892 = vadd.f32 %v1827, %v1891
        %v1893 = vpop.f32.mrb[0].mxu0
        %1894 = vmatprep.mubr.bf16.mxu0 %v1298
        %1895 = vmatmul.mubr.bf16.gmra.mrb[0].mxu0 %v1297
        %v1896 = vpop.f32.mrb[0].mxu0
        %v1897 = vadd.f32 %v1832, %v1896
        %v1898 = vpop.f32.mrb[0].mxu0
        %v1899 = vpop.f32.mrb[0].mxu0
        %v1900 = vadd.f32 %v1835, %v1899
        %v1901 = vpop.f32.mrb[0].mxu0
        %1902 = vmatprep.mubr.bf16.mxu0 %v1307
        %1903 = vmatmul.mubr.bf16.gmra.mrb[0].mxu0 %v1306
        %v1904 = vpop.f32.mrb[0].mxu0
        %v1905 = vadd.f32 %v1840, %v1904
        %v1906 = vpop.f32.mrb[0].mxu0
        %v1907 = vpop.f32.mrb[0].mxu0
        %v1908 = vadd.f32 %v1843, %v1907
        %v1909 = vpop.f32.mrb[0].mxu0
        %1910 = vdwg.mxu0
        %1911 = vmatprep.subr.bf16.mxu0 0
        %1912 = vmatpush1.bf16.msra.mxu0 %v1669
        %1913 = vmatprep.subr.bf16.mxu0 0
        %1914 = vmatpush1.bf16.msra.mxu0 %v1670
        %1915 = vmatprep.subr.bf16.mxu0 0
        %1916 = vmatpush1.bf16.msra.mxu0 %v1671
        %1917 = vmatprep.subr.bf16.mxu0 0
        %1918 = vmatpush1.bf16.msra.mxu0 %v1672
        %1919 = vmatprep.subr.bf16.mxu0 0
        %1920 = vmatpush1.bf16.msra.mxu0 %v1673
        %1921 = vmatprep.subr.bf16.mxu0 0
        %1922 = vmatpush1.bf16.msra.mxu0 %v1674
        %1923 = vmatprep.subr.bf16.mxu0 0
        %1924 = vmatpush1.bf16.msra.mxu0 %v1675
        %1925 = vmatprep.subr.bf16.mxu0 0
        %1926 = vmatpush1.bf16.msra.mxu0 %v1676
        %1927 = vmatprep.subr.bf16.mxu0 0
        %1928 = vmatpush1.bf16.msra.mxu0 %v1677
        %1929 = vmatprep.subr.bf16.mxu0 0
        %1930 = vmatpush1.bf16.msra.mxu0 %v1678
        %1931 = vmatprep.subr.bf16.mxu0 0
        %1932 = vmatpush1.bf16.msra.mxu0 %v1679
        %1933 = vmatprep.subr.bf16.mxu0 0
        %1934 = vmatpush1.bf16.msra.mxu0 %v1680
        %1935 = vmatprep.subr.bf16.mxu0 0
        %1936 = vmatpush1.bf16.msra.mxu0 %v1681
        %1937 = vmatprep.subr.bf16.mxu0 0
        %1938 = vmatpush1.bf16.msra.mxu0 %v1682
        %1939 = vmatprep.subr.bf16.mxu0 0
        %1940 = vmatpush1.bf16.msra.mxu0 %v1683
        %1941 = vmatprep.subr.bf16.mxu0 0
        %1942 = vmatpush1.bf16.msra.mxu0 %v1684
        %1943 = vmatprep.mubr.bf16.mxu0 %v1282
        %1944 = vmatmul.mubr.bf16.gmra.mrb[0].mxu0 %v1281
        %v1945 = vpop.f32.mrb[0].mxu0
        %v1946 = vadd.f32 %v1881, %v1945
        %v1947 = vpop.f32.mrb[0].mxu0
        %v1948 = vpop.f32.mrb[0].mxu0
        %v1949 = vadd.f32 %v1884, %v1948
        %v1950 = vpop.f32.mrb[0].mxu0
        %1951 = vmatprep.mubr.bf16.mxu0 %v1291
        %1952 = vmatmul.mubr.bf16.gmra.mrb[0].mxu0 %v1290
        %v1953 = vpop.f32.mrb[0].mxu0
        %v1954 = vadd.f32 %v1889, %v1953
        %v1955 = vpop.f32.mrb[0].mxu0
        %v1956 = vpop.f32.mrb[0].mxu0
        %v1957 = vadd.f32 %v1892, %v1956
        %v1958 = vpop.f32.mrb[0].mxu0
        %1959 = vmatprep.mubr.bf16.mxu0 %v1300
        %1960 = vmatmul.mubr.bf16.gmra.mrb[0].mxu0 %v1299
        %v1961 = vpop.f32.mrb[0].mxu0
        %v1962 = vadd.f32 %v1897, %v1961
        %v1963 = vpop.f32.mrb[0].mxu0
        %v1964 = vpop.f32.mrb[0].mxu0
        %v1965 = vadd.f32 %v1900, %v1964
        %v1966 = vpop.f32.mrb[0].mxu0
        %1967 = vmatprep.mubr.bf16.mxu0 %v1309
        %1968 = vmatmul.mubr.bf16.gmra.mrb[0].mxu0 %v1308
        %v1969 = vpop.f32.mrb[0].mxu0
        %v1970 = vadd.f32 %v1905, %v1969
        %v1971 = vpop.f32.mrb[0].mxu0
        %v1972 = vpop.f32.mrb[0].mxu0
        %v1973 = vadd.f32 %v1908, %v1972
        %v1974 = vpop.f32.mrb[0].mxu0
        %1975 = vdwg.mxu0
        %1976 = vmatprep.subr.bf16.mxu0 0
        %1977 = vmatpush1.bf16.msra.mxu0 %v1685
        %1978 = vmatprep.subr.bf16.mxu0 0
        %1979 = vmatpush1.bf16.msra.mxu0 %v1686
        %1980 = vmatprep.subr.bf16.mxu0 0
        %1981 = vmatpush1.bf16.msra.mxu0 %v1687
        %1982 = vmatprep.subr.bf16.mxu0 0
        %1983 = vmatpush1.bf16.msra.mxu0 %v1688
        %1984 = vmatprep.subr.bf16.mxu0 0
        %1985 = vmatpush1.bf16.msra.mxu0 %v1689
        %1986 = vmatprep.subr.bf16.mxu0 0
        %1987 = vmatpush1.bf16.msra.mxu0 %v1690
        %1988 = vmatprep.subr.bf16.mxu0 0
        %1989 = vmatpush1.bf16.msra.mxu0 %v1691
        %1990 = vmatprep.subr.bf16.mxu0 0
        %1991 = vmatpush1.bf16.msra.mxu0 %v1692
        %1992 = vmatprep.subr.bf16.mxu0 0
        %1993 = vmatpush1.bf16.msra.mxu0 %v1693
        %1994 = vmatprep.subr.bf16.mxu0 0
        %1995 = vmatpush1.bf16.msra.mxu0 %v1694
        %1996 = vmatprep.subr.bf16.mxu0 0
        %1997 = vmatpush1.bf16.msra.mxu0 %v1695
        %1998 = vmatprep.subr.bf16.mxu0 0
        %1999 = vmatpush1.bf16.msra.mxu0 %v1696
        %2000 = vmatprep.subr.bf16.mxu0 0
        %2001 = vmatpush1.bf16.msra.mxu0 %v1697
        %2002 = vmatprep.subr.bf16.mxu0 0
        %2003 = vmatpush1.bf16.msra.mxu0 %v1698
        %2004 = vmatprep.subr.bf16.mxu0 0
        %2005 = vmatpush1.bf16.msra.mxu0 %v1699
        %2006 = vmatprep.subr.bf16.mxu0 0
        %2007 = vmatpush1.bf16.msra.mxu0 %v1700
        %2008 = vmatprep.mubr.bf16.mxu0 %v1284
        %2009 = vmatmul.mubr.bf16.gmra.mrb[0].mxu0 %v1283
        %v2010 = vpop.f32.mrb[0].mxu0
        %v2011 = vadd.f32 %v1946, %v2010
        %v2012 = vpop.f32.mrb[0].mxu0
        %v2013 = vpop.f32.mrb[0].mxu0
        %v2014 = vadd.f32 %v1949, %v2013
        %v2015 = vpop.f32.mrb[0].mxu0
        %2016 = vmatprep.mubr.bf16.mxu0 %v1293
        %2017 = vmatmul.mubr.bf16.gmra.mrb[0].mxu0 %v1292
        %v2018 = vpop.f32.mrb[0].mxu0
        %v2019 = vadd.f32 %v1954, %v2018
        %v2020 = vpop.f32.mrb[0].mxu0
        %v2021 = vpop.f32.mrb[0].mxu0
        %v2022 = vadd.f32 %v1957, %v2021
        %v2023 = vpop.f32.mrb[0].mxu0
        %2024 = vmatprep.mubr.bf16.mxu0 %v1302
        %2025 = vmatmul.mubr.bf16.gmra.mrb[0].mxu0 %v1301
        %v2026 = vpop.f32.mrb[0].mxu0
        %v2027 = vadd.f32 %v1962, %v2026
        %v2028 = vpop.f32.mrb[0].mxu0
        %v2029 = vpop.f32.mrb[0].mxu0
        %v2030 = vadd.f32 %v1965, %v2029
        %v2031 = vpop.f32.mrb[0].mxu0
        %2032 = vmatprep.mubr.bf16.mxu0 %v1311
        %2033 = vmatmul.mubr.bf16.gmra.mrb[0].mxu0 %v1310
        %v2034 = vpop.f32.mrb[0].mxu0
        %v2035 = vadd.f32 %v1970, %v2034
        %v2036 = vpop.f32.mrb[0].mxu0
        %v2037 = vpop.f32.mrb[0].mxu0
        %v2038 = vadd.f32 %v1973, %v2037
        %v2039 = vpop.f32.mrb[0].mxu0
        %2040 = vdwg.mxu0
        %2041 = vmatprep.subr.bf16.mxu0 0
        %2042 = vmatpush1.bf16.msra.mxu0 %v1701
        %2043 = vmatprep.subr.bf16.mxu0 0
        %2044 = vmatpush1.bf16.msra.mxu0 %v1702
        %2045 = vmatprep.subr.bf16.mxu0 0
        %2046 = vmatpush1.bf16.msra.mxu0 %v1703
        %2047 = vmatprep.subr.bf16.mxu0 0
        %2048 = vmatpush1.bf16.msra.mxu0 %v1704
        %2049 = vmatprep.subr.bf16.mxu0 0
        %2050 = vmatpush1.bf16.msra.mxu0 %v1705
        %2051 = vmatprep.subr.bf16.mxu0 0
        %2052 = vmatpush1.bf16.msra.mxu0 %v1706
        %2053 = vmatprep.subr.bf16.mxu0 0
        %2054 = vmatpush1.bf16.msra.mxu0 %v1707
        %2055 = vmatprep.subr.bf16.mxu0 0
        %2056 = vmatpush1.bf16.msra.mxu0 %v1708
        %2057 = vmatprep.subr.bf16.mxu0 0
        %2058 = vmatpush1.bf16.msra.mxu0 0
        %2059 = vmatprep.subr.bf16.mxu0 0
        %2060 = vmatpush1.bf16.msra.mxu0 0
        %2061 = vmatprep.subr.bf16.mxu0 0
        %2062 = vmatpush1.bf16.msra.mxu0 0
        %2063 = vmatprep.subr.bf16.mxu0 0
        %2064 = vmatpush1.bf16.msra.mxu0 0
        %2065 = vmatprep.subr.bf16.mxu0 0
        %2066 = vmatpush1.bf16.msra.mxu0 0
        %2067 = vmatprep.subr.bf16.mxu0 0
        %2068 = vmatpush1.bf16.msra.mxu0 0
        %2069 = vmatprep.subr.bf16.mxu0 0
        %2070 = vmatpush1.bf16.msra.mxu0 0
        %2071 = vmatprep.subr.bf16.mxu0 0
        %2072 = vmatpush1.bf16.msra.mxu0 0
        %2073 = vmatprep.mubr.bf16.mxu0 0
        %2074 = vmatmul.mubr.bf16.gmra.mrb[0].mxu0 %v1285
        %v2075 = vpop.f32.mrb[0].mxu0
        %v2076 = vadd.f32 %v2011, %v2075
        %v2077 = vpop.f32.mrb[0].mxu0
        %v2078 = vpop.f32.mrb[0].mxu0
        %v2079 = vadd.f32 %v2014, %v2078
        %v2080 = vpop.f32.mrb[0].mxu0
        %2081 = vmatprep.mubr.bf16.mxu0 0
        %2082 = vmatmul.mubr.bf16.gmra.mrb[0].mxu0 %v1294
        %v2083 = vpop.f32.mrb[0].mxu0
        %v2084 = vadd.f32 %v2019, %v2083
        %v2085 = vpop.f32.mrb[0].mxu0
        %v2086 = vpop.f32.mrb[0].mxu0
        %v2087 = vadd.f32 %v2022, %v2086
        %v2088 = vpop.f32.mrb[0].mxu0
        %2089 = vmatprep.mubr.bf16.mxu0 0
        %2090 = vmatmul.mubr.bf16.gmra.mrb[0].mxu0 %v1303
        %v2091 = vpop.f32.mrb[0].mxu0
        %v2092 = vadd.f32 %v2027, %v2091
        %v2093 = vpop.f32.mrb[0].mxu0
        %v2094 = vpop.f32.mrb[0].mxu0
        %v2095 = vadd.f32 %v2030, %v2094
        %v2096 = vpop.f32.mrb[0].mxu0
        %2097 = vmatprep.mubr.bf16.mxu0 0
        %2098 = vmatmul.mubr.bf16.gmra.mrb[0].mxu0 %v1312
        %v2099 = vpop.f32.mrb[0].mxu0
        %v2100 = vadd.f32 %v2035, %v2099
        %v2101 = vpop.f32.mrb[0].mxu0
        %v2102 = vpop.f32.mrb[0].mxu0
        %v2103 = vadd.f32 %v2038, %v2102
        %v2104 = vpop.f32.mrb[0].mxu0
        %2105 = vdwg.mxu0
        %v2106 = vmax.f32 %v2076, 0.0
        %v2107 = vmax.f32 %v2079, 0.0
        %v2108 = vmax.f32 %v2084, 0.0
        %v2109 = vmax.f32 %v2087, 0.0
        %v2110 = vmax.f32 %v2092, 0.0
        %v2111 = vmax.f32 %v2095, 0.0
        %v2112 = vmax.f32 %v2100, 0.0
        %v2113 = vmax.f32 %v2103, 0.0
        %2114 = vst [vmem:[#allocation3] sm:$0xff] 0.0
        %2115 = vst [vmem:[#allocation3 + $0x8] sm:$0xf] 0.0
        %2116 = vst [vmem:[#allocation3 + $0x10] sm:$0xff] 0.0
        %2117 = vst [vmem:[#allocation3 + $0x18] sm:$0xf] 0.0
        %2118 = vst [vmem:[#allocation3 + $0x20] sm:$0xff] 0.0
        %2119 = vst [vmem:[#allocation3 + $0x28] sm:$0xf] 0.0
        %2120 = vst [vmem:[#allocation3 + $0x30] sm:$0xff] 0.0
        %2121 = vst [vmem:[#allocation3 + $0x38] sm:$0xf] 0.0
        %2122 = vst [vmem:[#allocation3 + $0x40] sm:$0xff] 0.0
        %2123 = vst [vmem:[#allocation3 + $0x48] sm:$0xf] 0.0
        %2124 = vst [vmem:[#allocation3 + $0x50] sm:$0xff] 0.0
        %2125 = vst [vmem:[#allocation3 + $0x58] sm:$0xf] 0.0
        %2126 = vst [vmem:[#allocation3 + $0x60] sm:$0xff] 0.0
        %2127 = vst [vmem:[#allocation3 + $0x68] sm:$0xf] 0.0
        %2128 = vst [vmem:[#allocation3 + $0x70] sm:$0xff] 0.0
        %2129 = vst [vmem:[#allocation3 + $0x78] sm:$0xf] 0.0
        %2130 = vst [vmem:[#allocation3 + $0x80] sm:$0xff] 0.0
        %2131 = vst [vmem:[#allocation3 + $0x88] sm:$0xf] 0.0
        %2132 = vst [vmem:[#allocation3 + $0x90] sm:$0xff] 0.0
        %2133 = vst [vmem:[#allocation3 + $0x98] sm:$0xf] 0.0
        %2134 = vst [vmem:[#allocation3 + $0xa0] sm:$0xff] 0.0
        %2135 = vst [vmem:[#allocation3 + $0xa8] sm:$0xf] 0.0
        %2136 = vst [vmem:[#allocation3 + $0xb0] sm:$0xff] 0.0
        %2137 = vst [vmem:[#allocation3 + $0xb8] sm:$0xf] 0.0
        %s2138 = scalar_lea.vmem [#allocation3], 32
        %2139 = vst [vmem:[%s2138 + $0x2] sm:$0xff] %v785
        %2140 = vst [vmem:[%s2138 + $0x12] sm:$0xff] %v788
        %2141 = vst [vmem:[%s2138 + $0x22] sm:$0xff] %v791
        %2142 = vst [vmem:[%s2138 + $0x32] sm:$0xff] %v794
        %2143 = vst [vmem:[%s2138 + $0x42] sm:$0xff] %v797
        %2144 = vst [vmem:[%s2138 + $0x52] sm:$0xff] %v800
        %2145 = vst [vmem:[%s2138 + $0x62] sm:$0xff] %v803
        %2146 = vst [vmem:[%s2138 + $0x72] sm:$0xff] %v806
        %v2147 = vld [vmem:[#allocation3] sm:$0xff]
        %v2148 = vld [vmem:[#allocation3 + $0x10] sm:$0xff]
        %v2149 = vld [vmem:[#allocation3 + $0x20] sm:$0xff]
        %v2150 = vld [vmem:[#allocation3 + $0x30] sm:$0xff]
        %v2151 = vld [vmem:[#allocation3 + $0x40] sm:$0xff]
        %v2152 = vld [vmem:[#allocation3 + $0x50] sm:$0xff]
        %v2153 = vld [vmem:[#allocation3 + $0x60] sm:$0xff]
        %v2154 = vld [vmem:[#allocation3 + $0x70] sm:$0xff]
        %v2155 = vpack.c.bf16 %v2147, %v2147
        %v2156 = vpack.c.bf16 %v2148, %v2148
        %v2157 = vpack.c.bf16 %v2149, %v2149
        %v2158 = vpack.c.bf16 %v2150, %v2150
        %v2159 = vpack.c.bf16 %v2151, %v2151
        %v2160 = vpack.c.bf16 %v2152, %v2152
        %v2161 = vpack.c.bf16 %v2153, %v2153
        %v2162 = vpack.c.bf16 %v2154, %v2154
        %v2163 = vld [vmem:[#allocation3 + $0x1] sm:$0xff]
        %v2164 = vld [vmem:[#allocation3 + $0x11] sm:$0xff]
        %v2165 = vld [vmem:[#allocation3 + $0x21] sm:$0xff]
        %v2166 = vld [vmem:[#allocation3 + $0x31] sm:$0xff]
        %v2167 = vld [vmem:[#allocation3 + $0x41] sm:$0xff]
        %v2168 = vld [vmem:[#allocation3 + $0x51] sm:$0xff]
        %v2169 = vld [vmem:[#allocation3 + $0x61] sm:$0xff]
        %v2170 = vld [vmem:[#allocation3 + $0x71] sm:$0xff]
        %v2171 = vpack.c.bf16 %v2163, %v2163
        %v2172 = vpack.c.bf16 %v2164, %v2164
        %v2173 = vpack.c.bf16 %v2165, %v2165
        %v2174 = vpack.c.bf16 %v2166, %v2166
        %v2175 = vpack.c.bf16 %v2167, %v2167
        %v2176 = vpack.c.bf16 %v2168, %v2168
        %v2177 = vpack.c.bf16 %v2169, %v2169
        %v2178 = vpack.c.bf16 %v2170, %v2170
        %v2179 = vld [vmem:[#allocation3 + $0x2] sm:$0xff]
        %v2180 = vld [vmem:[#allocation3 + $0x12] sm:$0xff]
        %v2181 = vld [vmem:[#allocation3 + $0x22] sm:$0xff]
        %v2182 = vld [vmem:[#allocation3 + $0x32] sm:$0xff]
        %v2183 = vld [vmem:[#allocation3 + $0x42] sm:$0xff]
        %v2184 = vld [vmem:[#allocation3 + $0x52] sm:$0xff]
        %v2185 = vld [vmem:[#allocation3 + $0x62] sm:$0xff]
        %v2186 = vld [vmem:[#allocation3 + $0x72] sm:$0xff]
        %v2187 = vpack.c.bf16 %v2179, %v2179
        %v2188 = vpack.c.bf16 %v2180, %v2180
        %v2189 = vpack.c.bf16 %v2181, %v2181
        %v2190 = vpack.c.bf16 %v2182, %v2182
        %v2191 = vpack.c.bf16 %v2183, %v2183
        %v2192 = vpack.c.bf16 %v2184, %v2184
        %v2193 = vpack.c.bf16 %v2185, %v2185
        %v2194 = vpack.c.bf16 %v2186, %v2186
        %v2195 = vld [vmem:[#allocation3 + $0x3] sm:$0xff]
        %v2196 = vld [vmem:[#allocation3 + $0x13] sm:$0xff]
        %v2197 = vld [vmem:[#allocation3 + $0x23] sm:$0xff]
        %v2198 = vld [vmem:[#allocation3 + $0x33] sm:$0xff]
        %v2199 = vld [vmem:[#allocation3 + $0x43] sm:$0xff]
        %v2200 = vld [vmem:[#allocation3 + $0x53] sm:$0xff]
        %v2201 = vld [vmem:[#allocation3 + $0x63] sm:$0xff]
        %v2202 = vld [vmem:[#allocation3 + $0x73] sm:$0xff]
        %v2203 = vpack.c.bf16 %v2195, %v2195
        %v2204 = vpack.c.bf16 %v2196, %v2196
        %v2205 = vpack.c.bf16 %v2197, %v2197
        %v2206 = vpack.c.bf16 %v2198, %v2198
        %v2207 = vpack.c.bf16 %v2199, %v2199
        %v2208 = vpack.c.bf16 %v2200, %v2200
        %v2209 = vpack.c.bf16 %v2201, %v2201
        %v2210 = vpack.c.bf16 %v2202, %v2202
        %v2211 = vld [vmem:[#allocation3 + $0x4] sm:$0xff]
        %v2212 = vld [vmem:[#allocation3 + $0x14] sm:$0xff]
        %v2213 = vld [vmem:[#allocation3 + $0x24] sm:$0xff]
        %v2214 = vld [vmem:[#allocation3 + $0x34] sm:$0xff]
        %v2215 = vld [vmem:[#allocation3 + $0x44] sm:$0xff]
        %v2216 = vld [vmem:[#allocation3 + $0x54] sm:$0xff]
        %v2217 = vld [vmem:[#allocation3 + $0x64] sm:$0xff]
        %v2218 = vld [vmem:[#allocation3 + $0x74] sm:$0xff]
        %v2219 = vpack.c.bf16 %v2211, %v2211
        %v2220 = vpack.c.bf16 %v2212, %v2212
        %v2221 = vpack.c.bf16 %v2213, %v2213
        %v2222 = vpack.c.bf16 %v2214, %v2214
        %v2223 = vpack.c.bf16 %v2215, %v2215
        %v2224 = vpack.c.bf16 %v2216, %v2216
        %v2225 = vpack.c.bf16 %v2217, %v2217
        %v2226 = vpack.c.bf16 %v2218, %v2218
        %s2227 = scalar_lea.vmem [#allocation3], 16
        %v2228 = vld [vmem:[%s2227] sm:$0xff]
        %v2229 = vld [vmem:[%s2227 + $0x10] sm:$0xff]
        %v2230 = vld [vmem:[%s2227 + $0x20] sm:$0xff]
        %v2231 = vld [vmem:[%s2227 + $0x30] sm:$0xff]
        %v2232 = vld [vmem:[%s2227 + $0x40] sm:$0xff]
        %v2233 = vld [vmem:[%s2227 + $0x50] sm:$0xff]
        %v2234 = vld [vmem:[%s2227 + $0x60] sm:$0xff]
        %v2235 = vld [vmem:[%s2227 + $0x70] sm:$0xff]
        %v2236 = vpack.c.bf16 %v2228, %v2228
        %v2237 = vpack.c.bf16 %v2229, %v2229
        %v2238 = vpack.c.bf16 %v2230, %v2230
        %v2239 = vpack.c.bf16 %v2231, %v2231
        %v2240 = vpack.c.bf16 %v2232, %v2232
        %v2241 = vpack.c.bf16 %v2233, %v2233
        %v2242 = vpack.c.bf16 %v2234, %v2234
        %v2243 = vpack.c.bf16 %v2235, %v2235
        %v2244 = vld [vmem:[%s2227 + $0x1] sm:$0xff]
        %v2245 = vld [vmem:[%s2227 + $0x11] sm:$0xff]
        %v2246 = vld [vmem:[%s2227 + $0x21] sm:$0xff]
        %v2247 = vld [vmem:[%s2227 + $0x31] sm:$0xff]
        %v2248 = vld [vmem:[%s2227 + $0x41] sm:$0xff]
        %v2249 = vld [vmem:[%s2227 + $0x51] sm:$0xff]
        %v2250 = vld [vmem:[%s2227 + $0x61] sm:$0xff]
        %v2251 = vld [vmem:[%s2227 + $0x71] sm:$0xff]
        %v2252 = vpack.c.bf16 %v2244, %v2244
        %v2253 = vpack.c.bf16 %v2245, %v2245
        %v2254 = vpack.c.bf16 %v2246, %v2246
        %v2255 = vpack.c.bf16 %v2247, %v2247
        %v2256 = vpack.c.bf16 %v2248, %v2248
        %v2257 = vpack.c.bf16 %v2249, %v2249
        %v2258 = vpack.c.bf16 %v2250, %v2250
        %v2259 = vpack.c.bf16 %v2251, %v2251
        %v2260 = vld [vmem:[%s2227 + $0x2] sm:$0xff]
        %v2261 = vld [vmem:[%s2227 + $0x12] sm:$0xff]
        %v2262 = vld [vmem:[%s2227 + $0x22] sm:$0xff]
        %v2263 = vld [vmem:[%s2227 + $0x32] sm:$0xff]
        %v2264 = vld [vmem:[%s2227 + $0x42] sm:$0xff]
        %v2265 = vld [vmem:[%s2227 + $0x52] sm:$0xff]
        %v2266 = vld [vmem:[%s2227 + $0x62] sm:$0xff]
        %v2267 = vld [vmem:[%s2227 + $0x72] sm:$0xff]
        %v2268 = vpack.c.bf16 %v2260, %v2260
        %v2269 = vpack.c.bf16 %v2261, %v2261
        %v2270 = vpack.c.bf16 %v2262, %v2262
        %v2271 = vpack.c.bf16 %v2263, %v2263
        %v2272 = vpack.c.bf16 %v2264, %v2264
        %v2273 = vpack.c.bf16 %v2265, %v2265
        %v2274 = vpack.c.bf16 %v2266, %v2266
        %v2275 = vpack.c.bf16 %v2267, %v2267
        %v2276 = vld [vmem:[%s2227 + $0x3] sm:$0xff]
        %v2277 = vld [vmem:[%s2227 + $0x13] sm:$0xff]
        %v2278 = vld [vmem:[%s2227 + $0x23] sm:$0xff]
        %v2279 = vld [vmem:[%s2227 + $0x33] sm:$0xff]
        %v2280 = vld [vmem:[%s2227 + $0x43] sm:$0xff]
        %v2281 = vld [vmem:[%s2227 + $0x53] sm:$0xff]
        %v2282 = vld [vmem:[%s2227 + $0x63] sm:$0xff]
        %v2283 = vld [vmem:[%s2227 + $0x73] sm:$0xff]
        %v2284 = vpack.c.bf16 %v2276, %v2276
        %v2285 = vpack.c.bf16 %v2277, %v2277
        %v2286 = vpack.c.bf16 %v2278, %v2278
        %v2287 = vpack.c.bf16 %v2279, %v2279
        %v2288 = vpack.c.bf16 %v2280, %v2280
        %v2289 = vpack.c.bf16 %v2281, %v2281
        %v2290 = vpack.c.bf16 %v2282, %v2282
        %v2291 = vpack.c.bf16 %v2283, %v2283
        %v2292 = vld [vmem:[%s2227 + $0x4] sm:$0xff]
        %v2293 = vld [vmem:[%s2227 + $0x14] sm:$0xff]
        %v2294 = vld [vmem:[%s2227 + $0x24] sm:$0xff]
        %v2295 = vld [vmem:[%s2227 + $0x34] sm:$0xff]
        %v2296 = vld [vmem:[%s2227 + $0x44] sm:$0xff]
        %v2297 = vld [vmem:[%s2227 + $0x54] sm:$0xff]
        %v2298 = vld [vmem:[%s2227 + $0x64] sm:$0xff]
        %v2299 = vld [vmem:[%s2227 + $0x74] sm:$0xff]
        %v2300 = vpack.c.bf16 %v2292, %v2292
        %v2301 = vpack.c.bf16 %v2293, %v2293
        %v2302 = vpack.c.bf16 %v2294, %v2294
        %v2303 = vpack.c.bf16 %v2295, %v2295
        %v2304 = vpack.c.bf16 %v2296, %v2296
        %v2305 = vpack.c.bf16 %v2297, %v2297
        %v2306 = vpack.c.bf16 %v2298, %v2298
        %v2307 = vpack.c.bf16 %v2299, %v2299
        %v2308 = vld [vmem:[%s2138] sm:$0xff]
        %v2309 = vld [vmem:[%s2138 + $0x10] sm:$0xff]
        %v2310 = vld [vmem:[%s2138 + $0x20] sm:$0xff]
        %v2311 = vld [vmem:[%s2138 + $0x30] sm:$0xff]
        %v2312 = vld [vmem:[%s2138 + $0x40] sm:$0xff]
        %v2313 = vld [vmem:[%s2138 + $0x50] sm:$0xff]
        %v2314 = vld [vmem:[%s2138 + $0x60] sm:$0xff]
        %v2315 = vld [vmem:[%s2138 + $0x70] sm:$0xff]
        %v2316 = vpack.c.bf16 %v2308, %v2308
        %v2317 = vpack.c.bf16 %v2309, %v2309
        %v2318 = vpack.c.bf16 %v2310, %v2310
        %v2319 = vpack.c.bf16 %v2311, %v2311
        %v2320 = vpack.c.bf16 %v2312, %v2312
        %v2321 = vpack.c.bf16 %v2313, %v2313
        %v2322 = vpack.c.bf16 %v2314, %v2314
        %v2323 = vpack.c.bf16 %v2315, %v2315
        %v2324 = vld [vmem:[%s2138 + $0x1] sm:$0xff]
        %v2325 = vld [vmem:[%s2138 + $0x11] sm:$0xff]
        %v2326 = vld [vmem:[%s2138 + $0x21] sm:$0xff]
        %v2327 = vld [vmem:[%s2138 + $0x31] sm:$0xff]
        %v2328 = vld [vmem:[%s2138 + $0x41] sm:$0xff]
        %v2329 = vld [vmem:[%s2138 + $0x51] sm:$0xff]
        %v2330 = vld [vmem:[%s2138 + $0x61] sm:$0xff]
        %v2331 = vld [vmem:[%s2138 + $0x71] sm:$0xff]
        %v2332 = vpack.c.bf16 %v2324, %v2324
        %v2333 = vpack.c.bf16 %v2325, %v2325
        %v2334 = vpack.c.bf16 %v2326, %v2326
        %v2335 = vpack.c.bf16 %v2327, %v2327
        %v2336 = vpack.c.bf16 %v2328, %v2328
        %v2337 = vpack.c.bf16 %v2329, %v2329
        %v2338 = vpack.c.bf16 %v2330, %v2330
        %v2339 = vpack.c.bf16 %v2331, %v2331
        %v2340 = vld [vmem:[%s2138 + $0x2] sm:$0xff]
        %v2341 = vld [vmem:[%s2138 + $0x12] sm:$0xff]
        %v2342 = vld [vmem:[%s2138 + $0x22] sm:$0xff]
        %v2343 = vld [vmem:[%s2138 + $0x32] sm:$0xff]
        %v2344 = vld [vmem:[%s2138 + $0x42] sm:$0xff]
        %v2345 = vld [vmem:[%s2138 + $0x52] sm:$0xff]
        %v2346 = vld [vmem:[%s2138 + $0x62] sm:$0xff]
        %v2347 = vld [vmem:[%s2138 + $0x72] sm:$0xff]
        %v2348 = vpack.c.bf16 %v2340, %v2340
        %v2349 = vpack.c.bf16 %v2341, %v2341
        %v2350 = vpack.c.bf16 %v2342, %v2342
        %v2351 = vpack.c.bf16 %v2343, %v2343
        %v2352 = vpack.c.bf16 %v2344, %v2344
        %v2353 = vpack.c.bf16 %v2345, %v2345
        %v2354 = vpack.c.bf16 %v2346, %v2346
        %v2355 = vpack.c.bf16 %v2347, %v2347
        %v2356 = vld [vmem:[%s2138 + $0x3] sm:$0xff]
        %v2357 = vld [vmem:[%s2138 + $0x13] sm:$0xff]
        %v2358 = vld [vmem:[%s2138 + $0x23] sm:$0xff]
        %v2359 = vld [vmem:[%s2138 + $0x33] sm:$0xff]
        %v2360 = vld [vmem:[%s2138 + $0x43] sm:$0xff]
        %v2361 = vld [vmem:[%s2138 + $0x53] sm:$0xff]
        %v2362 = vld [vmem:[%s2138 + $0x63] sm:$0xff]
        %v2363 = vld [vmem:[%s2138 + $0x73] sm:$0xff]
        %v2364 = vpack.c.bf16 %v2356, %v2356
        %v2365 = vpack.c.bf16 %v2357, %v2357
        %v2366 = vpack.c.bf16 %v2358, %v2358
        %v2367 = vpack.c.bf16 %v2359, %v2359
        %v2368 = vpack.c.bf16 %v2360, %v2360
        %v2369 = vpack.c.bf16 %v2361, %v2361
        %v2370 = vpack.c.bf16 %v2362, %v2362
        %v2371 = vpack.c.bf16 %v2363, %v2363
        %v2372 = vld [vmem:[%s2138 + $0x4] sm:$0xff]
        %v2373 = vld [vmem:[%s2138 + $0x14] sm:$0xff]
        %v2374 = vld [vmem:[%s2138 + $0x24] sm:$0xff]
        %v2375 = vld [vmem:[%s2138 + $0x34] sm:$0xff]
        %v2376 = vld [vmem:[%s2138 + $0x44] sm:$0xff]
        %v2377 = vld [vmem:[%s2138 + $0x54] sm:$0xff]
        %v2378 = vld [vmem:[%s2138 + $0x64] sm:$0xff]
        %v2379 = vld [vmem:[%s2138 + $0x74] sm:$0xff]
        %v2380 = vpack.c.bf16 %v2372, %v2372
        %v2381 = vpack.c.bf16 %v2373, %v2373
        %v2382 = vpack.c.bf16 %v2374, %v2374
        %v2383 = vpack.c.bf16 %v2375, %v2375
        %v2384 = vpack.c.bf16 %v2376, %v2376
        %v2385 = vpack.c.bf16 %v2377, %v2377
        %v2386 = vpack.c.bf16 %v2378, %v2378
        %v2387 = vpack.c.bf16 %v2379, %v2379
        %s2388 = scalar_lea.vmem [#allocation3], 48
        %v2389 = vld [vmem:[%s2388] sm:$0xff]
        %v2390 = vld [vmem:[%s2388 + $0x10] sm:$0xff]
        %v2391 = vld [vmem:[%s2388 + $0x20] sm:$0xff]
        %v2392 = vld [vmem:[%s2388 + $0x30] sm:$0xff]
        %v2393 = vld [vmem:[%s2388 + $0x40] sm:$0xff]
        %v2394 = vld [vmem:[%s2388 + $0x50] sm:$0xff]
        %v2395 = vld [vmem:[%s2388 + $0x60] sm:$0xff]
        %v2396 = vld [vmem:[%s2388 + $0x70] sm:$0xff]
        %v2397 = vpack.c.bf16 %v2389, %v2389
        %v2398 = vpack.c.bf16 %v2390, %v2390
        %v2399 = vpack.c.bf16 %v2391, %v2391
        %v2400 = vpack.c.bf16 %v2392, %v2392
        %v2401 = vpack.c.bf16 %v2393, %v2393
        %v2402 = vpack.c.bf16 %v2394, %v2394
        %v2403 = vpack.c.bf16 %v2395, %v2395
        %v2404 = vpack.c.bf16 %v2396, %v2396
        %v2405 = vld [vmem:[%s2388 + $0x1] sm:$0xff]
        %v2406 = vld [vmem:[%s2388 + $0x11] sm:$0xff]
        %v2407 = vld [vmem:[%s2388 + $0x21] sm:$0xff]
        %v2408 = vld [vmem:[%s2388 + $0x31] sm:$0xff]
        %v2409 = vld [vmem:[%s2388 + $0x41] sm:$0xff]
        %v2410 = vld [vmem:[%s2388 + $0x51] sm:$0xff]
        %v2411 = vld [vmem:[%s2388 + $0x61] sm:$0xff]
        %v2412 = vld [vmem:[%s2388 + $0x71] sm:$0xff]
        %v2413 = vpack.c.bf16 %v2405, %v2405
        %v2414 = vpack.c.bf16 %v2406, %v2406
        %v2415 = vpack.c.bf16 %v2407, %v2407
        %v2416 = vpack.c.bf16 %v2408, %v2408
        %v2417 = vpack.c.bf16 %v2409, %v2409
        %v2418 = vpack.c.bf16 %v2410, %v2410
        %v2419 = vpack.c.bf16 %v2411, %v2411
        %v2420 = vpack.c.bf16 %v2412, %v2412
        %v2421 = vld [vmem:[%s2388 + $0x2] sm:$0xff]
        %v2422 = vld [vmem:[%s2388 + $0x12] sm:$0xff]
        %v2423 = vld [vmem:[%s2388 + $0x22] sm:$0xff]
        %v2424 = vld [vmem:[%s2388 + $0x32] sm:$0xff]
        %v2425 = vld [vmem:[%s2388 + $0x42] sm:$0xff]
        %v2426 = vld [vmem:[%s2388 + $0x52] sm:$0xff]
        %v2427 = vld [vmem:[%s2388 + $0x62] sm:$0xff]
        %v2428 = vld [vmem:[%s2388 + $0x72] sm:$0xff]
        %v2429 = vpack.c.bf16 %v2421, %v2421
        %v2430 = vpack.c.bf16 %v2422, %v2422
        %v2431 = vpack.c.bf16 %v2423, %v2423
        %v2432 = vpack.c.bf16 %v2424, %v2424
        %v2433 = vpack.c.bf16 %v2425, %v2425
        %v2434 = vpack.c.bf16 %v2426, %v2426
        %v2435 = vpack.c.bf16 %v2427, %v2427
        %v2436 = vpack.c.bf16 %v2428, %v2428
        %v2437 = vld [vmem:[%s2388 + $0x3] sm:$0xff]
        %v2438 = vld [vmem:[%s2388 + $0x13] sm:$0xff]
        %v2439 = vld [vmem:[%s2388 + $0x23] sm:$0xff]
        %v2440 = vld [vmem:[%s2388 + $0x33] sm:$0xff]
        %v2441 = vld [vmem:[%s2388 + $0x43] sm:$0xff]
        %v2442 = vld [vmem:[%s2388 + $0x53] sm:$0xff]
        %v2443 = vld [vmem:[%s2388 + $0x63] sm:$0xff]
        %v2444 = vld [vmem:[%s2388 + $0x73] sm:$0xff]
        %v2445 = vpack.c.bf16 %v2437, %v2437
        %v2446 = vpack.c.bf16 %v2438, %v2438
        %v2447 = vpack.c.bf16 %v2439, %v2439
        %v2448 = vpack.c.bf16 %v2440, %v2440
        %v2449 = vpack.c.bf16 %v2441, %v2441
        %v2450 = vpack.c.bf16 %v2442, %v2442
        %v2451 = vpack.c.bf16 %v2443, %v2443
        %v2452 = vpack.c.bf16 %v2444, %v2444
        %v2453 = vld [vmem:[%s2388 + $0x4] sm:$0xff]
        %v2454 = vld [vmem:[%s2388 + $0x14] sm:$0xff]
        %v2455 = vld [vmem:[%s2388 + $0x24] sm:$0xff]
        %v2456 = vld [vmem:[%s2388 + $0x34] sm:$0xff]
        %v2457 = vld [vmem:[%s2388 + $0x44] sm:$0xff]
        %v2458 = vld [vmem:[%s2388 + $0x54] sm:$0xff]
        %v2459 = vld [vmem:[%s2388 + $0x64] sm:$0xff]
        %v2460 = vld [vmem:[%s2388 + $0x74] sm:$0xff]
        %v2461 = vpack.c.bf16 %v2453, %v2453
        %v2462 = vpack.c.bf16 %v2454, %v2454
        %v2463 = vpack.c.bf16 %v2455, %v2455
        %v2464 = vpack.c.bf16 %v2456, %v2456
        %v2465 = vpack.c.bf16 %v2457, %v2457
        %v2466 = vpack.c.bf16 %v2458, %v2458
        %v2467 = vpack.c.bf16 %v2459, %v2459
        %v2468 = vpack.c.bf16 %v2460, %v2460
        %s2469 = scalar_lea.vmem [#allocation3], 64
        %v2470 = vld [vmem:[%s2469] sm:$0xff]
        %v2471 = vld [vmem:[%s2469 + $0x10] sm:$0xff]
        %v2472 = vld [vmem:[%s2469 + $0x20] sm:$0xff]
        %v2473 = vld [vmem:[%s2469 + $0x30] sm:$0xff]
        %v2474 = vld [vmem:[%s2469 + $0x40] sm:$0xff]
        %v2475 = vld [vmem:[%s2469 + $0x50] sm:$0xff]
        %v2476 = vld [vmem:[%s2469 + $0x60] sm:$0xff]
        %v2477 = vld [vmem:[%s2469 + $0x70] sm:$0xff]
        %v2478 = vpack.c.bf16 %v2470, %v2470
        %v2479 = vpack.c.bf16 %v2471, %v2471
        %v2480 = vpack.c.bf16 %v2472, %v2472
        %v2481 = vpack.c.bf16 %v2473, %v2473
        %v2482 = vpack.c.bf16 %v2474, %v2474
        %v2483 = vpack.c.bf16 %v2475, %v2475
        %v2484 = vpack.c.bf16 %v2476, %v2476
        %v2485 = vpack.c.bf16 %v2477, %v2477
        %v2486 = vld [vmem:[%s2469 + $0x1] sm:$0xff]
        %v2487 = vld [vmem:[%s2469 + $0x11] sm:$0xff]
        %v2488 = vld [vmem:[%s2469 + $0x21] sm:$0xff]
        %v2489 = vld [vmem:[%s2469 + $0x31] sm:$0xff]
        %v2490 = vld [vmem:[%s2469 + $0x41] sm:$0xff]
        %v2491 = vld [vmem:[%s2469 + $0x51] sm:$0xff]
        %v2492 = vld [vmem:[%s2469 + $0x61] sm:$0xff]
        %v2493 = vld [vmem:[%s2469 + $0x71] sm:$0xff]
        %v2494 = vpack.c.bf16 %v2486, %v2486
        %v2495 = vpack.c.bf16 %v2487, %v2487
        %v2496 = vpack.c.bf16 %v2488, %v2488
        %v2497 = vpack.c.bf16 %v2489, %v2489
        %v2498 = vpack.c.bf16 %v2490, %v2490
        %v2499 = vpack.c.bf16 %v2491, %v2491
        %v2500 = vpack.c.bf16 %v2492, %v2492
        %v2501 = vpack.c.bf16 %v2493, %v2493
        %v2502 = vld [vmem:[%s2469 + $0x2] sm:$0xff]
        %v2503 = vld [vmem:[%s2469 + $0x12] sm:$0xff]
        %v2504 = vld [vmem:[%s2469 + $0x22] sm:$0xff]
        %v2505 = vld [vmem:[%s2469 + $0x32] sm:$0xff]
        %v2506 = vld [vmem:[%s2469 + $0x42] sm:$0xff]
        %v2507 = vld [vmem:[%s2469 + $0x52] sm:$0xff]
        %v2508 = vld [vmem:[%s2469 + $0x62] sm:$0xff]
        %v2509 = vld [vmem:[%s2469 + $0x72] sm:$0xff]
        %v2510 = vpack.c.bf16 %v2502, %v2502
        %v2511 = vpack.c.bf16 %v2503, %v2503
        %v2512 = vpack.c.bf16 %v2504, %v2504
        %v2513 = vpack.c.bf16 %v2505, %v2505
        %v2514 = vpack.c.bf16 %v2506, %v2506
        %v2515 = vpack.c.bf16 %v2507, %v2507
        %v2516 = vpack.c.bf16 %v2508, %v2508
        %v2517 = vpack.c.bf16 %v2509, %v2509
        %v2518 = vld [vmem:[%s2469 + $0x3] sm:$0xff]
        %v2519 = vld [vmem:[%s2469 + $0x13] sm:$0xff]
        %v2520 = vld [vmem:[%s2469 + $0x23] sm:$0xff]
        %v2521 = vld [vmem:[%s2469 + $0x33] sm:$0xff]
        %v2522 = vld [vmem:[%s2469 + $0x43] sm:$0xff]
        %v2523 = vld [vmem:[%s2469 + $0x53] sm:$0xff]
        %v2524 = vld [vmem:[%s2469 + $0x63] sm:$0xff]
        %v2525 = vld [vmem:[%s2469 + $0x73] sm:$0xff]
        %v2526 = vpack.c.bf16 %v2518, %v2518
        %v2527 = vpack.c.bf16 %v2519, %v2519
        %v2528 = vpack.c.bf16 %v2520, %v2520
        %v2529 = vpack.c.bf16 %v2521, %v2521
        %v2530 = vpack.c.bf16 %v2522, %v2522
        %v2531 = vpack.c.bf16 %v2523, %v2523
        %v2532 = vpack.c.bf16 %v2524, %v2524
        %v2533 = vpack.c.bf16 %v2525, %v2525
        %v2534 = vld [vmem:[%s2469 + $0x4] sm:$0xff]
        %v2535 = vld [vmem:[%s2469 + $0x14] sm:$0xff]
        %v2536 = vld [vmem:[%s2469 + $0x24] sm:$0xff]
        %v2537 = vld [vmem:[%s2469 + $0x34] sm:$0xff]
        %v2538 = vld [vmem:[%s2469 + $0x44] sm:$0xff]
        %v2539 = vld [vmem:[%s2469 + $0x54] sm:$0xff]
        %v2540 = vld [vmem:[%s2469 + $0x64] sm:$0xff]
        %v2541 = vld [vmem:[%s2469 + $0x74] sm:$0xff]
        %v2542 = vpack.c.bf16 %v2534, %v2534
        %v2543 = vpack.c.bf16 %v2535, %v2535
        %v2544 = vpack.c.bf16 %v2536, %v2536
        %v2545 = vpack.c.bf16 %v2537, %v2537
        %v2546 = vpack.c.bf16 %v2538, %v2538
        %v2547 = vpack.c.bf16 %v2539, %v2539
        %v2548 = vpack.c.bf16 %v2540, %v2540
        %v2549 = vpack.c.bf16 %v2541, %v2541
        %v2750 = vunpack.c.l.b16 %v2155
        %v2751 = vunpack.c.l.b16 %v2171
        %v2752 = vunpack.c.l.b16 %v2187
        %v2753 = vunpack.c.l.b16 %v2203
        %v2754 = vunpack.c.l.b16 %v2219
        %v2755 = vunpack.c.l.b16 %v2236
        %v2756 = vunpack.c.l.b16 %v2252
        %v2757 = vunpack.c.l.b16 %v2268
        %v2758 = vunpack.c.l.b16 %v2284
        %v2759 = vunpack.c.l.b16 %v2300
        %v2760 = vunpack.c.l.b16 %v2316
        %v2761 = vunpack.c.l.b16 %v2332
        %v2762 = vunpack.c.l.b16 %v2348
        %v2763 = vunpack.c.l.b16 %v2364
        %v2764 = vunpack.c.l.b16 %v2380
        %v2765 = vunpack.c.l.b16 %v2397
        %v2766 = vunpack.c.l.b16 %v2413
        %v2767 = vunpack.c.l.b16 %v2429
        %v2768 = vunpack.c.l.b16 %v2445
        %v2769 = vunpack.c.l.b16 %v2461
        %v2770 = vunpack.c.l.b16 %v2478
        %v2771 = vunpack.c.l.b16 %v2494
        %v2772 = vunpack.c.l.b16 %v2510
        %v2773 = vunpack.c.l.b16 %v2526
        %v2774 = vunpack.c.l.b16 %v2542
        %v2775 = vunpack.c.l.b16 %v2156
        %v2776 = vunpack.c.l.b16 %v2172
        %v2777 = vunpack.c.l.b16 %v2188
        %v2778 = vunpack.c.l.b16 %v2204
        %v2779 = vunpack.c.l.b16 %v2220
        %v2780 = vunpack.c.l.b16 %v2237
        %v2781 = vunpack.c.l.b16 %v2253
        %v2782 = vunpack.c.l.b16 %v2269
        %v2783 = vunpack.c.l.b16 %v2285
        %v2784 = vunpack.c.l.b16 %v2301
        %v2785 = vunpack.c.l.b16 %v2317
        %v2786 = vunpack.c.l.b16 %v2333
        %v2787 = vunpack.c.l.b16 %v2349
        %v2788 = vunpack.c.l.b16 %v2365
        %v2789 = vunpack.c.l.b16 %v2381
        %v2790 = vunpack.c.l.b16 %v2398
        %v2791 = vunpack.c.l.b16 %v2414
        %v2792 = vunpack.c.l.b16 %v2430
        %v2793 = vunpack.c.l.b16 %v2446
        %v2794 = vunpack.c.l.b16 %v2462
        %v2795 = vunpack.c.l.b16 %v2479
        %v2796 = vunpack.c.l.b16 %v2495
        %v2797 = vunpack.c.l.b16 %v2511
        %v2798 = vunpack.c.l.b16 %v2527
        %v2799 = vunpack.c.l.b16 %v2543
        %v2800 = vunpack.c.l.b16 %v2157
        %v2801 = vunpack.c.l.b16 %v2173
        %v2802 = vunpack.c.l.b16 %v2189
        %v2803 = vunpack.c.l.b16 %v2205
        %v2804 = vunpack.c.l.b16 %v2221
        %v2805 = vunpack.c.l.b16 %v2238
        %v2806 = vunpack.c.l.b16 %v2254
        %v2807 = vunpack.c.l.b16 %v2270
        %v2808 = vunpack.c.l.b16 %v2286
        %v2809 = vunpack.c.l.b16 %v2302
        %v2810 = vunpack.c.l.b16 %v2318
        %v2811 = vunpack.c.l.b16 %v2334
        %v2812 = vunpack.c.l.b16 %v2350
        %v2813 = vunpack.c.l.b16 %v2366
        %v2814 = vunpack.c.l.b16 %v2382
        %v2815 = vunpack.c.l.b16 %v2399
        %v2816 = vunpack.c.l.b16 %v2415
        %v2817 = vunpack.c.l.b16 %v2431
        %v2818 = vunpack.c.l.b16 %v2447
        %v2819 = vunpack.c.l.b16 %v2463
        %v2820 = vunpack.c.l.b16 %v2480
        %v2821 = vunpack.c.l.b16 %v2496
        %v2822 = vunpack.c.l.b16 %v2512
        %v2823 = vunpack.c.l.b16 %v2528
        %v2824 = vunpack.c.l.b16 %v2544
        %v2825 = vunpack.c.l.b16 %v2158
        %v2826 = vunpack.c.l.b16 %v2174
        %v2827 = vunpack.c.l.b16 %v2190
        %v2828 = vunpack.c.l.b16 %v2206
        %v2829 = vunpack.c.l.b16 %v2222
        %v2830 = vunpack.c.l.b16 %v2239
        %v2831 = vunpack.c.l.b16 %v2255
        %v2832 = vunpack.c.l.b16 %v2271
        %v2833 = vunpack.c.l.b16 %v2287
        %v2834 = vunpack.c.l.b16 %v2303
        %v2835 = vunpack.c.l.b16 %v2319
        %v2836 = vunpack.c.l.b16 %v2335
        %v2837 = vunpack.c.l.b16 %v2351
        %v2838 = vunpack.c.l.b16 %v2367
        %v2839 = vunpack.c.l.b16 %v2383
        %v2840 = vunpack.c.l.b16 %v2400
        %v2841 = vunpack.c.l.b16 %v2416
        %v2842 = vunpack.c.l.b16 %v2432
        %v2843 = vunpack.c.l.b16 %v2448
        %v2844 = vunpack.c.l.b16 %v2464
        %v2845 = vunpack.c.l.b16 %v2481
        %v2846 = vunpack.c.l.b16 %v2497
        %v2847 = vunpack.c.l.b16 %v2513
        %v2848 = vunpack.c.l.b16 %v2529
        %v2849 = vunpack.c.l.b16 %v2545
        %v2850 = vunpack.c.l.b16 %v2159
        %v2851 = vunpack.c.l.b16 %v2175
        %v2852 = vunpack.c.l.b16 %v2191
        %v2853 = vunpack.c.l.b16 %v2207
        %v2854 = vunpack.c.l.b16 %v2223
        %v2855 = vunpack.c.l.b16 %v2240
        %v2856 = vunpack.c.l.b16 %v2256
        %v2857 = vunpack.c.l.b16 %v2272
        %v2858 = vunpack.c.l.b16 %v2288
        %v2859 = vunpack.c.l.b16 %v2304
        %v2860 = vunpack.c.l.b16 %v2320
        %v2861 = vunpack.c.l.b16 %v2336
        %v2862 = vunpack.c.l.b16 %v2352
        %v2863 = vunpack.c.l.b16 %v2368
        %v2864 = vunpack.c.l.b16 %v2384
        %v2865 = vunpack.c.l.b16 %v2401
        %v2866 = vunpack.c.l.b16 %v2417
        %v2867 = vunpack.c.l.b16 %v2433
        %v2868 = vunpack.c.l.b16 %v2449
        %v2869 = vunpack.c.l.b16 %v2465
        %v2870 = vunpack.c.l.b16 %v2482
        %v2871 = vunpack.c.l.b16 %v2498
        %v2872 = vunpack.c.l.b16 %v2514
        %v2873 = vunpack.c.l.b16 %v2530
        %v2874 = vunpack.c.l.b16 %v2546
        %v2875 = vunpack.c.l.b16 %v2160
        %v2876 = vunpack.c.l.b16 %v2176
        %v2877 = vunpack.c.l.b16 %v2192
        %v2878 = vunpack.c.l.b16 %v2208
        %v2879 = vunpack.c.l.b16 %v2224
        %v2880 = vunpack.c.l.b16 %v2241
        %v2881 = vunpack.c.l.b16 %v2257
        %v2882 = vunpack.c.l.b16 %v2273
        %v2883 = vunpack.c.l.b16 %v2289
        %v2884 = vunpack.c.l.b16 %v2305
        %v2885 = vunpack.c.l.b16 %v2321
        %v2886 = vunpack.c.l.b16 %v2337
        %v2887 = vunpack.c.l.b16 %v2353
        %v2888 = vunpack.c.l.b16 %v2369
        %v2889 = vunpack.c.l.b16 %v2385
        %v2890 = vunpack.c.l.b16 %v2402
        %v2891 = vunpack.c.l.b16 %v2418
        %v2892 = vunpack.c.l.b16 %v2434
        %v2893 = vunpack.c.l.b16 %v2450
        %v2894 = vunpack.c.l.b16 %v2466
        %v2895 = vunpack.c.l.b16 %v2483
        %v2896 = vunpack.c.l.b16 %v2499
        %v2897 = vunpack.c.l.b16 %v2515
        %v2898 = vunpack.c.l.b16 %v2531
        %v2899 = vunpack.c.l.b16 %v2547
        %v2900 = vunpack.c.l.b16 %v2161
        %v2901 = vunpack.c.l.b16 %v2177
        %v2902 = vunpack.c.l.b16 %v2193
        %v2903 = vunpack.c.l.b16 %v2209
        %v2904 = vunpack.c.l.b16 %v2225
        %v2905 = vunpack.c.l.b16 %v2242
        %v2906 = vunpack.c.l.b16 %v2258
        %v2907 = vunpack.c.l.b16 %v2274
        %v2908 = vunpack.c.l.b16 %v2290
        %v2909 = vunpack.c.l.b16 %v2306
        %v2910 = vunpack.c.l.b16 %v2322
        %v2911 = vunpack.c.l.b16 %v2338
        %v2912 = vunpack.c.l.b16 %v2354
        %v2913 = vunpack.c.l.b16 %v2370
        %v2914 = vunpack.c.l.b16 %v2386
        %v2915 = vunpack.c.l.b16 %v2403
        %v2916 = vunpack.c.l.b16 %v2419
        %v2917 = vunpack.c.l.b16 %v2435
        %v2918 = vunpack.c.l.b16 %v2451
        %v2919 = vunpack.c.l.b16 %v2467
        %v2920 = vunpack.c.l.b16 %v2484
        %v2921 = vunpack.c.l.b16 %v2500
        %v2922 = vunpack.c.l.b16 %v2516
        %v2923 = vunpack.c.l.b16 %v2532
        %v2924 = vunpack.c.l.b16 %v2548
        %v2925 = vunpack.c.l.b16 %v2162
        %v2926 = vunpack.c.l.b16 %v2178
        %v2927 = vunpack.c.l.b16 %v2194
        %v2928 = vunpack.c.l.b16 %v2210
        %v2929 = vunpack.c.l.b16 %v2226
        %v2930 = vunpack.c.l.b16 %v2243
        %v2931 = vunpack.c.l.b16 %v2259
        %v2932 = vunpack.c.l.b16 %v2275
        %v2933 = vunpack.c.l.b16 %v2291
        %v2934 = vunpack.c.l.b16 %v2307
        %v2935 = vunpack.c.l.b16 %v2323
        %v2936 = vunpack.c.l.b16 %v2339
        %v2937 = vunpack.c.l.b16 %v2355
        %v2938 = vunpack.c.l.b16 %v2371
        %v2939 = vunpack.c.l.b16 %v2387
        %v2940 = vunpack.c.l.b16 %v2404
        %v2941 = vunpack.c.l.b16 %v2420
        %v2942 = vunpack.c.l.b16 %v2436
        %v2943 = vunpack.c.l.b16 %v2452
        %v2944 = vunpack.c.l.b16 %v2468
        %v2945 = vunpack.c.l.b16 %v2485
        %v2946 = vunpack.c.l.b16 %v2501
        %v2947 = vunpack.c.l.b16 %v2517
        %v2948 = vunpack.c.l.b16 %v2533
        %v2949 = vunpack.c.l.b16 %v2549
        %v2950 = vld [vmem:[%s5] sm:$0xf]
        %v2951 = vld [vmem:[%s5 + $0x4] sm:$0xf]
        %v2952 = vld [vmem:[%s5 + $0x8] sm:$0xf]
        %v2953 = vld [vmem:[%s5 + $0xc] sm:$0xf]
        %v2954 = vld [vmem:[%s5 + $0x10] sm:$0xf]
        %v2955 = vld [vmem:[%s5 + $0x14] sm:$0xf]
        %v2956 = vld [vmem:[%s5 + $0x18] sm:$0xf]
        %v2957 = vld [vmem:[%s5 + $0x1c] sm:$0xf]
        %v2958 = vld [vmem:[%s5 + $0x20] sm:$0xf]
        %v2959 = vld [vmem:[%s5 + $0x24] sm:$0xf]
        %v2960 = vld [vmem:[%s5 + $0x28] sm:$0xf]
        %v2961 = vld [vmem:[%s5 + $0x2c] sm:$0xf]
        %v2962 = vld [vmem:[%s5 + $0x30] sm:$0xf]
        %v2963 = vld [vmem:[%s5 + $0x34] sm:$0xf]
        %v2964 = vld [vmem:[%s5 + $0x38] sm:$0xf]
        %v2965 = vld [vmem:[%s5 + $0x3c] sm:$0xf]
        %v2966 = vld [vmem:[%s5 + $0x40] sm:$0xf]
        %v2967 = vld [vmem:[%s5 + $0x44] sm:$0xf]
        %v2968 = vld [vmem:[%s5 + $0x48] sm:$0xf]
        %v2969 = vld [vmem:[%s5 + $0x4c] sm:$0xf]
        %v2970 = vld [vmem:[%s5 + $0x50] sm:$0xf]
        %v2971 = vld [vmem:[%s5 + $0x54] sm:$0xf]
        %v2972 = vld [vmem:[%s5 + $0x58] sm:$0xf]
        %v2973 = vld [vmem:[%s5 + $0x5c] sm:$0xf]
        %v2974 = vld [vmem:[%s5 + $0x60] sm:$0xf]
        %v2975 = vld [vmem:[%s5 + $0x64] sm:$0xf]
        %v2976 = vld [vmem:[%s5 + $0x68] sm:$0xf]
        %v2977 = vld [vmem:[%s5 + $0x6c] sm:$0xf]
        %v2978 = vld [vmem:[%s5 + $0x70] sm:$0xf]
        %v2979 = vld [vmem:[%s5 + $0x74] sm:$0xf]
        %v2980 = vld [vmem:[%s5 + $0x78] sm:$0xf]
        %v2981 = vld [vmem:[%s5 + $0x7c] sm:$0xf]
        %v2982 = vld [vmem:[%s5 + $0x80] sm:$0xf]
        %v2983 = vld [vmem:[%s5 + $0x84] sm:$0xf]
        %v2984 = vld [vmem:[%s5 + $0x88] sm:$0xf]
        %v2985 = vld [vmem:[%s5 + $0x8c] sm:$0xf]
        %v2986 = vld [vmem:[%s5 + $0x90] sm:$0xf]
        %v2987 = vld [vmem:[%s5 + $0x94] sm:$0xf]
        %v2988 = vld [vmem:[%s5 + $0x98] sm:$0xf]
        %v2989 = vld [vmem:[%s5 + $0x9c] sm:$0xf]
        %v2990 = vld [vmem:[%s5 + $0xa0] sm:$0xf]
        %v2991 = vld [vmem:[%s5 + $0xa4] sm:$0xf]
        %v2992 = vld [vmem:[%s5 + $0xa8] sm:$0xf]
        %v2993 = vld [vmem:[%s5 + $0xac] sm:$0xf]
        %v2994 = vld [vmem:[%s5 + $0xb0] sm:$0xf]
        %v2995 = vld [vmem:[%s5 + $0xb4] sm:$0xf]
        %v2996 = vld [vmem:[%s5 + $0xb8] sm:$0xf]
        %v2997 = vld [vmem:[%s5 + $0xbc] sm:$0xf]
        %v2998 = vld [vmem:[%s5 + $0xc0] sm:$0xf]
        %v2999 = vld [vmem:[%s5 + $0xc4] sm:$0xf]
        %v3000 = vld [vmem:[%s5 + $0xc8] sm:$0xf]
        %v3001 = vld [vmem:[%s5 + $0xcc] sm:$0xf]
        %v3002 = vld [vmem:[%s5 + $0xd0] sm:$0xf]
        %v3003 = vld [vmem:[%s5 + $0xd4] sm:$0xf]
        %v3004 = vld [vmem:[%s5 + $0xd8] sm:$0xf]
        %v3005 = vld [vmem:[%s5 + $0xdc] sm:$0xf]
        %v3006 = vld [vmem:[%s5 + $0xe0] sm:$0xf]
        %v3007 = vld [vmem:[%s5 + $0xe4] sm:$0xf]
        %v3008 = vld [vmem:[%s5 + $0xe8] sm:$0xf]
        %v3009 = vld [vmem:[%s5 + $0xec] sm:$0xf]
        %v3010 = vld [vmem:[%s5 + $0xf0] sm:$0xf]
        %v3011 = vld [vmem:[%s5 + $0xf4] sm:$0xf]
        %v3012 = vld [vmem:[%s5 + $0xf8] sm:$0xf]
        %v3013 = vld [vmem:[%s5 + $0xfc] sm:$0xf]
        %v3014 = vld [vmem:[%s5 + $0x100] sm:$0xf]
        %v3015 = vld [vmem:[%s5 + $0x104] sm:$0xf]
        %v3016 = vld [vmem:[%s5 + $0x108] sm:$0xf]
        %v3017 = vld [vmem:[%s5 + $0x10c] sm:$0xf]
        %v3018 = vld [vmem:[%s5 + $0x110] sm:$0xf]
        %v3019 = vld [vmem:[%s5 + $0x114] sm:$0xf]
        %v3020 = vld [vmem:[%s5 + $0x118] sm:$0xf]
        %v3021 = vld [vmem:[%s5 + $0x11c] sm:$0xf]
        %v3022 = vld [vmem:[%s5 + $0x120] sm:$0xf]
        %v3023 = vld [vmem:[%s5 + $0x124] sm:$0xf]
        %v3024 = vld [vmem:[%s5 + $0x128] sm:$0xf]
        %v3025 = vld [vmem:[%s5 + $0x12c] sm:$0xf]
        %v3026 = vld [vmem:[%s5 + $0x130] sm:$0xf]
        %v3027 = vld [vmem:[%s5 + $0x134] sm:$0xf]
        %v3028 = vld [vmem:[%s5 + $0x138] sm:$0xf]
        %v3029 = vld [vmem:[%s5 + $0x13c] sm:$0xf]
        %v3030 = vld [vmem:[%s5 + $0x140] sm:$0xf]
        %v3031 = vld [vmem:[%s5 + $0x144] sm:$0xf]
        %v3032 = vld [vmem:[%s5 + $0x148] sm:$0xf]
        %v3033 = vld [vmem:[%s5 + $0x14c] sm:$0xf]
        %v3034 = vld [vmem:[%s5 + $0x150] sm:$0xf]
        %v3035 = vld [vmem:[%s5 + $0x154] sm:$0xf]
        %v3036 = vld [vmem:[%s5 + $0x158] sm:$0xf]
        %v3037 = vld [vmem:[%s5 + $0x15c] sm:$0xf]
        %v3038 = vld [vmem:[%s5 + $0x160] sm:$0xf]
        %v3039 = vld [vmem:[%s5 + $0x164] sm:$0xf]
        %v3040 = vld [vmem:[%s5 + $0x168] sm:$0xf]
        %v3041 = vld [vmem:[%s5 + $0x16c] sm:$0xf]
        %v3042 = vld [vmem:[%s5 + $0x170] sm:$0xf]
        %v3043 = vld [vmem:[%s5 + $0x174] sm:$0xf]
        %v3044 = vld [vmem:[%s5 + $0x178] sm:$0xf]
        %v3045 = vld [vmem:[%s5 + $0x17c] sm:$0xf]
        %v3046 = vld [vmem:[%s5 + $0x180] sm:$0xf]
        %v3047 = vld [vmem:[%s5 + $0x184] sm:$0xf]
        %v3048 = vld [vmem:[%s5 + $0x188] sm:$0xf]
        %v3049 = vld [vmem:[%s5 + $0x18c] sm:$0xf]
        %v3050 = vld [vmem:[%s5 + $0x190] sm:$0xf]
        %v3051 = vld [vmem:[%s5 + $0x194] sm:$0xf]
        %v3052 = vld [vmem:[%s5 + $0x198] sm:$0xf]
        %v3053 = vld [vmem:[%s5 + $0x19c] sm:$0xf]
        %v3054 = vld [vmem:[%s5 + $0x1a0] sm:$0xf]
        %v3055 = vld [vmem:[%s5 + $0x1a4] sm:$0xf]
        %v3056 = vld [vmem:[%s5 + $0x1a8] sm:$0xf]
        %v3057 = vld [vmem:[%s5 + $0x1ac] sm:$0xf]
        %v3058 = vld [vmem:[%s5 + $0x1b0] sm:$0xf]
        %v3059 = vld [vmem:[%s5 + $0x1b4] sm:$0xf]
        %v3060 = vld [vmem:[%s5 + $0x1b8] sm:$0xf]
        %v3061 = vld [vmem:[%s5 + $0x1bc] sm:$0xf]
        %v3062 = vld [vmem:[%s5 + $0x1c0] sm:$0xf]
        %v3063 = vld [vmem:[%s5 + $0x1c4] sm:$0xf]
        %v3064 = vld [vmem:[%s5 + $0x1c8] sm:$0xf]
        %v3065 = vld [vmem:[%s5 + $0x1cc] sm:$0xf]
        %v3066 = vld [vmem:[%s5 + $0x1d0] sm:$0xf]
        %v3067 = vld [vmem:[%s5 + $0x1d4] sm:$0xf]
        %v3068 = vld [vmem:[%s5 + $0x1d8] sm:$0xf]
        %v3069 = vld [vmem:[%s5 + $0x1dc] sm:$0xf]
        %v3070 = vld [vmem:[%s5 + $0x1e0] sm:$0xf]
        %v3071 = vld [vmem:[%s5 + $0x1e4] sm:$0xf]
        %v3072 = vld [vmem:[%s5 + $0x1e8] sm:$0xf]
        %v3073 = vld [vmem:[%s5 + $0x1ec] sm:$0xf]
        %v3074 = vld [vmem:[%s5 + $0x1f0] sm:$0xf]
        %v3075 = vld [vmem:[%s5 + $0x1f4] sm:$0xf]
        %v3076 = vld [vmem:[%s5 + $0x1f8] sm:$0xf]
        %v3077 = vld [vmem:[%s5 + $0x1fc] sm:$0xf]
        %v3078 = vld [vmem:[%s5 + $0x200] sm:$0xf]
        %v3079 = vld [vmem:[%s5 + $0x204] sm:$0xf]
        %v3080 = vld [vmem:[%s5 + $0x208] sm:$0xf]
        %v3081 = vld [vmem:[%s5 + $0x20c] sm:$0xf]
        %v3082 = vld [vmem:[%s5 + $0x210] sm:$0xf]
        %v3083 = vld [vmem:[%s5 + $0x214] sm:$0xf]
        %v3084 = vld [vmem:[%s5 + $0x218] sm:$0xf]
        %v3085 = vld [vmem:[%s5 + $0x21c] sm:$0xf]
        %v3086 = vld [vmem:[%s5 + $0x220] sm:$0xf]
        %v3087 = vld [vmem:[%s5 + $0x224] sm:$0xf]
        %v3088 = vld [vmem:[%s5 + $0x228] sm:$0xf]
        %v3089 = vld [vmem:[%s5 + $0x22c] sm:$0xf]
        %v3090 = vld [vmem:[%s5 + $0x230] sm:$0xf]
        %v3091 = vld [vmem:[%s5 + $0x234] sm:$0xf]
        %v3092 = vld [vmem:[%s5 + $0x238] sm:$0xf]
        %v3093 = vld [vmem:[%s5 + $0x23c] sm:$0xf]
        %v3094 = vld [vmem:[%s5 + $0x240] sm:$0xf]
        %v3095 = vld [vmem:[%s5 + $0x244] sm:$0xf]
        %v3096 = vld [vmem:[%s5 + $0x248] sm:$0xf]
        %v3097 = vld [vmem:[%s5 + $0x24c] sm:$0xf]
        %v3098 = vld [vmem:[%s5 + $0x250] sm:$0xf]
        %v3099 = vld [vmem:[%s5 + $0x254] sm:$0xf]
        %v3100 = vld [vmem:[%s5 + $0x258] sm:$0xf]
        %v3101 = vld [vmem:[%s5 + $0x25c] sm:$0xf]
        %v3102 = vld [vmem:[%s5 + $0x260] sm:$0xf]
        %v3103 = vld [vmem:[%s5 + $0x264] sm:$0xf]
        %v3104 = vld [vmem:[%s5 + $0x268] sm:$0xf]
        %v3105 = vld [vmem:[%s5 + $0x26c] sm:$0xf]
        %v3106 = vld [vmem:[%s5 + $0x270] sm:$0xf]
        %v3107 = vld [vmem:[%s5 + $0x274] sm:$0xf]
        %v3108 = vld [vmem:[%s5 + $0x278] sm:$0xf]
        %v3109 = vld [vmem:[%s5 + $0x27c] sm:$0xf]
        %v3110 = vld [vmem:[%s5 + $0x280] sm:$0xf]
        %v3111 = vld [vmem:[%s5 + $0x284] sm:$0xf]
        %v3112 = vld [vmem:[%s5 + $0x288] sm:$0xf]
        %v3113 = vld [vmem:[%s5 + $0x28c] sm:$0xf]
        %v3114 = vld [vmem:[%s5 + $0x290] sm:$0xf]
        %v3115 = vld [vmem:[%s5 + $0x294] sm:$0xf]
        %v3116 = vld [vmem:[%s5 + $0x298] sm:$0xf]
        %v3117 = vld [vmem:[%s5 + $0x29c] sm:$0xf]
        %v3118 = vld [vmem:[%s5 + $0x2a0] sm:$0xf]
        %v3119 = vld [vmem:[%s5 + $0x2a4] sm:$0xf]
        %v3120 = vld [vmem:[%s5 + $0x2a8] sm:$0xf]
        %v3121 = vld [vmem:[%s5 + $0x2ac] sm:$0xf]
        %v3122 = vld [vmem:[%s5 + $0x2b0] sm:$0xf]
        %v3123 = vld [vmem:[%s5 + $0x2b4] sm:$0xf]
        %v3124 = vld [vmem:[%s5 + $0x2b8] sm:$0xf]
        %v3125 = vld [vmem:[%s5 + $0x2bc] sm:$0xf]
        %v3126 = vld [vmem:[%s5 + $0x2c0] sm:$0xf]
        %v3127 = vld [vmem:[%s5 + $0x2c4] sm:$0xf]
        %v3128 = vld [vmem:[%s5 + $0x2c8] sm:$0xf]
        %v3129 = vld [vmem:[%s5 + $0x2cc] sm:$0xf]
        %v3130 = vld [vmem:[%s5 + $0x2d0] sm:$0xf]
        %v3131 = vld [vmem:[%s5 + $0x2d4] sm:$0xf]
        %v3132 = vld [vmem:[%s5 + $0x2d8] sm:$0xf]
        %v3133 = vld [vmem:[%s5 + $0x2dc] sm:$0xf]
        %v3134 = vld [vmem:[%s5 + $0x2e0] sm:$0xf]
        %v3135 = vld [vmem:[%s5 + $0x2e4] sm:$0xf]
        %v3136 = vld [vmem:[%s5 + $0x2e8] sm:$0xf]
        %v3137 = vld [vmem:[%s5 + $0x2ec] sm:$0xf]
        %v3138 = vld [vmem:[%s5 + $0x2f0] sm:$0xf]
        %v3139 = vld [vmem:[%s5 + $0x2f4] sm:$0xf]
        %v3140 = vld [vmem:[%s5 + $0x2f8] sm:$0xf]
        %v3141 = vld [vmem:[%s5 + $0x2fc] sm:$0xf]
        %v3142 = vld [vmem:[%s5 + $0x300] sm:$0xf]
        %v3143 = vld [vmem:[%s5 + $0x304] sm:$0xf]
        %v3144 = vld [vmem:[%s5 + $0x308] sm:$0xf]
        %v3145 = vld [vmem:[%s5 + $0x30c] sm:$0xf]
        %v3146 = vld [vmem:[%s5 + $0x310] sm:$0xf]
        %v3147 = vld [vmem:[%s5 + $0x314] sm:$0xf]
        %v3148 = vld [vmem:[%s5 + $0x318] sm:$0xf]
        %v3149 = vld [vmem:[%s5 + $0x31c] sm:$0xf]
        %v3150 = vld [vmem:[%s5 + $0x320] sm:$0xf]
        %v3151 = vld [vmem:[%s5 + $0x324] sm:$0xf]
        %v3152 = vld [vmem:[%s5 + $0x328] sm:$0xf]
        %v3153 = vld [vmem:[%s5 + $0x32c] sm:$0xf]
        %v3154 = vld [vmem:[%s5 + $0x330] sm:$0xf]
        %v3155 = vld [vmem:[%s5 + $0x334] sm:$0xf]
        %v3156 = vld [vmem:[%s5 + $0x338] sm:$0xf]
        %v3157 = vld [vmem:[%s5 + $0x33c] sm:$0xf]
        %v3158 = vld [vmem:[%s5 + $0x340] sm:$0xf]
        %v3159 = vld [vmem:[%s5 + $0x344] sm:$0xf]
        %v3160 = vld [vmem:[%s5 + $0x348] sm:$0xf]
        %v3161 = vld [vmem:[%s5 + $0x34c] sm:$0xf]
        %v3162 = vld [vmem:[%s5 + $0x350] sm:$0xf]
        %v3163 = vld [vmem:[%s5 + $0x354] sm:$0xf]
        %v3164 = vld [vmem:[%s5 + $0x358] sm:$0xf]
        %v3165 = vld [vmem:[%s5 + $0x35c] sm:$0xf]
        %v3166 = vld [vmem:[%s5 + $0x360] sm:$0xf]
        %v3167 = vld [vmem:[%s5 + $0x364] sm:$0xf]
        %v3168 = vld [vmem:[%s5 + $0x368] sm:$0xf]
        %v3169 = vld [vmem:[%s5 + $0x36c] sm:$0xf]
        %v3170 = vld [vmem:[%s5 + $0x370] sm:$0xf]
        %v3171 = vld [vmem:[%s5 + $0x374] sm:$0xf]
        %v3172 = vld [vmem:[%s5 + $0x378] sm:$0xf]
        %v3173 = vld [vmem:[%s5 + $0x37c] sm:$0xf]
        %v3174 = vld [vmem:[%s5 + $0x380] sm:$0xf]
        %v3175 = vld [vmem:[%s5 + $0x384] sm:$0xf]
        %v3176 = vld [vmem:[%s5 + $0x388] sm:$0xf]
        %v3177 = vld [vmem:[%s5 + $0x38c] sm:$0xf]
        %v3178 = vld [vmem:[%s5 + $0x390] sm:$0xf]
        %v3179 = vld [vmem:[%s5 + $0x394] sm:$0xf]
        %v3180 = vld [vmem:[%s5 + $0x398] sm:$0xf]
        %v3181 = vld [vmem:[%s5 + $0x39c] sm:$0xf]
        %v3182 = vld [vmem:[%s5 + $0x3a0] sm:$0xf]
        %v3183 = vld [vmem:[%s5 + $0x3a4] sm:$0xf]
        %v3184 = vld [vmem:[%s5 + $0x3a8] sm:$0xf]
        %v3185 = vld [vmem:[%s5 + $0x3ac] sm:$0xf]
        %v3186 = vld [vmem:[%s5 + $0x3b0] sm:$0xf]
        %v3187 = vld [vmem:[%s5 + $0x3b4] sm:$0xf]
        %v3188 = vld [vmem:[%s5 + $0x3b8] sm:$0xf]
        %v3189 = vld [vmem:[%s5 + $0x3bc] sm:$0xf]
        %v3190 = vld [vmem:[%s5 + $0x3c0] sm:$0xf]
        %v3191 = vld [vmem:[%s5 + $0x3c4] sm:$0xf]
        %v3192 = vld [vmem:[%s5 + $0x3c8] sm:$0xf]
        %v3193 = vld [vmem:[%s5 + $0x3cc] sm:$0xf]
        %v3194 = vld [vmem:[%s5 + $0x3d0] sm:$0xf]
        %v3195 = vld [vmem:[%s5 + $0x3d4] sm:$0xf]
        %v3196 = vld [vmem:[%s5 + $0x3d8] sm:$0xf]
        %v3197 = vld [vmem:[%s5 + $0x3dc] sm:$0xf]
        %v3198 = vld [vmem:[%s5 + $0x3e0] sm:$0xf]
        %v3199 = vld [vmem:[%s5 + $0x3e4] sm:$0xf]
        %v3200 = vld [vmem:[%s5 + $0x3e8] sm:$0xf]
        %v3201 = vld [vmem:[%s5 + $0x3ec] sm:$0xf]
        %v3202 = vld [vmem:[%s5 + $0x3f0] sm:$0xf]
        %v3203 = vld [vmem:[%s5 + $0x3f4] sm:$0xf]
        %v3204 = vld [vmem:[%s5 + $0x3f8] sm:$0xf]
        %v3205 = vld [vmem:[%s5 + $0x3fc] sm:$0xf]
        %v3206 = vld [vmem:[%s5 + $0x400] sm:$0xf]
        %v3207 = vld [vmem:[%s5 + $0x404] sm:$0xf]
        %v3208 = vld [vmem:[%s5 + $0x408] sm:$0xf]
        %v3209 = vld [vmem:[%s5 + $0x40c] sm:$0xf]
        %v3210 = vld [vmem:[%s5 + $0x410] sm:$0xf]
        %v3211 = vld [vmem:[%s5 + $0x414] sm:$0xf]
        %v3212 = vld [vmem:[%s5 + $0x418] sm:$0xf]
        %v3213 = vld [vmem:[%s5 + $0x41c] sm:$0xf]
        %v3214 = vld [vmem:[%s5 + $0x420] sm:$0xf]
        %v3215 = vld [vmem:[%s5 + $0x424] sm:$0xf]
        %v3216 = vld [vmem:[%s5 + $0x428] sm:$0xf]
        %v3217 = vld [vmem:[%s5 + $0x42c] sm:$0xf]
        %v3218 = vld [vmem:[%s5 + $0x430] sm:$0xf]
        %v3219 = vld [vmem:[%s5 + $0x434] sm:$0xf]
        %v3220 = vld [vmem:[%s5 + $0x438] sm:$0xf]
        %v3221 = vld [vmem:[%s5 + $0x43c] sm:$0xf]
        %v3222 = vld [vmem:[%s5 + $0x440] sm:$0xf]
        %v3223 = vld [vmem:[%s5 + $0x444] sm:$0xf]
        %v3224 = vld [vmem:[%s5 + $0x448] sm:$0xf]
        %v3225 = vld [vmem:[%s5 + $0x44c] sm:$0xf]
        %v3226 = vld [vmem:[%s5 + $0x450] sm:$0xf]
        %v3227 = vld [vmem:[%s5 + $0x454] sm:$0xf]
        %v3228 = vld [vmem:[%s5 + $0x458] sm:$0xf]
        %v3229 = vld [vmem:[%s5 + $0x45c] sm:$0xf]
        %v3230 = vld [vmem:[%s5 + $0x460] sm:$0xf]
        %v3231 = vld [vmem:[%s5 + $0x464] sm:$0xf]
        %v3232 = vld [vmem:[%s5 + $0x468] sm:$0xf]
        %v3233 = vld [vmem:[%s5 + $0x46c] sm:$0xf]
        %v3234 = vld [vmem:[%s5 + $0x470] sm:$0xf]
        %v3235 = vld [vmem:[%s5 + $0x474] sm:$0xf]
        %v3236 = vld [vmem:[%s5 + $0x478] sm:$0xf]
        %v3237 = vld [vmem:[%s5 + $0x47c] sm:$0xf]
        %v3238 = vld [vmem:[%s5 + $0x480] sm:$0xf]
        %v3239 = vld [vmem:[%s5 + $0x484] sm:$0xf]
        %v3240 = vld [vmem:[%s5 + $0x488] sm:$0xf]
        %v3241 = vld [vmem:[%s5 + $0x48c] sm:$0xf]
        %v3242 = vld [vmem:[%s5 + $0x490] sm:$0xf]
        %v3243 = vld [vmem:[%s5 + $0x494] sm:$0xf]
        %v3244 = vld [vmem:[%s5 + $0x498] sm:$0xf]
        %v3245 = vld [vmem:[%s5 + $0x49c] sm:$0xf]
        %v3246 = vld [vmem:[%s5 + $0x4a0] sm:$0xf]
        %v3247 = vld [vmem:[%s5 + $0x4a4] sm:$0xf]
        %v3248 = vld [vmem:[%s5 + $0x4a8] sm:$0xf]
        %v3249 = vld [vmem:[%s5 + $0x4ac] sm:$0xf]
        %v3250 = vld [vmem:[%s5 + $0x4b0] sm:$0xf]
        %v3251 = vld [vmem:[%s5 + $0x4b4] sm:$0xf]
        %v3252 = vld [vmem:[%s5 + $0x4b8] sm:$0xf]
        %v3253 = vld [vmem:[%s5 + $0x4bc] sm:$0xf]
        %v3254 = vld [vmem:[%s5 + $0x4c0] sm:$0xf]
        %v3255 = vld [vmem:[%s5 + $0x4c4] sm:$0xf]
        %v3256 = vld [vmem:[%s5 + $0x4c8] sm:$0xf]
        %v3257 = vld [vmem:[%s5 + $0x4cc] sm:$0xf]
        %v3258 = vld [vmem:[%s5 + $0x4d0] sm:$0xf]
        %v3259 = vld [vmem:[%s5 + $0x4d4] sm:$0xf]
        %v3260 = vld [vmem:[%s5 + $0x4d8] sm:$0xf]
        %v3261 = vld [vmem:[%s5 + $0x4dc] sm:$0xf]
        %v3262 = vld [vmem:[%s5 + $0x4e0] sm:$0xf]
        %v3263 = vld [vmem:[%s5 + $0x4e4] sm:$0xf]
        %v3264 = vld [vmem:[%s5 + $0x4e8] sm:$0xf]
        %v3265 = vld [vmem:[%s5 + $0x4ec] sm:$0xf]
        %v3266 = vld [vmem:[%s5 + $0x4f0] sm:$0xf]
        %v3267 = vld [vmem:[%s5 + $0x4f4] sm:$0xf]
        %v3268 = vld [vmem:[%s5 + $0x4f8] sm:$0xf]
        %v3269 = vld [vmem:[%s5 + $0x4fc] sm:$0xf]
        %v3270 = vld [vmem:[%s5 + $0x500] sm:$0xf]
        %v3271 = vld [vmem:[%s5 + $0x504] sm:$0xf]
        %v3272 = vld [vmem:[%s5 + $0x508] sm:$0xf]
        %v3273 = vld [vmem:[%s5 + $0x50c] sm:$0xf]
        %v3274 = vld [vmem:[%s5 + $0x510] sm:$0xf]
        %v3275 = vld [vmem:[%s5 + $0x514] sm:$0xf]
        %v3276 = vld [vmem:[%s5 + $0x518] sm:$0xf]
        %v3277 = vld [vmem:[%s5 + $0x51c] sm:$0xf]
        %v3278 = vld [vmem:[%s5 + $0x520] sm:$0xf]
        %v3279 = vld [vmem:[%s5 + $0x524] sm:$0xf]
        %v3280 = vld [vmem:[%s5 + $0x528] sm:$0xf]
        %v3281 = vld [vmem:[%s5 + $0x52c] sm:$0xf]
        %v3282 = vld [vmem:[%s5 + $0x530] sm:$0xf]
        %v3283 = vld [vmem:[%s5 + $0x534] sm:$0xf]
        %v3284 = vld [vmem:[%s5 + $0x538] sm:$0xf]
        %v3285 = vld [vmem:[%s5 + $0x53c] sm:$0xf]
        %v3286 = vld [vmem:[%s5 + $0x540] sm:$0xf]
        %v3287 = vld [vmem:[%s5 + $0x544] sm:$0xf]
        %v3288 = vld [vmem:[%s5 + $0x548] sm:$0xf]
        %v3289 = vld [vmem:[%s5 + $0x54c] sm:$0xf]
        %v3290 = vld [vmem:[%s5 + $0x550] sm:$0xf]
        %v3291 = vld [vmem:[%s5 + $0x554] sm:$0xf]
        %v3292 = vld [vmem:[%s5 + $0x558] sm:$0xf]
        %v3293 = vld [vmem:[%s5 + $0x55c] sm:$0xf]
        %v3294 = vld [vmem:[%s5 + $0x560] sm:$0xf]
        %v3295 = vld [vmem:[%s5 + $0x564] sm:$0xf]
        %v3296 = vld [vmem:[%s5 + $0x568] sm:$0xf]
        %v3297 = vld [vmem:[%s5 + $0x56c] sm:$0xf]
        %v3298 = vld [vmem:[%s5 + $0x570] sm:$0xf]
        %v3299 = vld [vmem:[%s5 + $0x574] sm:$0xf]
        %v3300 = vld [vmem:[%s5 + $0x578] sm:$0xf]
        %v3301 = vld [vmem:[%s5 + $0x57c] sm:$0xf]
        %v3302 = vld [vmem:[%s5 + $0x580] sm:$0xf]
        %v3303 = vld [vmem:[%s5 + $0x584] sm:$0xf]
        %v3304 = vld [vmem:[%s5 + $0x588] sm:$0xf]
        %v3305 = vld [vmem:[%s5 + $0x58c] sm:$0xf]
        %v3306 = vld [vmem:[%s5 + $0x590] sm:$0xf]
        %v3307 = vld [vmem:[%s5 + $0x594] sm:$0xf]
        %v3308 = vld [vmem:[%s5 + $0x598] sm:$0xf]
        %v3309 = vld [vmem:[%s5 + $0x59c] sm:$0xf]
        %v3310 = vld [vmem:[%s5 + $0x5a0] sm:$0xf]
        %v3311 = vld [vmem:[%s5 + $0x5a4] sm:$0xf]
        %v3312 = vld [vmem:[%s5 + $0x5a8] sm:$0xf]
        %v3313 = vld [vmem:[%s5 + $0x5ac] sm:$0xf]
        %v3314 = vld [vmem:[%s5 + $0x5b0] sm:$0xf]
        %v3315 = vld [vmem:[%s5 + $0x5b4] sm:$0xf]
        %v3316 = vld [vmem:[%s5 + $0x5b8] sm:$0xf]
        %v3317 = vld [vmem:[%s5 + $0x5bc] sm:$0xf]
        %v3318 = vld [vmem:[%s5 + $0x5c0] sm:$0xf]
        %v3319 = vld [vmem:[%s5 + $0x5c4] sm:$0xf]
        %v3320 = vld [vmem:[%s5 + $0x5c8] sm:$0xf]
        %v3321 = vld [vmem:[%s5 + $0x5cc] sm:$0xf]
        %v3322 = vld [vmem:[%s5 + $0x5d0] sm:$0xf]
        %v3323 = vld [vmem:[%s5 + $0x5d4] sm:$0xf]
        %v3324 = vld [vmem:[%s5 + $0x5d8] sm:$0xf]
        %v3325 = vld [vmem:[%s5 + $0x5dc] sm:$0xf]
        %v3326 = vld [vmem:[%s5 + $0x5e0] sm:$0xf]
        %v3327 = vld [vmem:[%s5 + $0x5e4] sm:$0xf]
        %v3328 = vld [vmem:[%s5 + $0x5e8] sm:$0xf]
        %v3329 = vld [vmem:[%s5 + $0x5ec] sm:$0xf]
        %v3330 = vld [vmem:[%s5 + $0x5f0] sm:$0xf]
        %v3331 = vld [vmem:[%s5 + $0x5f4] sm:$0xf]
        %v3332 = vld [vmem:[%s5 + $0x5f8] sm:$0xf]
        %v3333 = vld [vmem:[%s5 + $0x5fc] sm:$0xf]
        %v3334 = vld [vmem:[%s5 + $0x600] sm:$0xf]
        %v3335 = vld [vmem:[%s5 + $0x604] sm:$0xf]
        %v3336 = vld [vmem:[%s5 + $0x608] sm:$0xf]
        %v3337 = vld [vmem:[%s5 + $0x60c] sm:$0xf]
        %v3338 = vld [vmem:[%s5 + $0x610] sm:$0xf]
        %v3339 = vld [vmem:[%s5 + $0x614] sm:$0xf]
        %v3340 = vld [vmem:[%s5 + $0x618] sm:$0xf]
        %v3341 = vld [vmem:[%s5 + $0x61c] sm:$0xf]
        %v3342 = vld [vmem:[%s5 + $0x620] sm:$0xf]
        %v3343 = vld [vmem:[%s5 + $0x624] sm:$0xf]
        %v3344 = vld [vmem:[%s5 + $0x628] sm:$0xf]
        %v3345 = vld [vmem:[%s5 + $0x62c] sm:$0xf]
        %v3346 = vld [vmem:[%s5 + $0x630] sm:$0xf]
        %v3347 = vld [vmem:[%s5 + $0x634] sm:$0xf]
        %v3348 = vld [vmem:[%s5 + $0x638] sm:$0xf]
        %v3349 = vld [vmem:[%s5 + $0x63c] sm:$0xf]
        %v3350 = vld [vmem:[%s6] sm:$0x1]
        %v3352 = vlaneseq
        %v3353 = vshrl.u32 %v3352, 7
        %v3354 = vsub.s32 0, %v3353
        %v3355 = vrot.slane %v3350, %v3354
        %v3357 = vpack.c.b16 %v2775, %v2750
        %v3358 = vpack.c.b16 %v2776, %v2751
        %v3359 = vpack.c.b16 %v2777, %v2752
        %v3360 = vpack.c.b16 %v2778, %v2753
        %v3361 = vpack.c.b16 %v2779, %v2754
        %v3362 = vpack.c.b16 %v2780, %v2755
        %v3363 = vpack.c.b16 %v2781, %v2756
        %v3364 = vpack.c.b16 %v2782, %v2757
        %v3365 = vpack.c.b16 %v2783, %v2758
        %v3366 = vpack.c.b16 %v2784, %v2759
        %v3367 = vpack.c.b16 %v2785, %v2760
        %v3368 = vpack.c.b16 %v2786, %v2761
        %v3369 = vpack.c.b16 %v2787, %v2762
        %v3370 = vpack.c.b16 %v2788, %v2763
        %v3371 = vpack.c.b16 %v2789, %v2764
        %v3372 = vpack.c.b16 %v2790, %v2765
        %v3373 = vpack.c.b16 %v2791, %v2766
        %v3374 = vpack.c.b16 %v2792, %v2767
        %v3375 = vpack.c.b16 %v2793, %v2768
        %v3376 = vpack.c.b16 %v2794, %v2769
        %v3377 = vpack.c.b16 %v2795, %v2770
        %v3378 = vpack.c.b16 %v2796, %v2771
        %v3379 = vpack.c.b16 %v2797, %v2772
        %v3380 = vpack.c.b16 %v2798, %v2773
        %v3381 = vpack.c.b16 %v2799, %v2774
        %v3382 = vpack.c.b16 %v2825, %v2800
        %v3383 = vpack.c.b16 %v2826, %v2801
        %v3384 = vpack.c.b16 %v2827, %v2802
        %v3385 = vpack.c.b16 %v2828, %v2803
        %v3386 = vpack.c.b16 %v2829, %v2804
        %v3387 = vpack.c.b16 %v2830, %v2805
        %v3388 = vpack.c.b16 %v2831, %v2806
        %v3389 = vpack.c.b16 %v2832, %v2807
        %v3390 = vpack.c.b16 %v2833, %v2808
        %v3391 = vpack.c.b16 %v2834, %v2809
        %v3392 = vpack.c.b16 %v2835, %v2810
        %v3393 = vpack.c.b16 %v2836, %v2811
        %v3394 = vpack.c.b16 %v2837, %v2812
        %v3395 = vpack.c.b16 %v2838, %v2813
        %v3396 = vpack.c.b16 %v2839, %v2814
        %v3397 = vpack.c.b16 %v2840, %v2815
        %v3398 = vpack.c.b16 %v2841, %v2816
        %v3399 = vpack.c.b16 %v2842, %v2817
        %v3400 = vpack.c.b16 %v2843, %v2818
        %v3401 = vpack.c.b16 %v2844, %v2819
        %v3402 = vpack.c.b16 %v2845, %v2820
        %v3403 = vpack.c.b16 %v2846, %v2821
        %v3404 = vpack.c.b16 %v2847, %v2822
        %v3405 = vpack.c.b16 %v2848, %v2823
        %v3406 = vpack.c.b16 %v2849, %v2824
        %v3407 = vpack.c.b16 %v2875, %v2850
        %v3408 = vpack.c.b16 %v2876, %v2851
        %v3409 = vpack.c.b16 %v2877, %v2852
        %v3410 = vpack.c.b16 %v2878, %v2853
        %v3411 = vpack.c.b16 %v2879, %v2854
        %v3412 = vpack.c.b16 %v2880, %v2855
        %v3413 = vpack.c.b16 %v2881, %v2856
        %v3414 = vpack.c.b16 %v2882, %v2857
        %v3415 = vpack.c.b16 %v2883, %v2858
        %v3416 = vpack.c.b16 %v2884, %v2859
        %v3417 = vpack.c.b16 %v2885, %v2860
        %v3418 = vpack.c.b16 %v2886, %v2861
        %v3419 = vpack.c.b16 %v2887, %v2862
        %v3420 = vpack.c.b16 %v2888, %v2863
        %v3421 = vpack.c.b16 %v2889, %v2864
        %v3422 = vpack.c.b16 %v2890, %v2865
        %v3423 = vpack.c.b16 %v2891, %v2866
        %v3424 = vpack.c.b16 %v2892, %v2867
        %v3425 = vpack.c.b16 %v2893, %v2868
        %v3426 = vpack.c.b16 %v2894, %v2869
        %v3427 = vpack.c.b16 %v2895, %v2870
        %v3428 = vpack.c.b16 %v2896, %v2871
        %v3429 = vpack.c.b16 %v2897, %v2872
        %v3430 = vpack.c.b16 %v2898, %v2873
        %v3431 = vpack.c.b16 %v2899, %v2874
        %v3432 = vpack.c.b16 %v2925, %v2900
        %v3433 = vpack.c.b16 %v2926, %v2901
        %v3434 = vpack.c.b16 %v2927, %v2902
        %v3435 = vpack.c.b16 %v2928, %v2903
        %v3436 = vpack.c.b16 %v2929, %v2904
        %v3437 = vpack.c.b16 %v2930, %v2905
        %v3438 = vpack.c.b16 %v2931, %v2906
        %v3439 = vpack.c.b16 %v2932, %v2907
        %v3440 = vpack.c.b16 %v2933, %v2908
        %v3441 = vpack.c.b16 %v2934, %v2909
        %v3442 = vpack.c.b16 %v2935, %v2910
        %v3443 = vpack.c.b16 %v2936, %v2911
        %v3444 = vpack.c.b16 %v2937, %v2912
        %v3445 = vpack.c.b16 %v2938, %v2913
        %v3446 = vpack.c.b16 %v2939, %v2914
        %v3447 = vpack.c.b16 %v2940, %v2915
        %v3448 = vpack.c.b16 %v2941, %v2916
        %v3449 = vpack.c.b16 %v2942, %v2917
        %v3450 = vpack.c.b16 %v2943, %v2918
        %v3451 = vpack.c.b16 %v2944, %v2919
        %v3452 = vpack.c.b16 %v2945, %v2920
        %v3453 = vpack.c.b16 %v2946, %v2921
        %v3454 = vpack.c.b16 %v2947, %v2922
        %v3455 = vpack.c.b16 %v2948, %v2923
        %v3456 = vpack.c.b16 %v2949, %v2924
        %v3957 = vunpack.c.l.b16 %v2950
        %v3958 = vunpack.c.l.b16 %v2951
        %v3959 = vunpack.c.l.b16 %v2952
        %v3960 = vunpack.c.l.b16 %v2953
        %v3961 = vunpack.c.l.b16 %v2954
        %v3962 = vunpack.c.l.b16 %v2955
        %v3963 = vunpack.c.l.b16 %v2956
        %v3964 = vunpack.c.l.b16 %v2957
        %v3965 = vunpack.c.l.b16 %v2958
        %v3966 = vunpack.c.l.b16 %v2959
        %v3967 = vunpack.c.l.b16 %v2960
        %v3968 = vunpack.c.l.b16 %v2961
        %v3969 = vunpack.c.l.b16 %v2962
        %v3970 = vunpack.c.l.b16 %v2963
        %v3971 = vunpack.c.l.b16 %v2964
        %v3972 = vunpack.c.l.b16 %v2965
        %v3973 = vunpack.c.l.b16 %v2966
        %v3974 = vunpack.c.l.b16 %v2967
        %v3975 = vunpack.c.l.b16 %v2968
        %v3976 = vunpack.c.l.b16 %v2969
        %v3977 = vunpack.c.l.b16 %v2970
        %v3978 = vunpack.c.l.b16 %v2971
        %v3979 = vunpack.c.l.b16 %v2972
        %v3980 = vunpack.c.l.b16 %v2973
        %v3981 = vunpack.c.l.b16 %v2974
        %v3982 = vunpack.c.l.b16 %v2975
        %v3983 = vunpack.c.l.b16 %v2976
        %v3984 = vunpack.c.l.b16 %v2977
        %v3985 = vunpack.c.l.b16 %v2978
        %v3986 = vunpack.c.l.b16 %v2979
        %v3987 = vunpack.c.l.b16 %v2980
        %v3988 = vunpack.c.l.b16 %v2981
        %v3989 = vunpack.c.l.b16 %v2982
        %v3990 = vunpack.c.l.b16 %v2983
        %v3991 = vunpack.c.l.b16 %v2984
        %v3992 = vunpack.c.l.b16 %v2985
        %v3993 = vunpack.c.l.b16 %v2986
        %v3994 = vunpack.c.l.b16 %v2987
        %v3995 = vunpack.c.l.b16 %v2988
        %v3996 = vunpack.c.l.b16 %v2989
        %v3997 = vunpack.c.l.b16 %v2990
        %v3998 = vunpack.c.l.b16 %v2991
        %v3999 = vunpack.c.l.b16 %v2992
        %v4000 = vunpack.c.l.b16 %v2993
        %v4001 = vunpack.c.l.b16 %v2994
        %v4002 = vunpack.c.l.b16 %v2995
        %v4003 = vunpack.c.l.b16 %v2996
        %v4004 = vunpack.c.l.b16 %v2997
        %v4005 = vunpack.c.l.b16 %v2998
        %v4006 = vunpack.c.l.b16 %v2999
        %v4007 = vunpack.c.l.b16 %v3000
        %v4008 = vunpack.c.l.b16 %v3001
        %v4009 = vunpack.c.l.b16 %v3002
        %v4010 = vunpack.c.l.b16 %v3003
        %v4011 = vunpack.c.l.b16 %v3004
        %v4012 = vunpack.c.l.b16 %v3005
        %v4013 = vunpack.c.l.b16 %v3006
        %v4014 = vunpack.c.l.b16 %v3007
        %v4015 = vunpack.c.l.b16 %v3008
        %v4016 = vunpack.c.l.b16 %v3009
        %v4017 = vunpack.c.l.b16 %v3010
        %v4018 = vunpack.c.l.b16 %v3011
        %v4019 = vunpack.c.l.b16 %v3012
        %v4020 = vunpack.c.l.b16 %v3013
        %v4021 = vunpack.c.l.b16 %v3014
        %v4022 = vunpack.c.l.b16 %v3015
        %v4023 = vunpack.c.l.b16 %v3016
        %v4024 = vunpack.c.l.b16 %v3017
        %v4025 = vunpack.c.l.b16 %v3018
        %v4026 = vunpack.c.l.b16 %v3019
        %v4027 = vunpack.c.l.b16 %v3020
        %v4028 = vunpack.c.l.b16 %v3021
        %v4029 = vunpack.c.l.b16 %v3022
        %v4030 = vunpack.c.l.b16 %v3023
        %v4031 = vunpack.c.l.b16 %v3024
        %v4032 = vunpack.c.l.b16 %v3025
        %v4033 = vunpack.c.l.b16 %v3026
        %v4034 = vunpack.c.l.b16 %v3027
        %v4035 = vunpack.c.l.b16 %v3028
        %v4036 = vunpack.c.l.b16 %v3029
        %v4037 = vunpack.c.l.b16 %v3030
        %v4038 = vunpack.c.l.b16 %v3031
        %v4039 = vunpack.c.l.b16 %v3032
        %v4040 = vunpack.c.l.b16 %v3033
        %v4041 = vunpack.c.l.b16 %v3034
        %v4042 = vunpack.c.l.b16 %v3035
        %v4043 = vunpack.c.l.b16 %v3036
        %v4044 = vunpack.c.l.b16 %v3037
        %v4045 = vunpack.c.l.b16 %v3038
        %v4046 = vunpack.c.l.b16 %v3039
        %v4047 = vunpack.c.l.b16 %v3040
        %v4048 = vunpack.c.l.b16 %v3041
        %v4049 = vunpack.c.l.b16 %v3042
        %v4050 = vunpack.c.l.b16 %v3043
        %v4051 = vunpack.c.l.b16 %v3044
        %v4052 = vunpack.c.l.b16 %v3045
        %v4053 = vunpack.c.l.b16 %v3046
        %v4054 = vunpack.c.l.b16 %v3047
        %v4055 = vunpack.c.l.b16 %v3048
        %v4056 = vunpack.c.l.b16 %v3049
        %v4057 = vunpack.c.l.b16 %v3050
        %v4058 = vunpack.c.l.b16 %v3051
        %v4059 = vunpack.c.l.b16 %v3052
        %v4060 = vunpack.c.l.b16 %v3053
        %v4061 = vunpack.c.l.b16 %v3054
        %v4062 = vunpack.c.l.b16 %v3055
        %v4063 = vunpack.c.l.b16 %v3056
        %v4064 = vunpack.c.l.b16 %v3057
        %v4065 = vunpack.c.l.b16 %v3058
        %v4066 = vunpack.c.l.b16 %v3059
        %v4067 = vunpack.c.l.b16 %v3060
        %v4068 = vunpack.c.l.b16 %v3061
        %v4069 = vunpack.c.l.b16 %v3062
        %v4070 = vunpack.c.l.b16 %v3063
        %v4071 = vunpack.c.l.b16 %v3064
        %v4072 = vunpack.c.l.b16 %v3065
        %v4073 = vunpack.c.l.b16 %v3066
        %v4074 = vunpack.c.l.b16 %v3067
        %v4075 = vunpack.c.l.b16 %v3068
        %v4076 = vunpack.c.l.b16 %v3069
        %v4077 = vunpack.c.l.b16 %v3070
        %v4078 = vunpack.c.l.b16 %v3071
        %v4079 = vunpack.c.l.b16 %v3072
        %v4080 = vunpack.c.l.b16 %v3073
        %v4081 = vunpack.c.l.b16 %v3074
        %v4082 = vunpack.c.l.b16 %v3075
        %v4083 = vunpack.c.l.b16 %v3076
        %v4084 = vunpack.c.l.b16 %v3077
        %v4085 = vunpack.c.l.b16 %v3078
        %v4086 = vunpack.c.l.b16 %v3079
        %v4087 = vunpack.c.l.b16 %v3080
        %v4088 = vunpack.c.l.b16 %v3081
        %v4089 = vunpack.c.l.b16 %v3082
        %v4090 = vunpack.c.l.b16 %v3083
        %v4091 = vunpack.c.l.b16 %v3084
        %v4092 = vunpack.c.l.b16 %v3085
        %v4093 = vunpack.c.l.b16 %v3086
        %v4094 = vunpack.c.l.b16 %v3087
        %v4095 = vunpack.c.l.b16 %v3088
        %v4096 = vunpack.c.l.b16 %v3089
        %v4097 = vunpack.c.l.b16 %v3090
        %v4098 = vunpack.c.l.b16 %v3091
        %v4099 = vunpack.c.l.b16 %v3092
        %v4100 = vunpack.c.l.b16 %v3093
        %v4101 = vunpack.c.l.b16 %v3094
        %v4102 = vunpack.c.l.b16 %v3095
        %v4103 = vunpack.c.l.b16 %v3096
        %v4104 = vunpack.c.l.b16 %v3097
        %v4105 = vunpack.c.l.b16 %v3098
        %v4106 = vunpack.c.l.b16 %v3099
        %v4107 = vunpack.c.l.b16 %v3100
        %v4108 = vunpack.c.l.b16 %v3101
        %v4109 = vunpack.c.l.b16 %v3102
        %v4110 = vunpack.c.l.b16 %v3103
        %v4111 = vunpack.c.l.b16 %v3104
        %v4112 = vunpack.c.l.b16 %v3105
        %v4113 = vunpack.c.l.b16 %v3106
        %v4114 = vunpack.c.l.b16 %v3107
        %v4115 = vunpack.c.l.b16 %v3108
        %v4116 = vunpack.c.l.b16 %v3109
        %v4117 = vunpack.c.l.b16 %v3110
        %v4118 = vunpack.c.l.b16 %v3111
        %v4119 = vunpack.c.l.b16 %v3112
        %v4120 = vunpack.c.l.b16 %v3113
        %v4121 = vunpack.c.l.b16 %v3114
        %v4122 = vunpack.c.l.b16 %v3115
        %v4123 = vunpack.c.l.b16 %v3116
        %v4124 = vunpack.c.l.b16 %v3117
        %v4125 = vunpack.c.l.b16 %v3118
        %v4126 = vunpack.c.l.b16 %v3119
        %v4127 = vunpack.c.l.b16 %v3120
        %v4128 = vunpack.c.l.b16 %v3121
        %v4129 = vunpack.c.l.b16 %v3122
        %v4130 = vunpack.c.l.b16 %v3123
        %v4131 = vunpack.c.l.b16 %v3124
        %v4132 = vunpack.c.l.b16 %v3125
        %v4133 = vunpack.c.l.b16 %v3126
        %v4134 = vunpack.c.l.b16 %v3127
        %v4135 = vunpack.c.l.b16 %v3128
        %v4136 = vunpack.c.l.b16 %v3129
        %v4137 = vunpack.c.l.b16 %v3130
        %v4138 = vunpack.c.l.b16 %v3131
        %v4139 = vunpack.c.l.b16 %v3132
        %v4140 = vunpack.c.l.b16 %v3133
        %v4141 = vunpack.c.l.b16 %v3134
        %v4142 = vunpack.c.l.b16 %v3135
        %v4143 = vunpack.c.l.b16 %v3136
        %v4144 = vunpack.c.l.b16 %v3137
        %v4145 = vunpack.c.l.b16 %v3138
        %v4146 = vunpack.c.l.b16 %v3139
        %v4147 = vunpack.c.l.b16 %v3140
        %v4148 = vunpack.c.l.b16 %v3141
        %v4149 = vunpack.c.l.b16 %v3142
        %v4150 = vunpack.c.l.b16 %v3143
        %v4151 = vunpack.c.l.b16 %v3144
        %v4152 = vunpack.c.l.b16 %v3145
        %v4153 = vunpack.c.l.b16 %v3146
        %v4154 = vunpack.c.l.b16 %v3147
        %v4155 = vunpack.c.l.b16 %v3148
        %v4156 = vunpack.c.l.b16 %v3149
        %v4157 = vunpack.c.l.b16 %v3150
        %v4158 = vunpack.c.l.b16 %v3151
        %v4159 = vunpack.c.l.b16 %v3152
        %v4160 = vunpack.c.l.b16 %v3153
        %v4161 = vunpack.c.l.b16 %v3154
        %v4162 = vunpack.c.l.b16 %v3155
        %v4163 = vunpack.c.l.b16 %v3156
        %v4164 = vunpack.c.l.b16 %v3157
        %v4165 = vunpack.c.l.b16 %v3158
        %v4166 = vunpack.c.l.b16 %v3159
        %v4167 = vunpack.c.l.b16 %v3160
        %v4168 = vunpack.c.l.b16 %v3161
        %v4169 = vunpack.c.l.b16 %v3162
        %v4170 = vunpack.c.l.b16 %v3163
        %v4171 = vunpack.c.l.b16 %v3164
        %v4172 = vunpack.c.l.b16 %v3165
        %v4173 = vunpack.c.l.b16 %v3166
        %v4174 = vunpack.c.l.b16 %v3167
        %v4175 = vunpack.c.l.b16 %v3168
        %v4176 = vunpack.c.l.b16 %v3169
        %v4177 = vunpack.c.l.b16 %v3170
        %v4178 = vunpack.c.l.b16 %v3171
        %v4179 = vunpack.c.l.b16 %v3172
        %v4180 = vunpack.c.l.b16 %v3173
        %v4181 = vunpack.c.l.b16 %v3174
        %v4182 = vunpack.c.l.b16 %v3175
        %v4183 = vunpack.c.l.b16 %v3176
        %v4184 = vunpack.c.l.b16 %v3177
        %v4185 = vunpack.c.l.b16 %v3178
        %v4186 = vunpack.c.l.b16 %v3179
        %v4187 = vunpack.c.l.b16 %v3180
        %v4188 = vunpack.c.l.b16 %v3181
        %v4189 = vunpack.c.l.b16 %v3182
        %v4190 = vunpack.c.l.b16 %v3183
        %v4191 = vunpack.c.l.b16 %v3184
        %v4192 = vunpack.c.l.b16 %v3185
        %v4193 = vunpack.c.l.b16 %v3186
        %v4194 = vunpack.c.l.b16 %v3187
        %v4195 = vunpack.c.l.b16 %v3188
        %v4196 = vunpack.c.l.b16 %v3189
        %v4197 = vunpack.c.l.b16 %v3190
        %v4198 = vunpack.c.l.b16 %v3191
        %v4199 = vunpack.c.l.b16 %v3192
        %v4200 = vunpack.c.l.b16 %v3193
        %v4201 = vunpack.c.l.b16 %v3194
        %v4202 = vunpack.c.l.b16 %v3195
        %v4203 = vunpack.c.l.b16 %v3196
        %v4204 = vunpack.c.l.b16 %v3197
        %v4205 = vunpack.c.l.b16 %v3198
        %v4206 = vunpack.c.l.b16 %v3199
        %v4207 = vunpack.c.l.b16 %v3200
        %v4208 = vunpack.c.l.b16 %v3201
        %v4209 = vunpack.c.l.b16 %v3202
        %v4210 = vunpack.c.l.b16 %v3203
        %v4211 = vunpack.c.l.b16 %v3204
        %v4212 = vunpack.c.l.b16 %v3205
        %v4213 = vunpack.c.l.b16 %v3206
        %v4214 = vunpack.c.l.b16 %v3207
        %v4215 = vunpack.c.l.b16 %v3208
        %v4216 = vunpack.c.l.b16 %v3209
        %v4217 = vunpack.c.l.b16 %v3210
        %v4218 = vunpack.c.l.b16 %v3211
        %v4219 = vunpack.c.l.b16 %v3212
        %v4220 = vunpack.c.l.b16 %v3213
        %v4221 = vunpack.c.l.b16 %v3214
        %v4222 = vunpack.c.l.b16 %v3215
        %v4223 = vunpack.c.l.b16 %v3216
        %v4224 = vunpack.c.l.b16 %v3217
        %v4225 = vunpack.c.l.b16 %v3218
        %v4226 = vunpack.c.l.b16 %v3219
        %v4227 = vunpack.c.l.b16 %v3220
        %v4228 = vunpack.c.l.b16 %v3221
        %v4229 = vunpack.c.l.b16 %v3222
        %v4230 = vunpack.c.l.b16 %v3223
        %v4231 = vunpack.c.l.b16 %v3224
        %v4232 = vunpack.c.l.b16 %v3225
        %v4233 = vunpack.c.l.b16 %v3226
        %v4234 = vunpack.c.l.b16 %v3227
        %v4235 = vunpack.c.l.b16 %v3228
        %v4236 = vunpack.c.l.b16 %v3229
        %v4237 = vunpack.c.l.b16 %v3230
        %v4238 = vunpack.c.l.b16 %v3231
        %v4239 = vunpack.c.l.b16 %v3232
        %v4240 = vunpack.c.l.b16 %v3233
        %v4241 = vunpack.c.l.b16 %v3234
        %v4242 = vunpack.c.l.b16 %v3235
        %v4243 = vunpack.c.l.b16 %v3236
        %v4244 = vunpack.c.l.b16 %v3237
        %v4245 = vunpack.c.l.b16 %v3238
        %v4246 = vunpack.c.l.b16 %v3239
        %v4247 = vunpack.c.l.b16 %v3240
        %v4248 = vunpack.c.l.b16 %v3241
        %v4249 = vunpack.c.l.b16 %v3242
        %v4250 = vunpack.c.l.b16 %v3243
        %v4251 = vunpack.c.l.b16 %v3244
        %v4252 = vunpack.c.l.b16 %v3245
        %v4253 = vunpack.c.l.b16 %v3246
        %v4254 = vunpack.c.l.b16 %v3247
        %v4255 = vunpack.c.l.b16 %v3248
        %v4256 = vunpack.c.l.b16 %v3249
        %v4257 = vunpack.c.l.b16 %v3250
        %v4258 = vunpack.c.l.b16 %v3251
        %v4259 = vunpack.c.l.b16 %v3252
        %v4260 = vunpack.c.l.b16 %v3253
        %v4261 = vunpack.c.l.b16 %v3254
        %v4262 = vunpack.c.l.b16 %v3255
        %v4263 = vunpack.c.l.b16 %v3256
        %v4264 = vunpack.c.l.b16 %v3257
        %v4265 = vunpack.c.l.b16 %v3258
        %v4266 = vunpack.c.l.b16 %v3259
        %v4267 = vunpack.c.l.b16 %v3260
        %v4268 = vunpack.c.l.b16 %v3261
        %v4269 = vunpack.c.l.b16 %v3262
        %v4270 = vunpack.c.l.b16 %v3263
        %v4271 = vunpack.c.l.b16 %v3264
        %v4272 = vunpack.c.l.b16 %v3265
        %v4273 = vunpack.c.l.b16 %v3266
        %v4274 = vunpack.c.l.b16 %v3267
        %v4275 = vunpack.c.l.b16 %v3268
        %v4276 = vunpack.c.l.b16 %v3269
        %v4277 = vunpack.c.l.b16 %v3270
        %v4278 = vunpack.c.l.b16 %v3271
        %v4279 = vunpack.c.l.b16 %v3272
        %v4280 = vunpack.c.l.b16 %v3273
        %v4281 = vunpack.c.l.b16 %v3274
        %v4282 = vunpack.c.l.b16 %v3275
        %v4283 = vunpack.c.l.b16 %v3276
        %v4284 = vunpack.c.l.b16 %v3277
        %v4285 = vunpack.c.l.b16 %v3278
        %v4286 = vunpack.c.l.b16 %v3279
        %v4287 = vunpack.c.l.b16 %v3280
        %v4288 = vunpack.c.l.b16 %v3281
        %v4289 = vunpack.c.l.b16 %v3282
        %v4290 = vunpack.c.l.b16 %v3283
        %v4291 = vunpack.c.l.b16 %v3284
        %v4292 = vunpack.c.l.b16 %v3285
        %v4293 = vunpack.c.l.b16 %v3286
        %v4294 = vunpack.c.l.b16 %v3287
        %v4295 = vunpack.c.l.b16 %v3288
        %v4296 = vunpack.c.l.b16 %v3289
        %v4297 = vunpack.c.l.b16 %v3290
        %v4298 = vunpack.c.l.b16 %v3291
        %v4299 = vunpack.c.l.b16 %v3292
        %v4300 = vunpack.c.l.b16 %v3293
        %v4301 = vunpack.c.l.b16 %v3294
        %v4302 = vunpack.c.l.b16 %v3295
        %v4303 = vunpack.c.l.b16 %v3296
        %v4304 = vunpack.c.l.b16 %v3297
        %v4305 = vunpack.c.l.b16 %v3298
        %v4306 = vunpack.c.l.b16 %v3299
        %v4307 = vunpack.c.l.b16 %v3300
        %v4308 = vunpack.c.l.b16 %v3301
        %v4309 = vunpack.c.l.b16 %v3302
        %v4310 = vunpack.c.l.b16 %v3303
        %v4311 = vunpack.c.l.b16 %v3304
        %v4312 = vunpack.c.l.b16 %v3305
        %v4313 = vunpack.c.l.b16 %v3306
        %v4314 = vunpack.c.l.b16 %v3307
        %v4315 = vunpack.c.l.b16 %v3308
        %v4316 = vunpack.c.l.b16 %v3309
        %v4317 = vunpack.c.l.b16 %v3310
        %v4318 = vunpack.c.l.b16 %v3311
        %v4319 = vunpack.c.l.b16 %v3312
        %v4320 = vunpack.c.l.b16 %v3313
        %v4321 = vunpack.c.l.b16 %v3314
        %v4322 = vunpack.c.l.b16 %v3315
        %v4323 = vunpack.c.l.b16 %v3316
        %v4324 = vunpack.c.l.b16 %v3317
        %v4325 = vunpack.c.l.b16 %v3318
        %v4326 = vunpack.c.l.b16 %v3319
        %v4327 = vunpack.c.l.b16 %v3320
        %v4328 = vunpack.c.l.b16 %v3321
        %v4329 = vunpack.c.l.b16 %v3322
        %v4330 = vunpack.c.l.b16 %v3323
        %v4331 = vunpack.c.l.b16 %v3324
        %v4332 = vunpack.c.l.b16 %v3325
        %v4333 = vunpack.c.l.b16 %v3326
        %v4334 = vunpack.c.l.b16 %v3327
        %v4335 = vunpack.c.l.b16 %v3328
        %v4336 = vunpack.c.l.b16 %v3329
        %v4337 = vunpack.c.l.b16 %v3330
        %v4338 = vunpack.c.l.b16 %v3331
        %v4339 = vunpack.c.l.b16 %v3332
        %v4340 = vunpack.c.l.b16 %v3333
        %v4341 = vunpack.c.l.b16 %v3334
        %v4342 = vunpack.c.l.b16 %v3335
        %v4343 = vunpack.c.l.b16 %v3336
        %v4344 = vunpack.c.l.b16 %v3337
        %v4345 = vunpack.c.l.b16 %v3338
        %v4346 = vunpack.c.l.b16 %v3339
        %v4347 = vunpack.c.l.b16 %v3340
        %v4348 = vunpack.c.l.b16 %v3341
        %v4349 = vunpack.c.l.b16 %v3342
        %v4350 = vunpack.c.l.b16 %v3343
        %v4351 = vunpack.c.l.b16 %v3344
        %v4352 = vunpack.c.l.b16 %v3345
        %v4353 = vunpack.c.l.b16 %v3346
        %v4354 = vunpack.c.l.b16 %v3347
        %v4355 = vunpack.c.l.b16 %v3348
        %v4356 = vunpack.c.l.b16 %v3349
        %v4357 = vpack.c.b16 %v3958, %v3957
        %v4358 = vpack.c.b16 %v3960, %v3959
        %v4359 = vpack.c.b16 %v3962, %v3961
        %v4360 = vpack.c.b16 %v3964, %v3963
        %v4361 = vpack.c.b16 %v3966, %v3965
        %v4362 = vpack.c.b16 %v3968, %v3967
        %v4363 = vpack.c.b16 %v3970, %v3969
        %v4364 = vpack.c.b16 %v3972, %v3971
        %v4365 = vpack.c.b16 %v3974, %v3973
        %v4366 = vpack.c.b16 %v3976, %v3975
        %v4367 = vpack.c.b16 %v3978, %v3977
        %v4368 = vpack.c.b16 %v3980, %v3979
        %v4369 = vpack.c.b16 %v3982, %v3981
        %v4370 = vpack.c.b16 %v3984, %v3983
        %v4371 = vpack.c.b16 %v3986, %v3985
        %v4372 = vpack.c.b16 %v3988, %v3987
        %v4373 = vpack.c.b16 %v3990, %v3989
        %v4374 = vpack.c.b16 %v3992, %v3991
        %v4375 = vpack.c.b16 %v3994, %v3993
        %v4376 = vpack.c.b16 %v3996, %v3995
        %v4377 = vpack.c.b16 %v3998, %v3997
        %v4378 = vpack.c.b16 %v4000, %v3999
        %v4379 = vpack.c.b16 %v4002, %v4001
        %v4380 = vpack.c.b16 %v4004, %v4003
        %v4381 = vpack.c.b16 %v4006, %v4005
        %v4382 = vpack.c.b16 %v4008, %v4007
        %v4383 = vpack.c.b16 %v4010, %v4009
        %v4384 = vpack.c.b16 %v4012, %v4011
        %v4385 = vpack.c.b16 %v4014, %v4013
        %v4386 = vpack.c.b16 %v4016, %v4015
        %v4387 = vpack.c.b16 %v4018, %v4017
        %v4388 = vpack.c.b16 %v4020, %v4019
        %v4389 = vpack.c.b16 %v4022, %v4021
        %v4390 = vpack.c.b16 %v4024, %v4023
        %v4391 = vpack.c.b16 %v4026, %v4025
        %v4392 = vpack.c.b16 %v4028, %v4027
        %v4393 = vpack.c.b16 %v4030, %v4029
        %v4394 = vpack.c.b16 %v4032, %v4031
        %v4395 = vpack.c.b16 %v4034, %v4033
        %v4396 = vpack.c.b16 %v4036, %v4035
        %v4397 = vpack.c.b16 %v4038, %v4037
        %v4398 = vpack.c.b16 %v4040, %v4039
        %v4399 = vpack.c.b16 %v4042, %v4041
        %v4400 = vpack.c.b16 %v4044, %v4043
        %v4401 = vpack.c.b16 %v4046, %v4045
        %v4402 = vpack.c.b16 %v4048, %v4047
        %v4403 = vpack.c.b16 %v4050, %v4049
        %v4404 = vpack.c.b16 %v4052, %v4051
        %v4405 = vpack.c.b16 %v4054, %v4053
        %v4406 = vpack.c.b16 %v4056, %v4055
        %v4407 = vpack.c.b16 %v4058, %v4057
        %v4408 = vpack.c.b16 %v4060, %v4059
        %v4409 = vpack.c.b16 %v4062, %v4061
        %v4410 = vpack.c.b16 %v4064, %v4063
        %v4411 = vpack.c.b16 %v4066, %v4065
        %v4412 = vpack.c.b16 %v4068, %v4067
        %v4413 = vpack.c.b16 %v4070, %v4069
        %v4414 = vpack.c.b16 %v4072, %v4071
        %v4415 = vpack.c.b16 %v4074, %v4073
        %v4416 = vpack.c.b16 %v4076, %v4075
        %v4417 = vpack.c.b16 %v4078, %v4077
        %v4418 = vpack.c.b16 %v4080, %v4079
        %v4419 = vpack.c.b16 %v4082, %v4081
        %v4420 = vpack.c.b16 %v4084, %v4083
        %v4421 = vpack.c.b16 %v4086, %v4085
        %v4422 = vpack.c.b16 %v4088, %v4087
        %v4423 = vpack.c.b16 %v4090, %v4089
        %v4424 = vpack.c.b16 %v4092, %v4091
        %v4425 = vpack.c.b16 %v4094, %v4093
        %v4426 = vpack.c.b16 %v4096, %v4095
        %v4427 = vpack.c.b16 %v4098, %v4097
        %v4428 = vpack.c.b16 %v4100, %v4099
        %v4429 = vpack.c.b16 %v4102, %v4101
        %v4430 = vpack.c.b16 %v4104, %v4103
        %v4431 = vpack.c.b16 %v4106, %v4105
        %v4432 = vpack.c.b16 %v4108, %v4107
        %v4433 = vpack.c.b16 %v4110, %v4109
        %v4434 = vpack.c.b16 %v4112, %v4111
        %v4435 = vpack.c.b16 %v4114, %v4113
        %v4436 = vpack.c.b16 %v4116, %v4115
        %v4437 = vpack.c.b16 %v4118, %v4117
        %v4438 = vpack.c.b16 %v4120, %v4119
        %v4439 = vpack.c.b16 %v4122, %v4121
        %v4440 = vpack.c.b16 %v4124, %v4123
        %v4441 = vpack.c.b16 %v4126, %v4125
        %v4442 = vpack.c.b16 %v4128, %v4127
        %v4443 = vpack.c.b16 %v4130, %v4129
        %v4444 = vpack.c.b16 %v4132, %v4131
        %v4445 = vpack.c.b16 %v4134, %v4133
        %v4446 = vpack.c.b16 %v4136, %v4135
        %v4447 = vpack.c.b16 %v4138, %v4137
        %v4448 = vpack.c.b16 %v4140, %v4139
        %v4449 = vpack.c.b16 %v4142, %v4141
        %v4450 = vpack.c.b16 %v4144, %v4143
        %v4451 = vpack.c.b16 %v4146, %v4145
        %v4452 = vpack.c.b16 %v4148, %v4147
        %v4453 = vpack.c.b16 %v4150, %v4149
        %v4454 = vpack.c.b16 %v4152, %v4151
        %v4455 = vpack.c.b16 %v4154, %v4153
        %v4456 = vpack.c.b16 %v4156, %v4155
        %v4457 = vpack.c.b16 %v4158, %v4157
        %v4458 = vpack.c.b16 %v4160, %v4159
        %v4459 = vpack.c.b16 %v4162, %v4161
        %v4460 = vpack.c.b16 %v4164, %v4163
        %v4461 = vpack.c.b16 %v4166, %v4165
        %v4462 = vpack.c.b16 %v4168, %v4167
        %v4463 = vpack.c.b16 %v4170, %v4169
        %v4464 = vpack.c.b16 %v4172, %v4171
        %v4465 = vpack.c.b16 %v4174, %v4173
        %v4466 = vpack.c.b16 %v4176, %v4175
        %v4467 = vpack.c.b16 %v4178, %v4177
        %v4468 = vpack.c.b16 %v4180, %v4179
        %v4469 = vpack.c.b16 %v4182, %v4181
        %v4470 = vpack.c.b16 %v4184, %v4183
        %v4471 = vpack.c.b16 %v4186, %v4185
        %v4472 = vpack.c.b16 %v4188, %v4187
        %v4473 = vpack.c.b16 %v4190, %v4189
        %v4474 = vpack.c.b16 %v4192, %v4191
        %v4475 = vpack.c.b16 %v4194, %v4193
        %v4476 = vpack.c.b16 %v4196, %v4195
        %v4477 = vpack.c.b16 %v4198, %v4197
        %v4478 = vpack.c.b16 %v4200, %v4199
        %v4479 = vpack.c.b16 %v4202, %v4201
        %v4480 = vpack.c.b16 %v4204, %v4203
        %v4481 = vpack.c.b16 %v4206, %v4205
        %v4482 = vpack.c.b16 %v4208, %v4207
        %v4483 = vpack.c.b16 %v4210, %v4209
        %v4484 = vpack.c.b16 %v4212, %v4211
        %v4485 = vpack.c.b16 %v4214, %v4213
        %v4486 = vpack.c.b16 %v4216, %v4215
        %v4487 = vpack.c.b16 %v4218, %v4217
        %v4488 = vpack.c.b16 %v4220, %v4219
        %v4489 = vpack.c.b16 %v4222, %v4221
        %v4490 = vpack.c.b16 %v4224, %v4223
        %v4491 = vpack.c.b16 %v4226, %v4225
        %v4492 = vpack.c.b16 %v4228, %v4227
        %v4493 = vpack.c.b16 %v4230, %v4229
        %v4494 = vpack.c.b16 %v4232, %v4231
        %v4495 = vpack.c.b16 %v4234, %v4233
        %v4496 = vpack.c.b16 %v4236, %v4235
        %v4497 = vpack.c.b16 %v4238, %v4237
        %v4498 = vpack.c.b16 %v4240, %v4239
        %v4499 = vpack.c.b16 %v4242, %v4241
        %v4500 = vpack.c.b16 %v4244, %v4243
        %v4501 = vpack.c.b16 %v4246, %v4245
        %v4502 = vpack.c.b16 %v4248, %v4247
        %v4503 = vpack.c.b16 %v4250, %v4249
        %v4504 = vpack.c.b16 %v4252, %v4251
        %v4505 = vpack.c.b16 %v4254, %v4253
        %v4506 = vpack.c.b16 %v4256, %v4255
        %v4507 = vpack.c.b16 %v4258, %v4257
        %v4508 = vpack.c.b16 %v4260, %v4259
        %v4509 = vpack.c.b16 %v4262, %v4261
        %v4510 = vpack.c.b16 %v4264, %v4263
        %v4511 = vpack.c.b16 %v4266, %v4265
        %v4512 = vpack.c.b16 %v4268, %v4267
        %v4513 = vpack.c.b16 %v4270, %v4269
        %v4514 = vpack.c.b16 %v4272, %v4271
        %v4515 = vpack.c.b16 %v4274, %v4273
        %v4516 = vpack.c.b16 %v4276, %v4275
        %v4517 = vpack.c.b16 %v4278, %v4277
        %v4518 = vpack.c.b16 %v4280, %v4279
        %v4519 = vpack.c.b16 %v4282, %v4281
        %v4520 = vpack.c.b16 %v4284, %v4283
        %v4521 = vpack.c.b16 %v4286, %v4285
        %v4522 = vpack.c.b16 %v4288, %v4287
        %v4523 = vpack.c.b16 %v4290, %v4289
        %v4524 = vpack.c.b16 %v4292, %v4291
        %v4525 = vpack.c.b16 %v4294, %v4293
        %v4526 = vpack.c.b16 %v4296, %v4295
        %v4527 = vpack.c.b16 %v4298, %v4297
        %v4528 = vpack.c.b16 %v4300, %v4299
        %v4529 = vpack.c.b16 %v4302, %v4301
        %v4530 = vpack.c.b16 %v4304, %v4303
        %v4531 = vpack.c.b16 %v4306, %v4305
        %v4532 = vpack.c.b16 %v4308, %v4307
        %v4533 = vpack.c.b16 %v4310, %v4309
        %v4534 = vpack.c.b16 %v4312, %v4311
        %v4535 = vpack.c.b16 %v4314, %v4313
        %v4536 = vpack.c.b16 %v4316, %v4315
        %v4537 = vpack.c.b16 %v4318, %v4317
        %v4538 = vpack.c.b16 %v4320, %v4319
        %v4539 = vpack.c.b16 %v4322, %v4321
        %v4540 = vpack.c.b16 %v4324, %v4323
        %v4541 = vpack.c.b16 %v4326, %v4325
        %v4542 = vpack.c.b16 %v4328, %v4327
        %v4543 = vpack.c.b16 %v4330, %v4329
        %v4544 = vpack.c.b16 %v4332, %v4331
        %v4545 = vpack.c.b16 %v4334, %v4333
        %v4546 = vpack.c.b16 %v4336, %v4335
        %v4547 = vpack.c.b16 %v4338, %v4337
        %v4548 = vpack.c.b16 %v4340, %v4339
        %v4549 = vpack.c.b16 %v4342, %v4341
        %v4550 = vpack.c.b16 %v4344, %v4343
        %v4551 = vpack.c.b16 %v4346, %v4345
        %v4552 = vpack.c.b16 %v4348, %v4347
        %v4553 = vpack.c.b16 %v4350, %v4349
        %v4554 = vpack.c.b16 %v4352, %v4351
        %v4555 = vpack.c.b16 %v4354, %v4353
        %v4556 = vpack.c.b16 %v4356, %v4355
        %4757 = vmatprep.subr.bf16.mxu0 0
        %4758 = vmatpush1.bf16.msra.mxu0 %v4357
        %4759 = vmatprep.subr.bf16.mxu0 0
        %4760 = vmatpush1.bf16.msra.mxu0 %v4358
        %4761 = vmatprep.subr.bf16.mxu0 0
        %4762 = vmatpush1.bf16.msra.mxu0 %v4359
        %4763 = vmatprep.subr.bf16.mxu0 0
        %4764 = vmatpush1.bf16.msra.mxu0 %v4360
        %4765 = vmatprep.subr.bf16.mxu0 0
        %4766 = vmatpush1.bf16.msra.mxu0 %v4361
        %4767 = vmatprep.subr.bf16.mxu0 0
        %4768 = vmatpush1.bf16.msra.mxu0 %v4362
        %4769 = vmatprep.subr.bf16.mxu0 0
        %4770 = vmatpush1.bf16.msra.mxu0 %v4363
        %4771 = vmatprep.subr.bf16.mxu0 0
        %4772 = vmatpush1.bf16.msra.mxu0 %v4364
        %4773 = vmatprep.subr.bf16.mxu0 0
        %4774 = vmatpush1.bf16.msra.mxu0 %v4365
        %4775 = vmatprep.subr.bf16.mxu0 0
        %4776 = vmatpush1.bf16.msra.mxu0 %v4366
        %4777 = vmatprep.subr.bf16.mxu0 0
        %4778 = vmatpush1.bf16.msra.mxu0 %v4367
        %4779 = vmatprep.subr.bf16.mxu0 0
        %4780 = vmatpush1.bf16.msra.mxu0 %v4368
        %4781 = vmatprep.subr.bf16.mxu0 0
        %4782 = vmatpush1.bf16.msra.mxu0 %v4369
        %4783 = vmatprep.subr.bf16.mxu0 0
        %4784 = vmatpush1.bf16.msra.mxu0 %v4370
        %4785 = vmatprep.subr.bf16.mxu0 0
        %4786 = vmatpush1.bf16.msra.mxu0 %v4371
        %4787 = vmatprep.subr.bf16.mxu0 0
        %4788 = vmatpush1.bf16.msra.mxu0 %v4372
        %4789 = vmatprep.mubr.bf16.mxu0 %v3358
        %4790 = vmatmul.mubr.bf16.gmra.mrb[0].mxu0 %v3357
        %v4791 = vpop.f32.mrb[0].mxu0
        %v4792 = vadd.f32 %v3355, %v4791
        %v4793 = vpop.f32.mrb[0].mxu0
        %v4794 = vpop.f32.mrb[0].mxu0
        %v4795 = vadd.f32 %v3355, %v4794
        %v4796 = vpop.f32.mrb[0].mxu0
        %4797 = vmatprep.mubr.bf16.mxu0 %v3383
        %4798 = vmatmul.mubr.bf16.gmra.mrb[0].mxu0 %v3382
        %v4799 = vpop.f32.mrb[0].mxu0
        %v4800 = vadd.f32 %v3355, %v4799
        %v4801 = vpop.f32.mrb[0].mxu0
        %v4802 = vpop.f32.mrb[0].mxu0
        %v4803 = vadd.f32 %v3355, %v4802
        %v4804 = vpop.f32.mrb[0].mxu0
        %4805 = vmatprep.mubr.bf16.mxu0 %v3408
        %4806 = vmatmul.mubr.bf16.gmra.mrb[0].mxu0 %v3407
        %v4807 = vpop.f32.mrb[0].mxu0
        %v4808 = vadd.f32 %v3355, %v4807
        %v4809 = vpop.f32.mrb[0].mxu0
        %v4810 = vpop.f32.mrb[0].mxu0
        %v4811 = vadd.f32 %v3355, %v4810
        %v4812 = vpop.f32.mrb[0].mxu0
        %4813 = vmatprep.mubr.bf16.mxu0 %v3433
        %4814 = vmatmul.mubr.bf16.gmra.mrb[0].mxu0 %v3432
        %v4815 = vpop.f32.mrb[0].mxu0
        %v4816 = vadd.f32 %v3355, %v4815
        %v4817 = vpop.f32.mrb[0].mxu0
        %v4818 = vpop.f32.mrb[0].mxu0
        %v4819 = vadd.f32 %v3355, %v4818
        %v4820 = vpop.f32.mrb[0].mxu0
        %4821 = vdwg.mxu0
        %4822 = vmatprep.subr.bf16.mxu0 0
        %4823 = vmatpush1.bf16.msra.mxu0 %v4373
        %4824 = vmatprep.subr.bf16.mxu0 0
        %4825 = vmatpush1.bf16.msra.mxu0 %v4374
        %4826 = vmatprep.subr.bf16.mxu0 0
        %4827 = vmatpush1.bf16.msra.mxu0 %v4375
        %4828 = vmatprep.subr.bf16.mxu0 0
        %4829 = vmatpush1.bf16.msra.mxu0 %v4376
        %4830 = vmatprep.subr.bf16.mxu0 0
        %4831 = vmatpush1.bf16.msra.mxu0 %v4377
        %4832 = vmatprep.subr.bf16.mxu0 0
        %4833 = vmatpush1.bf16.msra.mxu0 %v4378
        %4834 = vmatprep.subr.bf16.mxu0 0
        %4835 = vmatpush1.bf16.msra.mxu0 %v4379
        %4836 = vmatprep.subr.bf16.mxu0 0
        %4837 = vmatpush1.bf16.msra.mxu0 %v4380
        %4838 = vmatprep.subr.bf16.mxu0 0
        %4839 = vmatpush1.bf16.msra.mxu0 %v4381
        %4840 = vmatprep.subr.bf16.mxu0 0
        %4841 = vmatpush1.bf16.msra.mxu0 %v4382
        %4842 = vmatprep.subr.bf16.mxu0 0
        %4843 = vmatpush1.bf16.msra.mxu0 %v4383
        %4844 = vmatprep.subr.bf16.mxu0 0
        %4845 = vmatpush1.bf16.msra.mxu0 %v4384
        %4846 = vmatprep.subr.bf16.mxu0 0
        %4847 = vmatpush1.bf16.msra.mxu0 %v4385
        %4848 = vmatprep.subr.bf16.mxu0 0
        %4849 = vmatpush1.bf16.msra.mxu0 %v4386
        %4850 = vmatprep.subr.bf16.mxu0 0
        %4851 = vmatpush1.bf16.msra.mxu0 %v4387
        %4852 = vmatprep.subr.bf16.mxu0 0
        %4853 = vmatpush1.bf16.msra.mxu0 %v4388
        %4854 = vmatprep.mubr.bf16.mxu0 %v3360
        %4855 = vmatmul.mubr.bf16.gmra.mrb[0].mxu0 %v3359
        %v4856 = vpop.f32.mrb[0].mxu0
        %v4857 = vadd.f32 %v4792, %v4856
        %v4858 = vpop.f32.mrb[0].mxu0
        %v4859 = vpop.f32.mrb[0].mxu0
        %v4860 = vadd.f32 %v4795, %v4859
        %v4861 = vpop.f32.mrb[0].mxu0
        %4862 = vmatprep.mubr.bf16.mxu0 %v3385
        %4863 = vmatmul.mubr.bf16.gmra.mrb[0].mxu0 %v3384
        %v4864 = vpop.f32.mrb[0].mxu0
        %v4865 = vadd.f32 %v4800, %v4864
        %v4866 = vpop.f32.mrb[0].mxu0
        %v4867 = vpop.f32.mrb[0].mxu0
        %v4868 = vadd.f32 %v4803, %v4867
        %v4869 = vpop.f32.mrb[0].mxu0
        %4870 = vmatprep.mubr.bf16.mxu0 %v3410
        %4871 = vmatmul.mubr.bf16.gmra.mrb[0].mxu0 %v3409
        %v4872 = vpop.f32.mrb[0].mxu0
        %v4873 = vadd.f32 %v4808, %v4872
        %v4874 = vpop.f32.mrb[0].mxu0
        %v4875 = vpop.f32.mrb[0].mxu0
        %v4876 = vadd.f32 %v4811, %v4875
        %v4877 = vpop.f32.mrb[0].mxu0
        %4878 = vmatprep.mubr.bf16.mxu0 %v3435
        %4879 = vmatmul.mubr.bf16.gmra.mrb[0].mxu0 %v3434
        %v4880 = vpop.f32.mrb[0].mxu0
        %v4881 = vadd.f32 %v4816, %v4880
        %v4882 = vpop.f32.mrb[0].mxu0
        %v4883 = vpop.f32.mrb[0].mxu0
        %v4884 = vadd.f32 %v4819, %v4883
        %v4885 = vpop.f32.mrb[0].mxu0
        %4886 = vdwg.mxu0
        %4887 = vmatprep.subr.bf16.mxu0 0
        %4888 = vmatpush1.bf16.msra.mxu0 %v4389
        %4889 = vmatprep.subr.bf16.mxu0 0
        %4890 = vmatpush1.bf16.msra.mxu0 %v4390
        %4891 = vmatprep.subr.bf16.mxu0 0
        %4892 = vmatpush1.bf16.msra.mxu0 %v4391
        %4893 = vmatprep.subr.bf16.mxu0 0
        %4894 = vmatpush1.bf16.msra.mxu0 %v4392
        %4895 = vmatprep.subr.bf16.mxu0 0
        %4896 = vmatpush1.bf16.msra.mxu0 %v4393
        %4897 = vmatprep.subr.bf16.mxu0 0
        %4898 = vmatpush1.bf16.msra.mxu0 %v4394
        %4899 = vmatprep.subr.bf16.mxu0 0
        %4900 = vmatpush1.bf16.msra.mxu0 %v4395
        %4901 = vmatprep.subr.bf16.mxu0 0
        %4902 = vmatpush1.bf16.msra.mxu0 %v4396
        %4903 = vmatprep.subr.bf16.mxu0 0
        %4904 = vmatpush1.bf16.msra.mxu0 %v4397
        %4905 = vmatprep.subr.bf16.mxu0 0
        %4906 = vmatpush1.bf16.msra.mxu0 %v4398
        %4907 = vmatprep.subr.bf16.mxu0 0
        %4908 = vmatpush1.bf16.msra.mxu0 %v4399
        %4909 = vmatprep.subr.bf16.mxu0 0
        %4910 = vmatpush1.bf16.msra.mxu0 %v4400
        %4911 = vmatprep.subr.bf16.mxu0 0
        %4912 = vmatpush1.bf16.msra.mxu0 %v4401
        %4913 = vmatprep.subr.bf16.mxu0 0
        %4914 = vmatpush1.bf16.msra.mxu0 %v4402
        %4915 = vmatprep.subr.bf16.mxu0 0
        %4916 = vmatpush1.bf16.msra.mxu0 %v4403
        %4917 = vmatprep.subr.bf16.mxu0 0
        %4918 = vmatpush1.bf16.msra.mxu0 %v4404
        %4919 = vmatprep.mubr.bf16.mxu0 %v3362
        %4920 = vmatmul.mubr.bf16.gmra.mrb[0].mxu0 %v3361
        %v4921 = vpop.f32.mrb[0].mxu0
        %v4922 = vadd.f32 %v4857, %v4921
        %v4923 = vpop.f32.mrb[0].mxu0
        %v4924 = vpop.f32.mrb[0].mxu0
        %v4925 = vadd.f32 %v4860, %v4924
        %v4926 = vpop.f32.mrb[0].mxu0
        %4927 = vmatprep.mubr.bf16.mxu0 %v3387
        %4928 = vmatmul.mubr.bf16.gmra.mrb[0].mxu0 %v3386
        %v4929 = vpop.f32.mrb[0].mxu0
        %v4930 = vadd.f32 %v4865, %v4929
        %v4931 = vpop.f32.mrb[0].mxu0
        %v4932 = vpop.f32.mrb[0].mxu0
        %v4933 = vadd.f32 %v4868, %v4932
        %v4934 = vpop.f32.mrb[0].mxu0
        %4935 = vmatprep.mubr.bf16.mxu0 %v3412
        %4936 = vmatmul.mubr.bf16.gmra.mrb[0].mxu0 %v3411
        %v4937 = vpop.f32.mrb[0].mxu0
        %v4938 = vadd.f32 %v4873, %v4937
        %v4939 = vpop.f32.mrb[0].mxu0
        %v4940 = vpop.f32.mrb[0].mxu0
        %v4941 = vadd.f32 %v4876, %v4940
        %v4942 = vpop.f32.mrb[0].mxu0
        %4943 = vmatprep.mubr.bf16.mxu0 %v3437
        %4944 = vmatmul.mubr.bf16.gmra.mrb[0].mxu0 %v3436
        %v4945 = vpop.f32.mrb[0].mxu0
        %v4946 = vadd.f32 %v4881, %v4945
        %v4947 = vpop.f32.mrb[0].mxu0
        %v4948 = vpop.f32.mrb[0].mxu0
        %v4949 = vadd.f32 %v4884, %v4948
        %v4950 = vpop.f32.mrb[0].mxu0
        %4951 = vdwg.mxu0
        %4952 = vmatprep.subr.bf16.mxu0 0
        %4953 = vmatpush1.bf16.msra.mxu0 %v4405
        %4954 = vmatprep.subr.bf16.mxu0 0
        %4955 = vmatpush1.bf16.msra.mxu0 %v4406
        %4956 = vmatprep.subr.bf16.mxu0 0
        %4957 = vmatpush1.bf16.msra.mxu0 %v4407
        %4958 = vmatprep.subr.bf16.mxu0 0
        %4959 = vmatpush1.bf16.msra.mxu0 %v4408
        %4960 = vmatprep.subr.bf16.mxu0 0
        %4961 = vmatpush1.bf16.msra.mxu0 %v4409
        %4962 = vmatprep.subr.bf16.mxu0 0
        %4963 = vmatpush1.bf16.msra.mxu0 %v4410
        %4964 = vmatprep.subr.bf16.mxu0 0
        %4965 = vmatpush1.bf16.msra.mxu0 %v4411
        %4966 = vmatprep.subr.bf16.mxu0 0
        %4967 = vmatpush1.bf16.msra.mxu0 %v4412
        %4968 = vmatprep.subr.bf16.mxu0 0
        %4969 = vmatpush1.bf16.msra.mxu0 %v4413
        %4970 = vmatprep.subr.bf16.mxu0 0
        %4971 = vmatpush1.bf16.msra.mxu0 %v4414
        %4972 = vmatprep.subr.bf16.mxu0 0
        %4973 = vmatpush1.bf16.msra.mxu0 %v4415
        %4974 = vmatprep.subr.bf16.mxu0 0
        %4975 = vmatpush1.bf16.msra.mxu0 %v4416
        %4976 = vmatprep.subr.bf16.mxu0 0
        %4977 = vmatpush1.bf16.msra.mxu0 %v4417
        %4978 = vmatprep.subr.bf16.mxu0 0
        %4979 = vmatpush1.bf16.msra.mxu0 %v4418
        %4980 = vmatprep.subr.bf16.mxu0 0
        %4981 = vmatpush1.bf16.msra.mxu0 %v4419
        %4982 = vmatprep.subr.bf16.mxu0 0
        %4983 = vmatpush1.bf16.msra.mxu0 %v4420
        %4984 = vmatprep.mubr.bf16.mxu0 %v3364
        %4985 = vmatmul.mubr.bf16.gmra.mrb[0].mxu0 %v3363
        %v4986 = vpop.f32.mrb[0].mxu0
        %v4987 = vadd.f32 %v4922, %v4986
        %v4988 = vpop.f32.mrb[0].mxu0
        %v4989 = vpop.f32.mrb[0].mxu0
        %v4990 = vadd.f32 %v4925, %v4989
        %v4991 = vpop.f32.mrb[0].mxu0
        %4992 = vmatprep.mubr.bf16.mxu0 %v3389
        %4993 = vmatmul.mubr.bf16.gmra.mrb[0].mxu0 %v3388
        %v4994 = vpop.f32.mrb[0].mxu0
        %v4995 = vadd.f32 %v4930, %v4994
        %v4996 = vpop.f32.mrb[0].mxu0
        %v4997 = vpop.f32.mrb[0].mxu0
        %v4998 = vadd.f32 %v4933, %v4997
        %v4999 = vpop.f32.mrb[0].mxu0
        %5000 = vmatprep.mubr.bf16.mxu0 %v3414
        %5001 = vmatmul.mubr.bf16.gmra.mrb[0].mxu0 %v3413
        %v5002 = vpop.f32.mrb[0].mxu0
        %v5003 = vadd.f32 %v4938, %v5002
        %v5004 = vpop.f32.mrb[0].mxu0
        %v5005 = vpop.f32.mrb[0].mxu0
        %v5006 = vadd.f32 %v4941, %v5005
        %v5007 = vpop.f32.mrb[0].mxu0
        %5008 = vmatprep.mubr.bf16.mxu0 %v3439
        %5009 = vmatmul.mubr.bf16.gmra.mrb[0].mxu0 %v3438
        %v5010 = vpop.f32.mrb[0].mxu0
        %v5011 = vadd.f32 %v4946, %v5010
        %v5012 = vpop.f32.mrb[0].mxu0
        %v5013 = vpop.f32.mrb[0].mxu0
        %v5014 = vadd.f32 %v4949, %v5013
        %v5015 = vpop.f32.mrb[0].mxu0
        %5016 = vdwg.mxu0
        %5017 = vmatprep.subr.bf16.mxu0 0
        %5018 = vmatpush1.bf16.msra.mxu0 %v4421
        %5019 = vmatprep.subr.bf16.mxu0 0
        %5020 = vmatpush1.bf16.msra.mxu0 %v4422
        %5021 = vmatprep.subr.bf16.mxu0 0
        %5022 = vmatpush1.bf16.msra.mxu0 %v4423
        %5023 = vmatprep.subr.bf16.mxu0 0
        %5024 = vmatpush1.bf16.msra.mxu0 %v4424
        %5025 = vmatprep.subr.bf16.mxu0 0
        %5026 = vmatpush1.bf16.msra.mxu0 %v4425
        %5027 = vmatprep.subr.bf16.mxu0 0
        %5028 = vmatpush1.bf16.msra.mxu0 %v4426
        %5029 = vmatprep.subr.bf16.mxu0 0
        %5030 = vmatpush1.bf16.msra.mxu0 %v4427
        %5031 = vmatprep.subr.bf16.mxu0 0
        %5032 = vmatpush1.bf16.msra.mxu0 %v4428
        %5033 = vmatprep.subr.bf16.mxu0 0
        %5034 = vmatpush1.bf16.msra.mxu0 %v4429
        %5035 = vmatprep.subr.bf16.mxu0 0
        %5036 = vmatpush1.bf16.msra.mxu0 %v4430
        %5037 = vmatprep.subr.bf16.mxu0 0
        %5038 = vmatpush1.bf16.msra.mxu0 %v4431
        %5039 = vmatprep.subr.bf16.mxu0 0
        %5040 = vmatpush1.bf16.msra.mxu0 %v4432
        %5041 = vmatprep.subr.bf16.mxu0 0
        %5042 = vmatpush1.bf16.msra.mxu0 %v4433
        %5043 = vmatprep.subr.bf16.mxu0 0
        %5044 = vmatpush1.bf16.msra.mxu0 %v4434
        %5045 = vmatprep.subr.bf16.mxu0 0
        %5046 = vmatpush1.bf16.msra.mxu0 %v4435
        %5047 = vmatprep.subr.bf16.mxu0 0
        %5048 = vmatpush1.bf16.msra.mxu0 %v4436
        %5049 = vmatprep.mubr.bf16.mxu0 %v3366
        %5050 = vmatmul.mubr.bf16.gmra.mrb[0].mxu0 %v3365
        %v5051 = vpop.f32.mrb[0].mxu0
        %v5052 = vadd.f32 %v4987, %v5051
        %v5053 = vpop.f32.mrb[0].mxu0
        %v5054 = vpop.f32.mrb[0].mxu0
        %v5055 = vadd.f32 %v4990, %v5054
        %v5056 = vpop.f32.mrb[0].mxu0
        %5057 = vmatprep.mubr.bf16.mxu0 %v3391
        %5058 = vmatmul.mubr.bf16.gmra.mrb[0].mxu0 %v3390
        %v5059 = vpop.f32.mrb[0].mxu0
        %v5060 = vadd.f32 %v4995, %v5059
        %v5061 = vpop.f32.mrb[0].mxu0
        %v5062 = vpop.f32.mrb[0].mxu0
        %v5063 = vadd.f32 %v4998, %v5062
        %v5064 = vpop.f32.mrb[0].mxu0
        %5065 = vmatprep.mubr.bf16.mxu0 %v3416
        %5066 = vmatmul.mubr.bf16.gmra.mrb[0].mxu0 %v3415
        %v5067 = vpop.f32.mrb[0].mxu0
        %v5068 = vadd.f32 %v5003, %v5067
        %v5069 = vpop.f32.mrb[0].mxu0
        %v5070 = vpop.f32.mrb[0].mxu0
        %v5071 = vadd.f32 %v5006, %v5070
        %v5072 = vpop.f32.mrb[0].mxu0
        %5073 = vmatprep.mubr.bf16.mxu0 %v3441
        %5074 = vmatmul.mubr.bf16.gmra.mrb[0].mxu0 %v3440
        %v5075 = vpop.f32.mrb[0].mxu0
        %v5076 = vadd.f32 %v5011, %v5075
        %v5077 = vpop.f32.mrb[0].mxu0
        %v5078 = vpop.f32.mrb[0].mxu0
        %v5079 = vadd.f32 %v5014, %v5078
        %v5080 = vpop.f32.mrb[0].mxu0
        %5081 = vdwg.mxu0
        %5082 = vmatprep.subr.bf16.mxu0 0
        %5083 = vmatpush1.bf16.msra.mxu0 %v4437
        %5084 = vmatprep.subr.bf16.mxu0 0
        %5085 = vmatpush1.bf16.msra.mxu0 %v4438
        %5086 = vmatprep.subr.bf16.mxu0 0
        %5087 = vmatpush1.bf16.msra.mxu0 %v4439
        %5088 = vmatprep.subr.bf16.mxu0 0
        %5089 = vmatpush1.bf16.msra.mxu0 %v4440
        %5090 = vmatprep.subr.bf16.mxu0 0
        %5091 = vmatpush1.bf16.msra.mxu0 %v4441
        %5092 = vmatprep.subr.bf16.mxu0 0
        %5093 = vmatpush1.bf16.msra.mxu0 %v4442
        %5094 = vmatprep.subr.bf16.mxu0 0
        %5095 = vmatpush1.bf16.msra.mxu0 %v4443
        %5096 = vmatprep.subr.bf16.mxu0 0
        %5097 = vmatpush1.bf16.msra.mxu0 %v4444
        %5098 = vmatprep.subr.bf16.mxu0 0
        %5099 = vmatpush1.bf16.msra.mxu0 %v4445
        %5100 = vmatprep.subr.bf16.mxu0 0
        %5101 = vmatpush1.bf16.msra.mxu0 %v4446
        %5102 = vmatprep.subr.bf16.mxu0 0
        %5103 = vmatpush1.bf16.msra.mxu0 %v4447
        %5104 = vmatprep.subr.bf16.mxu0 0
        %5105 = vmatpush1.bf16.msra.mxu0 %v4448
        %5106 = vmatprep.subr.bf16.mxu0 0
        %5107 = vmatpush1.bf16.msra.mxu0 %v4449
        %5108 = vmatprep.subr.bf16.mxu0 0
        %5109 = vmatpush1.bf16.msra.mxu0 %v4450
        %5110 = vmatprep.subr.bf16.mxu0 0
        %5111 = vmatpush1.bf16.msra.mxu0 %v4451
        %5112 = vmatprep.subr.bf16.mxu0 0
        %5113 = vmatpush1.bf16.msra.mxu0 %v4452
        %5114 = vmatprep.mubr.bf16.mxu0 %v3368
        %5115 = vmatmul.mubr.bf16.gmra.mrb[0].mxu0 %v3367
        %v5116 = vpop.f32.mrb[0].mxu0
        %v5117 = vadd.f32 %v5052, %v5116
        %v5118 = vpop.f32.mrb[0].mxu0
        %v5119 = vpop.f32.mrb[0].mxu0
        %v5120 = vadd.f32 %v5055, %v5119
        %v5121 = vpop.f32.mrb[0].mxu0
        %5122 = vmatprep.mubr.bf16.mxu0 %v3393
        %5123 = vmatmul.mubr.bf16.gmra.mrb[0].mxu0 %v3392
        %v5124 = vpop.f32.mrb[0].mxu0
        %v5125 = vadd.f32 %v5060, %v5124
        %v5126 = vpop.f32.mrb[0].mxu0
        %v5127 = vpop.f32.mrb[0].mxu0
        %v5128 = vadd.f32 %v5063, %v5127
        %v5129 = vpop.f32.mrb[0].mxu0
        %5130 = vmatprep.mubr.bf16.mxu0 %v3418
        %5131 = vmatmul.mubr.bf16.gmra.mrb[0].mxu0 %v3417
        %v5132 = vpop.f32.mrb[0].mxu0
        %v5133 = vadd.f32 %v5068, %v5132
        %v5134 = vpop.f32.mrb[0].mxu0
        %v5135 = vpop.f32.mrb[0].mxu0
        %v5136 = vadd.f32 %v5071, %v5135
        %v5137 = vpop.f32.mrb[0].mxu0
        %5138 = vmatprep.mubr.bf16.mxu0 %v3443
        %5139 = vmatmul.mubr.bf16.gmra.mrb[0].mxu0 %v3442
        %v5140 = vpop.f32.mrb[0].mxu0
        %v5141 = vadd.f32 %v5076, %v5140
        %v5142 = vpop.f32.mrb[0].mxu0
        %v5143 = vpop.f32.mrb[0].mxu0
        %v5144 = vadd.f32 %v5079, %v5143
        %v5145 = vpop.f32.mrb[0].mxu0
        %5146 = vdwg.mxu0
        %5147 = vmatprep.subr.bf16.mxu0 0
        %5148 = vmatpush1.bf16.msra.mxu0 %v4453
        %5149 = vmatprep.subr.bf16.mxu0 0
        %5150 = vmatpush1.bf16.msra.mxu0 %v4454
        %5151 = vmatprep.subr.bf16.mxu0 0
        %5152 = vmatpush1.bf16.msra.mxu0 %v4455
        %5153 = vmatprep.subr.bf16.mxu0 0
        %5154 = vmatpush1.bf16.msra.mxu0 %v4456
        %5155 = vmatprep.subr.bf16.mxu0 0
        %5156 = vmatpush1.bf16.msra.mxu0 %v4457
        %5157 = vmatprep.subr.bf16.mxu0 0
        %5158 = vmatpush1.bf16.msra.mxu0 %v4458
        %5159 = vmatprep.subr.bf16.mxu0 0
        %5160 = vmatpush1.bf16.msra.mxu0 %v4459
        %5161 = vmatprep.subr.bf16.mxu0 0
        %5162 = vmatpush1.bf16.msra.mxu0 %v4460
        %5163 = vmatprep.subr.bf16.mxu0 0
        %5164 = vmatpush1.bf16.msra.mxu0 %v4461
        %5165 = vmatprep.subr.bf16.mxu0 0
        %5166 = vmatpush1.bf16.msra.mxu0 %v4462
        %5167 = vmatprep.subr.bf16.mxu0 0
        %5168 = vmatpush1.bf16.msra.mxu0 %v4463
        %5169 = vmatprep.subr.bf16.mxu0 0
        %5170 = vmatpush1.bf16.msra.mxu0 %v4464
        %5171 = vmatprep.subr.bf16.mxu0 0
        %5172 = vmatpush1.bf16.msra.mxu0 %v4465
        %5173 = vmatprep.subr.bf16.mxu0 0
        %5174 = vmatpush1.bf16.msra.mxu0 %v4466
        %5175 = vmatprep.subr.bf16.mxu0 0
        %5176 = vmatpush1.bf16.msra.mxu0 %v4467
        %5177 = vmatprep.subr.bf16.mxu0 0
        %5178 = vmatpush1.bf16.msra.mxu0 %v4468
        %5179 = vmatprep.mubr.bf16.mxu0 %v3370
        %5180 = vmatmul.mubr.bf16.gmra.mrb[0].mxu0 %v3369
        %v5181 = vpop.f32.mrb[0].mxu0
        %v5182 = vadd.f32 %v5117, %v5181
        %v5183 = vpop.f32.mrb[0].mxu0
        %v5184 = vpop.f32.mrb[0].mxu0
        %v5185 = vadd.f32 %v5120, %v5184
        %v5186 = vpop.f32.mrb[0].mxu0
        %5187 = vmatprep.mubr.bf16.mxu0 %v3395
        %5188 = vmatmul.mubr.bf16.gmra.mrb[0].mxu0 %v3394
        %v5189 = vpop.f32.mrb[0].mxu0
        %v5190 = vadd.f32 %v5125, %v5189
        %v5191 = vpop.f32.mrb[0].mxu0
        %v5192 = vpop.f32.mrb[0].mxu0
        %v5193 = vadd.f32 %v5128, %v5192
        %v5194 = vpop.f32.mrb[0].mxu0
        %5195 = vmatprep.mubr.bf16.mxu0 %v3420
        %5196 = vmatmul.mubr.bf16.gmra.mrb[0].mxu0 %v3419
        %v5197 = vpop.f32.mrb[0].mxu0
        %v5198 = vadd.f32 %v5133, %v5197
        %v5199 = vpop.f32.mrb[0].mxu0
        %v5200 = vpop.f32.mrb[0].mxu0
        %v5201 = vadd.f32 %v5136, %v5200
        %v5202 = vpop.f32.mrb[0].mxu0
        %5203 = vmatprep.mubr.bf16.mxu0 %v3445
        %5204 = vmatmul.mubr.bf16.gmra.mrb[0].mxu0 %v3444
        %v5205 = vpop.f32.mrb[0].mxu0
        %v5206 = vadd.f32 %v5141, %v5205
        %v5207 = vpop.f32.mrb[0].mxu0
        %v5208 = vpop.f32.mrb[0].mxu0
        %v5209 = vadd.f32 %v5144, %v5208
        %v5210 = vpop.f32.mrb[0].mxu0
        %5211 = vdwg.mxu0
        %5212 = vmatprep.subr.bf16.mxu0 0
        %5213 = vmatpush1.bf16.msra.mxu0 %v4469
        %5214 = vmatprep.subr.bf16.mxu0 0
        %5215 = vmatpush1.bf16.msra.mxu0 %v4470
        %5216 = vmatprep.subr.bf16.mxu0 0
        %5217 = vmatpush1.bf16.msra.mxu0 %v4471
        %5218 = vmatprep.subr.bf16.mxu0 0
        %5219 = vmatpush1.bf16.msra.mxu0 %v4472
        %5220 = vmatprep.subr.bf16.mxu0 0
        %5221 = vmatpush1.bf16.msra.mxu0 %v4473
        %5222 = vmatprep.subr.bf16.mxu0 0
        %5223 = vmatpush1.bf16.msra.mxu0 %v4474
        %5224 = vmatprep.subr.bf16.mxu0 0
        %5225 = vmatpush1.bf16.msra.mxu0 %v4475
        %5226 = vmatprep.subr.bf16.mxu0 0
        %5227 = vmatpush1.bf16.msra.mxu0 %v4476
        %5228 = vmatprep.subr.bf16.mxu0 0
        %5229 = vmatpush1.bf16.msra.mxu0 %v4477
        %5230 = vmatprep.subr.bf16.mxu0 0
        %5231 = vmatpush1.bf16.msra.mxu0 %v4478
        %5232 = vmatprep.subr.bf16.mxu0 0
        %5233 = vmatpush1.bf16.msra.mxu0 %v4479
        %5234 = vmatprep.subr.bf16.mxu0 0
        %5235 = vmatpush1.bf16.msra.mxu0 %v4480
        %5236 = vmatprep.subr.bf16.mxu0 0
        %5237 = vmatpush1.bf16.msra.mxu0 %v4481
        %5238 = vmatprep.subr.bf16.mxu0 0
        %5239 = vmatpush1.bf16.msra.mxu0 %v4482
        %5240 = vmatprep.subr.bf16.mxu0 0
        %5241 = vmatpush1.bf16.msra.mxu0 %v4483
        %5242 = vmatprep.subr.bf16.mxu0 0
        %5243 = vmatpush1.bf16.msra.mxu0 %v4484
        %5244 = vmatprep.mubr.bf16.mxu0 %v3372
        %5245 = vmatmul.mubr.bf16.gmra.mrb[0].mxu0 %v3371
        %v5246 = vpop.f32.mrb[0].mxu0
        %v5247 = vadd.f32 %v5182, %v5246
        %v5248 = vpop.f32.mrb[0].mxu0
        %v5249 = vpop.f32.mrb[0].mxu0
        %v5250 = vadd.f32 %v5185, %v5249
        %v5251 = vpop.f32.mrb[0].mxu0
        %5252 = vmatprep.mubr.bf16.mxu0 %v3397
        %5253 = vmatmul.mubr.bf16.gmra.mrb[0].mxu0 %v3396
        %v5254 = vpop.f32.mrb[0].mxu0
        %v5255 = vadd.f32 %v5190, %v5254
        %v5256 = vpop.f32.mrb[0].mxu0
        %v5257 = vpop.f32.mrb[0].mxu0
        %v5258 = vadd.f32 %v5193, %v5257
        %v5259 = vpop.f32.mrb[0].mxu0
        %5260 = vmatprep.mubr.bf16.mxu0 %v3422
        %5261 = vmatmul.mubr.bf16.gmra.mrb[0].mxu0 %v3421
        %v5262 = vpop.f32.mrb[0].mxu0
        %v5263 = vadd.f32 %v5198, %v5262
        %v5264 = vpop.f32.mrb[0].mxu0
        %v5265 = vpop.f32.mrb[0].mxu0
        %v5266 = vadd.f32 %v5201, %v5265
        %v5267 = vpop.f32.mrb[0].mxu0
        %5268 = vmatprep.mubr.bf16.mxu0 %v3447
        %5269 = vmatmul.mubr.bf16.gmra.mrb[0].mxu0 %v3446
        %v5270 = vpop.f32.mrb[0].mxu0
        %v5271 = vadd.f32 %v5206, %v5270
        %v5272 = vpop.f32.mrb[0].mxu0
        %v5273 = vpop.f32.mrb[0].mxu0
        %v5274 = vadd.f32 %v5209, %v5273
        %v5275 = vpop.f32.mrb[0].mxu0
        %5276 = vdwg.mxu0
        %5277 = vmatprep.subr.bf16.mxu0 0
        %5278 = vmatpush1.bf16.msra.mxu0 %v4485
        %5279 = vmatprep.subr.bf16.mxu0 0
        %5280 = vmatpush1.bf16.msra.mxu0 %v4486
        %5281 = vmatprep.subr.bf16.mxu0 0
        %5282 = vmatpush1.bf16.msra.mxu0 %v4487
        %5283 = vmatprep.subr.bf16.mxu0 0
        %5284 = vmatpush1.bf16.msra.mxu0 %v4488
        %5285 = vmatprep.subr.bf16.mxu0 0
        %5286 = vmatpush1.bf16.msra.mxu0 %v4489
        %5287 = vmatprep.subr.bf16.mxu0 0
        %5288 = vmatpush1.bf16.msra.mxu0 %v4490
        %5289 = vmatprep.subr.bf16.mxu0 0
        %5290 = vmatpush1.bf16.msra.mxu0 %v4491
        %5291 = vmatprep.subr.bf16.mxu0 0
        %5292 = vmatpush1.bf16.msra.mxu0 %v4492
        %5293 = vmatprep.subr.bf16.mxu0 0
        %5294 = vmatpush1.bf16.msra.mxu0 %v4493
        %5295 = vmatprep.subr.bf16.mxu0 0
        %5296 = vmatpush1.bf16.msra.mxu0 %v4494
        %5297 = vmatprep.subr.bf16.mxu0 0
        %5298 = vmatpush1.bf16.msra.mxu0 %v4495
        %5299 = vmatprep.subr.bf16.mxu0 0
        %5300 = vmatpush1.bf16.msra.mxu0 %v4496
        %5301 = vmatprep.subr.bf16.mxu0 0
        %5302 = vmatpush1.bf16.msra.mxu0 %v4497
        %5303 = vmatprep.subr.bf16.mxu0 0
        %5304 = vmatpush1.bf16.msra.mxu0 %v4498
        %5305 = vmatprep.subr.bf16.mxu0 0
        %5306 = vmatpush1.bf16.msra.mxu0 %v4499
        %5307 = vmatprep.subr.bf16.mxu0 0
        %5308 = vmatpush1.bf16.msra.mxu0 %v4500
        %5309 = vmatprep.mubr.bf16.mxu0 %v3374
        %5310 = vmatmul.mubr.bf16.gmra.mrb[0].mxu0 %v3373
        %v5311 = vpop.f32.mrb[0].mxu0
        %v5312 = vadd.f32 %v5247, %v5311
        %v5313 = vpop.f32.mrb[0].mxu0
        %v5314 = vpop.f32.mrb[0].mxu0
        %v5315 = vadd.f32 %v5250, %v5314
        %v5316 = vpop.f32.mrb[0].mxu0
        %5317 = vmatprep.mubr.bf16.mxu0 %v3399
        %5318 = vmatmul.mubr.bf16.gmra.mrb[0].mxu0 %v3398
        %v5319 = vpop.f32.mrb[0].mxu0
        %v5320 = vadd.f32 %v5255, %v5319
        %v5321 = vpop.f32.mrb[0].mxu0
        %v5322 = vpop.f32.mrb[0].mxu0
        %v5323 = vadd.f32 %v5258, %v5322
        %v5324 = vpop.f32.mrb[0].mxu0
        %5325 = vmatprep.mubr.bf16.mxu0 %v3424
        %5326 = vmatmul.mubr.bf16.gmra.mrb[0].mxu0 %v3423
        %v5327 = vpop.f32.mrb[0].mxu0
        %v5328 = vadd.f32 %v5263, %v5327
        %v5329 = vpop.f32.mrb[0].mxu0
        %v5330 = vpop.f32.mrb[0].mxu0
        %v5331 = vadd.f32 %v5266, %v5330
        %v5332 = vpop.f32.mrb[0].mxu0
        %5333 = vmatprep.mubr.bf16.mxu0 %v3449
        %5334 = vmatmul.mubr.bf16.gmra.mrb[0].mxu0 %v3448
        %v5335 = vpop.f32.mrb[0].mxu0
        %v5336 = vadd.f32 %v5271, %v5335
        %v5337 = vpop.f32.mrb[0].mxu0
        %v5338 = vpop.f32.mrb[0].mxu0
        %v5339 = vadd.f32 %v5274, %v5338
        %v5340 = vpop.f32.mrb[0].mxu0
        %5341 = vdwg.mxu0
        %5342 = vmatprep.subr.bf16.mxu0 0
        %5343 = vmatpush1.bf16.msra.mxu0 %v4501
        %5344 = vmatprep.subr.bf16.mxu0 0
        %5345 = vmatpush1.bf16.msra.mxu0 %v4502
        %5346 = vmatprep.subr.bf16.mxu0 0
        %5347 = vmatpush1.bf16.msra.mxu0 %v4503
        %5348 = vmatprep.subr.bf16.mxu0 0
        %5349 = vmatpush1.bf16.msra.mxu0 %v4504
        %5350 = vmatprep.subr.bf16.mxu0 0
        %5351 = vmatpush1.bf16.msra.mxu0 %v4505
        %5352 = vmatprep.subr.bf16.mxu0 0
        %5353 = vmatpush1.bf16.msra.mxu0 %v4506
        %5354 = vmatprep.subr.bf16.mxu0 0
        %5355 = vmatpush1.bf16.msra.mxu0 %v4507
        %5356 = vmatprep.subr.bf16.mxu0 0
        %5357 = vmatpush1.bf16.msra.mxu0 %v4508
        %5358 = vmatprep.subr.bf16.mxu0 0
        %5359 = vmatpush1.bf16.msra.mxu0 %v4509
        %5360 = vmatprep.subr.bf16.mxu0 0
        %5361 = vmatpush1.bf16.msra.mxu0 %v4510
        %5362 = vmatprep.subr.bf16.mxu0 0
        %5363 = vmatpush1.bf16.msra.mxu0 %v4511
        %5364 = vmatprep.subr.bf16.mxu0 0
        %5365 = vmatpush1.bf16.msra.mxu0 %v4512
        %5366 = vmatprep.subr.bf16.mxu0 0
        %5367 = vmatpush1.bf16.msra.mxu0 %v4513
        %5368 = vmatprep.subr.bf16.mxu0 0
        %5369 = vmatpush1.bf16.msra.mxu0 %v4514
        %5370 = vmatprep.subr.bf16.mxu0 0
        %5371 = vmatpush1.bf16.msra.mxu0 %v4515
        %5372 = vmatprep.subr.bf16.mxu0 0
        %5373 = vmatpush1.bf16.msra.mxu0 %v4516
        %5374 = vmatprep.mubr.bf16.mxu0 %v3376
        %5375 = vmatmul.mubr.bf16.gmra.mrb[0].mxu0 %v3375
        %v5376 = vpop.f32.mrb[0].mxu0
        %v5377 = vadd.f32 %v5312, %v5376
        %v5378 = vpop.f32.mrb[0].mxu0
        %v5379 = vpop.f32.mrb[0].mxu0
        %v5380 = vadd.f32 %v5315, %v5379
        %v5381 = vpop.f32.mrb[0].mxu0
        %5382 = vmatprep.mubr.bf16.mxu0 %v3401
        %5383 = vmatmul.mubr.bf16.gmra.mrb[0].mxu0 %v3400
        %v5384 = vpop.f32.mrb[0].mxu0
        %v5385 = vadd.f32 %v5320, %v5384
        %v5386 = vpop.f32.mrb[0].mxu0
        %v5387 = vpop.f32.mrb[0].mxu0
        %v5388 = vadd.f32 %v5323, %v5387
        %v5389 = vpop.f32.mrb[0].mxu0
        %5390 = vmatprep.mubr.bf16.mxu0 %v3426
        %5391 = vmatmul.mubr.bf16.gmra.mrb[0].mxu0 %v3425
        %v5392 = vpop.f32.mrb[0].mxu0
        %v5393 = vadd.f32 %v5328, %v5392
        %v5394 = vpop.f32.mrb[0].mxu0
        %v5395 = vpop.f32.mrb[0].mxu0
        %v5396 = vadd.f32 %v5331, %v5395
        %v5397 = vpop.f32.mrb[0].mxu0
        %5398 = vmatprep.mubr.bf16.mxu0 %v3451
        %5399 = vmatmul.mubr.bf16.gmra.mrb[0].mxu0 %v3450
        %v5400 = vpop.f32.mrb[0].mxu0
        %v5401 = vadd.f32 %v5336, %v5400
        %v5402 = vpop.f32.mrb[0].mxu0
        %v5403 = vpop.f32.mrb[0].mxu0
        %v5404 = vadd.f32 %v5339, %v5403
        %v5405 = vpop.f32.mrb[0].mxu0
        %5406 = vdwg.mxu0
        %5407 = vmatprep.subr.bf16.mxu0 0
        %5408 = vmatpush1.bf16.msra.mxu0 %v4517
        %5409 = vmatprep.subr.bf16.mxu0 0
        %5410 = vmatpush1.bf16.msra.mxu0 %v4518
        %5411 = vmatprep.subr.bf16.mxu0 0
        %5412 = vmatpush1.bf16.msra.mxu0 %v4519
        %5413 = vmatprep.subr.bf16.mxu0 0
        %5414 = vmatpush1.bf16.msra.mxu0 %v4520
        %5415 = vmatprep.subr.bf16.mxu0 0
        %5416 = vmatpush1.bf16.msra.mxu0 %v4521
        %5417 = vmatprep.subr.bf16.mxu0 0
        %5418 = vmatpush1.bf16.msra.mxu0 %v4522
        %5419 = vmatprep.subr.bf16.mxu0 0
        %5420 = vmatpush1.bf16.msra.mxu0 %v4523
        %5421 = vmatprep.subr.bf16.mxu0 0
        %5422 = vmatpush1.bf16.msra.mxu0 %v4524
        %5423 = vmatprep.subr.bf16.mxu0 0
        %5424 = vmatpush1.bf16.msra.mxu0 %v4525
        %5425 = vmatprep.subr.bf16.mxu0 0
        %5426 = vmatpush1.bf16.msra.mxu0 %v4526
        %5427 = vmatprep.subr.bf16.mxu0 0
        %5428 = vmatpush1.bf16.msra.mxu0 %v4527
        %5429 = vmatprep.subr.bf16.mxu0 0
        %5430 = vmatpush1.bf16.msra.mxu0 %v4528
        %5431 = vmatprep.subr.bf16.mxu0 0
        %5432 = vmatpush1.bf16.msra.mxu0 %v4529
        %5433 = vmatprep.subr.bf16.mxu0 0
        %5434 = vmatpush1.bf16.msra.mxu0 %v4530
        %5435 = vmatprep.subr.bf16.mxu0 0
        %5436 = vmatpush1.bf16.msra.mxu0 %v4531
        %5437 = vmatprep.subr.bf16.mxu0 0
        %5438 = vmatpush1.bf16.msra.mxu0 %v4532
        %5439 = vmatprep.mubr.bf16.mxu0 %v3378
        %5440 = vmatmul.mubr.bf16.gmra.mrb[0].mxu0 %v3377
        %v5441 = vpop.f32.mrb[0].mxu0
        %v5442 = vadd.f32 %v5377, %v5441
        %v5443 = vpop.f32.mrb[0].mxu0
        %v5444 = vpop.f32.mrb[0].mxu0
        %v5445 = vadd.f32 %v5380, %v5444
        %v5446 = vpop.f32.mrb[0].mxu0
        %5447 = vmatprep.mubr.bf16.mxu0 %v3403
        %5448 = vmatmul.mubr.bf16.gmra.mrb[0].mxu0 %v3402
        %v5449 = vpop.f32.mrb[0].mxu0
        %v5450 = vadd.f32 %v5385, %v5449
        %v5451 = vpop.f32.mrb[0].mxu0
        %v5452 = vpop.f32.mrb[0].mxu0
        %v5453 = vadd.f32 %v5388, %v5452
        %v5454 = vpop.f32.mrb[0].mxu0
        %5455 = vmatprep.mubr.bf16.mxu0 %v3428
        %5456 = vmatmul.mubr.bf16.gmra.mrb[0].mxu0 %v3427
        %v5457 = vpop.f32.mrb[0].mxu0
        %v5458 = vadd.f32 %v5393, %v5457
        %v5459 = vpop.f32.mrb[0].mxu0
        %v5460 = vpop.f32.mrb[0].mxu0
        %v5461 = vadd.f32 %v5396, %v5460
        %v5462 = vpop.f32.mrb[0].mxu0
        %5463 = vmatprep.mubr.bf16.mxu0 %v3453
        %5464 = vmatmul.mubr.bf16.gmra.mrb[0].mxu0 %v3452
        %v5465 = vpop.f32.mrb[0].mxu0
        %v5466 = vadd.f32 %v5401, %v5465
        %v5467 = vpop.f32.mrb[0].mxu0
        %v5468 = vpop.f32.mrb[0].mxu0
        %v5469 = vadd.f32 %v5404, %v5468
        %v5470 = vpop.f32.mrb[0].mxu0
        %5471 = vdwg.mxu0
        %5472 = vmatprep.subr.bf16.mxu0 0
        %5473 = vmatpush1.bf16.msra.mxu0 %v4533
        %5474 = vmatprep.subr.bf16.mxu0 0
        %5475 = vmatpush1.bf16.msra.mxu0 %v4534
        %5476 = vmatprep.subr.bf16.mxu0 0
        %5477 = vmatpush1.bf16.msra.mxu0 %v4535
        %5478 = vmatprep.subr.bf16.mxu0 0
        %5479 = vmatpush1.bf16.msra.mxu0 %v4536
        %5480 = vmatprep.subr.bf16.mxu0 0
        %5481 = vmatpush1.bf16.msra.mxu0 %v4537
        %5482 = vmatprep.subr.bf16.mxu0 0
        %5483 = vmatpush1.bf16.msra.mxu0 %v4538
        %5484 = vmatprep.subr.bf16.mxu0 0
        %5485 = vmatpush1.bf16.msra.mxu0 %v4539
        %5486 = vmatprep.subr.bf16.mxu0 0
        %5487 = vmatpush1.bf16.msra.mxu0 %v4540
        %5488 = vmatprep.subr.bf16.mxu0 0
        %5489 = vmatpush1.bf16.msra.mxu0 %v4541
        %5490 = vmatprep.subr.bf16.mxu0 0
        %5491 = vmatpush1.bf16.msra.mxu0 %v4542
        %5492 = vmatprep.subr.bf16.mxu0 0
        %5493 = vmatpush1.bf16.msra.mxu0 %v4543
        %5494 = vmatprep.subr.bf16.mxu0 0
        %5495 = vmatpush1.bf16.msra.mxu0 %v4544
        %5496 = vmatprep.subr.bf16.mxu0 0
        %5497 = vmatpush1.bf16.msra.mxu0 %v4545
        %5498 = vmatprep.subr.bf16.mxu0 0
        %5499 = vmatpush1.bf16.msra.mxu0 %v4546
        %5500 = vmatprep.subr.bf16.mxu0 0
        %5501 = vmatpush1.bf16.msra.mxu0 %v4547
        %5502 = vmatprep.subr.bf16.mxu0 0
        %5503 = vmatpush1.bf16.msra.mxu0 %v4548
        %5504 = vmatprep.mubr.bf16.mxu0 %v3380
        %5505 = vmatmul.mubr.bf16.gmra.mrb[0].mxu0 %v3379
        %v5506 = vpop.f32.mrb[0].mxu0
        %v5507 = vadd.f32 %v5442, %v5506
        %v5508 = vpop.f32.mrb[0].mxu0
        %v5509 = vpop.f32.mrb[0].mxu0
        %v5510 = vadd.f32 %v5445, %v5509
        %v5511 = vpop.f32.mrb[0].mxu0
        %5512 = vmatprep.mubr.bf16.mxu0 %v3405
        %5513 = vmatmul.mubr.bf16.gmra.mrb[0].mxu0 %v3404
        %v5514 = vpop.f32.mrb[0].mxu0
        %v5515 = vadd.f32 %v5450, %v5514
        %v5516 = vpop.f32.mrb[0].mxu0
        %v5517 = vpop.f32.mrb[0].mxu0
        %v5518 = vadd.f32 %v5453, %v5517
        %v5519 = vpop.f32.mrb[0].mxu0
        %5520 = vmatprep.mubr.bf16.mxu0 %v3430
        %5521 = vmatmul.mubr.bf16.gmra.mrb[0].mxu0 %v3429
        %v5522 = vpop.f32.mrb[0].mxu0
        %v5523 = vadd.f32 %v5458, %v5522
        %v5524 = vpop.f32.mrb[0].mxu0
        %v5525 = vpop.f32.mrb[0].mxu0
        %v5526 = vadd.f32 %v5461, %v5525
        %v5527 = vpop.f32.mrb[0].mxu0
        %5528 = vmatprep.mubr.bf16.mxu0 %v3455
        %5529 = vmatmul.mubr.bf16.gmra.mrb[0].mxu0 %v3454
        %v5530 = vpop.f32.mrb[0].mxu0
        %v5531 = vadd.f32 %v5466, %v5530
        %v5532 = vpop.f32.mrb[0].mxu0
        %v5533 = vpop.f32.mrb[0].mxu0
        %v5534 = vadd.f32 %v5469, %v5533
        %v5535 = vpop.f32.mrb[0].mxu0
        %5536 = vdwg.mxu0
        %5537 = vmatprep.subr.bf16.mxu0 0
        %5538 = vmatpush1.bf16.msra.mxu0 %v4549
        %5539 = vmatprep.subr.bf16.mxu0 0
        %5540 = vmatpush1.bf16.msra.mxu0 %v4550
        %5541 = vmatprep.subr.bf16.mxu0 0
        %5542 = vmatpush1.bf16.msra.mxu0 %v4551
        %5543 = vmatprep.subr.bf16.mxu0 0
        %5544 = vmatpush1.bf16.msra.mxu0 %v4552
        %5545 = vmatprep.subr.bf16.mxu0 0
        %5546 = vmatpush1.bf16.msra.mxu0 %v4553
        %5547 = vmatprep.subr.bf16.mxu0 0
        %5548 = vmatpush1.bf16.msra.mxu0 %v4554
        %5549 = vmatprep.subr.bf16.mxu0 0
        %5550 = vmatpush1.bf16.msra.mxu0 %v4555
        %5551 = vmatprep.subr.bf16.mxu0 0
        %5552 = vmatpush1.bf16.msra.mxu0 %v4556
        %5553 = vmatprep.subr.bf16.mxu0 0
        %5554 = vmatpush1.bf16.msra.mxu0 0
        %5555 = vmatprep.subr.bf16.mxu0 0
        %5556 = vmatpush1.bf16.msra.mxu0 0
        %5557 = vmatprep.subr.bf16.mxu0 0
        %5558 = vmatpush1.bf16.msra.mxu0 0
        %5559 = vmatprep.subr.bf16.mxu0 0
        %5560 = vmatpush1.bf16.msra.mxu0 0
        %5561 = vmatprep.subr.bf16.mxu0 0
        %5562 = vmatpush1.bf16.msra.mxu0 0
        %5563 = vmatprep.subr.bf16.mxu0 0
        %5564 = vmatpush1.bf16.msra.mxu0 0
        %5565 = vmatprep.subr.bf16.mxu0 0
        %5566 = vmatpush1.bf16.msra.mxu0 0
        %5567 = vmatprep.subr.bf16.mxu0 0
        %5568 = vmatpush1.bf16.msra.mxu0 0
        %5569 = vmatprep.mubr.bf16.mxu0 0
        %5570 = vmatmul.mubr.bf16.gmra.mrb[0].mxu0 %v3381
        %v5571 = vpop.f32.mrb[0].mxu0
        %v5572 = vadd.f32 %v5507, %v5571
        %v5573 = vpop.f32.mrb[0].mxu0
        %v5574 = vpop.f32.mrb[0].mxu0
        %v5575 = vadd.f32 %v5510, %v5574
        %v5576 = vpop.f32.mrb[0].mxu0
        %5577 = vmatprep.mubr.bf16.mxu0 0
        %5578 = vmatmul.mubr.bf16.gmra.mrb[0].mxu0 %v3406
        %v5579 = vpop.f32.mrb[0].mxu0
        %v5580 = vadd.f32 %v5515, %v5579
        %v5581 = vpop.f32.mrb[0].mxu0
        %v5582 = vpop.f32.mrb[0].mxu0
        %v5583 = vadd.f32 %v5518, %v5582
        %v5584 = vpop.f32.mrb[0].mxu0
        %5585 = vmatprep.mubr.bf16.mxu0 0
        %5586 = vmatmul.mubr.bf16.gmra.mrb[0].mxu0 %v3431
        %v5587 = vpop.f32.mrb[0].mxu0
        %v5588 = vadd.f32 %v5523, %v5587
        %v5589 = vpop.f32.mrb[0].mxu0
        %v5590 = vpop.f32.mrb[0].mxu0
        %v5591 = vadd.f32 %v5526, %v5590
        %v5592 = vpop.f32.mrb[0].mxu0
        %5593 = vmatprep.mubr.bf16.mxu0 0
        %5594 = vmatmul.mubr.bf16.gmra.mrb[0].mxu0 %v3456
        %v5595 = vpop.f32.mrb[0].mxu0
        %v5596 = vadd.f32 %v5531, %v5595
        %v5597 = vpop.f32.mrb[0].mxu0
        %v5598 = vpop.f32.mrb[0].mxu0
        %v5599 = vadd.f32 %v5534, %v5598
        %v5600 = vpop.f32.mrb[0].mxu0
        %5601 = vdwg.mxu0
        %v5602 = vmax.f32 %v5572, 0.0
        %v5603 = vmax.f32 %v5575, 0.0
        %v5604 = vmax.f32 %v5580, 0.0
        %v5605 = vmax.f32 %v5583, 0.0
        %v5606 = vmax.f32 %v5588, 0.0
        %v5607 = vmax.f32 %v5591, 0.0
        %v5608 = vmax.f32 %v5596, 0.0
        %v5609 = vmax.f32 %v5599, 0.0
        %5610 = vst [vmem:[#allocation4] sm:$0xff] 0.0
        %5611 = vst.msk [vmem:[#allocation4 + $0x8] sm:$0xff] %vm633, 0.0
        %5612 = vst [vmem:[#allocation4 + $0x10] sm:$0x3] 0.0
        %vm5613 = vcmask 517120
        %5614 = vst.msk [vmem:[#allocation4 + $0x18] sm:$0x3] %vm5613, 0.0
        %5615 = vst [vmem:[#allocation4 + $0x20] sm:$0xff] 0.0
        %5616 = vst.msk [vmem:[#allocation4 + $0x28] sm:$0xff] %vm633, 0.0
        %5617 = vst [vmem:[#allocation4 + $0x30] sm:$0x3] 0.0
        %5618 = vst.msk [vmem:[#allocation4 + $0x38] sm:$0x3] %vm5613, 0.0
        %5619 = vst [vmem:[#allocation4 + $0x40] sm:$0xff] 0.0
        %5620 = vst.msk [vmem:[#allocation4 + $0x48] sm:$0xff] %vm633, 0.0
        %5621 = vst [vmem:[#allocation4 + $0x50] sm:$0x3] 0.0
        %5622 = vst.msk [vmem:[#allocation4 + $0x58] sm:$0x3] %vm5613, 0.0
        %5623 = vst [vmem:[#allocation4 + $0x60] sm:$0xff] 0.0
        %5624 = vst.msk [vmem:[#allocation4 + $0x68] sm:$0xff] %vm633, 0.0
        %5625 = vst [vmem:[#allocation4 + $0x70] sm:$0x3] 0.0
        %5626 = vst.msk [vmem:[#allocation4 + $0x78] sm:$0x3] %vm5613, 0.0
        %5627 = vst [vmem:[#allocation4 + $0x80] sm:$0xff] 0.0
        %5628 = vst.msk [vmem:[#allocation4 + $0x88] sm:$0xff] %vm633, 0.0
        %5629 = vst [vmem:[#allocation4 + $0x90] sm:$0x3] 0.0
        %5630 = vst.msk [vmem:[#allocation4 + $0x98] sm:$0x3] %vm5613, 0.0
        %5631 = vst [vmem:[#allocation4 + $0xa0] sm:$0xff] 0.0
        %5632 = vst.msk [vmem:[#allocation4 + $0xa8] sm:$0xff] %vm633, 0.0
        %5633 = vst [vmem:[#allocation4 + $0xb0] sm:$0x3] 0.0
        %5634 = vst.msk [vmem:[#allocation4 + $0xb8] sm:$0x3] %vm5613, 0.0
        %5635 = vst [vmem:[#allocation4 + $0xc0] sm:$0xff] 0.0
        %5636 = vst.msk [vmem:[#allocation4 + $0xc8] sm:$0xff] %vm633, 0.0
        %5637 = vst [vmem:[#allocation4 + $0xd0] sm:$0x3] 0.0
        %5638 = vst.msk [vmem:[#allocation4 + $0xd8] sm:$0x3] %vm5613, 0.0
        %5639 = vst [vmem:[#allocation4 + $0xe0] sm:$0xff] 0.0
        %5640 = vst.msk [vmem:[#allocation4 + $0xe8] sm:$0xff] %vm633, 0.0
        %5641 = vst [vmem:[#allocation4 + $0xf0] sm:$0x3] 0.0
        %5642 = vst.msk [vmem:[#allocation4 + $0xf8] sm:$0x3] %vm5613, 0.0
        %5643 = vst [vmem:[#allocation4 + $0x100] sm:$0xff] 0.0
        %5644 = vst.msk [vmem:[#allocation4 + $0x108] sm:$0xff] %vm633, 0.0
        %5645 = vst [vmem:[#allocation4 + $0x110] sm:$0x3] 0.0
        %5646 = vst.msk [vmem:[#allocation4 + $0x118] sm:$0x3] %vm5613, 0.0
        %5647 = vst [vmem:[#allocation4 + $0x120] sm:$0xff] 0.0
        %5648 = vst.msk [vmem:[#allocation4 + $0x128] sm:$0xff] %vm633, 0.0
        %5649 = vst [vmem:[#allocation4 + $0x130] sm:$0x3] 0.0
        %5650 = vst.msk [vmem:[#allocation4 + $0x138] sm:$0x3] %vm5613, 0.0
        %v5651 = vunpack.c.l.bf16 %v332
        %v5652 = vunpack.c.h.bf16 %v332
        %v5653 = vunpack.c.l.bf16 %v333
        %v5654 = vunpack.c.h.bf16 %v333
        %v5655 = vunpack.c.l.bf16 %v334
        %v5656 = vunpack.c.h.bf16 %v334
        %v5657 = vunpack.c.l.bf16 %v335
        %v5658 = vunpack.c.h.bf16 %v335
        %v5659 = vunpack.c.l.bf16 %v336
        %v5660 = vunpack.c.h.bf16 %v336
        %v5661 = vunpack.c.l.bf16 %v337
        %v5662 = vunpack.c.h.bf16 %v337
        %v5663 = vunpack.c.l.bf16 %v338
        %v5664 = vunpack.c.h.bf16 %v338
        %v5665 = vunpack.c.l.bf16 %v339
        %v5666 = vunpack.c.h.bf16 %v339
        %v5683 = vrot.slane %v5651, 7
        %v5684 = vrot.slane %v5652, 7
        %v5685 = vrot.slane %v5653, 7
        %v5686 = vrot.slane %v5654, 7
        %v5687 = vrot.slane %v5655, 7
        %v5688 = vrot.slane %v5656, 7
        %v5689 = vrot.slane %v5657, 7
        %v5690 = vrot.slane %v5658, 7
        %v5691 = vrot.slane %v5659, 7
        %v5692 = vrot.slane %v5660, 7
        %v5693 = vrot.slane %v5661, 7
        %v5694 = vrot.slane %v5662, 7
        %v5695 = vrot.slane %v5663, 7
        %v5696 = vrot.slane %v5664, 7
        %v5697 = vrot.slane %v5665, 7
        %v5698 = vrot.slane %v5666, 7
        %s5715 = scalar_lea.vmem [#allocation4], 32
        %5716 = vst [vmem:[%s5715] sm:$0xfe] %v5683
        %vm5717 = vcmask 523265
        %5718 = vst.msk [vmem:[%s5715 + $0x8] sm:$0xfe] %vm5717, %v5684
        %5719 = vst [vmem:[%s5715 + $0x10] sm:$0x1] %v5683
        %vm5720 = vcmask 516096
        %5721 = vst.msk [vmem:[%s5715 + $0x18] sm:$0x1] %vm5720, %v5684
        %5722 = vst [vmem:[%s5715 + $0x20] sm:$0xfe] %v5685
        %5723 = vst.msk [vmem:[%s5715 + $0x28] sm:$0xfe] %vm5717, %v5686
        %5724 = vst [vmem:[%s5715 + $0x30] sm:$0x1] %v5685
        %5725 = vst.msk [vmem:[%s5715 + $0x38] sm:$0x1] %vm5720, %v5686
        %5726 = vst [vmem:[%s5715 + $0x40] sm:$0xfe] %v5687
        %5727 = vst.msk [vmem:[%s5715 + $0x48] sm:$0xfe] %vm5717, %v5688
        %5728 = vst [vmem:[%s5715 + $0x50] sm:$0x1] %v5687
        %5729 = vst.msk [vmem:[%s5715 + $0x58] sm:$0x1] %vm5720, %v5688
        %5730 = vst [vmem:[%s5715 + $0x60] sm:$0xfe] %v5689
        %5731 = vst.msk [vmem:[%s5715 + $0x68] sm:$0xfe] %vm5717, %v5690
        %5732 = vst [vmem:[%s5715 + $0x70] sm:$0x1] %v5689
        %5733 = vst.msk [vmem:[%s5715 + $0x78] sm:$0x1] %vm5720, %v5690
        %5734 = vst [vmem:[%s5715 + $0x80] sm:$0xfe] %v5691
        %5735 = vst.msk [vmem:[%s5715 + $0x88] sm:$0xfe] %vm5717, %v5692
        %5736 = vst [vmem:[%s5715 + $0x90] sm:$0x1] %v5691
        %5737 = vst.msk [vmem:[%s5715 + $0x98] sm:$0x1] %vm5720, %v5692
        %5738 = vst [vmem:[%s5715 + $0xa0] sm:$0xfe] %v5693
        %5739 = vst.msk [vmem:[%s5715 + $0xa8] sm:$0xfe] %vm5717, %v5694
        %5740 = vst [vmem:[%s5715 + $0xb0] sm:$0x1] %v5693
        %5741 = vst.msk [vmem:[%s5715 + $0xb8] sm:$0x1] %vm5720, %v5694
        %5742 = vst [vmem:[%s5715 + $0xc0] sm:$0xfe] %v5695
        %5743 = vst.msk [vmem:[%s5715 + $0xc8] sm:$0xfe] %vm5717, %v5696
        %5744 = vst [vmem:[%s5715 + $0xd0] sm:$0x1] %v5695
        %5745 = vst.msk [vmem:[%s5715 + $0xd8] sm:$0x1] %vm5720, %v5696
        %5746 = vst [vmem:[%s5715 + $0xe0] sm:$0xfe] %v5697
        %5747 = vst.msk [vmem:[%s5715 + $0xe8] sm:$0xfe] %vm5717, %v5698
        %5748 = vst [vmem:[%s5715 + $0xf0] sm:$0x1] %v5697
        %5749 = vst.msk [vmem:[%s5715 + $0xf8] sm:$0x1] %vm5720, %v5698
        %v5750 = vld [vmem:[#allocation4] sm:$0xff]
        %v5751 = vld [vmem:[#allocation4 + $0x8] sm:$0xff]
        %v5752 = vld [vmem:[#allocation4 + $0x20] sm:$0xff]
        %v5753 = vld [vmem:[#allocation4 + $0x28] sm:$0xff]
        %v5754 = vld [vmem:[#allocation4 + $0x40] sm:$0xff]
        %v5755 = vld [vmem:[#allocation4 + $0x48] sm:$0xff]
        %v5756 = vld [vmem:[#allocation4 + $0x60] sm:$0xff]
        %v5757 = vld [vmem:[#allocation4 + $0x68] sm:$0xff]
        %v5758 = vld [vmem:[#allocation4 + $0x80] sm:$0xff]
        %v5759 = vld [vmem:[#allocation4 + $0x88] sm:$0xff]
        %v5760 = vld [vmem:[#allocation4 + $0xa0] sm:$0xff]
        %v5761 = vld [vmem:[#allocation4 + $0xa8] sm:$0xff]
        %v5762 = vld [vmem:[#allocation4 + $0xc0] sm:$0xff]
        %v5763 = vld [vmem:[#allocation4 + $0xc8] sm:$0xff]
        %v5764 = vld [vmem:[#allocation4 + $0xe0] sm:$0xff]
        %v5765 = vld [vmem:[#allocation4 + $0xe8] sm:$0xff]
        %v5766 = vld [vmem:[#allocation4] sm:$0xfe]
        %v5767 = vld [vmem:[#allocation4 + $0x8] sm:$0xfe]
        %v5768 = vld [vmem:[#allocation4 + $0x10] sm:$0x1]
        %v5769 = vld [vmem:[#allocation4 + $0x18] sm:$0x1]
        %v5770 = vld [vmem:[#allocation4 + $0x20] sm:$0xfe]
        %v5771 = vld [vmem:[#allocation4 + $0x28] sm:$0xfe]
        %v5772 = vld [vmem:[#allocation4 + $0x30] sm:$0x1]
        %v5773 = vld [vmem:[#allocation4 + $0x38] sm:$0x1]
        %v5774 = vld [vmem:[#allocation4 + $0x40] sm:$0xfe]
        %v5775 = vld [vmem:[#allocation4 + $0x48] sm:$0xfe]
        %v5776 = vld [vmem:[#allocation4 + $0x50] sm:$0x1]
        %v5777 = vld [vmem:[#allocation4 + $0x58] sm:$0x1]
        %v5778 = vld [vmem:[#allocation4 + $0x60] sm:$0xfe]
        %v5779 = vld [vmem:[#allocation4 + $0x68] sm:$0xfe]
        %v5780 = vld [vmem:[#allocation4 + $0x70] sm:$0x1]
        %v5781 = vld [vmem:[#allocation4 + $0x78] sm:$0x1]
        %v5782 = vld [vmem:[#allocation4 + $0x80] sm:$0xfe]
        %v5783 = vld [vmem:[#allocation4 + $0x88] sm:$0xfe]
        %v5784 = vld [vmem:[#allocation4 + $0x90] sm:$0x1]
        %v5785 = vld [vmem:[#allocation4 + $0x98] sm:$0x1]
        %v5786 = vld [vmem:[#allocation4 + $0xa0] sm:$0xfe]
        %v5787 = vld [vmem:[#allocation4 + $0xa8] sm:$0xfe]
        %v5788 = vld [vmem:[#allocation4 + $0xb0] sm:$0x1]
        %v5789 = vld [vmem:[#allocation4 + $0xb8] sm:$0x1]
        %v5790 = vld [vmem:[#allocation4 + $0xc0] sm:$0xfe]
        %v5791 = vld [vmem:[#allocation4 + $0xc8] sm:$0xfe]
        %v5792 = vld [vmem:[#allocation4 + $0xd0] sm:$0x1]
        %v5793 = vld [vmem:[#allocation4 + $0xd8] sm:$0x1]
        %v5794 = vld [vmem:[#allocation4 + $0xe0] sm:$0xfe]
        %v5795 = vld [vmem:[#allocation4 + $0xe8] sm:$0xfe]
        %v5796 = vld [vmem:[#allocation4 + $0xf0] sm:$0x1]
        %v5797 = vld [vmem:[#allocation4 + $0xf8] sm:$0x1]
        %vm5830 = vcmask 1046528
        %v5831 = vrot.slane %v5766, 1
        %v5832 = vrot.slane %v5768, 1
        %v5833 = vsel %vm5830, %v5831, %v5832
        %v5834 = vrot.slane %v5767, 1
        %v5835 = vrot.slane %v5769, 1
        %v5836 = vsel %vm5830, %v5834, %v5835
        %v5837 = vrot.slane %v5770, 1
        %v5838 = vrot.slane %v5772, 1
        %v5839 = vsel %vm5830, %v5837, %v5838
        %v5840 = vrot.slane %v5771, 1
        %v5841 = vrot.slane %v5773, 1
        %v5842 = vsel %vm5830, %v5840, %v5841
        %v5843 = vrot.slane %v5774, 1
        %v5844 = vrot.slane %v5776, 1
        %v5845 = vsel %vm5830, %v5843, %v5844
        %v5846 = vrot.slane %v5775, 1
        %v5847 = vrot.slane %v5777, 1
        %v5848 = vsel %vm5830, %v5846, %v5847
        %v5849 = vrot.slane %v5778, 1
        %v5850 = vrot.slane %v5780, 1
        %v5851 = vsel %vm5830, %v5849, %v5850
        %v5852 = vrot.slane %v5779, 1
        %v5853 = vrot.slane %v5781, 1
        %v5854 = vsel %vm5830, %v5852, %v5853
        %v5855 = vrot.slane %v5782, 1
        %v5856 = vrot.slane %v5784, 1
        %v5857 = vsel %vm5830, %v5855, %v5856
        %v5858 = vrot.slane %v5783, 1
        %v5859 = vrot.slane %v5785, 1
        %v5860 = vsel %vm5830, %v5858, %v5859
        %v5861 = vrot.slane %v5786, 1
        %v5862 = vrot.slane %v5788, 1
        %v5863 = vsel %vm5830, %v5861, %v5862
        %v5864 = vrot.slane %v5787, 1
        %v5865 = vrot.slane %v5789, 1
        %v5866 = vsel %vm5830, %v5864, %v5865
        %v5867 = vrot.slane %v5790, 1
        %v5868 = vrot.slane %v5792, 1
        %v5869 = vsel %vm5830, %v5867, %v5868
        %v5870 = vrot.slane %v5791, 1
        %v5871 = vrot.slane %v5793, 1
        %v5872 = vsel %vm5830, %v5870, %v5871
        %v5873 = vrot.slane %v5794, 1
        %v5874 = vrot.slane %v5796, 1
        %v5875 = vsel %vm5830, %v5873, %v5874
        %v5876 = vrot.slane %v5795, 1
        %v5877 = vrot.slane %v5797, 1
        %v5878 = vsel %vm5830, %v5876, %v5877
        %v5895 = vmax.f32 %v5750, %v5833
        %v5896 = vmax.f32 %v5751, %v5836
        %v5897 = vmax.f32 %v5752, %v5839
        %v5898 = vmax.f32 %v5753, %v5842
        %v5899 = vmax.f32 %v5754, %v5845
        %v5900 = vmax.f32 %v5755, %v5848
        %v5901 = vmax.f32 %v5756, %v5851
        %v5902 = vmax.f32 %v5757, %v5854
        %v5903 = vmax.f32 %v5758, %v5857
        %v5904 = vmax.f32 %v5759, %v5860
        %v5905 = vmax.f32 %v5760, %v5863
        %v5906 = vmax.f32 %v5761, %v5866
        %v5907 = vmax.f32 %v5762, %v5869
        %v5908 = vmax.f32 %v5763, %v5872
        %v5909 = vmax.f32 %v5764, %v5875
        %v5910 = vmax.f32 %v5765, %v5878
        %v5911 = vld [vmem:[#allocation4] sm:$0xfc]
        %v5912 = vld [vmem:[#allocation4 + $0x8] sm:$0xfc]
        %v5913 = vld [vmem:[#allocation4 + $0x10] sm:$0x3]
        %v5914 = vld [vmem:[#allocation4 + $0x18] sm:$0x3]
        %v5915 = vld [vmem:[#allocation4 + $0x20] sm:$0xfc]
        %v5916 = vld [vmem:[#allocation4 + $0x28] sm:$0xfc]
        %v5917 = vld [vmem:[#allocation4 + $0x30] sm:$0x3]
        %v5918 = vld [vmem:[#allocation4 + $0x38] sm:$0x3]
        %v5919 = vld [vmem:[#allocation4 + $0x40] sm:$0xfc]
        %v5920 = vld [vmem:[#allocation4 + $0x48] sm:$0xfc]
        %v5921 = vld [vmem:[#allocation4 + $0x50] sm:$0x3]
        %v5922 = vld [vmem:[#allocation4 + $0x58] sm:$0x3]
        %v5923 = vld [vmem:[#allocation4 + $0x60] sm:$0xfc]
        %v5924 = vld [vmem:[#allocation4 + $0x68] sm:$0xfc]
        %v5925 = vld [vmem:[#allocation4 + $0x70] sm:$0x3]
        %v5926 = vld [vmem:[#allocation4 + $0x78] sm:$0x3]
        %v5927 = vld [vmem:[#allocation4 + $0x80] sm:$0xfc]
        %v5928 = vld [vmem:[#allocation4 + $0x88] sm:$0xfc]
        %v5929 = vld [vmem:[#allocation4 + $0x90] sm:$0x3]
        %v5930 = vld [vmem:[#allocation4 + $0x98] sm:$0x3]
        %v5931 = vld [vmem:[#allocation4 + $0xa0] sm:$0xfc]
        %v5932 = vld [vmem:[#allocation4 + $0xa8] sm:$0xfc]
        %v5933 = vld [vmem:[#allocation4 + $0xb0] sm:$0x3]
        %v5934 = vld [vmem:[#allocation4 + $0xb8] sm:$0x3]
        %v5935 = vld [vmem:[#allocation4 + $0xc0] sm:$0xfc]
        %v5936 = vld [vmem:[#allocation4 + $0xc8] sm:$0xfc]
        %v5937 = vld [vmem:[#allocation4 + $0xd0] sm:$0x3]
        %v5938 = vld [vmem:[#allocation4 + $0xd8] sm:$0x3]
        %v5939 = vld [vmem:[#allocation4 + $0xe0] sm:$0xfc]
        %v5940 = vld [vmem:[#allocation4 + $0xe8] sm:$0xfc]
        %v5941 = vld [vmem:[#allocation4 + $0xf0] sm:$0x3]
        %v5942 = vld [vmem:[#allocation4 + $0xf8] sm:$0x3]
        %vm5975 = vcmask 1045504
        %v5976 = vrot.slane %v5911, 2
        %v5977 = vrot.slane %v5913, 2
        %v5978 = vsel %vm5975, %v5976, %v5977
        %v5979 = vrot.slane %v5912, 2
        %v5980 = vrot.slane %v5914, 2
        %v5981 = vsel %vm5975, %v5979, %v5980
        %v5982 = vrot.slane %v5915, 2
        %v5983 = vrot.slane %v5917, 2
        %v5984 = vsel %vm5975, %v5982, %v5983
        %v5985 = vrot.slane %v5916, 2
        %v5986 = vrot.slane %v5918, 2
        %v5987 = vsel %vm5975, %v5985, %v5986
        %v5988 = vrot.slane %v5919, 2
        %v5989 = vrot.slane %v5921, 2
        %v5990 = vsel %vm5975, %v5988, %v5989
        %v5991 = vrot.slane %v5920, 2
        %v5992 = vrot.slane %v5922, 2
        %v5993 = vsel %vm5975, %v5991, %v5992
        %v5994 = vrot.slane %v5923, 2
        %v5995 = vrot.slane %v5925, 2
        %v5996 = vsel %vm5975, %v5994, %v5995
        %v5997 = vrot.slane %v5924, 2
        %v5998 = vrot.slane %v5926, 2
        %v5999 = vsel %vm5975, %v5997, %v5998
        %v6000 = vrot.slane %v5927, 2
        %v6001 = vrot.slane %v5929, 2
        %v6002 = vsel %vm5975, %v6000, %v6001
        %v6003 = vrot.slane %v5928, 2
        %v6004 = vrot.slane %v5930, 2
        %v6005 = vsel %vm5975, %v6003, %v6004
        %v6006 = vrot.slane %v5931, 2
        %v6007 = vrot.slane %v5933, 2
        %v6008 = vsel %vm5975, %v6006, %v6007
        %v6009 = vrot.slane %v5932, 2
        %v6010 = vrot.slane %v5934, 2
        %v6011 = vsel %vm5975, %v6009, %v6010
        %v6012 = vrot.slane %v5935, 2
        %v6013 = vrot.slane %v5937, 2
        %v6014 = vsel %vm5975, %v6012, %v6013
        %v6015 = vrot.slane %v5936, 2
        %v6016 = vrot.slane %v5938, 2
        %v6017 = vsel %vm5975, %v6015, %v6016
        %v6018 = vrot.slane %v5939, 2
        %v6019 = vrot.slane %v5941, 2
        %v6020 = vsel %vm5975, %v6018, %v6019
        %v6021 = vrot.slane %v5940, 2
        %v6022 = vrot.slane %v5942, 2
        %v6023 = vsel %vm5975, %v6021, %v6022
        %v6040 = vmax.f32 %v5895, %v5978
        %v6041 = vmax.f32 %v5896, %v5981
        %v6042 = vmax.f32 %v5897, %v5984
        %v6043 = vmax.f32 %v5898, %v5987
        %v6044 = vmax.f32 %v5899, %v5990
        %v6045 = vmax.f32 %v5900, %v5993
        %v6046 = vmax.f32 %v5901, %v5996
        %v6047 = vmax.f32 %v5902, %v5999
        %v6048 = vmax.f32 %v5903, %v6002
        %v6049 = vmax.f32 %v5904, %v6005
        %v6050 = vmax.f32 %v5905, %v6008
        %v6051 = vmax.f32 %v5906, %v6011
        %v6052 = vmax.f32 %v5907, %v6014
        %v6053 = vmax.f32 %v5908, %v6017
        %v6054 = vmax.f32 %v5909, %v6020
        %v6055 = vmax.f32 %v5910, %v6023
        %v6056 = vld [vmem:[%s5715] sm:$0xff]
        %v6057 = vld [vmem:[%s5715 + $0x8] sm:$0xff]
        %v6058 = vld [vmem:[%s5715 + $0x20] sm:$0xff]
        %v6059 = vld [vmem:[%s5715 + $0x28] sm:$0xff]
        %v6060 = vld [vmem:[%s5715 + $0x40] sm:$0xff]
        %v6061 = vld [vmem:[%s5715 + $0x48] sm:$0xff]
        %v6062 = vld [vmem:[%s5715 + $0x60] sm:$0xff]
        %v6063 = vld [vmem:[%s5715 + $0x68] sm:$0xff]
        %v6064 = vld [vmem:[%s5715 + $0x80] sm:$0xff]
        %v6065 = vld [vmem:[%s5715 + $0x88] sm:$0xff]
        %v6066 = vld [vmem:[%s5715 + $0xa0] sm:$0xff]
        %v6067 = vld [vmem:[%s5715 + $0xa8] sm:$0xff]
        %v6068 = vld [vmem:[%s5715 + $0xc0] sm:$0xff]
        %v6069 = vld [vmem:[%s5715 + $0xc8] sm:$0xff]
        %v6070 = vld [vmem:[%s5715 + $0xe0] sm:$0xff]
        %v6071 = vld [vmem:[%s5715 + $0xe8] sm:$0xff]
        %v6072 = vmax.f32 %v6040, %v6056
        %v6073 = vmax.f32 %v6041, %v6057
        %v6074 = vmax.f32 %v6042, %v6058
        %v6075 = vmax.f32 %v6043, %v6059
        %v6076 = vmax.f32 %v6044, %v6060
        %v6077 = vmax.f32 %v6045, %v6061
        %v6078 = vmax.f32 %v6046, %v6062
        %v6079 = vmax.f32 %v6047, %v6063
        %v6080 = vmax.f32 %v6048, %v6064
        %v6081 = vmax.f32 %v6049, %v6065
        %v6082 = vmax.f32 %v6050, %v6066
        %v6083 = vmax.f32 %v6051, %v6067
        %v6084 = vmax.f32 %v6052, %v6068
        %v6085 = vmax.f32 %v6053, %v6069
        %v6086 = vmax.f32 %v6054, %v6070
        %v6087 = vmax.f32 %v6055, %v6071
        %v6088 = vld [vmem:[%s5715] sm:$0xfe]
        %v6089 = vld [vmem:[%s5715 + $0x8] sm:$0xfe]
        %v6090 = vld [vmem:[%s5715 + $0x10] sm:$0x1]
        %v6091 = vld [vmem:[%s5715 + $0x18] sm:$0x1]
        %v6092 = vld [vmem:[%s5715 + $0x20] sm:$0xfe]
        %v6093 = vld [vmem:[%s5715 + $0x28] sm:$0xfe]
        %v6094 = vld [vmem:[%s5715 + $0x30] sm:$0x1]
        %v6095 = vld [vmem:[%s5715 + $0x38] sm:$0x1]
        %v6096 = vld [vmem:[%s5715 + $0x40] sm:$0xfe]
        %v6097 = vld [vmem:[%s5715 + $0x48] sm:$0xfe]
        %v6098 = vld [vmem:[%s5715 + $0x50] sm:$0x1]
        %v6099 = vld [vmem:[%s5715 + $0x58] sm:$0x1]
        %v6100 = vld [vmem:[%s5715 + $0x60] sm:$0xfe]
        %v6101 = vld [vmem:[%s5715 + $0x68] sm:$0xfe]
        %v6102 = vld [vmem:[%s5715 + $0x70] sm:$0x1]
        %v6103 = vld [vmem:[%s5715 + $0x78] sm:$0x1]
        %v6104 = vld [vmem:[%s5715 + $0x80] sm:$0xfe]
        %v6105 = vld [vmem:[%s5715 + $0x88] sm:$0xfe]
        %v6106 = vld [vmem:[%s5715 + $0x90] sm:$0x1]
        %v6107 = vld [vmem:[%s5715 + $0x98] sm:$0x1]
        %v6108 = vld [vmem:[%s5715 + $0xa0] sm:$0xfe]
        %v6109 = vld [vmem:[%s5715 + $0xa8] sm:$0xfe]
        %v6110 = vld [vmem:[%s5715 + $0xb0] sm:$0x1]
        %v6111 = vld [vmem:[%s5715 + $0xb8] sm:$0x1]
        %v6112 = vld [vmem:[%s5715 + $0xc0] sm:$0xfe]
        %v6113 = vld [vmem:[%s5715 + $0xc8] sm:$0xfe]
        %v6114 = vld [vmem:[%s5715 + $0xd0] sm:$0x1]
        %v6115 = vld [vmem:[%s5715 + $0xd8] sm:$0x1]
        %v6116 = vld [vmem:[%s5715 + $0xe0] sm:$0xfe]
        %v6117 = vld [vmem:[%s5715 + $0xe8] sm:$0xfe]
        %v6118 = vld [vmem:[%s5715 + $0xf0] sm:$0x1]
        %v6119 = vld [vmem:[%s5715 + $0xf8] sm:$0x1]
        %v6152 = vrot.slane %v6088, 1
        %v6153 = vrot.slane %v6090, 1
        %v6154 = vsel %vm5830, %v6152, %v6153
        %v6155 = vrot.slane %v6089, 1
        %v6156 = vrot.slane %v6091, 1
        %v6157 = vsel %vm5830, %v6155, %v6156
        %v6158 = vrot.slane %v6092, 1
        %v6159 = vrot.slane %v6094, 1
        %v6160 = vsel %vm5830, %v6158, %v6159
        %v6161 = vrot.slane %v6093, 1
        %v6162 = vrot.slane %v6095, 1
        %v6163 = vsel %vm5830, %v6161, %v6162
        %v6164 = vrot.slane %v6096, 1
        %v6165 = vrot.slane %v6098, 1
        %v6166 = vsel %vm5830, %v6164, %v6165
        %v6167 = vrot.slane %v6097, 1
        %v6168 = vrot.slane %v6099, 1
        %v6169 = vsel %vm5830, %v6167, %v6168
        %v6170 = vrot.slane %v6100, 1
        %v6171 = vrot.slane %v6102, 1
        %v6172 = vsel %vm5830, %v6170, %v6171
        %v6173 = vrot.slane %v6101, 1
        %v6174 = vrot.slane %v6103, 1
        %v6175 = vsel %vm5830, %v6173, %v6174
        %v6176 = vrot.slane %v6104, 1
        %v6177 = vrot.slane %v6106, 1
        %v6178 = vsel %vm5830, %v6176, %v6177
        %v6179 = vrot.slane %v6105, 1
        %v6180 = vrot.slane %v6107, 1
        %v6181 = vsel %vm5830, %v6179, %v6180
        %v6182 = vrot.slane %v6108, 1
        %v6183 = vrot.slane %v6110, 1
        %v6184 = vsel %vm5830, %v6182, %v6183
        %v6185 = vrot.slane %v6109, 1
        %v6186 = vrot.slane %v6111, 1
        %v6187 = vsel %vm5830, %v6185, %v6186
        %v6188 = vrot.slane %v6112, 1
        %v6189 = vrot.slane %v6114, 1
        %v6190 = vsel %vm5830, %v6188, %v6189
        %v6191 = vrot.slane %v6113, 1
        %v6192 = vrot.slane %v6115, 1
        %v6193 = vsel %vm5830, %v6191, %v6192
        %v6194 = vrot.slane %v6116, 1
        %v6195 = vrot.slane %v6118, 1
        %v6196 = vsel %vm5830, %v6194, %v6195
        %v6197 = vrot.slane %v6117, 1
        %v6198 = vrot.slane %v6119, 1
        %v6199 = vsel %vm5830, %v6197, %v6198
        %v6216 = vmax.f32 %v6072, %v6154
        %v6217 = vmax.f32 %v6073, %v6157
        %v6218 = vmax.f32 %v6074, %v6160
        %v6219 = vmax.f32 %v6075, %v6163
        %v6220 = vmax.f32 %v6076, %v6166
        %v6221 = vmax.f32 %v6077, %v6169
        %v6222 = vmax.f32 %v6078, %v6172
        %v6223 = vmax.f32 %v6079, %v6175
        %v6224 = vmax.f32 %v6080, %v6178
        %v6225 = vmax.f32 %v6081, %v6181
        %v6226 = vmax.f32 %v6082, %v6184
        %v6227 = vmax.f32 %v6083, %v6187
        %v6228 = vmax.f32 %v6084, %v6190
        %v6229 = vmax.f32 %v6085, %v6193
        %v6230 = vmax.f32 %v6086, %v6196
        %v6231 = vmax.f32 %v6087, %v6199
        %v6232 = vld [vmem:[%s5715] sm:$0xfc]
        %v6233 = vld [vmem:[%s5715 + $0x8] sm:$0xfc]
        %v6234 = vld [vmem:[%s5715 + $0x10] sm:$0x3]
        %v6235 = vld [vmem:[%s5715 + $0x18] sm:$0x3]
        %v6236 = vld [vmem:[%s5715 + $0x20] sm:$0xfc]
        %v6237 = vld [vmem:[%s5715 + $0x28] sm:$0xfc]
        %v6238 = vld [vmem:[%s5715 + $0x30] sm:$0x3]
        %v6239 = vld [vmem:[%s5715 + $0x38] sm:$0x3]
        %v6240 = vld [vmem:[%s5715 + $0x40] sm:$0xfc]
        %v6241 = vld [vmem:[%s5715 + $0x48] sm:$0xfc]
        %v6242 = vld [vmem:[%s5715 + $0x50] sm:$0x3]
        %v6243 = vld [vmem:[%s5715 + $0x58] sm:$0x3]
        %v6244 = vld [vmem:[%s5715 + $0x60] sm:$0xfc]
        %v6245 = vld [vmem:[%s5715 + $0x68] sm:$0xfc]
        %v6246 = vld [vmem:[%s5715 + $0x70] sm:$0x3]
        %v6247 = vld [vmem:[%s5715 + $0x78] sm:$0x3]
        %v6248 = vld [vmem:[%s5715 + $0x80] sm:$0xfc]
        %v6249 = vld [vmem:[%s5715 + $0x88] sm:$0xfc]
        %v6250 = vld [vmem:[%s5715 + $0x90] sm:$0x3]
        %v6251 = vld [vmem:[%s5715 + $0x98] sm:$0x3]
        %v6252 = vld [vmem:[%s5715 + $0xa0] sm:$0xfc]
        %v6253 = vld [vmem:[%s5715 + $0xa8] sm:$0xfc]
        %v6254 = vld [vmem:[%s5715 + $0xb0] sm:$0x3]
        %v6255 = vld [vmem:[%s5715 + $0xb8] sm:$0x3]
        %v6256 = vld [vmem:[%s5715 + $0xc0] sm:$0xfc]
        %v6257 = vld [vmem:[%s5715 + $0xc8] sm:$0xfc]
        %v6258 = vld [vmem:[%s5715 + $0xd0] sm:$0x3]
        %v6259 = vld [vmem:[%s5715 + $0xd8] sm:$0x3]
        %v6260 = vld [vmem:[%s5715 + $0xe0] sm:$0xfc]
        %v6261 = vld [vmem:[%s5715 + $0xe8] sm:$0xfc]
        %v6262 = vld [vmem:[%s5715 + $0xf0] sm:$0x3]
        %v6263 = vld [vmem:[%s5715 + $0xf8] sm:$0x3]
        %v6296 = vrot.slane %v6232, 2
        %v6297 = vrot.slane %v6234, 2
        %v6298 = vsel %vm5975, %v6296, %v6297
        %v6299 = vrot.slane %v6233, 2
        %v6300 = vrot.slane %v6235, 2
        %v6301 = vsel %vm5975, %v6299, %v6300
        %v6302 = vrot.slane %v6236, 2
        %v6303 = vrot.slane %v6238, 2
        %v6304 = vsel %vm5975, %v6302, %v6303
        %v6305 = vrot.slane %v6237, 2
        %v6306 = vrot.slane %v6239, 2
        %v6307 = vsel %vm5975, %v6305, %v6306
        %v6308 = vrot.slane %v6240, 2
        %v6309 = vrot.slane %v6242, 2
        %v6310 = vsel %vm5975, %v6308, %v6309
        %v6311 = vrot.slane %v6241, 2
        %v6312 = vrot.slane %v6243, 2
        %v6313 = vsel %vm5975, %v6311, %v6312
        %v6314 = vrot.slane %v6244, 2
        %v6315 = vrot.slane %v6246, 2
        %v6316 = vsel %vm5975, %v6314, %v6315
        %v6317 = vrot.slane %v6245, 2
        %v6318 = vrot.slane %v6247, 2
        %v6319 = vsel %vm5975, %v6317, %v6318
        %v6320 = vrot.slane %v6248, 2
        %v6321 = vrot.slane %v6250, 2
        %v6322 = vsel %vm5975, %v6320, %v6321
        %v6323 = vrot.slane %v6249, 2
        %v6324 = vrot.slane %v6251, 2
        %v6325 = vsel %vm5975, %v6323, %v6324
        %v6326 = vrot.slane %v6252, 2
        %v6327 = vrot.slane %v6254, 2
        %v6328 = vsel %vm5975, %v6326, %v6327
        %v6329 = vrot.slane %v6253, 2
        %v6330 = vrot.slane %v6255, 2
        %v6331 = vsel %vm5975, %v6329, %v6330
        %v6332 = vrot.slane %v6256, 2
        %v6333 = vrot.slane %v6258, 2
        %v6334 = vsel %vm5975, %v6332, %v6333
        %v6335 = vrot.slane %v6257, 2
        %v6336 = vrot.slane %v6259, 2
        %v6337 = vsel %vm5975, %v6335, %v6336
        %v6338 = vrot.slane %v6260, 2
        %v6339 = vrot.slane %v6262, 2
        %v6340 = vsel %vm5975, %v6338, %v6339
        %v6341 = vrot.slane %v6261, 2
        %v6342 = vrot.slane %v6263, 2
        %v6343 = vsel %vm5975, %v6341, %v6342
        %v6360 = vmax.f32 %v6216, %v6298
        %v6361 = vmax.f32 %v6217, %v6301
        %v6362 = vmax.f32 %v6218, %v6304
        %v6363 = vmax.f32 %v6219, %v6307
        %v6364 = vmax.f32 %v6220, %v6310
        %v6365 = vmax.f32 %v6221, %v6313
        %v6366 = vmax.f32 %v6222, %v6316
        %v6367 = vmax.f32 %v6223, %v6319
        %v6368 = vmax.f32 %v6224, %v6322
        %v6369 = vmax.f32 %v6225, %v6325
        %v6370 = vmax.f32 %v6226, %v6328
        %v6371 = vmax.f32 %v6227, %v6331
        %v6372 = vmax.f32 %v6228, %v6334
        %v6373 = vmax.f32 %v6229, %v6337
        %v6374 = vmax.f32 %v6230, %v6340
        %v6375 = vmax.f32 %v6231, %v6343
        %s6376 = scalar_lea.vmem [#allocation4], 64
        %v6377 = vld [vmem:[%s6376] sm:$0xff]
        %v6378 = vld [vmem:[%s6376 + $0x8] sm:$0xff]
        %v6379 = vld [vmem:[%s6376 + $0x20] sm:$0xff]
        %v6380 = vld [vmem:[%s6376 + $0x28] sm:$0xff]
        %v6381 = vld [vmem:[%s6376 + $0x40] sm:$0xff]
        %v6382 = vld [vmem:[%s6376 + $0x48] sm:$0xff]
        %v6383 = vld [vmem:[%s6376 + $0x60] sm:$0xff]
        %v6384 = vld [vmem:[%s6376 + $0x68] sm:$0xff]
        %v6385 = vld [vmem:[%s6376 + $0x80] sm:$0xff]
        %v6386 = vld [vmem:[%s6376 + $0x88] sm:$0xff]
        %v6387 = vld [vmem:[%s6376 + $0xa0] sm:$0xff]
        %v6388 = vld [vmem:[%s6376 + $0xa8] sm:$0xff]
        %v6389 = vld [vmem:[%s6376 + $0xc0] sm:$0xff]
        %v6390 = vld [vmem:[%s6376 + $0xc8] sm:$0xff]
        %v6391 = vld [vmem:[%s6376 + $0xe0] sm:$0xff]
        %v6392 = vld [vmem:[%s6376 + $0xe8] sm:$0xff]
        %v6393 = vmax.f32 %v6360, %v6377
        %v6394 = vmax.f32 %v6361, %v6378
        %v6395 = vmax.f32 %v6362, %v6379
        %v6396 = vmax.f32 %v6363, %v6380
        %v6397 = vmax.f32 %v6364, %v6381
        %v6398 = vmax.f32 %v6365, %v6382
        %v6399 = vmax.f32 %v6366, %v6383
        %v6400 = vmax.f32 %v6367, %v6384
        %v6401 = vmax.f32 %v6368, %v6385
        %v6402 = vmax.f32 %v6369, %v6386
        %v6403 = vmax.f32 %v6370, %v6387
        %v6404 = vmax.f32 %v6371, %v6388
        %v6405 = vmax.f32 %v6372, %v6389
        %v6406 = vmax.f32 %v6373, %v6390
        %v6407 = vmax.f32 %v6374, %v6391
        %v6408 = vmax.f32 %v6375, %v6392
        %v6409 = vld [vmem:[%s6376] sm:$0xfe]
        %v6410 = vld [vmem:[%s6376 + $0x8] sm:$0xfe]
        %v6411 = vld [vmem:[%s6376 + $0x10] sm:$0x1]
        %v6412 = vld [vmem:[%s6376 + $0x18] sm:$0x1]
        %v6413 = vld [vmem:[%s6376 + $0x20] sm:$0xfe]
        %v6414 = vld [vmem:[%s6376 + $0x28] sm:$0xfe]
        %v6415 = vld [vmem:[%s6376 + $0x30] sm:$0x1]
        %v6416 = vld [vmem:[%s6376 + $0x38] sm:$0x1]
        %v6417 = vld [vmem:[%s6376 + $0x40] sm:$0xfe]
        %v6418 = vld [vmem:[%s6376 + $0x48] sm:$0xfe]
        %v6419 = vld [vmem:[%s6376 + $0x50] sm:$0x1]
        %v6420 = vld [vmem:[%s6376 + $0x58] sm:$0x1]
        %v6421 = vld [vmem:[%s6376 + $0x60] sm:$0xfe]
        %v6422 = vld [vmem:[%s6376 + $0x68] sm:$0xfe]
        %v6423 = vld [vmem:[%s6376 + $0x70] sm:$0x1]
        %v6424 = vld [vmem:[%s6376 + $0x78] sm:$0x1]
        %v6425 = vld [vmem:[%s6376 + $0x80] sm:$0xfe]
        %v6426 = vld [vmem:[%s6376 + $0x88] sm:$0xfe]
        %v6427 = vld [vmem:[%s6376 + $0x90] sm:$0x1]
        %v6428 = vld [vmem:[%s6376 + $0x98] sm:$0x1]
        %v6429 = vld [vmem:[%s6376 + $0xa0] sm:$0xfe]
        %v6430 = vld [vmem:[%s6376 + $0xa8] sm:$0xfe]
        %v6431 = vld [vmem:[%s6376 + $0xb0] sm:$0x1]
        %v6432 = vld [vmem:[%s6376 + $0xb8] sm:$0x1]
        %v6433 = vld [vmem:[%s6376 + $0xc0] sm:$0xfe]
        %v6434 = vld [vmem:[%s6376 + $0xc8] sm:$0xfe]
        %v6435 = vld [vmem:[%s6376 + $0xd0] sm:$0x1]
        %v6436 = vld [vmem:[%s6376 + $0xd8] sm:$0x1]
        %v6437 = vld [vmem:[%s6376 + $0xe0] sm:$0xfe]
        %v6438 = vld [vmem:[%s6376 + $0xe8] sm:$0xfe]
        %v6439 = vld [vmem:[%s6376 + $0xf0] sm:$0x1]
        %v6440 = vld [vmem:[%s6376 + $0xf8] sm:$0x1]
        %v6473 = vrot.slane %v6409, 1
        %v6474 = vrot.slane %v6411, 1
        %v6475 = vsel %vm5830, %v6473, %v6474
        %v6476 = vrot.slane %v6410, 1
        %v6477 = vrot.slane %v6412, 1
        %v6478 = vsel %vm5830, %v6476, %v6477
        %v6479 = vrot.slane %v6413, 1
        %v6480 = vrot.slane %v6415, 1
        %v6481 = vsel %vm5830, %v6479, %v6480
        %v6482 = vrot.slane %v6414, 1
        %v6483 = vrot.slane %v6416, 1
        %v6484 = vsel %vm5830, %v6482, %v6483
        %v6485 = vrot.slane %v6417, 1
        %v6486 = vrot.slane %v6419, 1
        %v6487 = vsel %vm5830, %v6485, %v6486
        %v6488 = vrot.slane %v6418, 1
        %v6489 = vrot.slane %v6420, 1
        %v6490 = vsel %vm5830, %v6488, %v6489
        %v6491 = vrot.slane %v6421, 1
        %v6492 = vrot.slane %v6423, 1
        %v6493 = vsel %vm5830, %v6491, %v6492
        %v6494 = vrot.slane %v6422, 1
        %v6495 = vrot.slane %v6424, 1
        %v6496 = vsel %vm5830, %v6494, %v6495
        %v6497 = vrot.slane %v6425, 1
        %v6498 = vrot.slane %v6427, 1
        %v6499 = vsel %vm5830, %v6497, %v6498
        %v6500 = vrot.slane %v6426, 1
        %v6501 = vrot.slane %v6428, 1
        %v6502 = vsel %vm5830, %v6500, %v6501
        %v6503 = vrot.slane %v6429, 1
        %v6504 = vrot.slane %v6431, 1
        %v6505 = vsel %vm5830, %v6503, %v6504
        %v6506 = vrot.slane %v6430, 1
        %v6507 = vrot.slane %v6432, 1
        %v6508 = vsel %vm5830, %v6506, %v6507
        %v6509 = vrot.slane %v6433, 1
        %v6510 = vrot.slane %v6435, 1
        %v6511 = vsel %vm5830, %v6509, %v6510
        %v6512 = vrot.slane %v6434, 1
        %v6513 = vrot.slane %v6436, 1
        %v6514 = vsel %vm5830, %v6512, %v6513
        %v6515 = vrot.slane %v6437, 1
        %v6516 = vrot.slane %v6439, 1
        %v6517 = vsel %vm5830, %v6515, %v6516
        %v6518 = vrot.slane %v6438, 1
        %v6519 = vrot.slane %v6440, 1
        %v6520 = vsel %vm5830, %v6518, %v6519
        %v6537 = vmax.f32 %v6393, %v6475
        %v6538 = vmax.f32 %v6394, %v6478
        %v6539 = vmax.f32 %v6395, %v6481
        %v6540 = vmax.f32 %v6396, %v6484
        %v6541 = vmax.f32 %v6397, %v6487
        %v6542 = vmax.f32 %v6398, %v6490
        %v6543 = vmax.f32 %v6399, %v6493
        %v6544 = vmax.f32 %v6400, %v6496
        %v6545 = vmax.f32 %v6401, %v6499
        %v6546 = vmax.f32 %v6402, %v6502
        %v6547 = vmax.f32 %v6403, %v6505
        %v6548 = vmax.f32 %v6404, %v6508
        %v6549 = vmax.f32 %v6405, %v6511
        %v6550 = vmax.f32 %v6406, %v6514
        %v6551 = vmax.f32 %v6407, %v6517
        %v6552 = vmax.f32 %v6408, %v6520
        %v6553 = vld [vmem:[%s6376] sm:$0xfc]
        %v6554 = vld [vmem:[%s6376 + $0x8] sm:$0xfc]
        %v6555 = vld [vmem:[%s6376 + $0x10] sm:$0x3]
        %v6556 = vld [vmem:[%s6376 + $0x18] sm:$0x3]
        %v6557 = vld [vmem:[%s6376 + $0x20] sm:$0xfc]
        %v6558 = vld [vmem:[%s6376 + $0x28] sm:$0xfc]
        %v6559 = vld [vmem:[%s6376 + $0x30] sm:$0x3]
        %v6560 = vld [vmem:[%s6376 + $0x38] sm:$0x3]
        %v6561 = vld [vmem:[%s6376 + $0x40] sm:$0xfc]
        %v6562 = vld [vmem:[%s6376 + $0x48] sm:$0xfc]
        %v6563 = vld [vmem:[%s6376 + $0x50] sm:$0x3]
        %v6564 = vld [vmem:[%s6376 + $0x58] sm:$0x3]
        %v6565 = vld [vmem:[%s6376 + $0x60] sm:$0xfc]
        %v6566 = vld [vmem:[%s6376 + $0x68] sm:$0xfc]
        %v6567 = vld [vmem:[%s6376 + $0x70] sm:$0x3]
        %v6568 = vld [vmem:[%s6376 + $0x78] sm:$0x3]
        %v6569 = vld [vmem:[%s6376 + $0x80] sm:$0xfc]
        %v6570 = vld [vmem:[%s6376 + $0x88] sm:$0xfc]
        %v6571 = vld [vmem:[%s6376 + $0x90] sm:$0x3]
        %v6572 = vld [vmem:[%s6376 + $0x98] sm:$0x3]
        %v6573 = vld [vmem:[%s6376 + $0xa0] sm:$0xfc]
        %v6574 = vld [vmem:[%s6376 + $0xa8] sm:$0xfc]
        %v6575 = vld [vmem:[%s6376 + $0xb0] sm:$0x3]
        %v6576 = vld [vmem:[%s6376 + $0xb8] sm:$0x3]
        %v6577 = vld [vmem:[%s6376 + $0xc0] sm:$0xfc]
        %v6578 = vld [vmem:[%s6376 + $0xc8] sm:$0xfc]
        %v6579 = vld [vmem:[%s6376 + $0xd0] sm:$0x3]
        %v6580 = vld [vmem:[%s6376 + $0xd8] sm:$0x3]
        %v6581 = vld [vmem:[%s6376 + $0xe0] sm:$0xfc]
        %v6582 = vld [vmem:[%s6376 + $0xe8] sm:$0xfc]
        %v6583 = vld [vmem:[%s6376 + $0xf0] sm:$0x3]
        %v6584 = vld [vmem:[%s6376 + $0xf8] sm:$0x3]
        %v6617 = vrot.slane %v6553, 2
        %v6618 = vrot.slane %v6555, 2
        %v6619 = vsel %vm5975, %v6617, %v6618
        %v6620 = vrot.slane %v6554, 2
        %v6621 = vrot.slane %v6556, 2
        %v6622 = vsel %vm5975, %v6620, %v6621
        %v6623 = vrot.slane %v6557, 2
        %v6624 = vrot.slane %v6559, 2
        %v6625 = vsel %vm5975, %v6623, %v6624
        %v6626 = vrot.slane %v6558, 2
        %v6627 = vrot.slane %v6560, 2
        %v6628 = vsel %vm5975, %v6626, %v6627
        %v6629 = vrot.slane %v6561, 2
        %v6630 = vrot.slane %v6563, 2
        %v6631 = vsel %vm5975, %v6629, %v6630
        %v6632 = vrot.slane %v6562, 2
        %v6633 = vrot.slane %v6564, 2
        %v6634 = vsel %vm5975, %v6632, %v6633
        %v6635 = vrot.slane %v6565, 2
        %v6636 = vrot.slane %v6567, 2
        %v6637 = vsel %vm5975, %v6635, %v6636
        %v6638 = vrot.slane %v6566, 2
        %v6639 = vrot.slane %v6568, 2
        %v6640 = vsel %vm5975, %v6638, %v6639
        %v6641 = vrot.slane %v6569, 2
        %v6642 = vrot.slane %v6571, 2
        %v6643 = vsel %vm5975, %v6641, %v6642
        %v6644 = vrot.slane %v6570, 2
        %v6645 = vrot.slane %v6572, 2
        %v6646 = vsel %vm5975, %v6644, %v6645
        %v6647 = vrot.slane %v6573, 2
        %v6648 = vrot.slane %v6575, 2
        %v6649 = vsel %vm5975, %v6647, %v6648
        %v6650 = vrot.slane %v6574, 2
        %v6651 = vrot.slane %v6576, 2
        %v6652 = vsel %vm5975, %v6650, %v6651
        %v6653 = vrot.slane %v6577, 2
        %v6654 = vrot.slane %v6579, 2
        %v6655 = vsel %vm5975, %v6653, %v6654
        %v6656 = vrot.slane %v6578, 2
        %v6657 = vrot.slane %v6580, 2
        %v6658 = vsel %vm5975, %v6656, %v6657
        %v6659 = vrot.slane %v6581, 2
        %v6660 = vrot.slane %v6583, 2
        %v6661 = vsel %vm5975, %v6659, %v6660
        %v6662 = vrot.slane %v6582, 2
        %v6663 = vrot.slane %v6584, 2
        %v6664 = vsel %vm5975, %v6662, %v6663
        %v6681 = vmax.f32 %v6537, %v6619
        %v6682 = vmax.f32 %v6538, %v6622
        %v6683 = vmax.f32 %v6539, %v6625
        %v6684 = vmax.f32 %v6540, %v6628
        %v6685 = vmax.f32 %v6541, %v6631
        %v6686 = vmax.f32 %v6542, %v6634
        %v6687 = vmax.f32 %v6543, %v6637
        %v6688 = vmax.f32 %v6544, %v6640
        %v6689 = vmax.f32 %v6545, %v6643
        %v6690 = vmax.f32 %v6546, %v6646
        %v6691 = vmax.f32 %v6547, %v6649
        %v6692 = vmax.f32 %v6548, %v6652
        %v6693 = vmax.f32 %v6549, %v6655
        %v6694 = vmax.f32 %v6550, %v6658
        %v6695 = vmax.f32 %v6551, %v6661
        %v6696 = vmax.f32 %v6552, %v6664
        %v6697 = vmax.f32 %v6681, 0.0
        %v6698 = vmax.f32 %v6682, 0.0
        %v6699 = vmax.f32 %v6683, 0.0
        %v6700 = vmax.f32 %v6684, 0.0
        %v6701 = vmax.f32 %v6685, 0.0
        %v6702 = vmax.f32 %v6686, 0.0
        %v6703 = vmax.f32 %v6687, 0.0
        %v6704 = vmax.f32 %v6688, 0.0
        %v6705 = vmax.f32 %v6689, 0.0
        %v6706 = vmax.f32 %v6690, 0.0
        %v6707 = vmax.f32 %v6691, 0.0
        %v6708 = vmax.f32 %v6692, 0.0
        %v6709 = vmax.f32 %v6693, 0.0
        %v6710 = vmax.f32 %v6694, 0.0
        %v6711 = vmax.f32 %v6695, 0.0
        %v6712 = vmax.f32 %v6696, 0.0
        %v6713 = vpack.c.bf16 %v6699, %v6697
        %v6714 = vpack.c.bf16 %v6700, %v6698
        %v6715 = vpack.c.bf16 %v6703, %v6701
        %v6716 = vpack.c.bf16 %v6704, %v6702
        %v6717 = vpack.c.bf16 %v6707, %v6705
        %v6718 = vpack.c.bf16 %v6708, %v6706
        %v6719 = vpack.c.bf16 %v6711, %v6709
        %v6720 = vpack.c.bf16 %v6712, %v6710
        %v6721 = vld [vmem:[%s7] sm:$0xf]
        %v6722 = vld [vmem:[%s7 + $0x4] sm:$0xf]
        %v6723 = vld [vmem:[%s7 + $0x8] sm:$0xf]
        %v6724 = vld [vmem:[%s7 + $0xc] sm:$0xf]
        %v6725 = vld [vmem:[%s7 + $0x10] sm:$0xf]
        %v6726 = vld [vmem:[%s7 + $0x14] sm:$0xf]
        %v6727 = vld [vmem:[%s7 + $0x18] sm:$0xf]
        %v6728 = vld [vmem:[%s7 + $0x1c] sm:$0xf]
        %v6729 = vld [vmem:[%s7 + $0x20] sm:$0xf]
        %v6730 = vld [vmem:[%s7 + $0x24] sm:$0xf]
        %v6731 = vld [vmem:[%s7 + $0x28] sm:$0xf]
        %v6732 = vld [vmem:[%s7 + $0x2c] sm:$0xf]
        %v6733 = vld [vmem:[%s7 + $0x30] sm:$0xf]
        %v6734 = vld [vmem:[%s7 + $0x34] sm:$0xf]
        %v6735 = vld [vmem:[%s7 + $0x38] sm:$0xf]
        %v6736 = vld [vmem:[%s7 + $0x3c] sm:$0xf]
        %v6737 = vld [vmem:[%s7 + $0x40] sm:$0xf]
        %v6738 = vld [vmem:[%s7 + $0x44] sm:$0xf]
        %v6739 = vld [vmem:[%s7 + $0x48] sm:$0xf]
        %v6740 = vld [vmem:[%s7 + $0x4c] sm:$0xf]
        %v6741 = vld [vmem:[%s7 + $0x50] sm:$0xf]
        %v6742 = vld [vmem:[%s7 + $0x54] sm:$0xf]
        %v6743 = vld [vmem:[%s7 + $0x58] sm:$0xf]
        %v6744 = vld [vmem:[%s7 + $0x5c] sm:$0xf]
        %v6745 = vld [vmem:[%s8] sm:$0x1]
        %v6747 = vlaneseq
        %v6748 = vshrl.u32 %v6747, 7
        %v6749 = vsub.s32 0, %v6748
        %v6750 = vrot.slane %v6745, %v6749
        %v6776 = vunpack.c.l.b16 %v6721
        %v6777 = vunpack.c.l.b16 %v6722
        %v6778 = vunpack.c.l.b16 %v6723
        %v6779 = vunpack.c.l.b16 %v6724
        %v6780 = vunpack.c.l.b16 %v6725
        %v6781 = vunpack.c.l.b16 %v6726
        %v6782 = vunpack.c.l.b16 %v6727
        %v6783 = vunpack.c.l.b16 %v6728
        %v6784 = vunpack.c.l.b16 %v6729
        %v6785 = vunpack.c.l.b16 %v6730
        %v6786 = vunpack.c.l.b16 %v6731
        %v6787 = vunpack.c.l.b16 %v6732
        %v6788 = vunpack.c.l.b16 %v6733
        %v6789 = vunpack.c.l.b16 %v6734
        %v6790 = vunpack.c.l.b16 %v6735
        %v6791 = vunpack.c.l.b16 %v6736
        %v6792 = vunpack.c.l.b16 %v6737
        %v6793 = vunpack.c.l.b16 %v6738
        %v6794 = vunpack.c.l.b16 %v6739
        %v6795 = vunpack.c.l.b16 %v6740
        %v6796 = vunpack.c.l.b16 %v6741
        %v6797 = vunpack.c.l.b16 %v6742
        %v6798 = vunpack.c.l.b16 %v6743
        %v6799 = vunpack.c.l.b16 %v6744
        %v6800 = vpack.c.b16 %v6777, %v6776
        %v6801 = vpack.c.b16 %v6779, %v6778
        %v6802 = vpack.c.b16 %v6781, %v6780
        %v6803 = vpack.c.b16 %v6783, %v6782
        %v6804 = vpack.c.b16 %v6785, %v6784
        %v6805 = vpack.c.b16 %v6787, %v6786
        %v6806 = vpack.c.b16 %v6789, %v6788
        %v6807 = vpack.c.b16 %v6791, %v6790
        %v6808 = vpack.c.b16 %v6793, %v6792
        %v6809 = vpack.c.b16 %v6795, %v6794
        %v6810 = vpack.c.b16 %v6797, %v6796
        %v6811 = vpack.c.b16 %v6799, %v6798
        %v6825 = vsel %vm633, %v6714, 0
        %v6828 = vsel %vm633, %v6716, 0
        %v6831 = vsel %vm633, %v6718, 0
        %v6834 = vsel %vm633, %v6720, 0
        %6836 = vmatprep.subr.bf16.mxu0 0
        %6837 = vmatpush1.bf16.msra.mxu0 %v6800
        %6838 = vmatprep.subr.bf16.mxu0 0
        %6839 = vmatpush1.bf16.msra.mxu0 %v6801
        %6840 = vmatprep.subr.bf16.mxu0 0
        %6841 = vmatpush1.bf16.msra.mxu0 %v6802
        %6842 = vmatprep.subr.bf16.mxu0 0
        %6843 = vmatpush1.bf16.msra.mxu0 %v6803
        %6844 = vmatprep.subr.bf16.mxu0 0
        %6845 = vmatpush1.bf16.msra.mxu0 %v6804
        %6846 = vmatprep.subr.bf16.mxu0 0
        %6847 = vmatpush1.bf16.msra.mxu0 %v6805
        %6848 = vmatprep.subr.bf16.mxu0 0
        %6849 = vmatpush1.bf16.msra.mxu0 %v6806
        %6850 = vmatprep.subr.bf16.mxu0 0
        %6851 = vmatpush1.bf16.msra.mxu0 %v6807
        %6852 = vmatprep.subr.bf16.mxu0 0
        %6853 = vmatpush1.bf16.msra.mxu0 %v6808
        %6854 = vmatprep.subr.bf16.mxu0 0
        %6855 = vmatpush1.bf16.msra.mxu0 %v6809
        %6856 = vmatprep.subr.bf16.mxu0 0
        %6857 = vmatpush1.bf16.msra.mxu0 %v6810
        %6858 = vmatprep.subr.bf16.mxu0 0
        %6859 = vmatpush1.bf16.msra.mxu0 %v6811
        %6860 = vmatprep.subr.bf16.mxu0 0
        %6861 = vmatpush1.bf16.msra.mxu0 0
        %6862 = vmatprep.subr.bf16.mxu0 0
        %6863 = vmatpush1.bf16.msra.mxu0 0
        %6864 = vmatprep.subr.bf16.mxu0 0
        %6865 = vmatpush1.bf16.msra.mxu0 0
        %6866 = vmatprep.subr.bf16.mxu0 0
        %6867 = vmatpush1.bf16.msra.mxu0 0
        %6868 = vmatprep.mubr.bf16.mxu0 %v6825
        %6869 = vmatmul.mubr.bf16.gmra.mrb[0].mxu0 %v6713
        %v6870 = vpop.f32.mrb[0].mxu0
        %v6871 = vadd.f32 %v6750, %v6870
        %v6872 = vpop.f32.mrb[0].mxu0
        %v6873 = vpop.f32.mrb[0].mxu0
        %v6874 = vadd.f32 %v6750, %v6873
        %v6875 = vpop.f32.mrb[0].mxu0
        %6876 = vmatprep.mubr.bf16.mxu0 %v6828
        %6877 = vmatmul.mubr.bf16.gmra.mrb[0].mxu0 %v6715
        %v6878 = vpop.f32.mrb[0].mxu0
        %v6879 = vadd.f32 %v6750, %v6878
        %v6880 = vpop.f32.mrb[0].mxu0
        %v6881 = vpop.f32.mrb[0].mxu0
        %v6882 = vadd.f32 %v6750, %v6881
        %v6883 = vpop.f32.mrb[0].mxu0
        %6884 = vmatprep.mubr.bf16.mxu0 %v6831
        %6885 = vmatmul.mubr.bf16.gmra.mrb[0].mxu0 %v6717
        %v6886 = vpop.f32.mrb[0].mxu0
        %v6887 = vadd.f32 %v6750, %v6886
        %v6888 = vpop.f32.mrb[0].mxu0
        %v6889 = vpop.f32.mrb[0].mxu0
        %v6890 = vadd.f32 %v6750, %v6889
        %v6891 = vpop.f32.mrb[0].mxu0
        %6892 = vmatprep.mubr.bf16.mxu0 %v6834
        %6893 = vmatmul.mubr.bf16.gmra.mrb[0].mxu0 %v6719
        %v6894 = vpop.f32.mrb[0].mxu0
        %v6895 = vadd.f32 %v6750, %v6894
        %v6896 = vpop.f32.mrb[0].mxu0
        %v6897 = vpop.f32.mrb[0].mxu0
        %v6898 = vadd.f32 %v6750, %v6897
        %v6899 = vpop.f32.mrb[0].mxu0
        %6900 = vdwg.mxu0
        %v6901 = vmax.f32 %v6871, 0.0
        %v6902 = vmax.f32 %v6874, 0.0
        %v6903 = vmax.f32 %v6879, 0.0
        %v6904 = vmax.f32 %v6882, 0.0
        %v6905 = vmax.f32 %v6887, 0.0
        %v6906 = vmax.f32 %v6890, 0.0
        %v6907 = vmax.f32 %v6895, 0.0
        %v6908 = vmax.f32 %v6898, 0.0
        %6909 = vst.msk [vmem:[%s325] sm:$0xff] %vm633, %v786
        %6910 = vst.msk [vmem:[%s325 + $0x10] sm:$0xff] %vm633, %v789
        %6911 = vst.msk [vmem:[%s325 + $0x20] sm:$0xff] %vm633, %v792
        %6912 = vst.msk [vmem:[%s325 + $0x30] sm:$0xff] %vm633, %v795
        %6913 = vst.msk [vmem:[%s325 + $0x40] sm:$0xff] %vm633, %v798
        %6914 = vst.msk [vmem:[%s325 + $0x50] sm:$0xff] %vm633, %v801
        %6915 = vst.msk [vmem:[%s325 + $0x60] sm:$0xff] %vm633, %v804
        %6916 = vst.msk [vmem:[%s325 + $0x70] sm:$0xff] %vm633, %v807
        %6925 = vrot.lane.b32.xlu0 %v2106, 64
        %v6926 = vpop.permute.xlu0 %6925
        %6927 = vrot.lane.b32.xlu0 %v2107, 64
        %v6928 = vpop.permute.xlu0 %6927
        %6929 = vrot.lane.b32.xlu0 %v2108, 64
        %v6930 = vpop.permute.xlu0 %6929
        %6931 = vrot.lane.b32.xlu0 %v2109, 64
        %v6932 = vpop.permute.xlu0 %6931
        %6933 = vrot.lane.b32.xlu0 %v2110, 64
        %v6934 = vpop.permute.xlu0 %6933
        %6935 = vrot.lane.b32.xlu0 %v2111, 64
        %v6936 = vpop.permute.xlu0 %6935
        %6937 = vrot.lane.b32.xlu0 %v2112, 64
        %v6938 = vpop.permute.xlu0 %6937
        %6939 = vrot.lane.b32.xlu0 %v2113, 64
        %v6940 = vpop.permute.xlu0 %6939
        %vm6949 = vcmask 1048064
        %6950 = vst.msk [vmem:[%s325] sm:$0xff] %vm6949, %v6926
        %6951 = vst.msk [vmem:[%s325 + $0x8] sm:$0xff] %vm633, %v6926
        %6952 = vst.msk [vmem:[%s325 + $0x10] sm:$0xff] %vm6949, %v6928
        %6953 = vst.msk [vmem:[%s325 + $0x18] sm:$0xff] %vm633, %v6928
        %6954 = vst.msk [vmem:[%s325 + $0x20] sm:$0xff] %vm6949, %v6930
        %6955 = vst.msk [vmem:[%s325 + $0x28] sm:$0xff] %vm633, %v6930
        %6956 = vst.msk [vmem:[%s325 + $0x30] sm:$0xff] %vm6949, %v6932
        %6957 = vst.msk [vmem:[%s325 + $0x38] sm:$0xff] %vm633, %v6932
        %6958 = vst.msk [vmem:[%s325 + $0x40] sm:$0xff] %vm6949, %v6934
        %6959 = vst.msk [vmem:[%s325 + $0x48] sm:$0xff] %vm633, %v6934
        %6960 = vst.msk [vmem:[%s325 + $0x50] sm:$0xff] %vm6949, %v6936
        %6961 = vst.msk [vmem:[%s325 + $0x58] sm:$0xff] %vm633, %v6936
        %6962 = vst.msk [vmem:[%s325 + $0x60] sm:$0xff] %vm6949, %v6938
        %6963 = vst.msk [vmem:[%s325 + $0x68] sm:$0xff] %vm633, %v6938
        %6964 = vst.msk [vmem:[%s325 + $0x70] sm:$0xff] %vm6949, %v6940
        %6965 = vst.msk [vmem:[%s325 + $0x78] sm:$0xff] %vm633, %v6940
        %6974 = vrot.lane.b32.xlu0 %v5602, 64
        %v6975 = vpop.permute.xlu0 %6974
        %6976 = vrot.lane.b32.xlu0 %v5603, 64
        %v6977 = vpop.permute.xlu0 %6976
        %6978 = vrot.lane.b32.xlu0 %v5604, 64
        %v6979 = vpop.permute.xlu0 %6978
        %6980 = vrot.lane.b32.xlu0 %v5605, 64
        %v6981 = vpop.permute.xlu0 %6980
        %6982 = vrot.lane.b32.xlu0 %v5606, 64
        %v6983 = vpop.permute.xlu0 %6982
        %6984 = vrot.lane.b32.xlu0 %v5607, 64
        %v6985 = vpop.permute.xlu0 %6984
        %6986 = vrot.lane.b32.xlu0 %v5608, 64
        %v6987 = vpop.permute.xlu0 %6986
        %6988 = vrot.lane.b32.xlu0 %v5609, 64
        %v6989 = vpop.permute.xlu0 %6988
        %vm6998 = vcmask 785920
        %6999 = vst.msk [vmem:[%s325 + $0x8] sm:$0xff] %vm6998, %v6975
        %7000 = vst.msk [vmem:[%s325 + $0x18] sm:$0xff] %vm6998, %v6977
        %7001 = vst.msk [vmem:[%s325 + $0x28] sm:$0xff] %vm6998, %v6979
        %7002 = vst.msk [vmem:[%s325 + $0x38] sm:$0xff] %vm6998, %v6981
        %7003 = vst.msk [vmem:[%s325 + $0x48] sm:$0xff] %vm6998, %v6983
        %7004 = vst.msk [vmem:[%s325 + $0x58] sm:$0xff] %vm6998, %v6985
        %7005 = vst.msk [vmem:[%s325 + $0x68] sm:$0xff] %vm6998, %v6987
        %7006 = vst.msk [vmem:[%s325 + $0x78] sm:$0xff] %vm6998, %v6989
        %7015 = vrot.lane.b32.xlu0 %v6901, 96
        %v7016 = vpop.permute.xlu0 %7015
        %7017 = vrot.lane.b32.xlu0 %v6902, 96
        %v7018 = vpop.permute.xlu0 %7017
        %7019 = vrot.lane.b32.xlu0 %v6903, 96
        %v7020 = vpop.permute.xlu0 %7019
        %7021 = vrot.lane.b32.xlu0 %v6904, 96
        %v7022 = vpop.permute.xlu0 %7021
        %7023 = vrot.lane.b32.xlu0 %v6905, 96
        %v7024 = vpop.permute.xlu0 %7023
        %7025 = vrot.lane.b32.xlu0 %v6906, 96
        %v7026 = vpop.permute.xlu0 %7025
        %7027 = vrot.lane.b32.xlu0 %v6907, 96
        %v7028 = vpop.permute.xlu0 %7027
        %7029 = vrot.lane.b32.xlu0 %v6908, 96
        %v7030 = vpop.permute.xlu0 %7029
        %vm7039 = vcmask 1048320
        %7040 = vst.msk [vmem:[%s325 + $0x8] sm:$0xff] %vm7039, %v7016
        %7041 = vst.msk [vmem:[%s325 + $0x18] sm:$0xff] %vm7039, %v7018
        %7042 = vst.msk [vmem:[%s325 + $0x28] sm:$0xff] %vm7039, %v7020
        %7043 = vst.msk [vmem:[%s325 + $0x38] sm:$0xff] %vm7039, %v7022
        %7044 = vst.msk [vmem:[%s325 + $0x48] sm:$0xff] %vm7039, %v7024
        %7045 = vst.msk [vmem:[%s325 + $0x58] sm:$0xff] %vm7039, %v7026
        %7046 = vst.msk [vmem:[%s325 + $0x68] sm:$0xff] %vm7039, %v7028
        %7047 = vst.msk [vmem:[%s325 + $0x78] sm:$0xff] %vm7039, %v7030
        %s7048 = sand.u32 %s225, 1
        %s7049 = scalar_lea.sflag [#allocation6], %s7048
        %s7050 = sand.u32 %s225, 1
        %s7051 = smul.addr %s7050, 128
        %s7052 = scalar_lea.vmem [#allocation5], %s7051
        // Predicated region
        $region57: #{_inception_forward_fn.1} parent=55 // pred_check
          %p7053 = pneg %p235
        $region58: #{_inception_forward_fn.1} parent=55 // pred_check_branch
          %7055 = sbr.rel (%p7053) target = $region60
        $region59: #{_inception_forward_fn.1} parent=55 // pred_region
          %s7057 = ssub.s32 2048, 2048
          %7058 = vsyncadd %s7049, %s7057
          %s7059 = smul.addr %s23, 16
          %s7060 = smul.addr %s7059, 128
          %s7061 = scalar_lea.hbm %s9, %s7060
          %s7062 = sshll.u32 %s7052, 4
          %s7063 = int_to_ptr.vmem [resolvable:$true] %s7062
          %7068 = dma.vmem_to_hbm [thread:$0]  %s7063, 2048, %s7061, %s7049, 256, 256, 16
        $region60: #{_inception_forward_fn.1} parent=55 // pred_fallthru
          _
      $region56: #{_inception_forward_fn.1} parent=5 // pred_fallthru
        _
      %p7069 = scmp.le.s32.totalorder 2, %s18
      // Predicated region
      $region61: #{_inception_forward_fn.1} parent=5 // pred_check
        %p7070 = pneg %p7069
      $region62: #{_inception_forward_fn.1} parent=5 // pred_check_branch
        %7072 = sbr.rel (%p7070) target = $region64
      $region63: #{_inception_forward_fn.1} parent=5 // pred_region
        %s7073 = ssub.s32 %s18, 2
        // Predicated region
        $region65: #{_inception_forward_fn.1} parent=63 // pred_check
          %p7074 = pneg %p241
        $region66: #{_inception_forward_fn.1} parent=63 // pred_check_branch
          %7076 = sbr.rel (%p7074) target = $region68
        $region67: #{_inception_forward_fn.1} parent=63 // pred_region
          %s7077 = sand.u32 %s226, 1
          %s7078 = scalar_lea.sflag [#allocation6], %s7077
          %s7079 = sand.u32 %s226, 1
          %s7080 = smul.addr %s7079, 128
          %s7081 = scalar_lea.vmem [#allocation5], %s7080
          %7082 = dma.done %s7078, 2048
        $region68: #{_inception_forward_fn.1} parent=63 // pred_fallthru
          _
      $region64: #{_inception_forward_fn.1} parent=5 // pred_fallthru
        _
    $region6: #{_inception_forward_fn.1} parent=1 // loop_footer
      %s22 = sadd.s32 1, %s18
    $region7: #{_inception_forward_fn.1} parent=1 // loop_footer_branch
      %17 = sbr.rel target = $region3
    $region8: #{_inception_forward_fn.1} parent=1 // loop_exit
      _
    %7083 = vsyncpa [#allocation6], 1
    %s7084 = scalar_lea.sflag [#allocation6], 1
    %7085 = vsyncpa %s7084, 1

</llo_original>
